<compile_context>
chip_gen: v5e
topology: v5e:2x2
jax: 0.10.0
libtpu: 0.0.40
codegen_flags: <defaults>
</compile_context>

<pallas_src>
import functools
import math

import jax
import jax.numpy as jnp
from jax.experimental import pallas as pl
from jax.experimental.pallas import tpu as pltpu


_VMEM_LIMIT = 32 * 1024 * 1024   # explicit VMEM budget (v7x: 64 MiB physical per TC)


def _round_up(x, m):
    return ((x + m - 1) // m) * m


def _sigmoid(x):
    return 1.0 / (1.0 + jnp.exp(-x))


# ----------------------------------------------------------------------------
# Weight layout helpers (lane-aligned, zero-padded; math is exact)
# ----------------------------------------------------------------------------
def _pad_gate_cols(m, H, Hp):
    """(rows, 3H) -> (rows, 3Hp): gate g placed at lane offset g*Hp, rest zero."""
    if H == Hp:
        return m
    gates = [jnp.pad(m[:, g * H:(g + 1) * H], ((0, 0), (0, Hp - H))) for g in range(3)]
    return jnp.concatenate(gates, axis=1)


def _prep_dir(p, H, Hp, padded_input):
    """Per-direction lane-aligned weights.

    Returns:
      wih_pad: (Fin_p, 3*Hp) input-projection weights (gates at 0 / Hp / 2Hp)
      bih_pad: (1, 3*Hp)     b_ih with b_hh[r,z] folded in
      whh_pad: (Hp, 3*Hp)    hidden weights, zero-padded rows/cols
      bhn_pad: (1, Hp)       n-gate hidden bias (scaled by r -> stays separate)
    """
    wih_t = p["w_ih"].T.astype(jnp.float32)                      # (Fin, 3H)
    wih_g = _pad_gate_cols(wih_t, H, Hp)                         # (Fin, 3Hp)
    if padded_input:
        # Previous layer output slab layout: [fwd(0:H) | zeros | bwd(0:H) | zeros]
        fwd_rows = jnp.pad(wih_g[:H], ((0, Hp - H), (0, 0)))
        bwd_rows = jnp.pad(wih_g[H:], ((0, Hp - H), (0, 0)))
        wih_pad = jnp.concatenate([fwd_rows, bwd_rows], axis=0)  # (2*Hp, 3*Hp)
    else:
        wih_pad = wih_g                                          # (Fin, 3*Hp)
    b_fold = p["b_ih"] + jnp.concatenate(
        [p["b_hh"][:2 * H], jnp.zeros((H,), jnp.float32)])
    bih_pad = _pad_gate_cols(b_fold.reshape(1, 3 * H), H, Hp)    # (1, 3*Hp)
    whh_pad = jnp.pad(_pad_gate_cols(p["w_hh"].T.astype(jnp.float32), H, Hp),
                      ((0, Hp - H), (0, 0)))                     # (Hp, 3*Hp)
    bhn_pad = jnp.pad(p["b_hh"][2 * H:].reshape(1, H), ((0, 0), (0, Hp - H)))
    return wih_pad, bih_pad, whh_pad, bhn_pad


# ----------------------------------------------------------------------------
# Middle-layer kernel: both directions, full-sequence output (T, Bp, 2*Hp)
# ----------------------------------------------------------------------------
def _gru_bidi_layer_kernel(x_ref, wih_ref, bih_ref, whhf_ref, whhb_ref,
                           bhnf_ref, bhnb_ref, out_ref, gx_scr,
                           *, T, Bp, Hp, unroll):
    G = 3 * Hp

    # (1) Fused input projection for BOTH directions and the whole sequence:
    #     one MXU matmul; gx never round-trips HBM.
    # TODO(synk): for long T, chunk this over time into a double-buffered scratch to
    # stay inside the v7x 64 MiB VMEM budget.
    gx_scr[...] = (
        jnp.dot(x_ref[...], wih_ref[...], preferred_element_type=jnp.float32)
        + bih_ref[...])

    # Hoist bias broadcasts out of the time loop (JAX does not CSE broadcast_in_dim).
    bhnf = jnp.broadcast_to(bhnf_ref[...], (Bp, Hp))
    bhnb = jnp.broadcast_to(bhnb_ref[...], (Bp, Hp))

    def cell(gx, h, whh_ref, bhn):
        gh = jnp.dot(h, whh_ref[...], preferred_element_type=jnp.float32)
        r = _sigmoid(gx[:, 0:Hp] + gh[:, 0:Hp])
        z = _sigmoid(gx[:, Hp:2 * Hp] + gh[:, Hp:2 * Hp])
        n = jnp.tanh(gx[:, 2 * Hp:G] + r * (gh[:, 2 * Hp:G] + bhn))
        return (1.0 - z) * n + z * h

    # (2) Recurrence: both directions interleaved in one loop body (two independent
    #     dependency chains per step); bwd time index is pure arithmetic (no reversal
    #     copies anywhere).
    def step(t, carry):
        hf, hb = carry
        tb = T - 1 - t
        rf = pl.multiple_of(t * Bp, 8)          # Bp is a multiple of 8 -> aligned rows
        rb = pl.multiple_of(tb * Bp, 8)
        hf = cell(gx_scr[pl.ds(rf, Bp), 0:G], hf, whhf_ref, bhnf)
        hb = cell(gx_scr[pl.ds(rb, Bp), G:2 * G], hb, whhb_ref, bhnb)
        out_ref[t, :, 0:Hp] = hf                # lane-aligned, unmasked stores
        out_ref[tb, :, Hp:2 * Hp] = hb
        return hf, hb

    h0 = jnp.zeros((Bp, Hp), jnp.float32)
    jax.lax.fori_loop(0, T, step, (h0, h0), unroll=unroll)


# ----------------------------------------------------------------------------
# Last-layer kernel: forward recurrence + ONE backward step + fused fc head.
# Only out[:, -1, :] of the original model feeds fc, so no full-sequence writeback.
# ----------------------------------------------------------------------------
def _gru_bidi_last_kernel(x_ref, wihf_ref, bihf_ref, wihb_ref, bihb_ref,
                          whhf_ref, bhnf_ref, bhnb_ref,
                          wfcf_ref, wfcb_ref, bfc_ref,
                          out_ref, gx_scr, *, T, Bp, Hp, unroll):
    G = 3 * Hp

    # Only the forward direction needs the whole-sequence projection here.
    gx_scr[...] = (
        jnp.dot(x_ref[...], wihf_ref[...], preferred_element_type=jnp.float32)
        + bihf_ref[...])

    bhnf = jnp.broadcast_to(bhnf_ref[...], (Bp, Hp))
    bhnb = jnp.broadcast_to(bhnb_ref[...], (Bp, Hp))

    def cell(gx, gh, h, bhn):
        r = _sigmoid(gx[:, 0:Hp] + gh[:, 0:Hp])
        z = _sigmoid(gx[:, Hp:2 * Hp] + gh[:, Hp:2 * Hp])
        n = jnp.tanh(gx[:, 2 * Hp:G] + r * (gh[:, 2 * Hp:G] + bhn))
        return (1.0 - z) * n + z * h

    def step(t, hf):
        rf = pl.multiple_of(t * Bp, 8)
        gx = gx_scr[pl.ds(rf, Bp), :]
        gh = jnp.dot(hf, whhf_ref[...], preferred_element_type=jnp.float32)
        return cell(gx, gh, hf, bhnf)

    hf = jax.lax.fori_loop(0, T, step, jnp.zeros((Bp, Hp), jnp.float32),
                           unroll=unroll)

    # Backward direction: its output at position T-1 is its FIRST step (h0 = 0),
    # so gh == 0 and no recurrence / no W_hh is needed.
    x_last = x_ref[pl.ds((T - 1) * Bp, Bp), :]
    gx_b = (jnp.dot(x_last, wihb_ref[...], preferred_element_type=jnp.float32)
            + bihb_ref[...])
    hb = cell(gx_b, jnp.zeros((Bp, G), jnp.float32),
              jnp.zeros((Bp, Hp), jnp.float32), bhnb)

    # Fused fc head: out = [hf, hb] @ W_fc^T + b_fc (two MXU matmuls, one tiny store).
    out_ref[...] = (
        jnp.dot(hf, wfcf_ref[...], preferred_element_type=jnp.float32)
        + jnp.dot(hb, wfcb_ref[...], preferred_element_type=jnp.float32)
        + bfc_ref[...]).astype(out_ref.dtype)


# ----------------------------------------------------------------------------
# Wrappers
# ----------------------------------------------------------------------------
def gru_bidi_layer(x2, fwd_p, bwd_p, *, T, Bp, H, Hp, padded_input, unroll):
    """x2: (T*Bp, Fin_p) f32 -> (T*Bp, 2*Hp) f32 padded fwd|bwd slab."""
    wf, bf, whf, bnf = _prep_dir(fwd_p, H, Hp, padded_input)
    wb, bb, whb, bnb = _prep_dir(bwd_p, H, Hp, padded_input)
    wih = jnp.concatenate([wf, wb], axis=1)          # (Fin_p, 6*Hp)
    bih = jnp.concatenate([bf, bb], axis=1)          # (1, 6*Hp)
    kernel = functools.partial(_gru_bidi_layer_kernel, T=T, Bp=Bp, Hp=Hp,
                               unroll=unroll)
    out = pl.pallas_call(
        kernel,
        out_shape=jax.ShapeDtypeStruct((T, Bp, 2 * Hp), jnp.float32),
        scratch_shapes=[pltpu.VMEM((T * Bp, 6 * Hp), jnp.float32)],
        compiler_params=pltpu.CompilerParams(vmem_limit_bytes=_VMEM_LIMIT),
    )(x2, wih, bih, whf, whb, bnf, bnb)
    # Free row-major collapse; the next layer consumes the padded slab directly —
    # no jnp.concatenate / HBM round trip between layers.
    return out.reshape(T * Bp, 2 * Hp)


def gru_bidi_last_fc(x2, fwd_p, bwd_p, fc_p, *, T, Bp, H, Hp, padded_input, unroll):
    """Last GRU layer fused with the fc head: returns (Bp, output_size)."""
    wf, bf, whf, bnf = _prep_dir(fwd_p, H, Hp, padded_input)
    wb, bb, _whb, bnb = _prep_dir(bwd_p, H, Hp, padded_input)
    O = fc_p["w"].shape[0]
    wfc_t = fc_p["w"].T.astype(jnp.float32)                   # (2H, O)
    wfcf = jnp.pad(wfc_t[:H], ((0, Hp - H), (0, 0)))          # (Hp, O)
    wfcb = jnp.pad(wfc_t[H:], ((0, Hp - H), (0, 0)))          # (Hp, O)
    bfc = fc_p["b"].reshape(1, O).astype(jnp.float32)
    kernel = functools.partial(_gru_bidi_last_kernel, T=T, Bp=Bp, Hp=Hp,
                               unroll=unroll)
    return pl.pallas_call(
        kernel,
        out_shape=jax.ShapeDtypeStruct((Bp, O), jnp.float32),
        scratch_shapes=[pltpu.VMEM((T * Bp, 3 * Hp), jnp.float32)],
        compiler_params=pltpu.CompilerParams(vmem_limit_bytes=_VMEM_LIMIT),
    )(x2, wf, bf, wb, bb, whf, bnf, bnb, wfcf, wfcb, bfc)


# ----------------------------------------------------------------------------
# Parameter init (deterministic, PyTorch-style uniform(-1/sqrt(H), 1/sqrt(H)))
# ----------------------------------------------------------------------------
def init_grud_params(key, input_size, hidden_size, output_size, num_layers=3):
    k = 1.0 / math.sqrt(hidden_size)
    num_directions = 2
    keys = iter(jax.random.split(key, num_layers * num_directions * 4 + 2))

    def u(shape):
        return jax.random.uniform(next(keys), shape, jnp.float32, -k, k)

    gru_layers = []
    for layer in range(num_layers):
        in_size = input_size if layer == 0 else hidden_size * num_directions
        dirs = []
        for _ in range(num_directions):
            dirs.append(dict(
                w_ih=u((3 * hidden_size, in_size)),
                w_hh=u((3 * hidden_size, hidden_size)),
                b_ih=u((3 * hidden_size,)),
                b_hh=u((3 * hidden_size,)),
            ))
        gru_layers.append(dirs)
    fc = dict(w=u((output_size, 2 * hidden_size)), b=u((output_size,)))
    return {"gru": gru_layers, "fc": fc}


# ----------------------------------------------------------------------------
# Forward (matches GRUDModel.forward semantics)
# ----------------------------------------------------------------------------
@functools.partial(jax.jit, static_argnames=("hidden_size",))
def grud_forward(params, x, hidden_size):
    """x: (B, T, input_size) float32 -> (B, output_size)."""
    B, T, _ = x.shape
    H = hidden_size
    Hp = _round_up(H, 128)        # lane-aligned gate / hidden width
    Bp = _round_up(B, 8)          # sublane-aligned batch
    unroll = min(T, 8)            # modest unroll: LLO visibility without code blow-up

    seq = jnp.transpose(x, (1, 0, 2)).astype(jnp.float32)     # time-major (T, B, F)
    if Bp != B:
        seq = jnp.pad(seq, ((0, 0), (0, Bp - B), (0, 0)))
    x2 = seq.reshape(T * Bp, seq.shape[-1])

    gru = params["gru"]
    for li in range(len(gru) - 1):
        x2 = gru_bidi_layer(x2, gru[li][0], gru[li][1], T=T, Bp=Bp, H=H, Hp=Hp,
                            padded_input=(li > 0), unroll=unroll)
    out = gru_bidi_last_fc(x2, gru[-1][0], gru[-1][1], params["fc"], T=T, Bp=Bp,
                           H=H, Hp=Hp, padded_input=(len(gru) > 1), unroll=unroll)
    return out[:B]


# ----------------------------------------------------------------------------
# Pure-JAX reference (same math, lax.scan) for a correctness check
# ----------------------------------------------------------------------------
def _ref_gru_direction(x_seq, p, H):
    def step(h, x_t):
        gx = x_t @ p["w_ih"].T + p["b_ih"]
        gh = h @ p["w_hh"].T + p["b_hh"]
        r = jax.nn.sigmoid(gx[:, :H] + gh[:, :H])
        z = jax.nn.sigmoid(gx[:, H:2 * H] + gh[:, H:2 * H])
        n = jnp.tanh(gx[:, 2 * H:] + r * gh[:, 2 * H:])
        h_new = (1.0 - z) * n + z * h
        return h_new, h_new

    h0 = jnp.zeros((x_seq.shape[1], H), jnp.float32)
    _, outs = jax.lax.scan(step, h0, x_seq)
    return outs


def grud_forward_ref(params, x, H):
    seq = jnp.transpose(x, (1, 0, 2))
    for layer_params in params["gru"]:
        f = _ref_gru_direction(seq, layer_params[0], H)
        b = _ref_gru_direction(seq[::-1], layer_params[1], H)[::-1]
        seq = jnp.concatenate([f, b], axis=-1)
    return seq[-1] @ params["fc"]["w"].T + params["fc"]["b"]


# ----------------------------------------------------------------------------
if __name__ == "__main__":
    key = jax.random.PRNGKey(0)
    pkey, xkey = jax.random.split(key)

    input_size, hidden_size, output_size, num_layers = 4, 32, 3, 3
    B, T = 2, 8

    params = init_grud_params(pkey, input_size, hidden_size, output_size, num_layers)
    x = jax.random.normal(xkey, (B, T, input_size), dtype=jnp.float32)

    out = grud_forward(params, x, hidden_size=hidden_size)
    out = jax.block_until_ready(out)
    assert out.shape == (B, output_size)

    ref = grud_forward_ref(params, x, hidden_size)
    if not bool(jnp.allclose(out, ref, atol=2e-3, rtol=2e-3)):
        raise AssertionError("Pallas GRU-D output mismatch vs JAX reference")

    print("KERNEL_OK")
</pallas_src>

<mosaic_0001>
module attributes {stable_mosaic.version = 11 : i64} {
  func.func @_gru_bidi_layer_kernel(%arg0: memref<64x4xf32, #tpu.memory_space<vmem>>, %arg1: memref<4x768xf32, #tpu.memory_space<vmem>>, %arg2: memref<1x768xf32, #tpu.memory_space<vmem>>, %arg3: memref<128x384xf32, #tpu.memory_space<vmem>>, %arg4: memref<128x384xf32, #tpu.memory_space<vmem>>, %arg5: memref<1x128xf32, #tpu.memory_space<vmem>>, %arg6: memref<1x128xf32, #tpu.memory_space<vmem>>, %arg7: memref<8x8x256xf32, #tpu.memory_space<vmem>>, %arg8: memref<64x768xf32, #tpu.memory_space<vmem>>) attributes {dimension_semantics = [], scalar_prefetch = 0 : i64, scratch_operands = 1 : i64, tpu.core_type = #tpu.core_type<tc>} {
    %c0 = arith.constant 0 : index
    %c0_0 = arith.constant 0 : index
    %0 = vector.load %arg0[%c0, %c0_0] : memref<64x4xf32, #tpu.memory_space<vmem>>, vector<64x4xf32>
    %c0_1 = arith.constant 0 : index
    %c0_2 = arith.constant 0 : index
    %1 = vector.load %arg1[%c0_1, %c0_2] : memref<4x768xf32, #tpu.memory_space<vmem>>, vector<4x768xf32>
    %cst = arith.constant dense<0.000000e+00> : vector<64x768xf32>
    %2 = tpu.matmul %0, %1, %cst {dimension_numbers = #tpu.dot_dimension_numbers<[1], [0], [0], [1], [0, 0, 1, 1], [], []>} : vector<64x4xf32>, vector<4x768xf32>, vector<64x768xf32> -> vector<64x768xf32>
    %c0_3 = arith.constant 0 : index
    %c0_4 = arith.constant 0 : index
    %3 = vector.load %arg2[%c0_3, %c0_4] : memref<1x768xf32, #tpu.memory_space<vmem>>, vector<1x768xf32>
    %4 = vector.broadcast %3 : vector<1x768xf32> to vector<64x768xf32>
    %5 = arith.addf %2, %4 : vector<64x768xf32>
    %c0_5 = arith.constant 0 : index
    %c0_6 = arith.constant 0 : index
    %6 = vector.load %arg8[%c0_5, %c0_6] : memref<64x768xf32, #tpu.memory_space<vmem>>, vector<64x768xf32>
    tpu.vector_store %arg8[%c0_5, %c0_6], %5 {strides = array<i32>} : memref<64x768xf32, #tpu.memory_space<vmem>>, vector<64x768xf32>,
    %c0_7 = arith.constant 0 : index
    %c0_8 = arith.constant 0 : index
    %7 = vector.load %arg5[%c0_7, %c0_8] : memref<1x128xf32, #tpu.memory_space<vmem>>, vector<1x128xf32>
    %8 = vector.shape_cast %7 : vector<1x128xf32> to vector<1x128xf32>
    %9 = vector.broadcast %8 : vector<1x128xf32> to vector<8x128xf32>
    %c0_9 = arith.constant 0 : index
    %c0_10 = arith.constant 0 : index
    %10 = vector.load %arg6[%c0_9, %c0_10] : memref<1x128xf32, #tpu.memory_space<vmem>>, vector<1x128xf32>
    %11 = vector.shape_cast %10 : vector<1x128xf32> to vector<1x128xf32>
    %12 = vector.broadcast %11 : vector<1x128xf32> to vector<8x128xf32>
    %cst_11 = arith.constant 0.000000e+00 : f32
    %13 = vector.broadcast %cst_11 : f32 to vector<8x128xf32>
    %c0_i32 = arith.constant 0 : i32
    %c7_i32 = arith.constant 7 : i32
    %14 = arith.subi %c7_i32, %c0_i32 : i32
    %c8_i32 = arith.constant 8 : i32
    %15 = arith.muli %c0_i32, %c8_i32 : i32
    %16 = tpu.assume_multiple %15, 8 : i32
    %c8_i32_12 = arith.constant 8 : i32
    %17 = arith.muli %14, %c8_i32_12 : i32
    %18 = tpu.assume_multiple %17, 8 : i32
    %19 = arith.index_cast %16 : i32 to index
    %c0_13 = arith.constant 0 : index
    %20 = vector.load %arg8[%19, %c0_13] : memref<64x768xf32, #tpu.memory_space<vmem>>, vector<8x384xf32>
    %c0_14 = arith.constant 0 : index
    %c0_15 = arith.constant 0 : index
    %21 = vector.load %arg3[%c0_14, %c0_15] : memref<128x384xf32, #tpu.memory_space<vmem>>, vector<128x384xf32>
    %cst_16 = arith.constant dense<0.000000e+00> : vector<8x384xf32>
    %22 = tpu.matmul %13, %21, %cst_16 {dimension_numbers = #tpu.dot_dimension_numbers<[1], [0], [0], [1], [0, 0, 1, 1], [], []>} : vector<8x128xf32>, vector<128x384xf32>, vector<8x384xf32> -> vector<8x384xf32>
    %23 = vector.extract_strided_slice %20 {offsets = [0, 0], sizes = [8, 128], strides = [1, 1]} : vector<8x384xf32> to vector<8x128xf32>
    %24 = vector.extract_strided_slice %22 {offsets = [0, 0], sizes = [8, 128], strides = [1, 1]} : vector<8x384xf32> to vector<8x128xf32>
    %25 = arith.addf %23, %24 : vector<8x128xf32>
    %cst_17 = arith.constant 0.000000e+00 : f32
    %26 = vector.broadcast %cst_17 : f32 to vector<8x128xf32>
    %27 = arith.subf %26, %25 : vector<8x128xf32>
    %28 = math.exp %27 : vector<8x128xf32>
    %cst_18 = arith.constant 1.000000e+00 : f32
    %29 = vector.broadcast %cst_18 : f32 to vector<8x128xf32>
    %30 = arith.addf %29, %28 : vector<8x128xf32>
    %cst_19 = arith.constant 1.000000e+00 : f32
    %31 = vector.broadcast %cst_19 : f32 to vector<8x128xf32>
    %32 = arith.divf %31, %30 : vector<8x128xf32>
    %33 = vector.extract_strided_slice %20 {offsets = [0, 128], sizes = [8, 128], strides = [1, 1]} : vector<8x384xf32> to vector<8x128xf32>
    %34 = vector.extract_strided_slice %22 {offsets = [0, 128], sizes = [8, 128], strides = [1, 1]} : vector<8x384xf32> to vector<8x128xf32>
    %35 = arith.addf %33, %34 : vector<8x128xf32>
    %cst_20 = arith.constant 0.000000e+00 : f32
    %36 = vector.broadcast %cst_20 : f32 to vector<8x128xf32>
    %37 = arith.subf %36, %35 : vector<8x128xf32>
    %38 = math.exp %37 : vector<8x128xf32>
    %cst_21 = arith.constant 1.000000e+00 : f32
    %39 = vector.broadcast %cst_21 : f32 to vector<8x128xf32>
    %40 = arith.addf %39, %38 : vector<8x128xf32>
    %cst_22 = arith.constant 1.000000e+00 : f32
    %41 = vector.broadcast %cst_22 : f32 to vector<8x128xf32>
    %42 = arith.divf %41, %40 : vector<8x128xf32>
    %43 = vector.extract_strided_slice %20 {offsets = [0, 256], sizes = [8, 128], strides = [1, 1]} : vector<8x384xf32> to vector<8x128xf32>
    %44 = vector.extract_strided_slice %22 {offsets = [0, 256], sizes = [8, 128], strides = [1, 1]} : vector<8x384xf32> to vector<8x128xf32>
    %45 = arith.addf %44, %9 : vector<8x128xf32>
    %46 = arith.mulf %32, %45 : vector<8x128xf32>
    %47 = arith.addf %43, %46 : vector<8x128xf32>
    %48 = math.tanh %47 : vector<8x128xf32>
    %cst_23 = arith.constant 1.000000e+00 : f32
    %49 = vector.broadcast %cst_23 : f32 to vector<8x128xf32>
    %50 = arith.subf %49, %42 : vector<8x128xf32>
    %51 = arith.mulf %50, %48 : vector<8x128xf32>
    %52 = arith.mulf %42, %13 : vector<8x128xf32>
    %53 = arith.addf %51, %52 : vector<8x128xf32>
    %54 = arith.index_cast %18 : i32 to index
    %c384 = arith.constant 384 : index
    %55 = vector.load %arg8[%54, %c384] : memref<64x768xf32, #tpu.memory_space<vmem>>, vector<8x384xf32>
    %c0_24 = arith.constant 0 : index
    %c0_25 = arith.constant 0 : index
    %56 = vector.load %arg4[%c0_24, %c0_25] : memref<128x384xf32, #tpu.memory_space<vmem>>, vector<128x384xf32>
    %cst_26 = arith.constant dense<0.000000e+00> : vector<8x384xf32>
    %57 = tpu.matmul %13, %56, %cst_26 {dimension_numbers = #tpu.dot_dimension_numbers<[1], [0], [0], [1], [0, 0, 1, 1], [], []>} : vector<8x128xf32>, vector<128x384xf32>, vector<8x384xf32> -> vector<8x384xf32>
    %58 = vector.extract_strided_slice %55 {offsets = [0, 0], sizes = [8, 128], strides = [1, 1]} : vector<8x384xf32> to vector<8x128xf32>
    %59 = vector.extract_strided_slice %57 {offsets = [0, 0], sizes = [8, 128], strides = [1, 1]} : vector<8x384xf32> to vector<8x128xf32>
    %60 = arith.addf %58, %59 : vector<8x128xf32>
    %cst_27 = arith.constant 0.000000e+00 : f32
    %61 = vector.broadcast %cst_27 : f32 to vector<8x128xf32>
    %62 = arith.subf %61, %60 : vector<8x128xf32>
    %63 = math.exp %62 : vector<8x128xf32>
    %cst_28 = arith.constant 1.000000e+00 : f32
    %64 = vector.broadcast %cst_28 : f32 to vector<8x128xf32>
    %65 = arith.addf %64, %63 : vector<8x128xf32>
    %cst_29 = arith.constant 1.000000e+00 : f32
    %66 = vector.broadcast %cst_29 : f32 to vector<8x128xf32>
    %67 = arith.divf %66, %65 : vector<8x128xf32>
    %68 = vector.extract_strided_slice %55 {offsets = [0, 128], sizes = [8, 128], strides = [1, 1]} : vector<8x384xf32> to vector<8x128xf32>
    %69 = vector.extract_strided_slice %57 {offsets = [0, 128], sizes = [8, 128], strides = [1, 1]} : vector<8x384xf32> to vector<8x128xf32>
    %70 = arith.addf %68, %69 : vector<8x128xf32>
    %cst_30 = arith.constant 0.000000e+00 : f32
    %71 = vector.broadcast %cst_30 : f32 to vector<8x128xf32>
    %72 = arith.subf %71, %70 : vector<8x128xf32>
    %73 = math.exp %72 : vector<8x128xf32>
    %cst_31 = arith.constant 1.000000e+00 : f32
    %74 = vector.broadcast %cst_31 : f32 to vector<8x128xf32>
    %75 = arith.addf %74, %73 : vector<8x128xf32>
    %cst_32 = arith.constant 1.000000e+00 : f32
    %76 = vector.broadcast %cst_32 : f32 to vector<8x128xf32>
    %77 = arith.divf %76, %75 : vector<8x128xf32>
    %78 = vector.extract_strided_slice %55 {offsets = [0, 256], sizes = [8, 128], strides = [1, 1]} : vector<8x384xf32> to vector<8x128xf32>
    %79 = vector.extract_strided_slice %57 {offsets = [0, 256], sizes = [8, 128], strides = [1, 1]} : vector<8x384xf32> to vector<8x128xf32>
    %80 = arith.addf %79, %12 : vector<8x128xf32>
    %81 = arith.mulf %67, %80 : vector<8x128xf32>
    %82 = arith.addf %78, %81 : vector<8x128xf32>
    %83 = math.tanh %82 : vector<8x128xf32>
    %cst_33 = arith.constant 1.000000e+00 : f32
    %84 = vector.broadcast %cst_33 : f32 to vector<8x128xf32>
    %85 = arith.subf %84, %77 : vector<8x128xf32>
    %86 = arith.mulf %85, %83 : vector<8x128xf32>
    %87 = arith.mulf %77, %13 : vector<8x128xf32>
    %88 = arith.addf %86, %87 : vector<8x128xf32>
    %89 = arith.index_cast %c0_i32 : i32 to index
    %c0_34 = arith.constant 0 : index
    %c0_35 = arith.constant 0 : index
    %90 = vector.load %arg7[%89, %c0_34, %c0_35] : memref<8x8x256xf32, #tpu.memory_space<vmem>>, vector<1x8x128xf32>
    %91 = vector.shape_cast %90 : vector<1x8x128xf32> to vector<8x128xf32>
    %92 = vector.shape_cast %53 : vector<8x128xf32> to vector<1x8x128xf32>
    tpu.vector_store %arg7[%89, %c0_34, %c0_35], %92 {strides = array<i32>} : memref<8x8x256xf32, #tpu.memory_space<vmem>>, vector<1x8x128xf32>,
    %93 = arith.index_cast %14 : i32 to index
    %c0_36 = arith.constant 0 : index
    %c128 = arith.constant 128 : index
    %94 = vector.load %arg7[%93, %c0_36, %c128] : memref<8x8x256xf32, #tpu.memory_space<vmem>>, vector<1x8x128xf32>
    %95 = vector.shape_cast %94 : vector<1x8x128xf32> to vector<8x128xf32>
    %96 = vector.shape_cast %88 : vector<8x128xf32> to vector<1x8x128xf32>
    tpu.vector_store %arg7[%93, %c0_36, %c128], %96 {strides = array<i32>} : memref<8x8x256xf32, #tpu.memory_space<vmem>>, vector<1x8x128xf32>,
    %c1_i32 = arith.constant 1 : i32
    %c7_i32_37 = arith.constant 7 : i32
    %97 = arith.subi %c7_i32_37, %c1_i32 : i32
    %c8_i32_38 = arith.constant 8 : i32
    %98 = arith.muli %c1_i32, %c8_i32_38 : i32
    %99 = tpu.assume_multiple %98, 8 : i32
    %c8_i32_39 = arith.constant 8 : i32
    %100 = arith.muli %97, %c8_i32_39 : i32
    %101 = tpu.assume_multiple %100, 8 : i32
    %102 = arith.index_cast %99 : i32 to index
    %c0_40 = arith.constant 0 : index
    %103 = vector.load %arg8[%102, %c0_40] : memref<64x768xf32, #tpu.memory_space<vmem>>, vector<8x384xf32>
    %c0_41 = arith.constant 0 : index
    %c0_42 = arith.constant 0 : index
    %104 = vector.load %arg3[%c0_41, %c0_42] : memref<128x384xf32, #tpu.memory_space<vmem>>, vector<128x384xf32>
    %cst_43 = arith.constant dense<0.000000e+00> : vector<8x384xf32>
    %105 = tpu.matmul %53, %104, %cst_43 {dimension_numbers = #tpu.dot_dimension_numbers<[1], [0], [0], [1], [0, 0, 1, 1], [], []>} : vector<8x128xf32>, vector<128x384xf32>, vector<8x384xf32> -> vector<8x384xf32>
    %106 = vector.extract_strided_slice %103 {offsets = [0, 0], sizes = [8, 128], strides = [1, 1]} : vector<8x384xf32> to vector<8x128xf32>
    %107 = vector.extract_strided_slice %105 {offsets = [0, 0], sizes = [8, 128], strides = [1, 1]} : vector<8x384xf32> to vector<8x128xf32>
    %108 = arith.addf %106, %107 : vector<8x128xf32>
    %cst_44 = arith.constant 0.000000e+00 : f32
    %109 = vector.broadcast %cst_44 : f32 to vector<8x128xf32>
    %110 = arith.subf %109, %108 : vector<8x128xf32>
    %111 = math.exp %110 : vector<8x128xf32>
    %cst_45 = arith.constant 1.000000e+00 : f32
    %112 = vector.broadcast %cst_45 : f32 to vector<8x128xf32>
    %113 = arith.addf %112, %111 : vector<8x128xf32>
    %cst_46 = arith.constant 1.000000e+00 : f32
    %114 = vector.broadcast %cst_46 : f32 to vector<8x128xf32>
    %115 = arith.divf %114, %113 : vector<8x128xf32>
    %116 = vector.extract_strided_slice %103 {offsets = [0, 128], sizes = [8, 128], strides = [1, 1]} : vector<8x384xf32> to vector<8x128xf32>
    %117 = vector.extract_strided_slice %105 {offsets = [0, 128], sizes = [8, 128], strides = [1, 1]} : vector<8x384xf32> to vector<8x128xf32>
    %118 = arith.addf %116, %117 : vector<8x128xf32>
    %cst_47 = arith.constant 0.000000e+00 : f32
    %119 = vector.broadcast %cst_47 : f32 to vector<8x128xf32>
    %120 = arith.subf %119, %118 : vector<8x128xf32>
    %121 = math.exp %120 : vector<8x128xf32>
    %cst_48 = arith.constant 1.000000e+00 : f32
    %122 = vector.broadcast %cst_48 : f32 to vector<8x128xf32>
    %123 = arith.addf %122, %121 : vector<8x128xf32>
    %cst_49 = arith.constant 1.000000e+00 : f32
    %124 = vector.broadcast %cst_49 : f32 to vector<8x128xf32>
    %125 = arith.divf %124, %123 : vector<8x128xf32>
    %126 = vector.extract_strided_slice %103 {offsets = [0, 256], sizes = [8, 128], strides = [1, 1]} : vector<8x384xf32> to vector<8x128xf32>
    %127 = vector.extract_strided_slice %105 {offsets = [0, 256], sizes = [8, 128], strides = [1, 1]} : vector<8x384xf32> to vector<8x128xf32>
    %128 = arith.addf %127, %9 : vector<8x128xf32>
    %129 = arith.mulf %115, %128 : vector<8x128xf32>
    %130 = arith.addf %126, %129 : vector<8x128xf32>
    %131 = math.tanh %130 : vector<8x128xf32>
    %cst_50 = arith.constant 1.000000e+00 : f32
    %132 = vector.broadcast %cst_50 : f32 to vector<8x128xf32>
    %133 = arith.subf %132, %125 : vector<8x128xf32>
    %134 = arith.mulf %133, %131 : vector<8x128xf32>
    %135 = arith.mulf %125, %53 : vector<8x128xf32>
    %136 = arith.addf %134, %135 : vector<8x128xf32>
    %137 = arith.index_cast %101 : i32 to index
    %c384_51 = arith.constant 384 : index
    %138 = vector.load %arg8[%137, %c384_51] : memref<64x768xf32, #tpu.memory_space<vmem>>, vector<8x384xf32>
    %c0_52 = arith.constant 0 : index
    %c0_53 = arith.constant 0 : index
    %139 = vector.load %arg4[%c0_52, %c0_53] : memref<128x384xf32, #tpu.memory_space<vmem>>, vector<128x384xf32>
    %cst_54 = arith.constant dense<0.000000e+00> : vector<8x384xf32>
    %140 = tpu.matmul %88, %139, %cst_54 {dimension_numbers = #tpu.dot_dimension_numbers<[1], [0], [0], [1], [0, 0, 1, 1], [], []>} : vector<8x128xf32>, vector<128x384xf32>, vector<8x384xf32> -> vector<8x384xf32>
    %141 = vector.extract_strided_slice %138 {offsets = [0, 0], sizes = [8, 128], strides = [1, 1]} : vector<8x384xf32> to vector<8x128xf32>
    %142 = vector.extract_strided_slice %140 {offsets = [0, 0], sizes = [8, 128], strides = [1, 1]} : vector<8x384xf32> to vector<8x128xf32>
    %143 = arith.addf %141, %142 : vector<8x128xf32>
    %cst_55 = arith.constant 0.000000e+00 : f32
    %144 = vector.broadcast %cst_55 : f32 to vector<8x128xf32>
    %145 = arith.subf %144, %143 : vector<8x128xf32>
    %146 = math.exp %145 : vector<8x128xf32>
    %cst_56 = arith.constant 1.000000e+00 : f32
    %147 = vector.broadcast %cst_56 : f32 to vector<8x128xf32>
    %148 = arith.addf %147, %146 : vector<8x128xf32>
    %cst_57 = arith.constant 1.000000e+00 : f32
    %149 = vector.broadcast %cst_57 : f32 to vector<8x128xf32>
    %150 = arith.divf %149, %148 : vector<8x128xf32>
    %151 = vector.extract_strided_slice %138 {offsets = [0, 128], sizes = [8, 128], strides = [1, 1]} : vector<8x384xf32> to vector<8x128xf32>
    %152 = vector.extract_strided_slice %140 {offsets = [0, 128], sizes = [8, 128], strides = [1, 1]} : vector<8x384xf32> to vector<8x128xf32>
    %153 = arith.addf %151, %152 : vector<8x128xf32>
    %cst_58 = arith.constant 0.000000e+00 : f32
    %154 = vector.broadcast %cst_58 : f32 to vector<8x128xf32>
    %155 = arith.subf %154, %153 : vector<8x128xf32>
    %156 = math.exp %155 : vector<8x128xf32>
    %cst_59 = arith.constant 1.000000e+00 : f32
    %157 = vector.broadcast %cst_59 : f32 to vector<8x128xf32>
    %158 = arith.addf %157, %156 : vector<8x128xf32>
    %cst_60 = arith.constant 1.000000e+00 : f32
    %159 = vector.broadcast %cst_60 : f32 to vector<8x128xf32>
    %160 = arith.divf %159, %158 : vector<8x128xf32>
    %161 = vector.extract_strided_slice %138 {offsets = [0, 256], sizes = [8, 128], strides = [1, 1]} : vector<8x384xf32> to vector<8x128xf32>
    %162 = vector.extract_strided_slice %140 {offsets = [0, 256], sizes = [8, 128], strides = [1, 1]} : vector<8x384xf32> to vector<8x128xf32>
    %163 = arith.addf %162, %12 : vector<8x128xf32>
    %164 = arith.mulf %150, %163 : vector<8x128xf32>
    %165 = arith.addf %161, %164 : vector<8x128xf32>
    %166 = math.tanh %165 : vector<8x128xf32>
    %cst_61 = arith.constant 1.000000e+00 : f32
    %167 = vector.broadcast %cst_61 : f32 to vector<8x128xf32>
    %168 = arith.subf %167, %160 : vector<8x128xf32>
    %169 = arith.mulf %168, %166 : vector<8x128xf32>
    %170 = arith.mulf %160, %88 : vector<8x128xf32>
    %171 = arith.addf %169, %170 : vector<8x128xf32>
    %172 = arith.index_cast %c1_i32 : i32 to index
    %c0_62 = arith.constant 0 : index
    %c0_63 = arith.constant 0 : index
    %173 = vector.load %arg7[%172, %c0_62, %c0_63] : memref<8x8x256xf32, #tpu.memory_space<vmem>>, vector<1x8x128xf32>
    %174 = vector.shape_cast %173 : vector<1x8x128xf32> to vector<8x128xf32>
    %175 = vector.shape_cast %136 : vector<8x128xf32> to vector<1x8x128xf32>
    tpu.vector_store %arg7[%172, %c0_62, %c0_63], %175 {strides = array<i32>} : memref<8x8x256xf32, #tpu.memory_space<vmem>>, vector<1x8x128xf32>,
    %176 = arith.index_cast %97 : i32 to index
    %c0_64 = arith.constant 0 : index
    %c128_65 = arith.constant 128 : index
    %177 = vector.load %arg7[%176, %c0_64, %c128_65] : memref<8x8x256xf32, #tpu.memory_space<vmem>>, vector<1x8x128xf32>
    %178 = vector.shape_cast %177 : vector<1x8x128xf32> to vector<8x128xf32>
    %179 = vector.shape_cast %171 : vector<8x128xf32> to vector<1x8x128xf32>
    tpu.vector_store %arg7[%176, %c0_64, %c128_65], %179 {strides = array<i32>} : memref<8x8x256xf32, #tpu.memory_space<vmem>>, vector<1x8x128xf32>,
    %c2_i32 = arith.constant 2 : i32
    %c7_i32_66 = arith.constant 7 : i32
    %180 = arith.subi %c7_i32_66, %c2_i32 : i32
    %c8_i32_67 = arith.constant 8 : i32
    %181 = arith.muli %c2_i32, %c8_i32_67 : i32
    %182 = tpu.assume_multiple %181, 8 : i32
    %c8_i32_68 = arith.constant 8 : i32
    %183 = arith.muli %180, %c8_i32_68 : i32
    %184 = tpu.assume_multiple %183, 8 : i32
    %185 = arith.index_cast %182 : i32 to index
    %c0_69 = arith.constant 0 : index
    %186 = vector.load %arg8[%185, %c0_69] : memref<64x768xf32, #tpu.memory_space<vmem>>, vector<8x384xf32>
    %c0_70 = arith.constant 0 : index
    %c0_71 = arith.constant 0 : index
    %187 = vector.load %arg3[%c0_70, %c0_71] : memref<128x384xf32, #tpu.memory_space<vmem>>, vector<128x384xf32>
    %cst_72 = arith.constant dense<0.000000e+00> : vector<8x384xf32>
    %188 = tpu.matmul %136, %187, %cst_72 {dimension_numbers = #tpu.dot_dimension_numbers<[1], [0], [0], [1], [0, 0, 1, 1], [], []>} : vector<8x128xf32>, vector<128x384xf32>, vector<8x384xf32> -> vector<8x384xf32>
    %189 = vector.extract_strided_slice %186 {offsets = [0, 0], sizes = [8, 128], strides = [1, 1]} : vector<8x384xf32> to vector<8x128xf32>
    %190 = vector.extract_strided_slice %188 {offsets = [0, 0], sizes = [8, 128], strides = [1, 1]} : vector<8x384xf32> to vector<8x128xf32>
    %191 = arith.addf %189, %190 : vector<8x128xf32>
    %cst_73 = arith.constant 0.000000e+00 : f32
    %192 = vector.broadcast %cst_73 : f32 to vector<8x128xf32>
    %193 = arith.subf %192, %191 : vector<8x128xf32>
    %194 = math.exp %193 : vector<8x128xf32>
    %cst_74 = arith.constant 1.000000e+00 : f32
    %195 = vector.broadcast %cst_74 : f32 to vector<8x128xf32>
    %196 = arith.addf %195, %194 : vector<8x128xf32>
    %cst_75 = arith.constant 1.000000e+00 : f32
    %197 = vector.broadcast %cst_75 : f32 to vector<8x128xf32>
    %198 = arith.divf %197, %196 : vector<8x128xf32>
    %199 = vector.extract_strided_slice %186 {offsets = [0, 128], sizes = [8, 128], strides = [1, 1]} : vector<8x384xf32> to vector<8x128xf32>
    %200 = vector.extract_strided_slice %188 {offsets = [0, 128], sizes = [8, 128], strides = [1, 1]} : vector<8x384xf32> to vector<8x128xf32>
    %201 = arith.addf %199, %200 : vector<8x128xf32>
    %cst_76 = arith.constant 0.000000e+00 : f32
    %202 = vector.broadcast %cst_76 : f32 to vector<8x128xf32>
    %203 = arith.subf %202, %201 : vector<8x128xf32>
    %204 = math.exp %203 : vector<8x128xf32>
    %cst_77 = arith.constant 1.000000e+00 : f32
    %205 = vector.broadcast %cst_77 : f32 to vector<8x128xf32>
    %206 = arith.addf %205, %204 : vector<8x128xf32>
    %cst_78 = arith.constant 1.000000e+00 : f32
    %207 = vector.broadcast %cst_78 : f32 to vector<8x128xf32>
    %208 = arith.divf %207, %206 : vector<8x128xf32>
    %209 = vector.extract_strided_slice %186 {offsets = [0, 256], sizes = [8, 128], strides = [1, 1]} : vector<8x384xf32> to vector<8x128xf32>
    %210 = vector.extract_strided_slice %188 {offsets = [0, 256], sizes = [8, 128], strides = [1, 1]} : vector<8x384xf32> to vector<8x128xf32>
    %211 = arith.addf %210, %9 : vector<8x128xf32>
    %212 = arith.mulf %198, %211 : vector<8x128xf32>
    %213 = arith.addf %209, %212 : vector<8x128xf32>
    %214 = math.tanh %213 : vector<8x128xf32>
    %cst_79 = arith.constant 1.000000e+00 : f32
    %215 = vector.broadcast %cst_79 : f32 to vector<8x128xf32>
    %216 = arith.subf %215, %208 : vector<8x128xf32>
    %217 = arith.mulf %216, %214 : vector<8x128xf32>
    %218 = arith.mulf %208, %136 : vector<8x128xf32>
    %219 = arith.addf %217, %218 : vector<8x128xf32>
    %220 = arith.index_cast %184 : i32 to index
    %c384_80 = arith.constant 384 : index
    %221 = vector.load %arg8[%220, %c384_80] : memref<64x768xf32, #tpu.memory_space<vmem>>, vector<8x384xf32>
    %c0_81 = arith.constant 0 : index
    %c0_82 = arith.constant 0 : index
    %222 = vector.load %arg4[%c0_81, %c0_82] : memref<128x384xf32, #tpu.memory_space<vmem>>, vector<128x384xf32>
    %cst_83 = arith.constant dense<0.000000e+00> : vector<8x384xf32>
    %223 = tpu.matmul %171, %222, %cst_83 {dimension_numbers = #tpu.dot_dimension_numbers<[1], [0], [0], [1], [0, 0, 1, 1], [], []>} : vector<8x128xf32>, vector<128x384xf32>, vector<8x384xf32> -> vector<8x384xf32>
    %224 = vector.extract_strided_slice %221 {offsets = [0, 0], sizes = [8, 128], strides = [1, 1]} : vector<8x384xf32> to vector<8x128xf32>
    %225 = vector.extract_strided_slice %223 {offsets = [0, 0], sizes = [8, 128], strides = [1, 1]} : vector<8x384xf32> to vector<8x128xf32>
    %226 = arith.addf %224, %225 : vector<8x128xf32>
    %cst_84 = arith.constant 0.000000e+00 : f32
    %227 = vector.broadcast %cst_84 : f32 to vector<8x128xf32>
    %228 = arith.subf %227, %226 : vector<8x128xf32>
    %229 = math.exp %228 : vector<8x128xf32>
    %cst_85 = arith.constant 1.000000e+00 : f32
    %230 = vector.broadcast %cst_85 : f32 to vector<8x128xf32>
    %231 = arith.addf %230, %229 : vector<8x128xf32>
    %cst_86 = arith.constant 1.000000e+00 : f32
    %232 = vector.broadcast %cst_86 : f32 to vector<8x128xf32>
    %233 = arith.divf %232, %231 : vector<8x128xf32>
    %234 = vector.extract_strided_slice %221 {offsets = [0, 128], sizes = [8, 128], strides = [1, 1]} : vector<8x384xf32> to vector<8x128xf32>
    %235 = vector.extract_strided_slice %223 {offsets = [0, 128], sizes = [8, 128], strides = [1, 1]} : vector<8x384xf32> to vector<8x128xf32>
    %236 = arith.addf %234, %235 : vector<8x128xf32>
    %cst_87 = arith.constant 0.000000e+00 : f32
    %237 = vector.broadcast %cst_87 : f32 to vector<8x128xf32>
    %238 = arith.subf %237, %236 : vector<8x128xf32>
    %239 = math.exp %238 : vector<8x128xf32>
    %cst_88 = arith.constant 1.000000e+00 : f32
    %240 = vector.broadcast %cst_88 : f32 to vector<8x128xf32>
    %241 = arith.addf %240, %239 : vector<8x128xf32>
    %cst_89 = arith.constant 1.000000e+00 : f32
    %242 = vector.broadcast %cst_89 : f32 to vector<8x128xf32>
    %243 = arith.divf %242, %241 : vector<8x128xf32>
    %244 = vector.extract_strided_slice %221 {offsets = [0, 256], sizes = [8, 128], strides = [1, 1]} : vector<8x384xf32> to vector<8x128xf32>
    %245 = vector.extract_strided_slice %223 {offsets = [0, 256], sizes = [8, 128], strides = [1, 1]} : vector<8x384xf32> to vector<8x128xf32>
    %246 = arith.addf %245, %12 : vector<8x128xf32>
    %247 = arith.mulf %233, %246 : vector<8x128xf32>
    %248 = arith.addf %244, %247 : vector<8x128xf32>
    %249 = math.tanh %248 : vector<8x128xf32>
    %cst_90 = arith.constant 1.000000e+00 : f32
    %250 = vector.broadcast %cst_90 : f32 to vector<8x128xf32>
    %251 = arith.subf %250, %243 : vector<8x128xf32>
    %252 = arith.mulf %251, %249 : vector<8x128xf32>
    %253 = arith.mulf %243, %171 : vector<8x128xf32>
    %254 = arith.addf %252, %253 : vector<8x128xf32>
    %255 = arith.index_cast %c2_i32 : i32 to index
    %c0_91 = arith.constant 0 : index
    %c0_92 = arith.constant 0 : index
    %256 = vector.load %arg7[%255, %c0_91, %c0_92] : memref<8x8x256xf32, #tpu.memory_space<vmem>>, vector<1x8x128xf32>
    %257 = vector.shape_cast %256 : vector<1x8x128xf32> to vector<8x128xf32>
    %258 = vector.shape_cast %219 : vector<8x128xf32> to vector<1x8x128xf32>
    tpu.vector_store %arg7[%255, %c0_91, %c0_92], %258 {strides = array<i32>} : memref<8x8x256xf32, #tpu.memory_space<vmem>>, vector<1x8x128xf32>,
    %259 = arith.index_cast %180 : i32 to index
    %c0_93 = arith.constant 0 : index
    %c128_94 = arith.constant 128 : index
    %260 = vector.load %arg7[%259, %c0_93, %c128_94] : memref<8x8x256xf32, #tpu.memory_space<vmem>>, vector<1x8x128xf32>
    %261 = vector.shape_cast %260 : vector<1x8x128xf32> to vector<8x128xf32>
    %262 = vector.shape_cast %254 : vector<8x128xf32> to vector<1x8x128xf32>
    tpu.vector_store %arg7[%259, %c0_93, %c128_94], %262 {strides = array<i32>} : memref<8x8x256xf32, #tpu.memory_space<vmem>>, vector<1x8x128xf32>,
    %c3_i32 = arith.constant 3 : i32
    %c7_i32_95 = arith.constant 7 : i32
    %263 = arith.subi %c7_i32_95, %c3_i32 : i32
    %c8_i32_96 = arith.constant 8 : i32
    %264 = arith.muli %c3_i32, %c8_i32_96 : i32
    %265 = tpu.assume_multiple %264, 8 : i32
    %c8_i32_97 = arith.constant 8 : i32
    %266 = arith.muli %263, %c8_i32_97 : i32
    %267 = tpu.assume_multiple %266, 8 : i32
    %268 = arith.index_cast %265 : i32 to index
    %c0_98 = arith.constant 0 : index
    %269 = vector.load %arg8[%268, %c0_98] : memref<64x768xf32, #tpu.memory_space<vmem>>, vector<8x384xf32>
    %c0_99 = arith.constant 0 : index
    %c0_100 = arith.constant 0 : index
    %270 = vector.load %arg3[%c0_99, %c0_100] : memref<128x384xf32, #tpu.memory_space<vmem>>, vector<128x384xf32>
    %cst_101 = arith.constant dense<0.000000e+00> : vector<8x384xf32>
    %271 = tpu.matmul %219, %270, %cst_101 {dimension_numbers = #tpu.dot_dimension_numbers<[1], [0], [0], [1], [0, 0, 1, 1], [], []>} : vector<8x128xf32>, vector<128x384xf32>, vector<8x384xf32> -> vector<8x384xf32>
    %272 = vector.extract_strided_slice %269 {offsets = [0, 0], sizes = [8, 128], strides = [1, 1]} : vector<8x384xf32> to vector<8x128xf32>
    %273 = vector.extract_strided_slice %271 {offsets = [0, 0], sizes = [8, 128], strides = [1, 1]} : vector<8x384xf32> to vector<8x128xf32>
    %274 = arith.addf %272, %273 : vector<8x128xf32>
    %cst_102 = arith.constant 0.000000e+00 : f32
    %275 = vector.broadcast %cst_102 : f32 to vector<8x128xf32>
    %276 = arith.subf %275, %274 : vector<8x128xf32>
    %277 = math.exp %276 : vector<8x128xf32>
    %cst_103 = arith.constant 1.000000e+00 : f32
    %278 = vector.broadcast %cst_103 : f32 to vector<8x128xf32>
    %279 = arith.addf %278, %277 : vector<8x128xf32>
    %cst_104 = arith.constant 1.000000e+00 : f32
    %280 = vector.broadcast %cst_104 : f32 to vector<8x128xf32>
    %281 = arith.divf %280, %279 : vector<8x128xf32>
    %282 = vector.extract_strided_slice %269 {offsets = [0, 128], sizes = [8, 128], strides = [1, 1]} : vector<8x384xf32> to vector<8x128xf32>
    %283 = vector.extract_strided_slice %271 {offsets = [0, 128], sizes = [8, 128], strides = [1, 1]} : vector<8x384xf32> to vector<8x128xf32>
    %284 = arith.addf %282, %283 : vector<8x128xf32>
    %cst_105 = arith.constant 0.000000e+00 : f32
    %285 = vector.broadcast %cst_105 : f32 to vector<8x128xf32>
    %286 = arith.subf %285, %284 : vector<8x128xf32>
    %287 = math.exp %286 : vector<8x128xf32>
    %cst_106 = arith.constant 1.000000e+00 : f32
    %288 = vector.broadcast %cst_106 : f32 to vector<8x128xf32>
    %289 = arith.addf %288, %287 : vector<8x128xf32>
    %cst_107 = arith.constant 1.000000e+00 : f32
    %290 = vector.broadcast %cst_107 : f32 to vector<8x128xf32>
    %291 = arith.divf %290, %289 : vector<8x128xf32>
    %292 = vector.extract_strided_slice %269 {offsets = [0, 256], sizes = [8, 128], strides = [1, 1]} : vector<8x384xf32> to vector<8x128xf32>
    %293 = vector.extract_strided_slice %271 {offsets = [0, 256], sizes = [8, 128], strides = [1, 1]} : vector<8x384xf32> to vector<8x128xf32>
    %294 = arith.addf %293, %9 : vector<8x128xf32>
    %295 = arith.mulf %281, %294 : vector<8x128xf32>
    %296 = arith.addf %292, %295 : vector<8x128xf32>
    %297 = math.tanh %296 : vector<8x128xf32>
    %cst_108 = arith.constant 1.000000e+00 : f32
    %298 = vector.broadcast %cst_108 : f32 to vector<8x128xf32>
    %299 = arith.subf %298, %291 : vector<8x128xf32>
    %300 = arith.mulf %299, %297 : vector<8x128xf32>
    %301 = arith.mulf %291, %219 : vector<8x128xf32>
    %302 = arith.addf %300, %301 : vector<8x128xf32>
    %303 = arith.index_cast %267 : i32 to index
    %c384_109 = arith.constant 384 : index
    %304 = vector.load %arg8[%303, %c384_109] : memref<64x768xf32, #tpu.memory_space<vmem>>, vector<8x384xf32>
    %c0_110 = arith.constant 0 : index
    %c0_111 = arith.constant 0 : index
    %305 = vector.load %arg4[%c0_110, %c0_111] : memref<128x384xf32, #tpu.memory_space<vmem>>, vector<128x384xf32>
    %cst_112 = arith.constant dense<0.000000e+00> : vector<8x384xf32>
    %306 = tpu.matmul %254, %305, %cst_112 {dimension_numbers = #tpu.dot_dimension_numbers<[1], [0], [0], [1], [0, 0, 1, 1], [], []>} : vector<8x128xf32>, vector<128x384xf32>, vector<8x384xf32> -> vector<8x384xf32>
    %307 = vector.extract_strided_slice %304 {offsets = [0, 0], sizes = [8, 128], strides = [1, 1]} : vector<8x384xf32> to vector<8x128xf32>
    %308 = vector.extract_strided_slice %306 {offsets = [0, 0], sizes = [8, 128], strides = [1, 1]} : vector<8x384xf32> to vector<8x128xf32>
    %309 = arith.addf %307, %308 : vector<8x128xf32>
    %cst_113 = arith.constant 0.000000e+00 : f32
    %310 = vector.broadcast %cst_113 : f32 to vector<8x128xf32>
    %311 = arith.subf %310, %309 : vector<8x128xf32>
    %312 = math.exp %311 : vector<8x128xf32>
    %cst_114 = arith.constant 1.000000e+00 : f32
    %313 = vector.broadcast %cst_114 : f32 to vector<8x128xf32>
    %314 = arith.addf %313, %312 : vector<8x128xf32>
    %cst_115 = arith.constant 1.000000e+00 : f32
    %315 = vector.broadcast %cst_115 : f32 to vector<8x128xf32>
    %316 = arith.divf %315, %314 : vector<8x128xf32>
    %317 = vector.extract_strided_slice %304 {offsets = [0, 128], sizes = [8, 128], strides = [1, 1]} : vector<8x384xf32> to vector<8x128xf32>
    %318 = vector.extract_strided_slice %306 {offsets = [0, 128], sizes = [8, 128], strides = [1, 1]} : vector<8x384xf32> to vector<8x128xf32>
    %319 = arith.addf %317, %318 : vector<8x128xf32>
    %cst_116 = arith.constant 0.000000e+00 : f32
    %320 = vector.broadcast %cst_116 : f32 to vector<8x128xf32>
    %321 = arith.subf %320, %319 : vector<8x128xf32>
    %322 = math.exp %321 : vector<8x128xf32>
    %cst_117 = arith.constant 1.000000e+00 : f32
    %323 = vector.broadcast %cst_117 : f32 to vector<8x128xf32>
    %324 = arith.addf %323, %322 : vector<8x128xf32>
    %cst_118 = arith.constant 1.000000e+00 : f32
    %325 = vector.broadcast %cst_118 : f32 to vector<8x128xf32>
    %326 = arith.divf %325, %324 : vector<8x128xf32>
    %327 = vector.extract_strided_slice %304 {offsets = [0, 256], sizes = [8, 128], strides = [1, 1]} : vector<8x384xf32> to vector<8x128xf32>
    %328 = vector.extract_strided_slice %306 {offsets = [0, 256], sizes = [8, 128], strides = [1, 1]} : vector<8x384xf32> to vector<8x128xf32>
    %329 = arith.addf %328, %12 : vector<8x128xf32>
    %330 = arith.mulf %316, %329 : vector<8x128xf32>
    %331 = arith.addf %327, %330 : vector<8x128xf32>
    %332 = math.tanh %331 : vector<8x128xf32>
    %cst_119 = arith.constant 1.000000e+00 : f32
    %333 = vector.broadcast %cst_119 : f32 to vector<8x128xf32>
    %334 = arith.subf %333, %326 : vector<8x128xf32>
    %335 = arith.mulf %334, %332 : vector<8x128xf32>
    %336 = arith.mulf %326, %254 : vector<8x128xf32>
    %337 = arith.addf %335, %336 : vector<8x128xf32>
    %338 = arith.index_cast %c3_i32 : i32 to index
    %c0_120 = arith.constant 0 : index
    %c0_121 = arith.constant 0 : index
    %339 = vector.load %arg7[%338, %c0_120, %c0_121] : memref<8x8x256xf32, #tpu.memory_space<vmem>>, vector<1x8x128xf32>
    %340 = vector.shape_cast %339 : vector<1x8x128xf32> to vector<8x128xf32>
    %341 = vector.shape_cast %302 : vector<8x128xf32> to vector<1x8x128xf32>
    tpu.vector_store %arg7[%338, %c0_120, %c0_121], %341 {strides = array<i32>} : memref<8x8x256xf32, #tpu.memory_space<vmem>>, vector<1x8x128xf32>,
    %342 = arith.index_cast %263 : i32 to index
    %c0_122 = arith.constant 0 : index
    %c128_123 = arith.constant 128 : index
    %343 = vector.load %arg7[%342, %c0_122, %c128_123] : memref<8x8x256xf32, #tpu.memory_space<vmem>>, vector<1x8x128xf32>
    %344 = vector.shape_cast %343 : vector<1x8x128xf32> to vector<8x128xf32>
    %345 = vector.shape_cast %337 : vector<8x128xf32> to vector<1x8x128xf32>
    tpu.vector_store %arg7[%342, %c0_122, %c128_123], %345 {strides = array<i32>} : memref<8x8x256xf32, #tpu.memory_space<vmem>>, vector<1x8x128xf32>,
    %c4_i32 = arith.constant 4 : i32
    %c7_i32_124 = arith.constant 7 : i32
    %346 = arith.subi %c7_i32_124, %c4_i32 : i32
    %c8_i32_125 = arith.constant 8 : i32
    %347 = arith.muli %c4_i32, %c8_i32_125 : i32
    %348 = tpu.assume_multiple %347, 8 : i32
    %c8_i32_126 = arith.constant 8 : i32
    %349 = arith.muli %346, %c8_i32_126 : i32
    %350 = tpu.assume_multiple %349, 8 : i32
    %351 = arith.index_cast %348 : i32 to index
    %c0_127 = arith.constant 0 : index
    %352 = vector.load %arg8[%351, %c0_127] : memref<64x768xf32, #tpu.memory_space<vmem>>, vector<8x384xf32>
    %c0_128 = arith.constant 0 : index
    %c0_129 = arith.constant 0 : index
    %353 = vector.load %arg3[%c0_128, %c0_129] : memref<128x384xf32, #tpu.memory_space<vmem>>, vector<128x384xf32>
    %cst_130 = arith.constant dense<0.000000e+00> : vector<8x384xf32>
    %354 = tpu.matmul %302, %353, %cst_130 {dimension_numbers = #tpu.dot_dimension_numbers<[1], [0], [0], [1], [0, 0, 1, 1], [], []>} : vector<8x128xf32>, vector<128x384xf32>, vector<8x384xf32> -> vector<8x384xf32>
    %355 = vector.extract_strided_slice %352 {offsets = [0, 0], sizes = [8, 128], strides = [1, 1]} : vector<8x384xf32> to vector<8x128xf32>
    %356 = vector.extract_strided_slice %354 {offsets = [0, 0], sizes = [8, 128], strides = [1, 1]} : vector<8x384xf32> to vector<8x128xf32>
    %357 = arith.addf %355, %356 : vector<8x128xf32>
    %cst_131 = arith.constant 0.000000e+00 : f32
    %358 = vector.broadcast %cst_131 : f32 to vector<8x128xf32>
    %359 = arith.subf %358, %357 : vector<8x128xf32>
    %360 = math.exp %359 : vector<8x128xf32>
    %cst_132 = arith.constant 1.000000e+00 : f32
    %361 = vector.broadcast %cst_132 : f32 to vector<8x128xf32>
    %362 = arith.addf %361, %360 : vector<8x128xf32>
    %cst_133 = arith.constant 1.000000e+00 : f32
    %363 = vector.broadcast %cst_133 : f32 to vector<8x128xf32>
    %364 = arith.divf %363, %362 : vector<8x128xf32>
    %365 = vector.extract_strided_slice %352 {offsets = [0, 128], sizes = [8, 128], strides = [1, 1]} : vector<8x384xf32> to vector<8x128xf32>
    %366 = vector.extract_strided_slice %354 {offsets = [0, 128], sizes = [8, 128], strides = [1, 1]} : vector<8x384xf32> to vector<8x128xf32>
    %367 = arith.addf %365, %366 : vector<8x128xf32>
    %cst_134 = arith.constant 0.000000e+00 : f32
    %368 = vector.broadcast %cst_134 : f32 to vector<8x128xf32>
    %369 = arith.subf %368, %367 : vector<8x128xf32>
    %370 = math.exp %369 : vector<8x128xf32>
    %cst_135 = arith.constant 1.000000e+00 : f32
    %371 = vector.broadcast %cst_135 : f32 to vector<8x128xf32>
    %372 = arith.addf %371, %370 : vector<8x128xf32>
    %cst_136 = arith.constant 1.000000e+00 : f32
    %373 = vector.broadcast %cst_136 : f32 to vector<8x128xf32>
    %374 = arith.divf %373, %372 : vector<8x128xf32>
    %375 = vector.extract_strided_slice %352 {offsets = [0, 256], sizes = [8, 128], strides = [1, 1]} : vector<8x384xf32> to vector<8x128xf32>
    %376 = vector.extract_strided_slice %354 {offsets = [0, 256], sizes = [8, 128], strides = [1, 1]} : vector<8x384xf32> to vector<8x128xf32>
    %377 = arith.addf %376, %9 : vector<8x128xf32>
    %378 = arith.mulf %364, %377 : vector<8x128xf32>
    %379 = arith.addf %375, %378 : vector<8x128xf32>
    %380 = math.tanh %379 : vector<8x128xf32>
    %cst_137 = arith.constant 1.000000e+00 : f32
    %381 = vector.broadcast %cst_137 : f32 to vector<8x128xf32>
    %382 = arith.subf %381, %374 : vector<8x128xf32>
    %383 = arith.mulf %382, %380 : vector<8x128xf32>
    %384 = arith.mulf %374, %302 : vector<8x128xf32>
    %385 = arith.addf %383, %384 : vector<8x128xf32>
    %386 = arith.index_cast %350 : i32 to index
    %c384_138 = arith.constant 384 : index
    %387 = vector.load %arg8[%386, %c384_138] : memref<64x768xf32, #tpu.memory_space<vmem>>, vector<8x384xf32>
    %c0_139 = arith.constant 0 : index
    %c0_140 = arith.constant 0 : index
    %388 = vector.load %arg4[%c0_139, %c0_140] : memref<128x384xf32, #tpu.memory_space<vmem>>, vector<128x384xf32>
    %cst_141 = arith.constant dense<0.000000e+00> : vector<8x384xf32>
    %389 = tpu.matmul %337, %388, %cst_141 {dimension_numbers = #tpu.dot_dimension_numbers<[1], [0], [0], [1], [0, 0, 1, 1], [], []>} : vector<8x128xf32>, vector<128x384xf32>, vector<8x384xf32> -> vector<8x384xf32>
    %390 = vector.extract_strided_slice %387 {offsets = [0, 0], sizes = [8, 128], strides = [1, 1]} : vector<8x384xf32> to vector<8x128xf32>
    %391 = vector.extract_strided_slice %389 {offsets = [0, 0], sizes = [8, 128], strides = [1, 1]} : vector<8x384xf32> to vector<8x128xf32>
    %392 = arith.addf %390, %391 : vector<8x128xf32>
    %cst_142 = arith.constant 0.000000e+00 : f32
    %393 = vector.broadcast %cst_142 : f32 to vector<8x128xf32>
    %394 = arith.subf %393, %392 : vector<8x128xf32>
    %395 = math.exp %394 : vector<8x128xf32>
    %cst_143 = arith.constant 1.000000e+00 : f32
    %396 = vector.broadcast %cst_143 : f32 to vector<8x128xf32>
    %397 = arith.addf %396, %395 : vector<8x128xf32>
    %cst_144 = arith.constant 1.000000e+00 : f32
    %398 = vector.broadcast %cst_144 : f32 to vector<8x128xf32>
    %399 = arith.divf %398, %397 : vector<8x128xf32>
    %400 = vector.extract_strided_slice %387 {offsets = [0, 128], sizes = [8, 128], strides = [1, 1]} : vector<8x384xf32> to vector<8x128xf32>
    %401 = vector.extract_strided_slice %389 {offsets = [0, 128], sizes = [8, 128], strides = [1, 1]} : vector<8x384xf32> to vector<8x128xf32>
    %402 = arith.addf %400, %401 : vector<8x128xf32>
    %cst_145 = arith.constant 0.000000e+00 : f32
    %403 = vector.broadcast %cst_145 : f32 to vector<8x128xf32>
    %404 = arith.subf %403, %402 : vector<8x128xf32>
    %405 = math.exp %404 : vector<8x128xf32>
    %cst_146 = arith.constant 1.000000e+00 : f32
    %406 = vector.broadcast %cst_146 : f32 to vector<8x128xf32>
    %407 = arith.addf %406, %405 : vector<8x128xf32>
    %cst_147 = arith.constant 1.000000e+00 : f32
    %408 = vector.broadcast %cst_147 : f32 to vector<8x128xf32>
    %409 = arith.divf %408, %407 : vector<8x128xf32>
    %410 = vector.extract_strided_slice %387 {offsets = [0, 256], sizes = [8, 128], strides = [1, 1]} : vector<8x384xf32> to vector<8x128xf32>
    %411 = vector.extract_strided_slice %389 {offsets = [0, 256], sizes = [8, 128], strides = [1, 1]} : vector<8x384xf32> to vector<8x128xf32>
    %412 = arith.addf %411, %12 : vector<8x128xf32>
    %413 = arith.mulf %399, %412 : vector<8x128xf32>
    %414 = arith.addf %410, %413 : vector<8x128xf32>
    %415 = math.tanh %414 : vector<8x128xf32>
    %cst_148 = arith.constant 1.000000e+00 : f32
    %416 = vector.broadcast %cst_148 : f32 to vector<8x128xf32>
    %417 = arith.subf %416, %409 : vector<8x128xf32>
    %418 = arith.mulf %417, %415 : vector<8x128xf32>
    %419 = arith.mulf %409, %337 : vector<8x128xf32>
    %420 = arith.addf %418, %419 : vector<8x128xf32>
    %421 = arith.index_cast %c4_i32 : i32 to index
    %c0_149 = arith.constant 0 : index
    %c0_150 = arith.constant 0 : index
    %422 = vector.load %arg7[%421, %c0_149, %c0_150] : memref<8x8x256xf32, #tpu.memory_space<vmem>>, vector<1x8x128xf32>
    %423 = vector.shape_cast %422 : vector<1x8x128xf32> to vector<8x128xf32>
    %424 = vector.shape_cast %385 : vector<8x128xf32> to vector<1x8x128xf32>
    tpu.vector_store %arg7[%421, %c0_149, %c0_150], %424 {strides = array<i32>} : memref<8x8x256xf32, #tpu.memory_space<vmem>>, vector<1x8x128xf32>,
    %425 = arith.index_cast %346 : i32 to index
    %c0_151 = arith.constant 0 : index
    %c128_152 = arith.constant 128 : index
    %426 = vector.load %arg7[%425, %c0_151, %c128_152] : memref<8x8x256xf32, #tpu.memory_space<vmem>>, vector<1x8x128xf32>
    %427 = vector.shape_cast %426 : vector<1x8x128xf32> to vector<8x128xf32>
    %428 = vector.shape_cast %420 : vector<8x128xf32> to vector<1x8x128xf32>
    tpu.vector_store %arg7[%425, %c0_151, %c128_152], %428 {strides = array<i32>} : memref<8x8x256xf32, #tpu.memory_space<vmem>>, vector<1x8x128xf32>,
    %c5_i32 = arith.constant 5 : i32
    %c7_i32_153 = arith.constant 7 : i32
    %429 = arith.subi %c7_i32_153, %c5_i32 : i32
    %c8_i32_154 = arith.constant 8 : i32
    %430 = arith.muli %c5_i32, %c8_i32_154 : i32
    %431 = tpu.assume_multiple %430, 8 : i32
    %c8_i32_155 = arith.constant 8 : i32
    %432 = arith.muli %429, %c8_i32_155 : i32
    %433 = tpu.assume_multiple %432, 8 : i32
    %434 = arith.index_cast %431 : i32 to index
    %c0_156 = arith.constant 0 : index
    %435 = vector.load %arg8[%434, %c0_156] : memref<64x768xf32, #tpu.memory_space<vmem>>, vector<8x384xf32>
    %c0_157 = arith.constant 0 : index
    %c0_158 = arith.constant 0 : index
    %436 = vector.load %arg3[%c0_157, %c0_158] : memref<128x384xf32, #tpu.memory_space<vmem>>, vector<128x384xf32>
    %cst_159 = arith.constant dense<0.000000e+00> : vector<8x384xf32>
    %437 = tpu.matmul %385, %436, %cst_159 {dimension_numbers = #tpu.dot_dimension_numbers<[1], [0], [0], [1], [0, 0, 1, 1], [], []>} : vector<8x128xf32>, vector<128x384xf32>, vector<8x384xf32> -> vector<8x384xf32>
    %438 = vector.extract_strided_slice %435 {offsets = [0, 0], sizes = [8, 128], strides = [1, 1]} : vector<8x384xf32> to vector<8x128xf32>
    %439 = vector.extract_strided_slice %437 {offsets = [0, 0], sizes = [8, 128], strides = [1, 1]} : vector<8x384xf32> to vector<8x128xf32>
    %440 = arith.addf %438, %439 : vector<8x128xf32>
    %cst_160 = arith.constant 0.000000e+00 : f32
    %441 = vector.broadcast %cst_160 : f32 to vector<8x128xf32>
    %442 = arith.subf %441, %440 : vector<8x128xf32>
    %443 = math.exp %442 : vector<8x128xf32>
    %cst_161 = arith.constant 1.000000e+00 : f32
    %444 = vector.broadcast %cst_161 : f32 to vector<8x128xf32>
    %445 = arith.addf %444, %443 : vector<8x128xf32>
    %cst_162 = arith.constant 1.000000e+00 : f32
    %446 = vector.broadcast %cst_162 : f32 to vector<8x128xf32>
    %447 = arith.divf %446, %445 : vector<8x128xf32>
    %448 = vector.extract_strided_slice %435 {offsets = [0, 128], sizes = [8, 128], strides = [1, 1]} : vector<8x384xf32> to vector<8x128xf32>
    %449 = vector.extract_strided_slice %437 {offsets = [0, 128], sizes = [8, 128], strides = [1, 1]} : vector<8x384xf32> to vector<8x128xf32>
    %450 = arith.addf %448, %449 : vector<8x128xf32>
    %cst_163 = arith.constant 0.000000e+00 : f32
    %451 = vector.broadcast %cst_163 : f32 to vector<8x128xf32>
    %452 = arith.subf %451, %450 : vector<8x128xf32>
    %453 = math.exp %452 : vector<8x128xf32>
    %cst_164 = arith.constant 1.000000e+00 : f32
    %454 = vector.broadcast %cst_164 : f32 to vector<8x128xf32>
    %455 = arith.addf %454, %453 : vector<8x128xf32>
    %cst_165 = arith.constant 1.000000e+00 : f32
    %456 = vector.broadcast %cst_165 : f32 to vector<8x128xf32>
    %457 = arith.divf %456, %455 : vector<8x128xf32>
    %458 = vector.extract_strided_slice %435 {offsets = [0, 256], sizes = [8, 128], strides = [1, 1]} : vector<8x384xf32> to vector<8x128xf32>
    %459 = vector.extract_strided_slice %437 {offsets = [0, 256], sizes = [8, 128], strides = [1, 1]} : vector<8x384xf32> to vector<8x128xf32>
    %460 = arith.addf %459, %9 : vector<8x128xf32>
    %461 = arith.mulf %447, %460 : vector<8x128xf32>
    %462 = arith.addf %458, %461 : vector<8x128xf32>
    %463 = math.tanh %462 : vector<8x128xf32>
    %cst_166 = arith.constant 1.000000e+00 : f32
    %464 = vector.broadcast %cst_166 : f32 to vector<8x128xf32>
    %465 = arith.subf %464, %457 : vector<8x128xf32>
    %466 = arith.mulf %465, %463 : vector<8x128xf32>
    %467 = arith.mulf %457, %385 : vector<8x128xf32>
    %468 = arith.addf %466, %467 : vector<8x128xf32>
    %469 = arith.index_cast %433 : i32 to index
    %c384_167 = arith.constant 384 : index
    %470 = vector.load %arg8[%469, %c384_167] : memref<64x768xf32, #tpu.memory_space<vmem>>, vector<8x384xf32>
    %c0_168 = arith.constant 0 : index
    %c0_169 = arith.constant 0 : index
    %471 = vector.load %arg4[%c0_168, %c0_169] : memref<128x384xf32, #tpu.memory_space<vmem>>, vector<128x384xf32>
    %cst_170 = arith.constant dense<0.000000e+00> : vector<8x384xf32>
    %472 = tpu.matmul %420, %471, %cst_170 {dimension_numbers = #tpu.dot_dimension_numbers<[1], [0], [0], [1], [0, 0, 1, 1], [], []>} : vector<8x128xf32>, vector<128x384xf32>, vector<8x384xf32> -> vector<8x384xf32>
    %473 = vector.extract_strided_slice %470 {offsets = [0, 0], sizes = [8, 128], strides = [1, 1]} : vector<8x384xf32> to vector<8x128xf32>
    %474 = vector.extract_strided_slice %472 {offsets = [0, 0], sizes = [8, 128], strides = [1, 1]} : vector<8x384xf32> to vector<8x128xf32>
    %475 = arith.addf %473, %474 : vector<8x128xf32>
    %cst_171 = arith.constant 0.000000e+00 : f32
    %476 = vector.broadcast %cst_171 : f32 to vector<8x128xf32>
    %477 = arith.subf %476, %475 : vector<8x128xf32>
    %478 = math.exp %477 : vector<8x128xf32>
    %cst_172 = arith.constant 1.000000e+00 : f32
    %479 = vector.broadcast %cst_172 : f32 to vector<8x128xf32>
    %480 = arith.addf %479, %478 : vector<8x128xf32>
    %cst_173 = arith.constant 1.000000e+00 : f32
    %481 = vector.broadcast %cst_173 : f32 to vector<8x128xf32>
    %482 = arith.divf %481, %480 : vector<8x128xf32>
    %483 = vector.extract_strided_slice %470 {offsets = [0, 128], sizes = [8, 128], strides = [1, 1]} : vector<8x384xf32> to vector<8x128xf32>
    %484 = vector.extract_strided_slice %472 {offsets = [0, 128], sizes = [8, 128], strides = [1, 1]} : vector<8x384xf32> to vector<8x128xf32>
    %485 = arith.addf %483, %484 : vector<8x128xf32>
    %cst_174 = arith.constant 0.000000e+00 : f32
    %486 = vector.broadcast %cst_174 : f32 to vector<8x128xf32>
    %487 = arith.subf %486, %485 : vector<8x128xf32>
    %488 = math.exp %487 : vector<8x128xf32>
    %cst_175 = arith.constant 1.000000e+00 : f32
    %489 = vector.broadcast %cst_175 : f32 to vector<8x128xf32>
    %490 = arith.addf %489, %488 : vector<8x128xf32>
    %cst_176 = arith.constant 1.000000e+00 : f32
    %491 = vector.broadcast %cst_176 : f32 to vector<8x128xf32>
    %492 = arith.divf %491, %490 : vector<8x128xf32>
    %493 = vector.extract_strided_slice %470 {offsets = [0, 256], sizes = [8, 128], strides = [1, 1]} : vector<8x384xf32> to vector<8x128xf32>
    %494 = vector.extract_strided_slice %472 {offsets = [0, 256], sizes = [8, 128], strides = [1, 1]} : vector<8x384xf32> to vector<8x128xf32>
    %495 = arith.addf %494, %12 : vector<8x128xf32>
    %496 = arith.mulf %482, %495 : vector<8x128xf32>
    %497 = arith.addf %493, %496 : vector<8x128xf32>
    %498 = math.tanh %497 : vector<8x128xf32>
    %cst_177 = arith.constant 1.000000e+00 : f32
    %499 = vector.broadcast %cst_177 : f32 to vector<8x128xf32>
    %500 = arith.subf %499, %492 : vector<8x128xf32>
    %501 = arith.mulf %500, %498 : vector<8x128xf32>
    %502 = arith.mulf %492, %420 : vector<8x128xf32>
    %503 = arith.addf %501, %502 : vector<8x128xf32>
    %504 = arith.index_cast %c5_i32 : i32 to index
    %c0_178 = arith.constant 0 : index
    %c0_179 = arith.constant 0 : index
    %505 = vector.load %arg7[%504, %c0_178, %c0_179] : memref<8x8x256xf32, #tpu.memory_space<vmem>>, vector<1x8x128xf32>
    %506 = vector.shape_cast %505 : vector<1x8x128xf32> to vector<8x128xf32>
    %507 = vector.shape_cast %468 : vector<8x128xf32> to vector<1x8x128xf32>
    tpu.vector_store %arg7[%504, %c0_178, %c0_179], %507 {strides = array<i32>} : memref<8x8x256xf32, #tpu.memory_space<vmem>>, vector<1x8x128xf32>,
    %508 = arith.index_cast %429 : i32 to index
    %c0_180 = arith.constant 0 : index
    %c128_181 = arith.constant 128 : index
    %509 = vector.load %arg7[%508, %c0_180, %c128_181] : memref<8x8x256xf32, #tpu.memory_space<vmem>>, vector<1x8x128xf32>
    %510 = vector.shape_cast %509 : vector<1x8x128xf32> to vector<8x128xf32>
    %511 = vector.shape_cast %503 : vector<8x128xf32> to vector<1x8x128xf32>
    tpu.vector_store %arg7[%508, %c0_180, %c128_181], %511 {strides = array<i32>} : memref<8x8x256xf32, #tpu.memory_space<vmem>>, vector<1x8x128xf32>,
    %c6_i32 = arith.constant 6 : i32
    %c7_i32_182 = arith.constant 7 : i32
    %512 = arith.subi %c7_i32_182, %c6_i32 : i32
    %c8_i32_183 = arith.constant 8 : i32
    %513 = arith.muli %c6_i32, %c8_i32_183 : i32
    %514 = tpu.assume_multiple %513, 8 : i32
    %c8_i32_184 = arith.constant 8 : i32
    %515 = arith.muli %512, %c8_i32_184 : i32
    %516 = tpu.assume_multiple %515, 8 : i32
    %517 = arith.index_cast %514 : i32 to index
    %c0_185 = arith.constant 0 : index
    %518 = vector.load %arg8[%517, %c0_185] : memref<64x768xf32, #tpu.memory_space<vmem>>, vector<8x384xf32>
    %c0_186 = arith.constant 0 : index
    %c0_187 = arith.constant 0 : index
    %519 = vector.load %arg3[%c0_186, %c0_187] : memref<128x384xf32, #tpu.memory_space<vmem>>, vector<128x384xf32>
    %cst_188 = arith.constant dense<0.000000e+00> : vector<8x384xf32>
    %520 = tpu.matmul %468, %519, %cst_188 {dimension_numbers = #tpu.dot_dimension_numbers<[1], [0], [0], [1], [0, 0, 1, 1], [], []>} : vector<8x128xf32>, vector<128x384xf32>, vector<8x384xf32> -> vector<8x384xf32>
    %521 = vector.extract_strided_slice %518 {offsets = [0, 0], sizes = [8, 128], strides = [1, 1]} : vector<8x384xf32> to vector<8x128xf32>
    %522 = vector.extract_strided_slice %520 {offsets = [0, 0], sizes = [8, 128], strides = [1, 1]} : vector<8x384xf32> to vector<8x128xf32>
    %523 = arith.addf %521, %522 : vector<8x128xf32>
    %cst_189 = arith.constant 0.000000e+00 : f32
    %524 = vector.broadcast %cst_189 : f32 to vector<8x128xf32>
    %525 = arith.subf %524, %523 : vector<8x128xf32>
    %526 = math.exp %525 : vector<8x128xf32>
    %cst_190 = arith.constant 1.000000e+00 : f32
    %527 = vector.broadcast %cst_190 : f32 to vector<8x128xf32>
    %528 = arith.addf %527, %526 : vector<8x128xf32>
    %cst_191 = arith.constant 1.000000e+00 : f32
    %529 = vector.broadcast %cst_191 : f32 to vector<8x128xf32>
    %530 = arith.divf %529, %528 : vector<8x128xf32>
    %531 = vector.extract_strided_slice %518 {offsets = [0, 128], sizes = [8, 128], strides = [1, 1]} : vector<8x384xf32> to vector<8x128xf32>
    %532 = vector.extract_strided_slice %520 {offsets = [0, 128], sizes = [8, 128], strides = [1, 1]} : vector<8x384xf32> to vector<8x128xf32>
    %533 = arith.addf %531, %532 : vector<8x128xf32>
    %cst_192 = arith.constant 0.000000e+00 : f32
    %534 = vector.broadcast %cst_192 : f32 to vector<8x128xf32>
    %535 = arith.subf %534, %533 : vector<8x128xf32>
    %536 = math.exp %535 : vector<8x128xf32>
    %cst_193 = arith.constant 1.000000e+00 : f32
    %537 = vector.broadcast %cst_193 : f32 to vector<8x128xf32>
    %538 = arith.addf %537, %536 : vector<8x128xf32>
    %cst_194 = arith.constant 1.000000e+00 : f32
    %539 = vector.broadcast %cst_194 : f32 to vector<8x128xf32>
    %540 = arith.divf %539, %538 : vector<8x128xf32>
    %541 = vector.extract_strided_slice %518 {offsets = [0, 256], sizes = [8, 128], strides = [1, 1]} : vector<8x384xf32> to vector<8x128xf32>
    %542 = vector.extract_strided_slice %520 {offsets = [0, 256], sizes = [8, 128], strides = [1, 1]} : vector<8x384xf32> to vector<8x128xf32>
    %543 = arith.addf %542, %9 : vector<8x128xf32>
    %544 = arith.mulf %530, %543 : vector<8x128xf32>
    %545 = arith.addf %541, %544 : vector<8x128xf32>
    %546 = math.tanh %545 : vector<8x128xf32>
    %cst_195 = arith.constant 1.000000e+00 : f32
    %547 = vector.broadcast %cst_195 : f32 to vector<8x128xf32>
    %548 = arith.subf %547, %540 : vector<8x128xf32>
    %549 = arith.mulf %548, %546 : vector<8x128xf32>
    %550 = arith.mulf %540, %468 : vector<8x128xf32>
    %551 = arith.addf %549, %550 : vector<8x128xf32>
    %552 = arith.index_cast %516 : i32 to index
    %c384_196 = arith.constant 384 : index
    %553 = vector.load %arg8[%552, %c384_196] : memref<64x768xf32, #tpu.memory_space<vmem>>, vector<8x384xf32>
    %c0_197 = arith.constant 0 : index
    %c0_198 = arith.constant 0 : index
    %554 = vector.load %arg4[%c0_197, %c0_198] : memref<128x384xf32, #tpu.memory_space<vmem>>, vector<128x384xf32>
    %cst_199 = arith.constant dense<0.000000e+00> : vector<8x384xf32>
    %555 = tpu.matmul %503, %554, %cst_199 {dimension_numbers = #tpu.dot_dimension_numbers<[1], [0], [0], [1], [0, 0, 1, 1], [], []>} : vector<8x128xf32>, vector<128x384xf32>, vector<8x384xf32> -> vector<8x384xf32>
    %556 = vector.extract_strided_slice %553 {offsets = [0, 0], sizes = [8, 128], strides = [1, 1]} : vector<8x384xf32> to vector<8x128xf32>
    %557 = vector.extract_strided_slice %555 {offsets = [0, 0], sizes = [8, 128], strides = [1, 1]} : vector<8x384xf32> to vector<8x128xf32>
    %558 = arith.addf %556, %557 : vector<8x128xf32>
    %cst_200 = arith.constant 0.000000e+00 : f32
    %559 = vector.broadcast %cst_200 : f32 to vector<8x128xf32>
    %560 = arith.subf %559, %558 : vector<8x128xf32>
    %561 = math.exp %560 : vector<8x128xf32>
    %cst_201 = arith.constant 1.000000e+00 : f32
    %562 = vector.broadcast %cst_201 : f32 to vector<8x128xf32>
    %563 = arith.addf %562, %561 : vector<8x128xf32>
    %cst_202 = arith.constant 1.000000e+00 : f32
    %564 = vector.broadcast %cst_202 : f32 to vector<8x128xf32>
    %565 = arith.divf %564, %563 : vector<8x128xf32>
    %566 = vector.extract_strided_slice %553 {offsets = [0, 128], sizes = [8, 128], strides = [1, 1]} : vector<8x384xf32> to vector<8x128xf32>
    %567 = vector.extract_strided_slice %555 {offsets = [0, 128], sizes = [8, 128], strides = [1, 1]} : vector<8x384xf32> to vector<8x128xf32>
    %568 = arith.addf %566, %567 : vector<8x128xf32>
    %cst_203 = arith.constant 0.000000e+00 : f32
    %569 = vector.broadcast %cst_203 : f32 to vector<8x128xf32>
    %570 = arith.subf %569, %568 : vector<8x128xf32>
    %571 = math.exp %570 : vector<8x128xf32>
    %cst_204 = arith.constant 1.000000e+00 : f32
    %572 = vector.broadcast %cst_204 : f32 to vector<8x128xf32>
    %573 = arith.addf %572, %571 : vector<8x128xf32>
    %cst_205 = arith.constant 1.000000e+00 : f32
    %574 = vector.broadcast %cst_205 : f32 to vector<8x128xf32>
    %575 = arith.divf %574, %573 : vector<8x128xf32>
    %576 = vector.extract_strided_slice %553 {offsets = [0, 256], sizes = [8, 128], strides = [1, 1]} : vector<8x384xf32> to vector<8x128xf32>
    %577 = vector.extract_strided_slice %555 {offsets = [0, 256], sizes = [8, 128], strides = [1, 1]} : vector<8x384xf32> to vector<8x128xf32>
    %578 = arith.addf %577, %12 : vector<8x128xf32>
    %579 = arith.mulf %565, %578 : vector<8x128xf32>
    %580 = arith.addf %576, %579 : vector<8x128xf32>
    %581 = math.tanh %580 : vector<8x128xf32>
    %cst_206 = arith.constant 1.000000e+00 : f32
    %582 = vector.broadcast %cst_206 : f32 to vector<8x128xf32>
    %583 = arith.subf %582, %575 : vector<8x128xf32>
    %584 = arith.mulf %583, %581 : vector<8x128xf32>
    %585 = arith.mulf %575, %503 : vector<8x128xf32>
    %586 = arith.addf %584, %585 : vector<8x128xf32>
    %587 = arith.index_cast %c6_i32 : i32 to index
    %c0_207 = arith.constant 0 : index
    %c0_208 = arith.constant 0 : index
    %588 = vector.load %arg7[%587, %c0_207, %c0_208] : memref<8x8x256xf32, #tpu.memory_space<vmem>>, vector<1x8x128xf32>
    %589 = vector.shape_cast %588 : vector<1x8x128xf32> to vector<8x128xf32>
    %590 = vector.shape_cast %551 : vector<8x128xf32> to vector<1x8x128xf32>
    tpu.vector_store %arg7[%587, %c0_207, %c0_208], %590 {strides = array<i32>} : memref<8x8x256xf32, #tpu.memory_space<vmem>>, vector<1x8x128xf32>,
    %591 = arith.index_cast %512 : i32 to index
    %c0_209 = arith.constant 0 : index
    %c128_210 = arith.constant 128 : index
    %592 = vector.load %arg7[%591, %c0_209, %c128_210] : memref<8x8x256xf32, #tpu.memory_space<vmem>>, vector<1x8x128xf32>
    %593 = vector.shape_cast %592 : vector<1x8x128xf32> to vector<8x128xf32>
    %594 = vector.shape_cast %586 : vector<8x128xf32> to vector<1x8x128xf32>
    tpu.vector_store %arg7[%591, %c0_209, %c128_210], %594 {strides = array<i32>} : memref<8x8x256xf32, #tpu.memory_space<vmem>>, vector<1x8x128xf32>,
    %c7_i32_211 = arith.constant 7 : i32
    %c7_i32_212 = arith.constant 7 : i32
    %595 = arith.subi %c7_i32_212, %c7_i32_211 : i32
    %c8_i32_213 = arith.constant 8 : i32
    %596 = arith.muli %c7_i32_211, %c8_i32_213 : i32
    %597 = tpu.assume_multiple %596, 8 : i32
    %c8_i32_214 = arith.constant 8 : i32
    %598 = arith.muli %595, %c8_i32_214 : i32
    %599 = tpu.assume_multiple %598, 8 : i32
    %600 = arith.index_cast %597 : i32 to index
    %c0_215 = arith.constant 0 : index
    %601 = vector.load %arg8[%600, %c0_215] : memref<64x768xf32, #tpu.memory_space<vmem>>, vector<8x384xf32>
    %c0_216 = arith.constant 0 : index
    %c0_217 = arith.constant 0 : index
    %602 = vector.load %arg3[%c0_216, %c0_217] : memref<128x384xf32, #tpu.memory_space<vmem>>, vector<128x384xf32>
    %cst_218 = arith.constant dense<0.000000e+00> : vector<8x384xf32>
    %603 = tpu.matmul %551, %602, %cst_218 {dimension_numbers = #tpu.dot_dimension_numbers<[1], [0], [0], [1], [0, 0, 1, 1], [], []>} : vector<8x128xf32>, vector<128x384xf32>, vector<8x384xf32> -> vector<8x384xf32>
    %604 = vector.extract_strided_slice %601 {offsets = [0, 0], sizes = [8, 128], strides = [1, 1]} : vector<8x384xf32> to vector<8x128xf32>
    %605 = vector.extract_strided_slice %603 {offsets = [0, 0], sizes = [8, 128], strides = [1, 1]} : vector<8x384xf32> to vector<8x128xf32>
    %606 = arith.addf %604, %605 : vector<8x128xf32>
    %cst_219 = arith.constant 0.000000e+00 : f32
    %607 = vector.broadcast %cst_219 : f32 to vector<8x128xf32>
    %608 = arith.subf %607, %606 : vector<8x128xf32>
    %609 = math.exp %608 : vector<8x128xf32>
    %cst_220 = arith.constant 1.000000e+00 : f32
    %610 = vector.broadcast %cst_220 : f32 to vector<8x128xf32>
    %611 = arith.addf %610, %609 : vector<8x128xf32>
    %cst_221 = arith.constant 1.000000e+00 : f32
    %612 = vector.broadcast %cst_221 : f32 to vector<8x128xf32>
    %613 = arith.divf %612, %611 : vector<8x128xf32>
    %614 = vector.extract_strided_slice %601 {offsets = [0, 128], sizes = [8, 128], strides = [1, 1]} : vector<8x384xf32> to vector<8x128xf32>
    %615 = vector.extract_strided_slice %603 {offsets = [0, 128], sizes = [8, 128], strides = [1, 1]} : vector<8x384xf32> to vector<8x128xf32>
    %616 = arith.addf %614, %615 : vector<8x128xf32>
    %cst_222 = arith.constant 0.000000e+00 : f32
    %617 = vector.broadcast %cst_222 : f32 to vector<8x128xf32>
    %618 = arith.subf %617, %616 : vector<8x128xf32>
    %619 = math.exp %618 : vector<8x128xf32>
    %cst_223 = arith.constant 1.000000e+00 : f32
    %620 = vector.broadcast %cst_223 : f32 to vector<8x128xf32>
    %621 = arith.addf %620, %619 : vector<8x128xf32>
    %cst_224 = arith.constant 1.000000e+00 : f32
    %622 = vector.broadcast %cst_224 : f32 to vector<8x128xf32>
    %623 = arith.divf %622, %621 : vector<8x128xf32>
    %624 = vector.extract_strided_slice %601 {offsets = [0, 256], sizes = [8, 128], strides = [1, 1]} : vector<8x384xf32> to vector<8x128xf32>
    %625 = vector.extract_strided_slice %603 {offsets = [0, 256], sizes = [8, 128], strides = [1, 1]} : vector<8x384xf32> to vector<8x128xf32>
    %626 = arith.addf %625, %9 : vector<8x128xf32>
    %627 = arith.mulf %613, %626 : vector<8x128xf32>
    %628 = arith.addf %624, %627 : vector<8x128xf32>
    %629 = math.tanh %628 : vector<8x128xf32>
    %cst_225 = arith.constant 1.000000e+00 : f32
    %630 = vector.broadcast %cst_225 : f32 to vector<8x128xf32>
    %631 = arith.subf %630, %623 : vector<8x128xf32>
    %632 = arith.mulf %631, %629 : vector<8x128xf32>
    %633 = arith.mulf %623, %551 : vector<8x128xf32>
    %634 = arith.addf %632, %633 : vector<8x128xf32>
    %635 = arith.index_cast %599 : i32 to index
    %c384_226 = arith.constant 384 : index
    %636 = vector.load %arg8[%635, %c384_226] : memref<64x768xf32, #tpu.memory_space<vmem>>, vector<8x384xf32>
    %c0_227 = arith.constant 0 : index
    %c0_228 = arith.constant 0 : index
    %637 = vector.load %arg4[%c0_227, %c0_228] : memref<128x384xf32, #tpu.memory_space<vmem>>, vector<128x384xf32>
    %cst_229 = arith.constant dense<0.000000e+00> : vector<8x384xf32>
    %638 = tpu.matmul %586, %637, %cst_229 {dimension_numbers = #tpu.dot_dimension_numbers<[1], [0], [0], [1], [0, 0, 1, 1], [], []>} : vector<8x128xf32>, vector<128x384xf32>, vector<8x384xf32> -> vector<8x384xf32>
    %639 = vector.extract_strided_slice %636 {offsets = [0, 0], sizes = [8, 128], strides = [1, 1]} : vector<8x384xf32> to vector<8x128xf32>
    %640 = vector.extract_strided_slice %638 {offsets = [0, 0], sizes = [8, 128], strides = [1, 1]} : vector<8x384xf32> to vector<8x128xf32>
    %641 = arith.addf %639, %640 : vector<8x128xf32>
    %cst_230 = arith.constant 0.000000e+00 : f32
    %642 = vector.broadcast %cst_230 : f32 to vector<8x128xf32>
    %643 = arith.subf %642, %641 : vector<8x128xf32>
    %644 = math.exp %643 : vector<8x128xf32>
    %cst_231 = arith.constant 1.000000e+00 : f32
    %645 = vector.broadcast %cst_231 : f32 to vector<8x128xf32>
    %646 = arith.addf %645, %644 : vector<8x128xf32>
    %cst_232 = arith.constant 1.000000e+00 : f32
    %647 = vector.broadcast %cst_232 : f32 to vector<8x128xf32>
    %648 = arith.divf %647, %646 : vector<8x128xf32>
    %649 = vector.extract_strided_slice %636 {offsets = [0, 128], sizes = [8, 128], strides = [1, 1]} : vector<8x384xf32> to vector<8x128xf32>
    %650 = vector.extract_strided_slice %638 {offsets = [0, 128], sizes = [8, 128], strides = [1, 1]} : vector<8x384xf32> to vector<8x128xf32>
    %651 = arith.addf %649, %650 : vector<8x128xf32>
    %cst_233 = arith.constant 0.000000e+00 : f32
    %652 = vector.broadcast %cst_233 : f32 to vector<8x128xf32>
    %653 = arith.subf %652, %651 : vector<8x128xf32>
    %654 = math.exp %653 : vector<8x128xf32>
    %cst_234 = arith.constant 1.000000e+00 : f32
    %655 = vector.broadcast %cst_234 : f32 to vector<8x128xf32>
    %656 = arith.addf %655, %654 : vector<8x128xf32>
    %cst_235 = arith.constant 1.000000e+00 : f32
    %657 = vector.broadcast %cst_235 : f32 to vector<8x128xf32>
    %658 = arith.divf %657, %656 : vector<8x128xf32>
    %659 = vector.extract_strided_slice %636 {offsets = [0, 256], sizes = [8, 128], strides = [1, 1]} : vector<8x384xf32> to vector<8x128xf32>
    %660 = vector.extract_strided_slice %638 {offsets = [0, 256], sizes = [8, 128], strides = [1, 1]} : vector<8x384xf32> to vector<8x128xf32>
    %661 = arith.addf %660, %12 : vector<8x128xf32>
    %662 = arith.mulf %648, %661 : vector<8x128xf32>
    %663 = arith.addf %659, %662 : vector<8x128xf32>
    %664 = math.tanh %663 : vector<8x128xf32>
    %cst_236 = arith.constant 1.000000e+00 : f32
    %665 = vector.broadcast %cst_236 : f32 to vector<8x128xf32>
    %666 = arith.subf %665, %658 : vector<8x128xf32>
    %667 = arith.mulf %666, %664 : vector<8x128xf32>
    %668 = arith.mulf %658, %586 : vector<8x128xf32>
    %669 = arith.addf %667, %668 : vector<8x128xf32>
    %670 = arith.index_cast %c7_i32_211 : i32 to index
    %c0_237 = arith.constant 0 : index
    %c0_238 = arith.constant 0 : index
    %671 = vector.load %arg7[%670, %c0_237, %c0_238] : memref<8x8x256xf32, #tpu.memory_space<vmem>>, vector<1x8x128xf32>
    %672 = vector.shape_cast %671 : vector<1x8x128xf32> to vector<8x128xf32>
    %673 = vector.shape_cast %634 : vector<8x128xf32> to vector<1x8x128xf32>
    tpu.vector_store %arg7[%670, %c0_237, %c0_238], %673 {strides = array<i32>} : memref<8x8x256xf32, #tpu.memory_space<vmem>>, vector<1x8x128xf32>,
    %674 = arith.index_cast %595 : i32 to index
    %c0_239 = arith.constant 0 : index
    %c128_240 = arith.constant 128 : index
    %675 = vector.load %arg7[%674, %c0_239, %c128_240] : memref<8x8x256xf32, #tpu.memory_space<vmem>>, vector<1x8x128xf32>
    %676 = vector.shape_cast %675 : vector<1x8x128xf32> to vector<8x128xf32>
    %677 = vector.shape_cast %669 : vector<8x128xf32> to vector<1x8x128xf32>
    tpu.vector_store %arg7[%674, %c0_239, %c128_240], %677 {strides = array<i32>} : memref<8x8x256xf32, #tpu.memory_space<vmem>>, vector<1x8x128xf32>,
    %c8_i32_241 = arith.constant 8 : i32
    return
  }
}

module attributes {stable_mosaic.version = 11 : i64} {
  func.func @_gru_bidi_layer_kernel(%arg0: memref<64x256xf32, #tpu.memory_space<vmem>>, %arg1: memref<256x768xf32, #tpu.memory_space<vmem>>, %arg2: memref<1x768xf32, #tpu.memory_space<vmem>>, %arg3: memref<128x384xf32, #tpu.memory_space<vmem>>, %arg4: memref<128x384xf32, #tpu.memory_space<vmem>>, %arg5: memref<1x128xf32, #tpu.memory_space<vmem>>, %arg6: memref<1x128xf32, #tpu.memory_space<vmem>>, %arg7: memref<8x8x256xf32, #tpu.memory_space<vmem>>, %arg8: memref<64x768xf32, #tpu.memory_space<vmem>>) attributes {dimension_semantics = [], scalar_prefetch = 0 : i64, scratch_operands = 1 : i64, tpu.core_type = #tpu.core_type<tc>} {
    %c0 = arith.constant 0 : index
    %c0_0 = arith.constant 0 : index
    %0 = vector.load %arg0[%c0, %c0_0] : memref<64x256xf32, #tpu.memory_space<vmem>>, vector<64x256xf32>
    %c0_1 = arith.constant 0 : index
    %c0_2 = arith.constant 0 : index
    %1 = vector.load %arg1[%c0_1, %c0_2] : memref<256x768xf32, #tpu.memory_space<vmem>>, vector<256x768xf32>
    %cst = arith.constant dense<0.000000e+00> : vector<64x768xf32>
    %2 = tpu.matmul %0, %1, %cst {dimension_numbers = #tpu.dot_dimension_numbers<[1], [0], [0], [1], [0, 0, 1, 1], [], []>} : vector<64x256xf32>, vector<256x768xf32>, vector<64x768xf32> -> vector<64x768xf32>
    %c0_3 = arith.constant 0 : index
    %c0_4 = arith.constant 0 : index
    %3 = vector.load %arg2[%c0_3, %c0_4] : memref<1x768xf32, #tpu.memory_space<vmem>>, vector<1x768xf32>
    %4 = vector.broadcast %3 : vector<1x768xf32> to vector<64x768xf32>
    %5 = arith.addf %2, %4 : vector<64x768xf32>
    %c0_5 = arith.constant 0 : index
    %c0_6 = arith.constant 0 : index
    %6 = vector.load %arg8[%c0_5, %c0_6] : memref<64x768xf32, #tpu.memory_space<vmem>>, vector<64x768xf32>
    tpu.vector_store %arg8[%c0_5, %c0_6], %5 {strides = array<i32>} : memref<64x768xf32, #tpu.memory_space<vmem>>, vector<64x768xf32>,
    %c0_7 = arith.constant 0 : index
    %c0_8 = arith.constant 0 : index
    %7 = vector.load %arg5[%c0_7, %c0_8] : memref<1x128xf32, #tpu.memory_space<vmem>>, vector<1x128xf32>
    %8 = vector.shape_cast %7 : vector<1x128xf32> to vector<1x128xf32>
    %9 = vector.broadcast %8 : vector<1x128xf32> to vector<8x128xf32>
    %c0_9 = arith.constant 0 : index
    %c0_10 = arith.constant 0 : index
    %10 = vector.load %arg6[%c0_9, %c0_10] : memref<1x128xf32, #tpu.memory_space<vmem>>, vector<1x128xf32>
    %11 = vector.shape_cast %10 : vector<1x128xf32> to vector<1x128xf32>
    %12 = vector.broadcast %11 : vector<1x128xf32> to vector<8x128xf32>
    %cst_11 = arith.constant 0.000000e+00 : f32
    %13 = vector.broadcast %cst_11 : f32 to vector<8x128xf32>
    %c0_i32 = arith.constant 0 : i32
    %c7_i32 = arith.constant 7 : i32
    %14 = arith.subi %c7_i32, %c0_i32 : i32
    %c8_i32 = arith.constant 8 : i32
    %15 = arith.muli %c0_i32, %c8_i32 : i32
    %16 = tpu.assume_multiple %15, 8 : i32
    %c8_i32_12 = arith.constant 8 : i32
    %17 = arith.muli %14, %c8_i32_12 : i32
    %18 = tpu.assume_multiple %17, 8 : i32
    %19 = arith.index_cast %16 : i32 to index
    %c0_13 = arith.constant 0 : index
    %20 = vector.load %arg8[%19, %c0_13] : memref<64x768xf32, #tpu.memory_space<vmem>>, vector<8x384xf32>
    %c0_14 = arith.constant 0 : index
    %c0_15 = arith.constant 0 : index
    %21 = vector.load %arg3[%c0_14, %c0_15] : memref<128x384xf32, #tpu.memory_space<vmem>>, vector<128x384xf32>
    %cst_16 = arith.constant dense<0.000000e+00> : vector<8x384xf32>
    %22 = tpu.matmul %13, %21, %cst_16 {dimension_numbers = #tpu.dot_dimension_numbers<[1], [0], [0], [1], [0, 0, 1, 1], [], []>} : vector<8x128xf32>, vector<128x384xf32>, vector<8x384xf32> -> vector<8x384xf32>
    %23 = vector.extract_strided_slice %20 {offsets = [0, 0], sizes = [8, 128], strides = [1, 1]} : vector<8x384xf32> to vector<8x128xf32>
    %24 = vector.extract_strided_slice %22 {offsets = [0, 0], sizes = [8, 128], strides = [1, 1]} : vector<8x384xf32> to vector<8x128xf32>
    %25 = arith.addf %23, %24 : vector<8x128xf32>
    %cst_17 = arith.constant 0.000000e+00 : f32
    %26 = vector.broadcast %cst_17 : f32 to vector<8x128xf32>
    %27 = arith.subf %26, %25 : vector<8x128xf32>
    %28 = math.exp %27 : vector<8x128xf32>
    %cst_18 = arith.constant 1.000000e+00 : f32
    %29 = vector.broadcast %cst_18 : f32 to vector<8x128xf32>
    %30 = arith.addf %29, %28 : vector<8x128xf32>
    %cst_19 = arith.constant 1.000000e+00 : f32
    %31 = vector.broadcast %cst_19 : f32 to vector<8x128xf32>
    %32 = arith.divf %31, %30 : vector<8x128xf32>
    %33 = vector.extract_strided_slice %20 {offsets = [0, 128], sizes = [8, 128], strides = [1, 1]} : vector<8x384xf32> to vector<8x128xf32>
    %34 = vector.extract_strided_slice %22 {offsets = [0, 128], sizes = [8, 128], strides = [1, 1]} : vector<8x384xf32> to vector<8x128xf32>
    %35 = arith.addf %33, %34 : vector<8x128xf32>
    %cst_20 = arith.constant 0.000000e+00 : f32
    %36 = vector.broadcast %cst_20 : f32 to vector<8x128xf32>
    %37 = arith.subf %36, %35 : vector<8x128xf32>
    %38 = math.exp %37 : vector<8x128xf32>
    %cst_21 = arith.constant 1.000000e+00 : f32
    %39 = vector.broadcast %cst_21 : f32 to vector<8x128xf32>
    %40 = arith.addf %39, %38 : vector<8x128xf32>
    %cst_22 = arith.constant 1.000000e+00 : f32
    %41 = vector.broadcast %cst_22 : f32 to vector<8x128xf32>
    %42 = arith.divf %41, %40 : vector<8x128xf32>
    %43 = vector.extract_strided_slice %20 {offsets = [0, 256], sizes = [8, 128], strides = [1, 1]} : vector<8x384xf32> to vector<8x128xf32>
    %44 = vector.extract_strided_slice %22 {offsets = [0, 256], sizes = [8, 128], strides = [1, 1]} : vector<8x384xf32> to vector<8x128xf32>
    %45 = arith.addf %44, %9 : vector<8x128xf32>
    %46 = arith.mulf %32, %45 : vector<8x128xf32>
    %47 = arith.addf %43, %46 : vector<8x128xf32>
    %48 = math.tanh %47 : vector<8x128xf32>
    %cst_23 = arith.constant 1.000000e+00 : f32
    %49 = vector.broadcast %cst_23 : f32 to vector<8x128xf32>
    %50 = arith.subf %49, %42 : vector<8x128xf32>
    %51 = arith.mulf %50, %48 : vector<8x128xf32>
    %52 = arith.mulf %42, %13 : vector<8x128xf32>
    %53 = arith.addf %51, %52 : vector<8x128xf32>
    %54 = arith.index_cast %18 : i32 to index
    %c384 = arith.constant 384 : index
    %55 = vector.load %arg8[%54, %c384] : memref<64x768xf32, #tpu.memory_space<vmem>>, vector<8x384xf32>
    %c0_24 = arith.constant 0 : index
    %c0_25 = arith.constant 0 : index
    %56 = vector.load %arg4[%c0_24, %c0_25] : memref<128x384xf32, #tpu.memory_space<vmem>>, vector<128x384xf32>
    %cst_26 = arith.constant dense<0.000000e+00> : vector<8x384xf32>
    %57 = tpu.matmul %13, %56, %cst_26 {dimension_numbers = #tpu.dot_dimension_numbers<[1], [0], [0], [1], [0, 0, 1, 1], [], []>} : vector<8x128xf32>, vector<128x384xf32>, vector<8x384xf32> -> vector<8x384xf32>
    %58 = vector.extract_strided_slice %55 {offsets = [0, 0], sizes = [8, 128], strides = [1, 1]} : vector<8x384xf32> to vector<8x128xf32>
    %59 = vector.extract_strided_slice %57 {offsets = [0, 0], sizes = [8, 128], strides = [1, 1]} : vector<8x384xf32> to vector<8x128xf32>
    %60 = arith.addf %58, %59 : vector<8x128xf32>
    %cst_27 = arith.constant 0.000000e+00 : f32
    %61 = vector.broadcast %cst_27 : f32 to vector<8x128xf32>
    %62 = arith.subf %61, %60 : vector<8x128xf32>
    %63 = math.exp %62 : vector<8x128xf32>
    %cst_28 = arith.constant 1.000000e+00 : f32
    %64 = vector.broadcast %cst_28 : f32 to vector<8x128xf32>
    %65 = arith.addf %64, %63 : vector<8x128xf32>
    %cst_29 = arith.constant 1.000000e+00 : f32
    %66 = vector.broadcast %cst_29 : f32 to vector<8x128xf32>
    %67 = arith.divf %66, %65 : vector<8x128xf32>
    %68 = vector.extract_strided_slice %55 {offsets = [0, 128], sizes = [8, 128], strides = [1, 1]} : vector<8x384xf32> to vector<8x128xf32>
    %69 = vector.extract_strided_slice %57 {offsets = [0, 128], sizes = [8, 128], strides = [1, 1]} : vector<8x384xf32> to vector<8x128xf32>
    %70 = arith.addf %68, %69 : vector<8x128xf32>
    %cst_30 = arith.constant 0.000000e+00 : f32
    %71 = vector.broadcast %cst_30 : f32 to vector<8x128xf32>
    %72 = arith.subf %71, %70 : vector<8x128xf32>
    %73 = math.exp %72 : vector<8x128xf32>
    %cst_31 = arith.constant 1.000000e+00 : f32
    %74 = vector.broadcast %cst_31 : f32 to vector<8x128xf32>
    %75 = arith.addf %74, %73 : vector<8x128xf32>
    %cst_32 = arith.constant 1.000000e+00 : f32
    %76 = vector.broadcast %cst_32 : f32 to vector<8x128xf32>
    %77 = arith.divf %76, %75 : vector<8x128xf32>
    %78 = vector.extract_strided_slice %55 {offsets = [0, 256], sizes = [8, 128], strides = [1, 1]} : vector<8x384xf32> to vector<8x128xf32>
    %79 = vector.extract_strided_slice %57 {offsets = [0, 256], sizes = [8, 128], strides = [1, 1]} : vector<8x384xf32> to vector<8x128xf32>
    %80 = arith.addf %79, %12 : vector<8x128xf32>
    %81 = arith.mulf %67, %80 : vector<8x128xf32>
    %82 = arith.addf %78, %81 : vector<8x128xf32>
    %83 = math.tanh %82 : vector<8x128xf32>
    %cst_33 = arith.constant 1.000000e+00 : f32
    %84 = vector.broadcast %cst_33 : f32 to vector<8x128xf32>
    %85 = arith.subf %84, %77 : vector<8x128xf32>
    %86 = arith.mulf %85, %83 : vector<8x128xf32>
    %87 = arith.mulf %77, %13 : vector<8x128xf32>
    %88 = arith.addf %86, %87 : vector<8x128xf32>
    %89 = arith.index_cast %c0_i32 : i32 to index
    %c0_34 = arith.constant 0 : index
    %c0_35 = arith.constant 0 : index
    %90 = vector.load %arg7[%89, %c0_34, %c0_35] : memref<8x8x256xf32, #tpu.memory_space<vmem>>, vector<1x8x128xf32>
    %91 = vector.shape_cast %90 : vector<1x8x128xf32> to vector<8x128xf32>
    %92 = vector.shape_cast %53 : vector<8x128xf32> to vector<1x8x128xf32>
    tpu.vector_store %arg7[%89, %c0_34, %c0_35], %92 {strides = array<i32>} : memref<8x8x256xf32, #tpu.memory_space<vmem>>, vector<1x8x128xf32>,
    %93 = arith.index_cast %14 : i32 to index
    %c0_36 = arith.constant 0 : index
    %c128 = arith.constant 128 : index
    %94 = vector.load %arg7[%93, %c0_36, %c128] : memref<8x8x256xf32, #tpu.memory_space<vmem>>, vector<1x8x128xf32>
    %95 = vector.shape_cast %94 : vector<1x8x128xf32> to vector<8x128xf32>
    %96 = vector.shape_cast %88 : vector<8x128xf32> to vector<1x8x128xf32>
    tpu.vector_store %arg7[%93, %c0_36, %c128], %96 {strides = array<i32>} : memref<8x8x256xf32, #tpu.memory_space<vmem>>, vector<1x8x128xf32>,
    %c1_i32 = arith.constant 1 : i32
    %c7_i32_37 = arith.constant 7 : i32
    %97 = arith.subi %c7_i32_37, %c1_i32 : i32
    %c8_i32_38 = arith.constant 8 : i32
    %98 = arith.muli %c1_i32, %c8_i32_38 : i32
    %99 = tpu.assume_multiple %98, 8 : i32
    %c8_i32_39 = arith.constant 8 : i32
    %100 = arith.muli %97, %c8_i32_39 : i32
    %101 = tpu.assume_multiple %100, 8 : i32
    %102 = arith.index_cast %99 : i32 to index
    %c0_40 = arith.constant 0 : index
    %103 = vector.load %arg8[%102, %c0_40] : memref<64x768xf32, #tpu.memory_space<vmem>>, vector<8x384xf32>
    %c0_41 = arith.constant 0 : index
    %c0_42 = arith.constant 0 : index
    %104 = vector.load %arg3[%c0_41, %c0_42] : memref<128x384xf32, #tpu.memory_space<vmem>>, vector<128x384xf32>
    %cst_43 = arith.constant dense<0.000000e+00> : vector<8x384xf32>
    %105 = tpu.matmul %53, %104, %cst_43 {dimension_numbers = #tpu.dot_dimension_numbers<[1], [0], [0], [1], [0, 0, 1, 1], [], []>} : vector<8x128xf32>, vector<128x384xf32>, vector<8x384xf32> -> vector<8x384xf32>
    %106 = vector.extract_strided_slice %103 {offsets = [0, 0], sizes = [8, 128], strides = [1, 1]} : vector<8x384xf32> to vector<8x128xf32>
    %107 = vector.extract_strided_slice %105 {offsets = [0, 0], sizes = [8, 128], strides = [1, 1]} : vector<8x384xf32> to vector<8x128xf32>
    %108 = arith.addf %106, %107 : vector<8x128xf32>
    %cst_44 = arith.constant 0.000000e+00 : f32
    %109 = vector.broadcast %cst_44 : f32 to vector<8x128xf32>
    %110 = arith.subf %109, %108 : vector<8x128xf32>
    %111 = math.exp %110 : vector<8x128xf32>
    %cst_45 = arith.constant 1.000000e+00 : f32
    %112 = vector.broadcast %cst_45 : f32 to vector<8x128xf32>
    %113 = arith.addf %112, %111 : vector<8x128xf32>
    %cst_46 = arith.constant 1.000000e+00 : f32
    %114 = vector.broadcast %cst_46 : f32 to vector<8x128xf32>
    %115 = arith.divf %114, %113 : vector<8x128xf32>
    %116 = vector.extract_strided_slice %103 {offsets = [0, 128], sizes = [8, 128], strides = [1, 1]} : vector<8x384xf32> to vector<8x128xf32>
    %117 = vector.extract_strided_slice %105 {offsets = [0, 128], sizes = [8, 128], strides = [1, 1]} : vector<8x384xf32> to vector<8x128xf32>
    %118 = arith.addf %116, %117 : vector<8x128xf32>
    %cst_47 = arith.constant 0.000000e+00 : f32
    %119 = vector.broadcast %cst_47 : f32 to vector<8x128xf32>
    %120 = arith.subf %119, %118 : vector<8x128xf32>
    %121 = math.exp %120 : vector<8x128xf32>
    %cst_48 = arith.constant 1.000000e+00 : f32
    %122 = vector.broadcast %cst_48 : f32 to vector<8x128xf32>
    %123 = arith.addf %122, %121 : vector<8x128xf32>
    %cst_49 = arith.constant 1.000000e+00 : f32
    %124 = vector.broadcast %cst_49 : f32 to vector<8x128xf32>
    %125 = arith.divf %124, %123 : vector<8x128xf32>
    %126 = vector.extract_strided_slice %103 {offsets = [0, 256], sizes = [8, 128], strides = [1, 1]} : vector<8x384xf32> to vector<8x128xf32>
    %127 = vector.extract_strided_slice %105 {offsets = [0, 256], sizes = [8, 128], strides = [1, 1]} : vector<8x384xf32> to vector<8x128xf32>
    %128 = arith.addf %127, %9 : vector<8x128xf32>
    %129 = arith.mulf %115, %128 : vector<8x128xf32>
    %130 = arith.addf %126, %129 : vector<8x128xf32>
    %131 = math.tanh %130 : vector<8x128xf32>
    %cst_50 = arith.constant 1.000000e+00 : f32
    %132 = vector.broadcast %cst_50 : f32 to vector<8x128xf32>
    %133 = arith.subf %132, %125 : vector<8x128xf32>
    %134 = arith.mulf %133, %131 : vector<8x128xf32>
    %135 = arith.mulf %125, %53 : vector<8x128xf32>
    %136 = arith.addf %134, %135 : vector<8x128xf32>
    %137 = arith.index_cast %101 : i32 to index
    %c384_51 = arith.constant 384 : index
    %138 = vector.load %arg8[%137, %c384_51] : memref<64x768xf32, #tpu.memory_space<vmem>>, vector<8x384xf32>
    %c0_52 = arith.constant 0 : index
    %c0_53 = arith.constant 0 : index
    %139 = vector.load %arg4[%c0_52, %c0_53] : memref<128x384xf32, #tpu.memory_space<vmem>>, vector<128x384xf32>
    %cst_54 = arith.constant dense<0.000000e+00> : vector<8x384xf32>
    %140 = tpu.matmul %88, %139, %cst_54 {dimension_numbers = #tpu.dot_dimension_numbers<[1], [0], [0], [1], [0, 0, 1, 1], [], []>} : vector<8x128xf32>, vector<128x384xf32>, vector<8x384xf32> -> vector<8x384xf32>
    %141 = vector.extract_strided_slice %138 {offsets = [0, 0], sizes = [8, 128], strides = [1, 1]} : vector<8x384xf32> to vector<8x128xf32>
    %142 = vector.extract_strided_slice %140 {offsets = [0, 0], sizes = [8, 128], strides = [1, 1]} : vector<8x384xf32> to vector<8x128xf32>
    %143 = arith.addf %141, %142 : vector<8x128xf32>
    %cst_55 = arith.constant 0.000000e+00 : f32
    %144 = vector.broadcast %cst_55 : f32 to vector<8x128xf32>
    %145 = arith.subf %144, %143 : vector<8x128xf32>
    %146 = math.exp %145 : vector<8x128xf32>
    %cst_56 = arith.constant 1.000000e+00 : f32
    %147 = vector.broadcast %cst_56 : f32 to vector<8x128xf32>
    %148 = arith.addf %147, %146 : vector<8x128xf32>
    %cst_57 = arith.constant 1.000000e+00 : f32
    %149 = vector.broadcast %cst_57 : f32 to vector<8x128xf32>
    %150 = arith.divf %149, %148 : vector<8x128xf32>
    %151 = vector.extract_strided_slice %138 {offsets = [0, 128], sizes = [8, 128], strides = [1, 1]} : vector<8x384xf32> to vector<8x128xf32>
    %152 = vector.extract_strided_slice %140 {offsets = [0, 128], sizes = [8, 128], strides = [1, 1]} : vector<8x384xf32> to vector<8x128xf32>
    %153 = arith.addf %151, %152 : vector<8x128xf32>
    %cst_58 = arith.constant 0.000000e+00 : f32
    %154 = vector.broadcast %cst_58 : f32 to vector<8x128xf32>
    %155 = arith.subf %154, %153 : vector<8x128xf32>
    %156 = math.exp %155 : vector<8x128xf32>
    %cst_59 = arith.constant 1.000000e+00 : f32
    %157 = vector.broadcast %cst_59 : f32 to vector<8x128xf32>
    %158 = arith.addf %157, %156 : vector<8x128xf32>
    %cst_60 = arith.constant 1.000000e+00 : f32
    %159 = vector.broadcast %cst_60 : f32 to vector<8x128xf32>
    %160 = arith.divf %159, %158 : vector<8x128xf32>
    %161 = vector.extract_strided_slice %138 {offsets = [0, 256], sizes = [8, 128], strides = [1, 1]} : vector<8x384xf32> to vector<8x128xf32>
    %162 = vector.extract_strided_slice %140 {offsets = [0, 256], sizes = [8, 128], strides = [1, 1]} : vector<8x384xf32> to vector<8x128xf32>
    %163 = arith.addf %162, %12 : vector<8x128xf32>
    %164 = arith.mulf %150, %163 : vector<8x128xf32>
    %165 = arith.addf %161, %164 : vector<8x128xf32>
    %166 = math.tanh %165 : vector<8x128xf32>
    %cst_61 = arith.constant 1.000000e+00 : f32
    %167 = vector.broadcast %cst_61 : f32 to vector<8x128xf32>
    %168 = arith.subf %167, %160 : vector<8x128xf32>
    %169 = arith.mulf %168, %166 : vector<8x128xf32>
    %170 = arith.mulf %160, %88 : vector<8x128xf32>
    %171 = arith.addf %169, %170 : vector<8x128xf32>
    %172 = arith.index_cast %c1_i32 : i32 to index
    %c0_62 = arith.constant 0 : index
    %c0_63 = arith.constant 0 : index
    %173 = vector.load %arg7[%172, %c0_62, %c0_63] : memref<8x8x256xf32, #tpu.memory_space<vmem>>, vector<1x8x128xf32>
    %174 = vector.shape_cast %173 : vector<1x8x128xf32> to vector<8x128xf32>
    %175 = vector.shape_cast %136 : vector<8x128xf32> to vector<1x8x128xf32>
    tpu.vector_store %arg7[%172, %c0_62, %c0_63], %175 {strides = array<i32>} : memref<8x8x256xf32, #tpu.memory_space<vmem>>, vector<1x8x128xf32>,
    %176 = arith.index_cast %97 : i32 to index
    %c0_64 = arith.constant 0 : index
    %c128_65 = arith.constant 128 : index
    %177 = vector.load %arg7[%176, %c0_64, %c128_65] : memref<8x8x256xf32, #tpu.memory_space<vmem>>, vector<1x8x128xf32>
    %178 = vector.shape_cast %177 : vector<1x8x128xf32> to vector<8x128xf32>
    %179 = vector.shape_cast %171 : vector<8x128xf32> to vector<1x8x128xf32>
    tpu.vector_store %arg7[%176, %c0_64, %c128_65], %179 {strides = array<i32>} : memref<8x8x256xf32, #tpu.memory_space<vmem>>, vector<1x8x128xf32>,
    %c2_i32 = arith.constant 2 : i32
    %c7_i32_66 = arith.constant 7 : i32
    %180 = arith.subi %c7_i32_66, %c2_i32 : i32
    %c8_i32_67 = arith.constant 8 : i32
    %181 = arith.muli %c2_i32, %c8_i32_67 : i32
    %182 = tpu.assume_multiple %181, 8 : i32
    %c8_i32_68 = arith.constant 8 : i32
    %183 = arith.muli %180, %c8_i32_68 : i32
    %184 = tpu.assume_multiple %183, 8 : i32
    %185 = arith.index_cast %182 : i32 to index
    %c0_69 = arith.constant 0 : index
    %186 = vector.load %arg8[%185, %c0_69] : memref<64x768xf32, #tpu.memory_space<vmem>>, vector<8x384xf32>
    %c0_70 = arith.constant 0 : index
    %c0_71 = arith.constant 0 : index
    %187 = vector.load %arg3[%c0_70, %c0_71] : memref<128x384xf32, #tpu.memory_space<vmem>>, vector<128x384xf32>
    %cst_72 = arith.constant dense<0.000000e+00> : vector<8x384xf32>
    %188 = tpu.matmul %136, %187, %cst_72 {dimension_numbers = #tpu.dot_dimension_numbers<[1], [0], [0], [1], [0, 0, 1, 1], [], []>} : vector<8x128xf32>, vector<128x384xf32>, vector<8x384xf32> -> vector<8x384xf32>
    %189 = vector.extract_strided_slice %186 {offsets = [0, 0], sizes = [8, 128], strides = [1, 1]} : vector<8x384xf32> to vector<8x128xf32>
    %190 = vector.extract_strided_slice %188 {offsets = [0, 0], sizes = [8, 128], strides = [1, 1]} : vector<8x384xf32> to vector<8x128xf32>
    %191 = arith.addf %189, %190 : vector<8x128xf32>
    %cst_73 = arith.constant 0.000000e+00 : f32
    %192 = vector.broadcast %cst_73 : f32 to vector<8x128xf32>
    %193 = arith.subf %192, %191 : vector<8x128xf32>
    %194 = math.exp %193 : vector<8x128xf32>
    %cst_74 = arith.constant 1.000000e+00 : f32
    %195 = vector.broadcast %cst_74 : f32 to vector<8x128xf32>
    %196 = arith.addf %195, %194 : vector<8x128xf32>
    %cst_75 = arith.constant 1.000000e+00 : f32
    %197 = vector.broadcast %cst_75 : f32 to vector<8x128xf32>
    %198 = arith.divf %197, %196 : vector<8x128xf32>
    %199 = vector.extract_strided_slice %186 {offsets = [0, 128], sizes = [8, 128], strides = [1, 1]} : vector<8x384xf32> to vector<8x128xf32>
    %200 = vector.extract_strided_slice %188 {offsets = [0, 128], sizes = [8, 128], strides = [1, 1]} : vector<8x384xf32> to vector<8x128xf32>
    %201 = arith.addf %199, %200 : vector<8x128xf32>
    %cst_76 = arith.constant 0.000000e+00 : f32
    %202 = vector.broadcast %cst_76 : f32 to vector<8x128xf32>
    %203 = arith.subf %202, %201 : vector<8x128xf32>
    %204 = math.exp %203 : vector<8x128xf32>
    %cst_77 = arith.constant 1.000000e+00 : f32
    %205 = vector.broadcast %cst_77 : f32 to vector<8x128xf32>
    %206 = arith.addf %205, %204 : vector<8x128xf32>
    %cst_78 = arith.constant 1.000000e+00 : f32
    %207 = vector.broadcast %cst_78 : f32 to vector<8x128xf32>
    %208 = arith.divf %207, %206 : vector<8x128xf32>
    %209 = vector.extract_strided_slice %186 {offsets = [0, 256], sizes = [8, 128], strides = [1, 1]} : vector<8x384xf32> to vector<8x128xf32>
    %210 = vector.extract_strided_slice %188 {offsets = [0, 256], sizes = [8, 128], strides = [1, 1]} : vector<8x384xf32> to vector<8x128xf32>
    %211 = arith.addf %210, %9 : vector<8x128xf32>
    %212 = arith.mulf %198, %211 : vector<8x128xf32>
    %213 = arith.addf %209, %212 : vector<8x128xf32>
    %214 = math.tanh %213 : vector<8x128xf32>
    %cst_79 = arith.constant 1.000000e+00 : f32
    %215 = vector.broadcast %cst_79 : f32 to vector<8x128xf32>
    %216 = arith.subf %215, %208 : vector<8x128xf32>
    %217 = arith.mulf %216, %214 : vector<8x128xf32>
    %218 = arith.mulf %208, %136 : vector<8x128xf32>
    %219 = arith.addf %217, %218 : vector<8x128xf32>
    %220 = arith.index_cast %184 : i32 to index
    %c384_80 = arith.constant 384 : index
    %221 = vector.load %arg8[%220, %c384_80] : memref<64x768xf32, #tpu.memory_space<vmem>>, vector<8x384xf32>
    %c0_81 = arith.constant 0 : index
    %c0_82 = arith.constant 0 : index
    %222 = vector.load %arg4[%c0_81, %c0_82] : memref<128x384xf32, #tpu.memory_space<vmem>>, vector<128x384xf32>
    %cst_83 = arith.constant dense<0.000000e+00> : vector<8x384xf32>
    %223 = tpu.matmul %171, %222, %cst_83 {dimension_numbers = #tpu.dot_dimension_numbers<[1], [0], [0], [1], [0, 0, 1, 1], [], []>} : vector<8x128xf32>, vector<128x384xf32>, vector<8x384xf32> -> vector<8x384xf32>
    %224 = vector.extract_strided_slice %221 {offsets = [0, 0], sizes = [8, 128], strides = [1, 1]} : vector<8x384xf32> to vector<8x128xf32>
    %225 = vector.extract_strided_slice %223 {offsets = [0, 0], sizes = [8, 128], strides = [1, 1]} : vector<8x384xf32> to vector<8x128xf32>
    %226 = arith.addf %224, %225 : vector<8x128xf32>
    %cst_84 = arith.constant 0.000000e+00 : f32
    %227 = vector.broadcast %cst_84 : f32 to vector<8x128xf32>
    %228 = arith.subf %227, %226 : vector<8x128xf32>
    %229 = math.exp %228 : vector<8x128xf32>
    %cst_85 = arith.constant 1.000000e+00 : f32
    %230 = vector.broadcast %cst_85 : f32 to vector<8x128xf32>
    %231 = arith.addf %230, %229 : vector<8x128xf32>
    %cst_86 = arith.constant 1.000000e+00 : f32
    %232 = vector.broadcast %cst_86 : f32 to vector<8x128xf32>
    %233 = arith.divf %232, %231 : vector<8x128xf32>
    %234 = vector.extract_strided_slice %221 {offsets = [0, 128], sizes = [8, 128], strides = [1, 1]} : vector<8x384xf32> to vector<8x128xf32>
    %235 = vector.extract_strided_slice %223 {offsets = [0, 128], sizes = [8, 128], strides = [1, 1]} : vector<8x384xf32> to vector<8x128xf32>
    %236 = arith.addf %234, %235 : vector<8x128xf32>
    %cst_87 = arith.constant 0.000000e+00 : f32
    %237 = vector.broadcast %cst_87 : f32 to vector<8x128xf32>
    %238 = arith.subf %237, %236 : vector<8x128xf32>
    %239 = math.exp %238 : vector<8x128xf32>
    %cst_88 = arith.constant 1.000000e+00 : f32
    %240 = vector.broadcast %cst_88 : f32 to vector<8x128xf32>
    %241 = arith.addf %240, %239 : vector<8x128xf32>
    %cst_89 = arith.constant 1.000000e+00 : f32
    %242 = vector.broadcast %cst_89 : f32 to vector<8x128xf32>
    %243 = arith.divf %242, %241 : vector<8x128xf32>
    %244 = vector.extract_strided_slice %221 {offsets = [0, 256], sizes = [8, 128], strides = [1, 1]} : vector<8x384xf32> to vector<8x128xf32>
    %245 = vector.extract_strided_slice %223 {offsets = [0, 256], sizes = [8, 128], strides = [1, 1]} : vector<8x384xf32> to vector<8x128xf32>
    %246 = arith.addf %245, %12 : vector<8x128xf32>
    %247 = arith.mulf %233, %246 : vector<8x128xf32>
    %248 = arith.addf %244, %247 : vector<8x128xf32>
    %249 = math.tanh %248 : vector<8x128xf32>
    %cst_90 = arith.constant 1.000000e+00 : f32
    %250 = vector.broadcast %cst_90 : f32 to vector<8x128xf32>
    %251 = arith.subf %250, %243 : vector<8x128xf32>
    %252 = arith.mulf %251, %249 : vector<8x128xf32>
    %253 = arith.mulf %243, %171 : vector<8x128xf32>
    %254 = arith.addf %252, %253 : vector<8x128xf32>
    %255 = arith.index_cast %c2_i32 : i32 to index
    %c0_91 = arith.constant 0 : index
    %c0_92 = arith.constant 0 : index
    %256 = vector.load %arg7[%255, %c0_91, %c0_92] : memref<8x8x256xf32, #tpu.memory_space<vmem>>, vector<1x8x128xf32>
    %257 = vector.shape_cast %256 : vector<1x8x128xf32> to vector<8x128xf32>
    %258 = vector.shape_cast %219 : vector<8x128xf32> to vector<1x8x128xf32>
    tpu.vector_store %arg7[%255, %c0_91, %c0_92], %258 {strides = array<i32>} : memref<8x8x256xf32, #tpu.memory_space<vmem>>, vector<1x8x128xf32>,
    %259 = arith.index_cast %180 : i32 to index
    %c0_93 = arith.constant 0 : index
    %c128_94 = arith.constant 128 : index
    %260 = vector.load %arg7[%259, %c0_93, %c128_94] : memref<8x8x256xf32, #tpu.memory_space<vmem>>, vector<1x8x128xf32>
    %261 = vector.shape_cast %260 : vector<1x8x128xf32> to vector<8x128xf32>
    %262 = vector.shape_cast %254 : vector<8x128xf32> to vector<1x8x128xf32>
    tpu.vector_store %arg7[%259, %c0_93, %c128_94], %262 {strides = array<i32>} : memref<8x8x256xf32, #tpu.memory_space<vmem>>, vector<1x8x128xf32>,
    %c3_i32 = arith.constant 3 : i32
    %c7_i32_95 = arith.constant 7 : i32
    %263 = arith.subi %c7_i32_95, %c3_i32 : i32
    %c8_i32_96 = arith.constant 8 : i32
    %264 = arith.muli %c3_i32, %c8_i32_96 : i32
    %265 = tpu.assume_multiple %264, 8 : i32
    %c8_i32_97 = arith.constant 8 : i32
    %266 = arith.muli %263, %c8_i32_97 : i32
    %267 = tpu.assume_multiple %266, 8 : i32
    %268 = arith.index_cast %265 : i32 to index
    %c0_98 = arith.constant 0 : index
    %269 = vector.load %arg8[%268, %c0_98] : memref<64x768xf32, #tpu.memory_space<vmem>>, vector<8x384xf32>
    %c0_99 = arith.constant 0 : index
    %c0_100 = arith.constant 0 : index
    %270 = vector.load %arg3[%c0_99, %c0_100] : memref<128x384xf32, #tpu.memory_space<vmem>>, vector<128x384xf32>
    %cst_101 = arith.constant dense<0.000000e+00> : vector<8x384xf32>
    %271 = tpu.matmul %219, %270, %cst_101 {dimension_numbers = #tpu.dot_dimension_numbers<[1], [0], [0], [1], [0, 0, 1, 1], [], []>} : vector<8x128xf32>, vector<128x384xf32>, vector<8x384xf32> -> vector<8x384xf32>
    %272 = vector.extract_strided_slice %269 {offsets = [0, 0], sizes = [8, 128], strides = [1, 1]} : vector<8x384xf32> to vector<8x128xf32>
    %273 = vector.extract_strided_slice %271 {offsets = [0, 0], sizes = [8, 128], strides = [1, 1]} : vector<8x384xf32> to vector<8x128xf32>
    %274 = arith.addf %272, %273 : vector<8x128xf32>
    %cst_102 = arith.constant 0.000000e+00 : f32
    %275 = vector.broadcast %cst_102 : f32 to vector<8x128xf32>
    %276 = arith.subf %275, %274 : vector<8x128xf32>
    %277 = math.exp %276 : vector<8x128xf32>
    %cst_103 = arith.constant 1.000000e+00 : f32
    %278 = vector.broadcast %cst_103 : f32 to vector<8x128xf32>
    %279 = arith.addf %278, %277 : vector<8x128xf32>
    %cst_104 = arith.constant 1.000000e+00 : f32
    %280 = vector.broadcast %cst_104 : f32 to vector<8x128xf32>
    %281 = arith.divf %280, %279 : vector<8x128xf32>
    %282 = vector.extract_strided_slice %269 {offsets = [0, 128], sizes = [8, 128], strides = [1, 1]} : vector<8x384xf32> to vector<8x128xf32>
    %283 = vector.extract_strided_slice %271 {offsets = [0, 128], sizes = [8, 128], strides = [1, 1]} : vector<8x384xf32> to vector<8x128xf32>
    %284 = arith.addf %282, %283 : vector<8x128xf32>
    %cst_105 = arith.constant 0.000000e+00 : f32
    %285 = vector.broadcast %cst_105 : f32 to vector<8x128xf32>
    %286 = arith.subf %285, %284 : vector<8x128xf32>
    %287 = math.exp %286 : vector<8x128xf32>
    %cst_106 = arith.constant 1.000000e+00 : f32
    %288 = vector.broadcast %cst_106 : f32 to vector<8x128xf32>
    %289 = arith.addf %288, %287 : vector<8x128xf32>
    %cst_107 = arith.constant 1.000000e+00 : f32
    %290 = vector.broadcast %cst_107 : f32 to vector<8x128xf32>
    %291 = arith.divf %290, %289 : vector<8x128xf32>
    %292 = vector.extract_strided_slice %269 {offsets = [0, 256], sizes = [8, 128], strides = [1, 1]} : vector<8x384xf32> to vector<8x128xf32>
    %293 = vector.extract_strided_slice %271 {offsets = [0, 256], sizes = [8, 128], strides = [1, 1]} : vector<8x384xf32> to vector<8x128xf32>
    %294 = arith.addf %293, %9 : vector<8x128xf32>
    %295 = arith.mulf %281, %294 : vector<8x128xf32>
    %296 = arith.addf %292, %295 : vector<8x128xf32>
    %297 = math.tanh %296 : vector<8x128xf32>
    %cst_108 = arith.constant 1.000000e+00 : f32
    %298 = vector.broadcast %cst_108 : f32 to vector<8x128xf32>
    %299 = arith.subf %298, %291 : vector<8x128xf32>
    %300 = arith.mulf %299, %297 : vector<8x128xf32>
    %301 = arith.mulf %291, %219 : vector<8x128xf32>
    %302 = arith.addf %300, %301 : vector<8x128xf32>
    %303 = arith.index_cast %267 : i32 to index
    %c384_109 = arith.constant 384 : index
    %304 = vector.load %arg8[%303, %c384_109] : memref<64x768xf32, #tpu.memory_space<vmem>>, vector<8x384xf32>
    %c0_110 = arith.constant 0 : index
    %c0_111 = arith.constant 0 : index
    %305 = vector.load %arg4[%c0_110, %c0_111] : memref<128x384xf32, #tpu.memory_space<vmem>>, vector<128x384xf32>
    %cst_112 = arith.constant dense<0.000000e+00> : vector<8x384xf32>
    %306 = tpu.matmul %254, %305, %cst_112 {dimension_numbers = #tpu.dot_dimension_numbers<[1], [0], [0], [1], [0, 0, 1, 1], [], []>} : vector<8x128xf32>, vector<128x384xf32>, vector<8x384xf32> -> vector<8x384xf32>
    %307 = vector.extract_strided_slice %304 {offsets = [0, 0], sizes = [8, 128], strides = [1, 1]} : vector<8x384xf32> to vector<8x128xf32>
    %308 = vector.extract_strided_slice %306 {offsets = [0, 0], sizes = [8, 128], strides = [1, 1]} : vector<8x384xf32> to vector<8x128xf32>
    %309 = arith.addf %307, %308 : vector<8x128xf32>
    %cst_113 = arith.constant 0.000000e+00 : f32
    %310 = vector.broadcast %cst_113 : f32 to vector<8x128xf32>
    %311 = arith.subf %310, %309 : vector<8x128xf32>
    %312 = math.exp %311 : vector<8x128xf32>
    %cst_114 = arith.constant 1.000000e+00 : f32
    %313 = vector.broadcast %cst_114 : f32 to vector<8x128xf32>
    %314 = arith.addf %313, %312 : vector<8x128xf32>
    %cst_115 = arith.constant 1.000000e+00 : f32
    %315 = vector.broadcast %cst_115 : f32 to vector<8x128xf32>
    %316 = arith.divf %315, %314 : vector<8x128xf32>
    %317 = vector.extract_strided_slice %304 {offsets = [0, 128], sizes = [8, 128], strides = [1, 1]} : vector<8x384xf32> to vector<8x128xf32>
    %318 = vector.extract_strided_slice %306 {offsets = [0, 128], sizes = [8, 128], strides = [1, 1]} : vector<8x384xf32> to vector<8x128xf32>
    %319 = arith.addf %317, %318 : vector<8x128xf32>
    %cst_116 = arith.constant 0.000000e+00 : f32
    %320 = vector.broadcast %cst_116 : f32 to vector<8x128xf32>
    %321 = arith.subf %320, %319 : vector<8x128xf32>
    %322 = math.exp %321 : vector<8x128xf32>
    %cst_117 = arith.constant 1.000000e+00 : f32
    %323 = vector.broadcast %cst_117 : f32 to vector<8x128xf32>
    %324 = arith.addf %323, %322 : vector<8x128xf32>
    %cst_118 = arith.constant 1.000000e+00 : f32
    %325 = vector.broadcast %cst_118 : f32 to vector<8x128xf32>
    %326 = arith.divf %325, %324 : vector<8x128xf32>
    %327 = vector.extract_strided_slice %304 {offsets = [0, 256], sizes = [8, 128], strides = [1, 1]} : vector<8x384xf32> to vector<8x128xf32>
    %328 = vector.extract_strided_slice %306 {offsets = [0, 256], sizes = [8, 128], strides = [1, 1]} : vector<8x384xf32> to vector<8x128xf32>
    %329 = arith.addf %328, %12 : vector<8x128xf32>
    %330 = arith.mulf %316, %329 : vector<8x128xf32>
    %331 = arith.addf %327, %330 : vector<8x128xf32>
    %332 = math.tanh %331 : vector<8x128xf32>
    %cst_119 = arith.constant 1.000000e+00 : f32
    %333 = vector.broadcast %cst_119 : f32 to vector<8x128xf32>
    %334 = arith.subf %333, %326 : vector<8x128xf32>
    %335 = arith.mulf %334, %332 : vector<8x128xf32>
    %336 = arith.mulf %326, %254 : vector<8x128xf32>
    %337 = arith.addf %335, %336 : vector<8x128xf32>
    %338 = arith.index_cast %c3_i32 : i32 to index
    %c0_120 = arith.constant 0 : index
    %c0_121 = arith.constant 0 : index
    %339 = vector.load %arg7[%338, %c0_120, %c0_121] : memref<8x8x256xf32, #tpu.memory_space<vmem>>, vector<1x8x128xf32>
    %340 = vector.shape_cast %339 : vector<1x8x128xf32> to vector<8x128xf32>
    %341 = vector.shape_cast %302 : vector<8x128xf32> to vector<1x8x128xf32>
    tpu.vector_store %arg7[%338, %c0_120, %c0_121], %341 {strides = array<i32>} : memref<8x8x256xf32, #tpu.memory_space<vmem>>, vector<1x8x128xf32>,
    %342 = arith.index_cast %263 : i32 to index
    %c0_122 = arith.constant 0 : index
    %c128_123 = arith.constant 128 : index
    %343 = vector.load %arg7[%342, %c0_122, %c128_123] : memref<8x8x256xf32, #tpu.memory_space<vmem>>, vector<1x8x128xf32>
    %344 = vector.shape_cast %343 : vector<1x8x128xf32> to vector<8x128xf32>
    %345 = vector.shape_cast %337 : vector<8x128xf32> to vector<1x8x128xf32>
    tpu.vector_store %arg7[%342, %c0_122, %c128_123], %345 {strides = array<i32>} : memref<8x8x256xf32, #tpu.memory_space<vmem>>, vector<1x8x128xf32>,
    %c4_i32 = arith.constant 4 : i32
    %c7_i32_124 = arith.constant 7 : i32
    %346 = arith.subi %c7_i32_124, %c4_i32 : i32
    %c8_i32_125 = arith.constant 8 : i32
    %347 = arith.muli %c4_i32, %c8_i32_125 : i32
    %348 = tpu.assume_multiple %347, 8 : i32
    %c8_i32_126 = arith.constant 8 : i32
    %349 = arith.muli %346, %c8_i32_126 : i32
    %350 = tpu.assume_multiple %349, 8 : i32
    %351 = arith.index_cast %348 : i32 to index
    %c0_127 = arith.constant 0 : index
    %352 = vector.load %arg8[%351, %c0_127] : memref<64x768xf32, #tpu.memory_space<vmem>>, vector<8x384xf32>
    %c0_128 = arith.constant 0 : index
    %c0_129 = arith.constant 0 : index
    %353 = vector.load %arg3[%c0_128, %c0_129] : memref<128x384xf32, #tpu.memory_space<vmem>>, vector<128x384xf32>
    %cst_130 = arith.constant dense<0.000000e+00> : vector<8x384xf32>
    %354 = tpu.matmul %302, %353, %cst_130 {dimension_numbers = #tpu.dot_dimension_numbers<[1], [0], [0], [1], [0, 0, 1, 1], [], []>} : vector<8x128xf32>, vector<128x384xf32>, vector<8x384xf32> -> vector<8x384xf32>
    %355 = vector.extract_strided_slice %352 {offsets = [0, 0], sizes = [8, 128], strides = [1, 1]} : vector<8x384xf32> to vector<8x128xf32>
    %356 = vector.extract_strided_slice %354 {offsets = [0, 0], sizes = [8, 128], strides = [1, 1]} : vector<8x384xf32> to vector<8x128xf32>
    %357 = arith.addf %355, %356 : vector<8x128xf32>
    %cst_131 = arith.constant 0.000000e+00 : f32
    %358 = vector.broadcast %cst_131 : f32 to vector<8x128xf32>
    %359 = arith.subf %358, %357 : vector<8x128xf32>
    %360 = math.exp %359 : vector<8x128xf32>
    %cst_132 = arith.constant 1.000000e+00 : f32
    %361 = vector.broadcast %cst_132 : f32 to vector<8x128xf32>
    %362 = arith.addf %361, %360 : vector<8x128xf32>
    %cst_133 = arith.constant 1.000000e+00 : f32
    %363 = vector.broadcast %cst_133 : f32 to vector<8x128xf32>
    %364 = arith.divf %363, %362 : vector<8x128xf32>
    %365 = vector.extract_strided_slice %352 {offsets = [0, 128], sizes = [8, 128], strides = [1, 1]} : vector<8x384xf32> to vector<8x128xf32>
    %366 = vector.extract_strided_slice %354 {offsets = [0, 128], sizes = [8, 128], strides = [1, 1]} : vector<8x384xf32> to vector<8x128xf32>
    %367 = arith.addf %365, %366 : vector<8x128xf32>
    %cst_134 = arith.constant 0.000000e+00 : f32
    %368 = vector.broadcast %cst_134 : f32 to vector<8x128xf32>
    %369 = arith.subf %368, %367 : vector<8x128xf32>
    %370 = math.exp %369 : vector<8x128xf32>
    %cst_135 = arith.constant 1.000000e+00 : f32
    %371 = vector.broadcast %cst_135 : f32 to vector<8x128xf32>
    %372 = arith.addf %371, %370 : vector<8x128xf32>
    %cst_136 = arith.constant 1.000000e+00 : f32
    %373 = vector.broadcast %cst_136 : f32 to vector<8x128xf32>
    %374 = arith.divf %373, %372 : vector<8x128xf32>
    %375 = vector.extract_strided_slice %352 {offsets = [0, 256], sizes = [8, 128], strides = [1, 1]} : vector<8x384xf32> to vector<8x128xf32>
    %376 = vector.extract_strided_slice %354 {offsets = [0, 256], sizes = [8, 128], strides = [1, 1]} : vector<8x384xf32> to vector<8x128xf32>
    %377 = arith.addf %376, %9 : vector<8x128xf32>
    %378 = arith.mulf %364, %377 : vector<8x128xf32>
    %379 = arith.addf %375, %378 : vector<8x128xf32>
    %380 = math.tanh %379 : vector<8x128xf32>
    %cst_137 = arith.constant 1.000000e+00 : f32
    %381 = vector.broadcast %cst_137 : f32 to vector<8x128xf32>
    %382 = arith.subf %381, %374 : vector<8x128xf32>
    %383 = arith.mulf %382, %380 : vector<8x128xf32>
    %384 = arith.mulf %374, %302 : vector<8x128xf32>
    %385 = arith.addf %383, %384 : vector<8x128xf32>
    %386 = arith.index_cast %350 : i32 to index
    %c384_138 = arith.constant 384 : index
    %387 = vector.load %arg8[%386, %c384_138] : memref<64x768xf32, #tpu.memory_space<vmem>>, vector<8x384xf32>
    %c0_139 = arith.constant 0 : index
    %c0_140 = arith.constant 0 : index
    %388 = vector.load %arg4[%c0_139, %c0_140] : memref<128x384xf32, #tpu.memory_space<vmem>>, vector<128x384xf32>
    %cst_141 = arith.constant dense<0.000000e+00> : vector<8x384xf32>
    %389 = tpu.matmul %337, %388, %cst_141 {dimension_numbers = #tpu.dot_dimension_numbers<[1], [0], [0], [1], [0, 0, 1, 1], [], []>} : vector<8x128xf32>, vector<128x384xf32>, vector<8x384xf32> -> vector<8x384xf32>
    %390 = vector.extract_strided_slice %387 {offsets = [0, 0], sizes = [8, 128], strides = [1, 1]} : vector<8x384xf32> to vector<8x128xf32>
    %391 = vector.extract_strided_slice %389 {offsets = [0, 0], sizes = [8, 128], strides = [1, 1]} : vector<8x384xf32> to vector<8x128xf32>
    %392 = arith.addf %390, %391 : vector<8x128xf32>
    %cst_142 = arith.constant 0.000000e+00 : f32
    %393 = vector.broadcast %cst_142 : f32 to vector<8x128xf32>
    %394 = arith.subf %393, %392 : vector<8x128xf32>
    %395 = math.exp %394 : vector<8x128xf32>
    %cst_143 = arith.constant 1.000000e+00 : f32
    %396 = vector.broadcast %cst_143 : f32 to vector<8x128xf32>
    %397 = arith.addf %396, %395 : vector<8x128xf32>
    %cst_144 = arith.constant 1.000000e+00 : f32
    %398 = vector.broadcast %cst_144 : f32 to vector<8x128xf32>
    %399 = arith.divf %398, %397 : vector<8x128xf32>
    %400 = vector.extract_strided_slice %387 {offsets = [0, 128], sizes = [8, 128], strides = [1, 1]} : vector<8x384xf32> to vector<8x128xf32>
    %401 = vector.extract_strided_slice %389 {offsets = [0, 128], sizes = [8, 128], strides = [1, 1]} : vector<8x384xf32> to vector<8x128xf32>
    %402 = arith.addf %400, %401 : vector<8x128xf32>
    %cst_145 = arith.constant 0.000000e+00 : f32
    %403 = vector.broadcast %cst_145 : f32 to vector<8x128xf32>
    %404 = arith.subf %403, %402 : vector<8x128xf32>
    %405 = math.exp %404 : vector<8x128xf32>
    %cst_146 = arith.constant 1.000000e+00 : f32
    %406 = vector.broadcast %cst_146 : f32 to vector<8x128xf32>
    %407 = arith.addf %406, %405 : vector<8x128xf32>
    %cst_147 = arith.constant 1.000000e+00 : f32
    %408 = vector.broadcast %cst_147 : f32 to vector<8x128xf32>
    %409 = arith.divf %408, %407 : vector<8x128xf32>
    %410 = vector.extract_strided_slice %387 {offsets = [0, 256], sizes = [8, 128], strides = [1, 1]} : vector<8x384xf32> to vector<8x128xf32>
    %411 = vector.extract_strided_slice %389 {offsets = [0, 256], sizes = [8, 128], strides = [1, 1]} : vector<8x384xf32> to vector<8x128xf32>
    %412 = arith.addf %411, %12 : vector<8x128xf32>
    %413 = arith.mulf %399, %412 : vector<8x128xf32>
    %414 = arith.addf %410, %413 : vector<8x128xf32>
    %415 = math.tanh %414 : vector<8x128xf32>
    %cst_148 = arith.constant 1.000000e+00 : f32
    %416 = vector.broadcast %cst_148 : f32 to vector<8x128xf32>
    %417 = arith.subf %416, %409 : vector<8x128xf32>
    %418 = arith.mulf %417, %415 : vector<8x128xf32>
    %419 = arith.mulf %409, %337 : vector<8x128xf32>
    %420 = arith.addf %418, %419 : vector<8x128xf32>
    %421 = arith.index_cast %c4_i32 : i32 to index
    %c0_149 = arith.constant 0 : index
    %c0_150 = arith.constant 0 : index
    %422 = vector.load %arg7[%421, %c0_149, %c0_150] : memref<8x8x256xf32, #tpu.memory_space<vmem>>, vector<1x8x128xf32>
    %423 = vector.shape_cast %422 : vector<1x8x128xf32> to vector<8x128xf32>
    %424 = vector.shape_cast %385 : vector<8x128xf32> to vector<1x8x128xf32>
    tpu.vector_store %arg7[%421, %c0_149, %c0_150], %424 {strides = array<i32>} : memref<8x8x256xf32, #tpu.memory_space<vmem>>, vector<1x8x128xf32>,
    %425 = arith.index_cast %346 : i32 to index
    %c0_151 = arith.constant 0 : index
    %c128_152 = arith.constant 128 : index
    %426 = vector.load %arg7[%425, %c0_151, %c128_152] : memref<8x8x256xf32, #tpu.memory_space<vmem>>, vector<1x8x128xf32>
    %427 = vector.shape_cast %426 : vector<1x8x128xf32> to vector<8x128xf32>
    %428 = vector.shape_cast %420 : vector<8x128xf32> to vector<1x8x128xf32>
    tpu.vector_store %arg7[%425, %c0_151, %c128_152], %428 {strides = array<i32>} : memref<8x8x256xf32, #tpu.memory_space<vmem>>, vector<1x8x128xf32>,
    %c5_i32 = arith.constant 5 : i32
    %c7_i32_153 = arith.constant 7 : i32
    %429 = arith.subi %c7_i32_153, %c5_i32 : i32
    %c8_i32_154 = arith.constant 8 : i32
    %430 = arith.muli %c5_i32, %c8_i32_154 : i32
    %431 = tpu.assume_multiple %430, 8 : i32
    %c8_i32_155 = arith.constant 8 : i32
    %432 = arith.muli %429, %c8_i32_155 : i32
    %433 = tpu.assume_multiple %432, 8 : i32
    %434 = arith.index_cast %431 : i32 to index
    %c0_156 = arith.constant 0 : index
    %435 = vector.load %arg8[%434, %c0_156] : memref<64x768xf32, #tpu.memory_space<vmem>>, vector<8x384xf32>
    %c0_157 = arith.constant 0 : index
    %c0_158 = arith.constant 0 : index
    %436 = vector.load %arg3[%c0_157, %c0_158] : memref<128x384xf32, #tpu.memory_space<vmem>>, vector<128x384xf32>
    %cst_159 = arith.constant dense<0.000000e+00> : vector<8x384xf32>
    %437 = tpu.matmul %385, %436, %cst_159 {dimension_numbers = #tpu.dot_dimension_numbers<[1], [0], [0], [1], [0, 0, 1, 1], [], []>} : vector<8x128xf32>, vector<128x384xf32>, vector<8x384xf32> -> vector<8x384xf32>
    %438 = vector.extract_strided_slice %435 {offsets = [0, 0], sizes = [8, 128], strides = [1, 1]} : vector<8x384xf32> to vector<8x128xf32>
    %439 = vector.extract_strided_slice %437 {offsets = [0, 0], sizes = [8, 128], strides = [1, 1]} : vector<8x384xf32> to vector<8x128xf32>
    %440 = arith.addf %438, %439 : vector<8x128xf32>
    %cst_160 = arith.constant 0.000000e+00 : f32
    %441 = vector.broadcast %cst_160 : f32 to vector<8x128xf32>
    %442 = arith.subf %441, %440 : vector<8x128xf32>
    %443 = math.exp %442 : vector<8x128xf32>
    %cst_161 = arith.constant 1.000000e+00 : f32
    %444 = vector.broadcast %cst_161 : f32 to vector<8x128xf32>
    %445 = arith.addf %444, %443 : vector<8x128xf32>
    %cst_162 = arith.constant 1.000000e+00 : f32
    %446 = vector.broadcast %cst_162 : f32 to vector<8x128xf32>
    %447 = arith.divf %446, %445 : vector<8x128xf32>
    %448 = vector.extract_strided_slice %435 {offsets = [0, 128], sizes = [8, 128], strides = [1, 1]} : vector<8x384xf32> to vector<8x128xf32>
    %449 = vector.extract_strided_slice %437 {offsets = [0, 128], sizes = [8, 128], strides = [1, 1]} : vector<8x384xf32> to vector<8x128xf32>
    %450 = arith.addf %448, %449 : vector<8x128xf32>
    %cst_163 = arith.constant 0.000000e+00 : f32
    %451 = vector.broadcast %cst_163 : f32 to vector<8x128xf32>
    %452 = arith.subf %451, %450 : vector<8x128xf32>
    %453 = math.exp %452 : vector<8x128xf32>
    %cst_164 = arith.constant 1.000000e+00 : f32
    %454 = vector.broadcast %cst_164 : f32 to vector<8x128xf32>
    %455 = arith.addf %454, %453 : vector<8x128xf32>
    %cst_165 = arith.constant 1.000000e+00 : f32
    %456 = vector.broadcast %cst_165 : f32 to vector<8x128xf32>
    %457 = arith.divf %456, %455 : vector<8x128xf32>
    %458 = vector.extract_strided_slice %435 {offsets = [0, 256], sizes = [8, 128], strides = [1, 1]} : vector<8x384xf32> to vector<8x128xf32>
    %459 = vector.extract_strided_slice %437 {offsets = [0, 256], sizes = [8, 128], strides = [1, 1]} : vector<8x384xf32> to vector<8x128xf32>
    %460 = arith.addf %459, %9 : vector<8x128xf32>
    %461 = arith.mulf %447, %460 : vector<8x128xf32>
    %462 = arith.addf %458, %461 : vector<8x128xf32>
    %463 = math.tanh %462 : vector<8x128xf32>
    %cst_166 = arith.constant 1.000000e+00 : f32
    %464 = vector.broadcast %cst_166 : f32 to vector<8x128xf32>
    %465 = arith.subf %464, %457 : vector<8x128xf32>
    %466 = arith.mulf %465, %463 : vector<8x128xf32>
    %467 = arith.mulf %457, %385 : vector<8x128xf32>
    %468 = arith.addf %466, %467 : vector<8x128xf32>
    %469 = arith.index_cast %433 : i32 to index
    %c384_167 = arith.constant 384 : index
    %470 = vector.load %arg8[%469, %c384_167] : memref<64x768xf32, #tpu.memory_space<vmem>>, vector<8x384xf32>
    %c0_168 = arith.constant 0 : index
    %c0_169 = arith.constant 0 : index
    %471 = vector.load %arg4[%c0_168, %c0_169] : memref<128x384xf32, #tpu.memory_space<vmem>>, vector<128x384xf32>
    %cst_170 = arith.constant dense<0.000000e+00> : vector<8x384xf32>
    %472 = tpu.matmul %420, %471, %cst_170 {dimension_numbers = #tpu.dot_dimension_numbers<[1], [0], [0], [1], [0, 0, 1, 1], [], []>} : vector<8x128xf32>, vector<128x384xf32>, vector<8x384xf32> -> vector<8x384xf32>
    %473 = vector.extract_strided_slice %470 {offsets = [0, 0], sizes = [8, 128], strides = [1, 1]} : vector<8x384xf32> to vector<8x128xf32>
    %474 = vector.extract_strided_slice %472 {offsets = [0, 0], sizes = [8, 128], strides = [1, 1]} : vector<8x384xf32> to vector<8x128xf32>
    %475 = arith.addf %473, %474 : vector<8x128xf32>
    %cst_171 = arith.constant 0.000000e+00 : f32
    %476 = vector.broadcast %cst_171 : f32 to vector<8x128xf32>
    %477 = arith.subf %476, %475 : vector<8x128xf32>
    %478 = math.exp %477 : vector<8x128xf32>
    %cst_172 = arith.constant 1.000000e+00 : f32
    %479 = vector.broadcast %cst_172 : f32 to vector<8x128xf32>
    %480 = arith.addf %479, %478 : vector<8x128xf32>
    %cst_173 = arith.constant 1.000000e+00 : f32
    %481 = vector.broadcast %cst_173 : f32 to vector<8x128xf32>
    %482 = arith.divf %481, %480 : vector<8x128xf32>
    %483 = vector.extract_strided_slice %470 {offsets = [0, 128], sizes = [8, 128], strides = [1, 1]} : vector<8x384xf32> to vector<8x128xf32>
    %484 = vector.extract_strided_slice %472 {offsets = [0, 128], sizes = [8, 128], strides = [1, 1]} : vector<8x384xf32> to vector<8x128xf32>
    %485 = arith.addf %483, %484 : vector<8x128xf32>
    %cst_174 = arith.constant 0.000000e+00 : f32
    %486 = vector.broadcast %cst_174 : f32 to vector<8x128xf32>
    %487 = arith.subf %486, %485 : vector<8x128xf32>
    %488 = math.exp %487 : vector<8x128xf32>
    %cst_175 = arith.constant 1.000000e+00 : f32
    %489 = vector.broadcast %cst_175 : f32 to vector<8x128xf32>
    %490 = arith.addf %489, %488 : vector<8x128xf32>
    %cst_176 = arith.constant 1.000000e+00 : f32
    %491 = vector.broadcast %cst_176 : f32 to vector<8x128xf32>
    %492 = arith.divf %491, %490 : vector<8x128xf32>
    %493 = vector.extract_strided_slice %470 {offsets = [0, 256], sizes = [8, 128], strides = [1, 1]} : vector<8x384xf32> to vector<8x128xf32>
    %494 = vector.extract_strided_slice %472 {offsets = [0, 256], sizes = [8, 128], strides = [1, 1]} : vector<8x384xf32> to vector<8x128xf32>
    %495 = arith.addf %494, %12 : vector<8x128xf32>
    %496 = arith.mulf %482, %495 : vector<8x128xf32>
    %497 = arith.addf %493, %496 : vector<8x128xf32>
    %498 = math.tanh %497 : vector<8x128xf32>
    %cst_177 = arith.constant 1.000000e+00 : f32
    %499 = vector.broadcast %cst_177 : f32 to vector<8x128xf32>
    %500 = arith.subf %499, %492 : vector<8x128xf32>
    %501 = arith.mulf %500, %498 : vector<8x128xf32>
    %502 = arith.mulf %492, %420 : vector<8x128xf32>
    %503 = arith.addf %501, %502 : vector<8x128xf32>
    %504 = arith.index_cast %c5_i32 : i32 to index
    %c0_178 = arith.constant 0 : index
    %c0_179 = arith.constant 0 : index
    %505 = vector.load %arg7[%504, %c0_178, %c0_179] : memref<8x8x256xf32, #tpu.memory_space<vmem>>, vector<1x8x128xf32>
    %506 = vector.shape_cast %505 : vector<1x8x128xf32> to vector<8x128xf32>
    %507 = vector.shape_cast %468 : vector<8x128xf32> to vector<1x8x128xf32>
    tpu.vector_store %arg7[%504, %c0_178, %c0_179], %507 {strides = array<i32>} : memref<8x8x256xf32, #tpu.memory_space<vmem>>, vector<1x8x128xf32>,
    %508 = arith.index_cast %429 : i32 to index
    %c0_180 = arith.constant 0 : index
    %c128_181 = arith.constant 128 : index
    %509 = vector.load %arg7[%508, %c0_180, %c128_181] : memref<8x8x256xf32, #tpu.memory_space<vmem>>, vector<1x8x128xf32>
    %510 = vector.shape_cast %509 : vector<1x8x128xf32> to vector<8x128xf32>
    %511 = vector.shape_cast %503 : vector<8x128xf32> to vector<1x8x128xf32>
    tpu.vector_store %arg7[%508, %c0_180, %c128_181], %511 {strides = array<i32>} : memref<8x8x256xf32, #tpu.memory_space<vmem>>, vector<1x8x128xf32>,
    %c6_i32 = arith.constant 6 : i32
    %c7_i32_182 = arith.constant 7 : i32
    %512 = arith.subi %c7_i32_182, %c6_i32 : i32
    %c8_i32_183 = arith.constant 8 : i32
    %513 = arith.muli %c6_i32, %c8_i32_183 : i32
    %514 = tpu.assume_multiple %513, 8 : i32
    %c8_i32_184 = arith.constant 8 : i32
    %515 = arith.muli %512, %c8_i32_184 : i32
    %516 = tpu.assume_multiple %515, 8 : i32
    %517 = arith.index_cast %514 : i32 to index
    %c0_185 = arith.constant 0 : index
    %518 = vector.load %arg8[%517, %c0_185] : memref<64x768xf32, #tpu.memory_space<vmem>>, vector<8x384xf32>
    %c0_186 = arith.constant 0 : index
    %c0_187 = arith.constant 0 : index
    %519 = vector.load %arg3[%c0_186, %c0_187] : memref<128x384xf32, #tpu.memory_space<vmem>>, vector<128x384xf32>
    %cst_188 = arith.constant dense<0.000000e+00> : vector<8x384xf32>
    %520 = tpu.matmul %468, %519, %cst_188 {dimension_numbers = #tpu.dot_dimension_numbers<[1], [0], [0], [1], [0, 0, 1, 1], [], []>} : vector<8x128xf32>, vector<128x384xf32>, vector<8x384xf32> -> vector<8x384xf32>
    %521 = vector.extract_strided_slice %518 {offsets = [0, 0], sizes = [8, 128], strides = [1, 1]} : vector<8x384xf32> to vector<8x128xf32>
    %522 = vector.extract_strided_slice %520 {offsets = [0, 0], sizes = [8, 128], strides = [1, 1]} : vector<8x384xf32> to vector<8x128xf32>
    %523 = arith.addf %521, %522 : vector<8x128xf32>
    %cst_189 = arith.constant 0.000000e+00 : f32
    %524 = vector.broadcast %cst_189 : f32 to vector<8x128xf32>
    %525 = arith.subf %524, %523 : vector<8x128xf32>
    %526 = math.exp %525 : vector<8x128xf32>
    %cst_190 = arith.constant 1.000000e+00 : f32
    %527 = vector.broadcast %cst_190 : f32 to vector<8x128xf32>
    %528 = arith.addf %527, %526 : vector<8x128xf32>
    %cst_191 = arith.constant 1.000000e+00 : f32
    %529 = vector.broadcast %cst_191 : f32 to vector<8x128xf32>
    %530 = arith.divf %529, %528 : vector<8x128xf32>
    %531 = vector.extract_strided_slice %518 {offsets = [0, 128], sizes = [8, 128], strides = [1, 1]} : vector<8x384xf32> to vector<8x128xf32>
    %532 = vector.extract_strided_slice %520 {offsets = [0, 128], sizes = [8, 128], strides = [1, 1]} : vector<8x384xf32> to vector<8x128xf32>
    %533 = arith.addf %531, %532 : vector<8x128xf32>
    %cst_192 = arith.constant 0.000000e+00 : f32
    %534 = vector.broadcast %cst_192 : f32 to vector<8x128xf32>
    %535 = arith.subf %534, %533 : vector<8x128xf32>
    %536 = math.exp %535 : vector<8x128xf32>
    %cst_193 = arith.constant 1.000000e+00 : f32
    %537 = vector.broadcast %cst_193 : f32 to vector<8x128xf32>
    %538 = arith.addf %537, %536 : vector<8x128xf32>
    %cst_194 = arith.constant 1.000000e+00 : f32
    %539 = vector.broadcast %cst_194 : f32 to vector<8x128xf32>
    %540 = arith.divf %539, %538 : vector<8x128xf32>
    %541 = vector.extract_strided_slice %518 {offsets = [0, 256], sizes = [8, 128], strides = [1, 1]} : vector<8x384xf32> to vector<8x128xf32>
    %542 = vector.extract_strided_slice %520 {offsets = [0, 256], sizes = [8, 128], strides = [1, 1]} : vector<8x384xf32> to vector<8x128xf32>
    %543 = arith.addf %542, %9 : vector<8x128xf32>
    %544 = arith.mulf %530, %543 : vector<8x128xf32>
    %545 = arith.addf %541, %544 : vector<8x128xf32>
    %546 = math.tanh %545 : vector<8x128xf32>
    %cst_195 = arith.constant 1.000000e+00 : f32
    %547 = vector.broadcast %cst_195 : f32 to vector<8x128xf32>
    %548 = arith.subf %547, %540 : vector<8x128xf32>
    %549 = arith.mulf %548, %546 : vector<8x128xf32>
    %550 = arith.mulf %540, %468 : vector<8x128xf32>
    %551 = arith.addf %549, %550 : vector<8x128xf32>
    %552 = arith.index_cast %516 : i32 to index
    %c384_196 = arith.constant 384 : index
    %553 = vector.load %arg8[%552, %c384_196] : memref<64x768xf32, #tpu.memory_space<vmem>>, vector<8x384xf32>
    %c0_197 = arith.constant 0 : index
    %c0_198 = arith.constant 0 : index
    %554 = vector.load %arg4[%c0_197, %c0_198] : memref<128x384xf32, #tpu.memory_space<vmem>>, vector<128x384xf32>
    %cst_199 = arith.constant dense<0.000000e+00> : vector<8x384xf32>
    %555 = tpu.matmul %503, %554, %cst_199 {dimension_numbers = #tpu.dot_dimension_numbers<[1], [0], [0], [1], [0, 0, 1, 1], [], []>} : vector<8x128xf32>, vector<128x384xf32>, vector<8x384xf32> -> vector<8x384xf32>
    %556 = vector.extract_strided_slice %553 {offsets = [0, 0], sizes = [8, 128], strides = [1, 1]} : vector<8x384xf32> to vector<8x128xf32>
    %557 = vector.extract_strided_slice %555 {offsets = [0, 0], sizes = [8, 128], strides = [1, 1]} : vector<8x384xf32> to vector<8x128xf32>
    %558 = arith.addf %556, %557 : vector<8x128xf32>
    %cst_200 = arith.constant 0.000000e+00 : f32
    %559 = vector.broadcast %cst_200 : f32 to vector<8x128xf32>
    %560 = arith.subf %559, %558 : vector<8x128xf32>
    %561 = math.exp %560 : vector<8x128xf32>
    %cst_201 = arith.constant 1.000000e+00 : f32
    %562 = vector.broadcast %cst_201 : f32 to vector<8x128xf32>
    %563 = arith.addf %562, %561 : vector<8x128xf32>
    %cst_202 = arith.constant 1.000000e+00 : f32
    %564 = vector.broadcast %cst_202 : f32 to vector<8x128xf32>
    %565 = arith.divf %564, %563 : vector<8x128xf32>
    %566 = vector.extract_strided_slice %553 {offsets = [0, 128], sizes = [8, 128], strides = [1, 1]} : vector<8x384xf32> to vector<8x128xf32>
    %567 = vector.extract_strided_slice %555 {offsets = [0, 128], sizes = [8, 128], strides = [1, 1]} : vector<8x384xf32> to vector<8x128xf32>
    %568 = arith.addf %566, %567 : vector<8x128xf32>
    %cst_203 = arith.constant 0.000000e+00 : f32
    %569 = vector.broadcast %cst_203 : f32 to vector<8x128xf32>
    %570 = arith.subf %569, %568 : vector<8x128xf32>
    %571 = math.exp %570 : vector<8x128xf32>
    %cst_204 = arith.constant 1.000000e+00 : f32
    %572 = vector.broadcast %cst_204 : f32 to vector<8x128xf32>
    %573 = arith.addf %572, %571 : vector<8x128xf32>
    %cst_205 = arith.constant 1.000000e+00 : f32
    %574 = vector.broadcast %cst_205 : f32 to vector<8x128xf32>
    %575 = arith.divf %574, %573 : vector<8x128xf32>
    %576 = vector.extract_strided_slice %553 {offsets = [0, 256], sizes = [8, 128], strides = [1, 1]} : vector<8x384xf32> to vector<8x128xf32>
    %577 = vector.extract_strided_slice %555 {offsets = [0, 256], sizes = [8, 128], strides = [1, 1]} : vector<8x384xf32> to vector<8x128xf32>
    %578 = arith.addf %577, %12 : vector<8x128xf32>
    %579 = arith.mulf %565, %578 : vector<8x128xf32>
    %580 = arith.addf %576, %579 : vector<8x128xf32>
    %581 = math.tanh %580 : vector<8x128xf32>
    %cst_206 = arith.constant 1.000000e+00 : f32
    %582 = vector.broadcast %cst_206 : f32 to vector<8x128xf32>
    %583 = arith.subf %582, %575 : vector<8x128xf32>
    %584 = arith.mulf %583, %581 : vector<8x128xf32>
    %585 = arith.mulf %575, %503 : vector<8x128xf32>
    %586 = arith.addf %584, %585 : vector<8x128xf32>
    %587 = arith.index_cast %c6_i32 : i32 to index
    %c0_207 = arith.constant 0 : index
    %c0_208 = arith.constant 0 : index
    %588 = vector.load %arg7[%587, %c0_207, %c0_208] : memref<8x8x256xf32, #tpu.memory_space<vmem>>, vector<1x8x128xf32>
    %589 = vector.shape_cast %588 : vector<1x8x128xf32> to vector<8x128xf32>
    %590 = vector.shape_cast %551 : vector<8x128xf32> to vector<1x8x128xf32>
    tpu.vector_store %arg7[%587, %c0_207, %c0_208], %590 {strides = array<i32>} : memref<8x8x256xf32, #tpu.memory_space<vmem>>, vector<1x8x128xf32>,
    %591 = arith.index_cast %512 : i32 to index
    %c0_209 = arith.constant 0 : index
    %c128_210 = arith.constant 128 : index
    %592 = vector.load %arg7[%591, %c0_209, %c128_210] : memref<8x8x256xf32, #tpu.memory_space<vmem>>, vector<1x8x128xf32>
    %593 = vector.shape_cast %592 : vector<1x8x128xf32> to vector<8x128xf32>
    %594 = vector.shape_cast %586 : vector<8x128xf32> to vector<1x8x128xf32>
    tpu.vector_store %arg7[%591, %c0_209, %c128_210], %594 {strides = array<i32>} : memref<8x8x256xf32, #tpu.memory_space<vmem>>, vector<1x8x128xf32>,
    %c7_i32_211 = arith.constant 7 : i32
    %c7_i32_212 = arith.constant 7 : i32
    %595 = arith.subi %c7_i32_212, %c7_i32_211 : i32
    %c8_i32_213 = arith.constant 8 : i32
    %596 = arith.muli %c7_i32_211, %c8_i32_213 : i32
    %597 = tpu.assume_multiple %596, 8 : i32
    %c8_i32_214 = arith.constant 8 : i32
    %598 = arith.muli %595, %c8_i32_214 : i32
    %599 = tpu.assume_multiple %598, 8 : i32
    %600 = arith.index_cast %597 : i32 to index
    %c0_215 = arith.constant 0 : index
    %601 = vector.load %arg8[%600, %c0_215] : memref<64x768xf32, #tpu.memory_space<vmem>>, vector<8x384xf32>
    %c0_216 = arith.constant 0 : index
    %c0_217 = arith.constant 0 : index
    %602 = vector.load %arg3[%c0_216, %c0_217] : memref<128x384xf32, #tpu.memory_space<vmem>>, vector<128x384xf32>
    %cst_218 = arith.constant dense<0.000000e+00> : vector<8x384xf32>
    %603 = tpu.matmul %551, %602, %cst_218 {dimension_numbers = #tpu.dot_dimension_numbers<[1], [0], [0], [1], [0, 0, 1, 1], [], []>} : vector<8x128xf32>, vector<128x384xf32>, vector<8x384xf32> -> vector<8x384xf32>
    %604 = vector.extract_strided_slice %601 {offsets = [0, 0], sizes = [8, 128], strides = [1, 1]} : vector<8x384xf32> to vector<8x128xf32>
    %605 = vector.extract_strided_slice %603 {offsets = [0, 0], sizes = [8, 128], strides = [1, 1]} : vector<8x384xf32> to vector<8x128xf32>
    %606 = arith.addf %604, %605 : vector<8x128xf32>
    %cst_219 = arith.constant 0.000000e+00 : f32
    %607 = vector.broadcast %cst_219 : f32 to vector<8x128xf32>
    %608 = arith.subf %607, %606 : vector<8x128xf32>
    %609 = math.exp %608 : vector<8x128xf32>
    %cst_220 = arith.constant 1.000000e+00 : f32
    %610 = vector.broadcast %cst_220 : f32 to vector<8x128xf32>
    %611 = arith.addf %610, %609 : vector<8x128xf32>
    %cst_221 = arith.constant 1.000000e+00 : f32
    %612 = vector.broadcast %cst_221 : f32 to vector<8x128xf32>
    %613 = arith.divf %612, %611 : vector<8x128xf32>
    %614 = vector.extract_strided_slice %601 {offsets = [0, 128], sizes = [8, 128], strides = [1, 1]} : vector<8x384xf32> to vector<8x128xf32>
    %615 = vector.extract_strided_slice %603 {offsets = [0, 128], sizes = [8, 128], strides = [1, 1]} : vector<8x384xf32> to vector<8x128xf32>
    %616 = arith.addf %614, %615 : vector<8x128xf32>
    %cst_222 = arith.constant 0.000000e+00 : f32
    %617 = vector.broadcast %cst_222 : f32 to vector<8x128xf32>
    %618 = arith.subf %617, %616 : vector<8x128xf32>
    %619 = math.exp %618 : vector<8x128xf32>
    %cst_223 = arith.constant 1.000000e+00 : f32
    %620 = vector.broadcast %cst_223 : f32 to vector<8x128xf32>
    %621 = arith.addf %620, %619 : vector<8x128xf32>
    %cst_224 = arith.constant 1.000000e+00 : f32
    %622 = vector.broadcast %cst_224 : f32 to vector<8x128xf32>
    %623 = arith.divf %622, %621 : vector<8x128xf32>
    %624 = vector.extract_strided_slice %601 {offsets = [0, 256], sizes = [8, 128], strides = [1, 1]} : vector<8x384xf32> to vector<8x128xf32>
    %625 = vector.extract_strided_slice %603 {offsets = [0, 256], sizes = [8, 128], strides = [1, 1]} : vector<8x384xf32> to vector<8x128xf32>
    %626 = arith.addf %625, %9 : vector<8x128xf32>
    %627 = arith.mulf %613, %626 : vector<8x128xf32>
    %628 = arith.addf %624, %627 : vector<8x128xf32>
    %629 = math.tanh %628 : vector<8x128xf32>
    %cst_225 = arith.constant 1.000000e+00 : f32
    %630 = vector.broadcast %cst_225 : f32 to vector<8x128xf32>
    %631 = arith.subf %630, %623 : vector<8x128xf32>
    %632 = arith.mulf %631, %629 : vector<8x128xf32>
    %633 = arith.mulf %623, %551 : vector<8x128xf32>
    %634 = arith.addf %632, %633 : vector<8x128xf32>
    %635 = arith.index_cast %599 : i32 to index
    %c384_226 = arith.constant 384 : index
    %636 = vector.load %arg8[%635, %c384_226] : memref<64x768xf32, #tpu.memory_space<vmem>>, vector<8x384xf32>
    %c0_227 = arith.constant 0 : index
    %c0_228 = arith.constant 0 : index
    %637 = vector.load %arg4[%c0_227, %c0_228] : memref<128x384xf32, #tpu.memory_space<vmem>>, vector<128x384xf32>
    %cst_229 = arith.constant dense<0.000000e+00> : vector<8x384xf32>
    %638 = tpu.matmul %586, %637, %cst_229 {dimension_numbers = #tpu.dot_dimension_numbers<[1], [0], [0], [1], [0, 0, 1, 1], [], []>} : vector<8x128xf32>, vector<128x384xf32>, vector<8x384xf32> -> vector<8x384xf32>
    %639 = vector.extract_strided_slice %636 {offsets = [0, 0], sizes = [8, 128], strides = [1, 1]} : vector<8x384xf32> to vector<8x128xf32>
    %640 = vector.extract_strided_slice %638 {offsets = [0, 0], sizes = [8, 128], strides = [1, 1]} : vector<8x384xf32> to vector<8x128xf32>
    %641 = arith.addf %639, %640 : vector<8x128xf32>
    %cst_230 = arith.constant 0.000000e+00 : f32
    %642 = vector.broadcast %cst_230 : f32 to vector<8x128xf32>
    %643 = arith.subf %642, %641 : vector<8x128xf32>
    %644 = math.exp %643 : vector<8x128xf32>
    %cst_231 = arith.constant 1.000000e+00 : f32
    %645 = vector.broadcast %cst_231 : f32 to vector<8x128xf32>
    %646 = arith.addf %645, %644 : vector<8x128xf32>
    %cst_232 = arith.constant 1.000000e+00 : f32
    %647 = vector.broadcast %cst_232 : f32 to vector<8x128xf32>
    %648 = arith.divf %647, %646 : vector<8x128xf32>
    %649 = vector.extract_strided_slice %636 {offsets = [0, 128], sizes = [8, 128], strides = [1, 1]} : vector<8x384xf32> to vector<8x128xf32>
    %650 = vector.extract_strided_slice %638 {offsets = [0, 128], sizes = [8, 128], strides = [1, 1]} : vector<8x384xf32> to vector<8x128xf32>
    %651 = arith.addf %649, %650 : vector<8x128xf32>
    %cst_233 = arith.constant 0.000000e+00 : f32
    %652 = vector.broadcast %cst_233 : f32 to vector<8x128xf32>
    %653 = arith.subf %652, %651 : vector<8x128xf32>
    %654 = math.exp %653 : vector<8x128xf32>
    %cst_234 = arith.constant 1.000000e+00 : f32
    %655 = vector.broadcast %cst_234 : f32 to vector<8x128xf32>
    %656 = arith.addf %655, %654 : vector<8x128xf32>
    %cst_235 = arith.constant 1.000000e+00 : f32
    %657 = vector.broadcast %cst_235 : f32 to vector<8x128xf32>
    %658 = arith.divf %657, %656 : vector<8x128xf32>
    %659 = vector.extract_strided_slice %636 {offsets = [0, 256], sizes = [8, 128], strides = [1, 1]} : vector<8x384xf32> to vector<8x128xf32>
    %660 = vector.extract_strided_slice %638 {offsets = [0, 256], sizes = [8, 128], strides = [1, 1]} : vector<8x384xf32> to vector<8x128xf32>
    %661 = arith.addf %660, %12 : vector<8x128xf32>
    %662 = arith.mulf %648, %661 : vector<8x128xf32>
    %663 = arith.addf %659, %662 : vector<8x128xf32>
    %664 = math.tanh %663 : vector<8x128xf32>
    %cst_236 = arith.constant 1.000000e+00 : f32
    %665 = vector.broadcast %cst_236 : f32 to vector<8x128xf32>
    %666 = arith.subf %665, %658 : vector<8x128xf32>
    %667 = arith.mulf %666, %664 : vector<8x128xf32>
    %668 = arith.mulf %658, %586 : vector<8x128xf32>
    %669 = arith.addf %667, %668 : vector<8x128xf32>
    %670 = arith.index_cast %c7_i32_211 : i32 to index
    %c0_237 = arith.constant 0 : index
    %c0_238 = arith.constant 0 : index
    %671 = vector.load %arg7[%670, %c0_237, %c0_238] : memref<8x8x256xf32, #tpu.memory_space<vmem>>, vector<1x8x128xf32>
    %672 = vector.shape_cast %671 : vector<1x8x128xf32> to vector<8x128xf32>
    %673 = vector.shape_cast %634 : vector<8x128xf32> to vector<1x8x128xf32>
    tpu.vector_store %arg7[%670, %c0_237, %c0_238], %673 {strides = array<i32>} : memref<8x8x256xf32, #tpu.memory_space<vmem>>, vector<1x8x128xf32>,
    %674 = arith.index_cast %595 : i32 to index
    %c0_239 = arith.constant 0 : index
    %c128_240 = arith.constant 128 : index
    %675 = vector.load %arg7[%674, %c0_239, %c128_240] : memref<8x8x256xf32, #tpu.memory_space<vmem>>, vector<1x8x128xf32>
    %676 = vector.shape_cast %675 : vector<1x8x128xf32> to vector<8x128xf32>
    %677 = vector.shape_cast %669 : vector<8x128xf32> to vector<1x8x128xf32>
    tpu.vector_store %arg7[%674, %c0_239, %c128_240], %677 {strides = array<i32>} : memref<8x8x256xf32, #tpu.memory_space<vmem>>, vector<1x8x128xf32>,
    %c8_i32_241 = arith.constant 8 : i32
    return
  }
}

module attributes {stable_mosaic.version = 11 : i64} {
  func.func @_gru_bidi_last_kernel(%arg0: memref<64x256xf32, #tpu.memory_space<vmem>>, %arg1: memref<256x384xf32, #tpu.memory_space<vmem>>, %arg2: memref<1x384xf32, #tpu.memory_space<vmem>>, %arg3: memref<256x384xf32, #tpu.memory_space<vmem>>, %arg4: memref<1x384xf32, #tpu.memory_space<vmem>>, %arg5: memref<128x384xf32, #tpu.memory_space<vmem>>, %arg6: memref<1x128xf32, #tpu.memory_space<vmem>>, %arg7: memref<1x128xf32, #tpu.memory_space<vmem>>, %arg8: memref<128x3xf32, #tpu.memory_space<vmem>>, %arg9: memref<128x3xf32, #tpu.memory_space<vmem>>, %arg10: memref<1x3xf32, #tpu.memory_space<vmem>>, %arg11: memref<8x3xf32, #tpu.memory_space<vmem>>, %arg12: memref<64x384xf32, #tpu.memory_space<vmem>>) attributes {dimension_semantics = [], scalar_prefetch = 0 : i64, scratch_operands = 1 : i64, tpu.core_type = #tpu.core_type<tc>} {
    %c0 = arith.constant 0 : index
    %c0_0 = arith.constant 0 : index
    %0 = vector.load %arg0[%c0, %c0_0] : memref<64x256xf32, #tpu.memory_space<vmem>>, vector<64x256xf32>
    %c0_1 = arith.constant 0 : index
    %c0_2 = arith.constant 0 : index
    %1 = vector.load %arg1[%c0_1, %c0_2] : memref<256x384xf32, #tpu.memory_space<vmem>>, vector<256x384xf32>
    %cst = arith.constant dense<0.000000e+00> : vector<64x384xf32>
    %2 = tpu.matmul %0, %1, %cst {dimension_numbers = #tpu.dot_dimension_numbers<[1], [0], [0], [1], [0, 0, 1, 1], [], []>} : vector<64x256xf32>, vector<256x384xf32>, vector<64x384xf32> -> vector<64x384xf32>
    %c0_3 = arith.constant 0 : index
    %c0_4 = arith.constant 0 : index
    %3 = vector.load %arg2[%c0_3, %c0_4] : memref<1x384xf32, #tpu.memory_space<vmem>>, vector<1x384xf32>
    %4 = vector.broadcast %3 : vector<1x384xf32> to vector<64x384xf32>
    %5 = arith.addf %2, %4 : vector<64x384xf32>
    %c0_5 = arith.constant 0 : index
    %c0_6 = arith.constant 0 : index
    %6 = vector.load %arg12[%c0_5, %c0_6] : memref<64x384xf32, #tpu.memory_space<vmem>>, vector<64x384xf32>
    tpu.vector_store %arg12[%c0_5, %c0_6], %5 {strides = array<i32>} : memref<64x384xf32, #tpu.memory_space<vmem>>, vector<64x384xf32>,
    %c0_7 = arith.constant 0 : index
    %c0_8 = arith.constant 0 : index
    %7 = vector.load %arg6[%c0_7, %c0_8] : memref<1x128xf32, #tpu.memory_space<vmem>>, vector<1x128xf32>
    %8 = vector.shape_cast %7 : vector<1x128xf32> to vector<1x128xf32>
    %9 = vector.broadcast %8 : vector<1x128xf32> to vector<8x128xf32>
    %c0_9 = arith.constant 0 : index
    %c0_10 = arith.constant 0 : index
    %10 = vector.load %arg7[%c0_9, %c0_10] : memref<1x128xf32, #tpu.memory_space<vmem>>, vector<1x128xf32>
    %11 = vector.shape_cast %10 : vector<1x128xf32> to vector<1x128xf32>
    %12 = vector.broadcast %11 : vector<1x128xf32> to vector<8x128xf32>
    %cst_11 = arith.constant 0.000000e+00 : f32
    %13 = vector.broadcast %cst_11 : f32 to vector<8x128xf32>
    %c0_i32 = arith.constant 0 : i32
    %c8_i32 = arith.constant 8 : i32
    %14 = arith.muli %c0_i32, %c8_i32 : i32
    %15 = tpu.assume_multiple %14, 8 : i32
    %16 = arith.index_cast %15 : i32 to index
    %c0_12 = arith.constant 0 : index
    %17 = vector.load %arg12[%16, %c0_12] : memref<64x384xf32, #tpu.memory_space<vmem>>, vector<8x384xf32>
    %c0_13 = arith.constant 0 : index
    %c0_14 = arith.constant 0 : index
    %18 = vector.load %arg5[%c0_13, %c0_14] : memref<128x384xf32, #tpu.memory_space<vmem>>, vector<128x384xf32>
    %cst_15 = arith.constant dense<0.000000e+00> : vector<8x384xf32>
    %19 = tpu.matmul %13, %18, %cst_15 {dimension_numbers = #tpu.dot_dimension_numbers<[1], [0], [0], [1], [0, 0, 1, 1], [], []>} : vector<8x128xf32>, vector<128x384xf32>, vector<8x384xf32> -> vector<8x384xf32>
    %20 = vector.extract_strided_slice %17 {offsets = [0, 0], sizes = [8, 128], strides = [1, 1]} : vector<8x384xf32> to vector<8x128xf32>
    %21 = vector.extract_strided_slice %19 {offsets = [0, 0], sizes = [8, 128], strides = [1, 1]} : vector<8x384xf32> to vector<8x128xf32>
    %22 = arith.addf %20, %21 : vector<8x128xf32>
    %cst_16 = arith.constant 0.000000e+00 : f32
    %23 = vector.broadcast %cst_16 : f32 to vector<8x128xf32>
    %24 = arith.subf %23, %22 : vector<8x128xf32>
    %25 = math.exp %24 : vector<8x128xf32>
    %cst_17 = arith.constant 1.000000e+00 : f32
    %26 = vector.broadcast %cst_17 : f32 to vector<8x128xf32>
    %27 = arith.addf %26, %25 : vector<8x128xf32>
    %cst_18 = arith.constant 1.000000e+00 : f32
    %28 = vector.broadcast %cst_18 : f32 to vector<8x128xf32>
    %29 = arith.divf %28, %27 : vector<8x128xf32>
    %30 = vector.extract_strided_slice %17 {offsets = [0, 128], sizes = [8, 128], strides = [1, 1]} : vector<8x384xf32> to vector<8x128xf32>
    %31 = vector.extract_strided_slice %19 {offsets = [0, 128], sizes = [8, 128], strides = [1, 1]} : vector<8x384xf32> to vector<8x128xf32>
    %32 = arith.addf %30, %31 : vector<8x128xf32>
    %cst_19 = arith.constant 0.000000e+00 : f32
    %33 = vector.broadcast %cst_19 : f32 to vector<8x128xf32>
    %34 = arith.subf %33, %32 : vector<8x128xf32>
    %35 = math.exp %34 : vector<8x128xf32>
    %cst_20 = arith.constant 1.000000e+00 : f32
    %36 = vector.broadcast %cst_20 : f32 to vector<8x128xf32>
    %37 = arith.addf %36, %35 : vector<8x128xf32>
    %cst_21 = arith.constant 1.000000e+00 : f32
    %38 = vector.broadcast %cst_21 : f32 to vector<8x128xf32>
    %39 = arith.divf %38, %37 : vector<8x128xf32>
    %40 = vector.extract_strided_slice %17 {offsets = [0, 256], sizes = [8, 128], strides = [1, 1]} : vector<8x384xf32> to vector<8x128xf32>
    %41 = vector.extract_strided_slice %19 {offsets = [0, 256], sizes = [8, 128], strides = [1, 1]} : vector<8x384xf32> to vector<8x128xf32>
    %42 = arith.addf %41, %9 : vector<8x128xf32>
    %43 = arith.mulf %29, %42 : vector<8x128xf32>
    %44 = arith.addf %40, %43 : vector<8x128xf32>
    %45 = math.tanh %44 : vector<8x128xf32>
    %cst_22 = arith.constant 1.000000e+00 : f32
    %46 = vector.broadcast %cst_22 : f32 to vector<8x128xf32>
    %47 = arith.subf %46, %39 : vector<8x128xf32>
    %48 = arith.mulf %47, %45 : vector<8x128xf32>
    %49 = arith.mulf %39, %13 : vector<8x128xf32>
    %50 = arith.addf %48, %49 : vector<8x128xf32>
    %c1_i32 = arith.constant 1 : i32
    %c8_i32_23 = arith.constant 8 : i32
    %51 = arith.muli %c1_i32, %c8_i32_23 : i32
    %52 = tpu.assume_multiple %51, 8 : i32
    %53 = arith.index_cast %52 : i32 to index
    %c0_24 = arith.constant 0 : index
    %54 = vector.load %arg12[%53, %c0_24] : memref<64x384xf32, #tpu.memory_space<vmem>>, vector<8x384xf32>
    %c0_25 = arith.constant 0 : index
    %c0_26 = arith.constant 0 : index
    %55 = vector.load %arg5[%c0_25, %c0_26] : memref<128x384xf32, #tpu.memory_space<vmem>>, vector<128x384xf32>
    %cst_27 = arith.constant dense<0.000000e+00> : vector<8x384xf32>
    %56 = tpu.matmul %50, %55, %cst_27 {dimension_numbers = #tpu.dot_dimension_numbers<[1], [0], [0], [1], [0, 0, 1, 1], [], []>} : vector<8x128xf32>, vector<128x384xf32>, vector<8x384xf32> -> vector<8x384xf32>
    %57 = vector.extract_strided_slice %54 {offsets = [0, 0], sizes = [8, 128], strides = [1, 1]} : vector<8x384xf32> to vector<8x128xf32>
    %58 = vector.extract_strided_slice %56 {offsets = [0, 0], sizes = [8, 128], strides = [1, 1]} : vector<8x384xf32> to vector<8x128xf32>
    %59 = arith.addf %57, %58 : vector<8x128xf32>
    %cst_28 = arith.constant 0.000000e+00 : f32
    %60 = vector.broadcast %cst_28 : f32 to vector<8x128xf32>
    %61 = arith.subf %60, %59 : vector<8x128xf32>
    %62 = math.exp %61 : vector<8x128xf32>
    %cst_29 = arith.constant 1.000000e+00 : f32
    %63 = vector.broadcast %cst_29 : f32 to vector<8x128xf32>
    %64 = arith.addf %63, %62 : vector<8x128xf32>
    %cst_30 = arith.constant 1.000000e+00 : f32
    %65 = vector.broadcast %cst_30 : f32 to vector<8x128xf32>
    %66 = arith.divf %65, %64 : vector<8x128xf32>
    %67 = vector.extract_strided_slice %54 {offsets = [0, 128], sizes = [8, 128], strides = [1, 1]} : vector<8x384xf32> to vector<8x128xf32>
    %68 = vector.extract_strided_slice %56 {offsets = [0, 128], sizes = [8, 128], strides = [1, 1]} : vector<8x384xf32> to vector<8x128xf32>
    %69 = arith.addf %67, %68 : vector<8x128xf32>
    %cst_31 = arith.constant 0.000000e+00 : f32
    %70 = vector.broadcast %cst_31 : f32 to vector<8x128xf32>
    %71 = arith.subf %70, %69 : vector<8x128xf32>
    %72 = math.exp %71 : vector<8x128xf32>
    %cst_32 = arith.constant 1.000000e+00 : f32
    %73 = vector.broadcast %cst_32 : f32 to vector<8x128xf32>
    %74 = arith.addf %73, %72 : vector<8x128xf32>
    %cst_33 = arith.constant 1.000000e+00 : f32
    %75 = vector.broadcast %cst_33 : f32 to vector<8x128xf32>
    %76 = arith.divf %75, %74 : vector<8x128xf32>
    %77 = vector.extract_strided_slice %54 {offsets = [0, 256], sizes = [8, 128], strides = [1, 1]} : vector<8x384xf32> to vector<8x128xf32>
    %78 = vector.extract_strided_slice %56 {offsets = [0, 256], sizes = [8, 128], strides = [1, 1]} : vector<8x384xf32> to vector<8x128xf32>
    %79 = arith.addf %78, %9 : vector<8x128xf32>
    %80 = arith.mulf %66, %79 : vector<8x128xf32>
    %81 = arith.addf %77, %80 : vector<8x128xf32>
    %82 = math.tanh %81 : vector<8x128xf32>
    %cst_34 = arith.constant 1.000000e+00 : f32
    %83 = vector.broadcast %cst_34 : f32 to vector<8x128xf32>
    %84 = arith.subf %83, %76 : vector<8x128xf32>
    %85 = arith.mulf %84, %82 : vector<8x128xf32>
    %86 = arith.mulf %76, %50 : vector<8x128xf32>
    %87 = arith.addf %85, %86 : vector<8x128xf32>
    %c2_i32 = arith.constant 2 : i32
    %c8_i32_35 = arith.constant 8 : i32
    %88 = arith.muli %c2_i32, %c8_i32_35 : i32
    %89 = tpu.assume_multiple %88, 8 : i32
    %90 = arith.index_cast %89 : i32 to index
    %c0_36 = arith.constant 0 : index
    %91 = vector.load %arg12[%90, %c0_36] : memref<64x384xf32, #tpu.memory_space<vmem>>, vector<8x384xf32>
    %c0_37 = arith.constant 0 : index
    %c0_38 = arith.constant 0 : index
    %92 = vector.load %arg5[%c0_37, %c0_38] : memref<128x384xf32, #tpu.memory_space<vmem>>, vector<128x384xf32>
    %cst_39 = arith.constant dense<0.000000e+00> : vector<8x384xf32>
    %93 = tpu.matmul %87, %92, %cst_39 {dimension_numbers = #tpu.dot_dimension_numbers<[1], [0], [0], [1], [0, 0, 1, 1], [], []>} : vector<8x128xf32>, vector<128x384xf32>, vector<8x384xf32> -> vector<8x384xf32>
    %94 = vector.extract_strided_slice %91 {offsets = [0, 0], sizes = [8, 128], strides = [1, 1]} : vector<8x384xf32> to vector<8x128xf32>
    %95 = vector.extract_strided_slice %93 {offsets = [0, 0], sizes = [8, 128], strides = [1, 1]} : vector<8x384xf32> to vector<8x128xf32>
    %96 = arith.addf %94, %95 : vector<8x128xf32>
    %cst_40 = arith.constant 0.000000e+00 : f32
    %97 = vector.broadcast %cst_40 : f32 to vector<8x128xf32>
    %98 = arith.subf %97, %96 : vector<8x128xf32>
    %99 = math.exp %98 : vector<8x128xf32>
    %cst_41 = arith.constant 1.000000e+00 : f32
    %100 = vector.broadcast %cst_41 : f32 to vector<8x128xf32>
    %101 = arith.addf %100, %99 : vector<8x128xf32>
    %cst_42 = arith.constant 1.000000e+00 : f32
    %102 = vector.broadcast %cst_42 : f32 to vector<8x128xf32>
    %103 = arith.divf %102, %101 : vector<8x128xf32>
    %104 = vector.extract_strided_slice %91 {offsets = [0, 128], sizes = [8, 128], strides = [1, 1]} : vector<8x384xf32> to vector<8x128xf32>
    %105 = vector.extract_strided_slice %93 {offsets = [0, 128], sizes = [8, 128], strides = [1, 1]} : vector<8x384xf32> to vector<8x128xf32>
    %106 = arith.addf %104, %105 : vector<8x128xf32>
    %cst_43 = arith.constant 0.000000e+00 : f32
    %107 = vector.broadcast %cst_43 : f32 to vector<8x128xf32>
    %108 = arith.subf %107, %106 : vector<8x128xf32>
    %109 = math.exp %108 : vector<8x128xf32>
    %cst_44 = arith.constant 1.000000e+00 : f32
    %110 = vector.broadcast %cst_44 : f32 to vector<8x128xf32>
    %111 = arith.addf %110, %109 : vector<8x128xf32>
    %cst_45 = arith.constant 1.000000e+00 : f32
    %112 = vector.broadcast %cst_45 : f32 to vector<8x128xf32>
    %113 = arith.divf %112, %111 : vector<8x128xf32>
    %114 = vector.extract_strided_slice %91 {offsets = [0, 256], sizes = [8, 128], strides = [1, 1]} : vector<8x384xf32> to vector<8x128xf32>
    %115 = vector.extract_strided_slice %93 {offsets = [0, 256], sizes = [8, 128], strides = [1, 1]} : vector<8x384xf32> to vector<8x128xf32>
    %116 = arith.addf %115, %9 : vector<8x128xf32>
    %117 = arith.mulf %103, %116 : vector<8x128xf32>
    %118 = arith.addf %114, %117 : vector<8x128xf32>
    %119 = math.tanh %118 : vector<8x128xf32>
    %cst_46 = arith.constant 1.000000e+00 : f32
    %120 = vector.broadcast %cst_46 : f32 to vector<8x128xf32>
    %121 = arith.subf %120, %113 : vector<8x128xf32>
    %122 = arith.mulf %121, %119 : vector<8x128xf32>
    %123 = arith.mulf %113, %87 : vector<8x128xf32>
    %124 = arith.addf %122, %123 : vector<8x128xf32>
    %c3_i32 = arith.constant 3 : i32
    %c8_i32_47 = arith.constant 8 : i32
    %125 = arith.muli %c3_i32, %c8_i32_47 : i32
    %126 = tpu.assume_multiple %125, 8 : i32
    %127 = arith.index_cast %126 : i32 to index
    %c0_48 = arith.constant 0 : index
    %128 = vector.load %arg12[%127, %c0_48] : memref<64x384xf32, #tpu.memory_space<vmem>>, vector<8x384xf32>
    %c0_49 = arith.constant 0 : index
    %c0_50 = arith.constant 0 : index
    %129 = vector.load %arg5[%c0_49, %c0_50] : memref<128x384xf32, #tpu.memory_space<vmem>>, vector<128x384xf32>
    %cst_51 = arith.constant dense<0.000000e+00> : vector<8x384xf32>
    %130 = tpu.matmul %124, %129, %cst_51 {dimension_numbers = #tpu.dot_dimension_numbers<[1], [0], [0], [1], [0, 0, 1, 1], [], []>} : vector<8x128xf32>, vector<128x384xf32>, vector<8x384xf32> -> vector<8x384xf32>
    %131 = vector.extract_strided_slice %128 {offsets = [0, 0], sizes = [8, 128], strides = [1, 1]} : vector<8x384xf32> to vector<8x128xf32>
    %132 = vector.extract_strided_slice %130 {offsets = [0, 0], sizes = [8, 128], strides = [1, 1]} : vector<8x384xf32> to vector<8x128xf32>
    %133 = arith.addf %131, %132 : vector<8x128xf32>
    %cst_52 = arith.constant 0.000000e+00 : f32
    %134 = vector.broadcast %cst_52 : f32 to vector<8x128xf32>
    %135 = arith.subf %134, %133 : vector<8x128xf32>
    %136 = math.exp %135 : vector<8x128xf32>
    %cst_53 = arith.constant 1.000000e+00 : f32
    %137 = vector.broadcast %cst_53 : f32 to vector<8x128xf32>
    %138 = arith.addf %137, %136 : vector<8x128xf32>
    %cst_54 = arith.constant 1.000000e+00 : f32
    %139 = vector.broadcast %cst_54 : f32 to vector<8x128xf32>
    %140 = arith.divf %139, %138 : vector<8x128xf32>
    %141 = vector.extract_strided_slice %128 {offsets = [0, 128], sizes = [8, 128], strides = [1, 1]} : vector<8x384xf32> to vector<8x128xf32>
    %142 = vector.extract_strided_slice %130 {offsets = [0, 128], sizes = [8, 128], strides = [1, 1]} : vector<8x384xf32> to vector<8x128xf32>
    %143 = arith.addf %141, %142 : vector<8x128xf32>
    %cst_55 = arith.constant 0.000000e+00 : f32
    %144 = vector.broadcast %cst_55 : f32 to vector<8x128xf32>
    %145 = arith.subf %144, %143 : vector<8x128xf32>
    %146 = math.exp %145 : vector<8x128xf32>
    %cst_56 = arith.constant 1.000000e+00 : f32
    %147 = vector.broadcast %cst_56 : f32 to vector<8x128xf32>
    %148 = arith.addf %147, %146 : vector<8x128xf32>
    %cst_57 = arith.constant 1.000000e+00 : f32
    %149 = vector.broadcast %cst_57 : f32 to vector<8x128xf32>
    %150 = arith.divf %149, %148 : vector<8x128xf32>
    %151 = vector.extract_strided_slice %128 {offsets = [0, 256], sizes = [8, 128], strides = [1, 1]} : vector<8x384xf32> to vector<8x128xf32>
    %152 = vector.extract_strided_slice %130 {offsets = [0, 256], sizes = [8, 128], strides = [1, 1]} : vector<8x384xf32> to vector<8x128xf32>
    %153 = arith.addf %152, %9 : vector<8x128xf32>
    %154 = arith.mulf %140, %153 : vector<8x128xf32>
    %155 = arith.addf %151, %154 : vector<8x128xf32>
    %156 = math.tanh %155 : vector<8x128xf32>
    %cst_58 = arith.constant 1.000000e+00 : f32
    %157 = vector.broadcast %cst_58 : f32 to vector<8x128xf32>
    %158 = arith.subf %157, %150 : vector<8x128xf32>
    %159 = arith.mulf %158, %156 : vector<8x128xf32>
    %160 = arith.mulf %150, %124 : vector<8x128xf32>
    %161 = arith.addf %159, %160 : vector<8x128xf32>
    %c4_i32 = arith.constant 4 : i32
    %c8_i32_59 = arith.constant 8 : i32
    %162 = arith.muli %c4_i32, %c8_i32_59 : i32
    %163 = tpu.assume_multiple %162, 8 : i32
    %164 = arith.index_cast %163 : i32 to index
    %c0_60 = arith.constant 0 : index
    %165 = vector.load %arg12[%164, %c0_60] : memref<64x384xf32, #tpu.memory_space<vmem>>, vector<8x384xf32>
    %c0_61 = arith.constant 0 : index
    %c0_62 = arith.constant 0 : index
    %166 = vector.load %arg5[%c0_61, %c0_62] : memref<128x384xf32, #tpu.memory_space<vmem>>, vector<128x384xf32>
    %cst_63 = arith.constant dense<0.000000e+00> : vector<8x384xf32>
    %167 = tpu.matmul %161, %166, %cst_63 {dimension_numbers = #tpu.dot_dimension_numbers<[1], [0], [0], [1], [0, 0, 1, 1], [], []>} : vector<8x128xf32>, vector<128x384xf32>, vector<8x384xf32> -> vector<8x384xf32>
    %168 = vector.extract_strided_slice %165 {offsets = [0, 0], sizes = [8, 128], strides = [1, 1]} : vector<8x384xf32> to vector<8x128xf32>
    %169 = vector.extract_strided_slice %167 {offsets = [0, 0], sizes = [8, 128], strides = [1, 1]} : vector<8x384xf32> to vector<8x128xf32>
    %170 = arith.addf %168, %169 : vector<8x128xf32>
    %cst_64 = arith.constant 0.000000e+00 : f32
    %171 = vector.broadcast %cst_64 : f32 to vector<8x128xf32>
    %172 = arith.subf %171, %170 : vector<8x128xf32>
    %173 = math.exp %172 : vector<8x128xf32>
    %cst_65 = arith.constant 1.000000e+00 : f32
    %174 = vector.broadcast %cst_65 : f32 to vector<8x128xf32>
    %175 = arith.addf %174, %173 : vector<8x128xf32>
    %cst_66 = arith.constant 1.000000e+00 : f32
    %176 = vector.broadcast %cst_66 : f32 to vector<8x128xf32>
    %177 = arith.divf %176, %175 : vector<8x128xf32>
    %178 = vector.extract_strided_slice %165 {offsets = [0, 128], sizes = [8, 128], strides = [1, 1]} : vector<8x384xf32> to vector<8x128xf32>
    %179 = vector.extract_strided_slice %167 {offsets = [0, 128], sizes = [8, 128], strides = [1, 1]} : vector<8x384xf32> to vector<8x128xf32>
    %180 = arith.addf %178, %179 : vector<8x128xf32>
    %cst_67 = arith.constant 0.000000e+00 : f32
    %181 = vector.broadcast %cst_67 : f32 to vector<8x128xf32>
    %182 = arith.subf %181, %180 : vector<8x128xf32>
    %183 = math.exp %182 : vector<8x128xf32>
    %cst_68 = arith.constant 1.000000e+00 : f32
    %184 = vector.broadcast %cst_68 : f32 to vector<8x128xf32>
    %185 = arith.addf %184, %183 : vector<8x128xf32>
    %cst_69 = arith.constant 1.000000e+00 : f32
    %186 = vector.broadcast %cst_69 : f32 to vector<8x128xf32>
    %187 = arith.divf %186, %185 : vector<8x128xf32>
    %188 = vector.extract_strided_slice %165 {offsets = [0, 256], sizes = [8, 128], strides = [1, 1]} : vector<8x384xf32> to vector<8x128xf32>
    %189 = vector.extract_strided_slice %167 {offsets = [0, 256], sizes = [8, 128], strides = [1, 1]} : vector<8x384xf32> to vector<8x128xf32>
    %190 = arith.addf %189, %9 : vector<8x128xf32>
    %191 = arith.mulf %177, %190 : vector<8x128xf32>
    %192 = arith.addf %188, %191 : vector<8x128xf32>
    %193 = math.tanh %192 : vector<8x128xf32>
    %cst_70 = arith.constant 1.000000e+00 : f32
    %194 = vector.broadcast %cst_70 : f32 to vector<8x128xf32>
    %195 = arith.subf %194, %187 : vector<8x128xf32>
    %196 = arith.mulf %195, %193 : vector<8x128xf32>
    %197 = arith.mulf %187, %161 : vector<8x128xf32>
    %198 = arith.addf %196, %197 : vector<8x128xf32>
    %c5_i32 = arith.constant 5 : i32
    %c8_i32_71 = arith.constant 8 : i32
    %199 = arith.muli %c5_i32, %c8_i32_71 : i32
    %200 = tpu.assume_multiple %199, 8 : i32
    %201 = arith.index_cast %200 : i32 to index
    %c0_72 = arith.constant 0 : index
    %202 = vector.load %arg12[%201, %c0_72] : memref<64x384xf32, #tpu.memory_space<vmem>>, vector<8x384xf32>
    %c0_73 = arith.constant 0 : index
    %c0_74 = arith.constant 0 : index
    %203 = vector.load %arg5[%c0_73, %c0_74] : memref<128x384xf32, #tpu.memory_space<vmem>>, vector<128x384xf32>
    %cst_75 = arith.constant dense<0.000000e+00> : vector<8x384xf32>
    %204 = tpu.matmul %198, %203, %cst_75 {dimension_numbers = #tpu.dot_dimension_numbers<[1], [0], [0], [1], [0, 0, 1, 1], [], []>} : vector<8x128xf32>, vector<128x384xf32>, vector<8x384xf32> -> vector<8x384xf32>
    %205 = vector.extract_strided_slice %202 {offsets = [0, 0], sizes = [8, 128], strides = [1, 1]} : vector<8x384xf32> to vector<8x128xf32>
    %206 = vector.extract_strided_slice %204 {offsets = [0, 0], sizes = [8, 128], strides = [1, 1]} : vector<8x384xf32> to vector<8x128xf32>
    %207 = arith.addf %205, %206 : vector<8x128xf32>
    %cst_76 = arith.constant 0.000000e+00 : f32
    %208 = vector.broadcast %cst_76 : f32 to vector<8x128xf32>
    %209 = arith.subf %208, %207 : vector<8x128xf32>
    %210 = math.exp %209 : vector<8x128xf32>
    %cst_77 = arith.constant 1.000000e+00 : f32
    %211 = vector.broadcast %cst_77 : f32 to vector<8x128xf32>
    %212 = arith.addf %211, %210 : vector<8x128xf32>
    %cst_78 = arith.constant 1.000000e+00 : f32
    %213 = vector.broadcast %cst_78 : f32 to vector<8x128xf32>
    %214 = arith.divf %213, %212 : vector<8x128xf32>
    %215 = vector.extract_strided_slice %202 {offsets = [0, 128], sizes = [8, 128], strides = [1, 1]} : vector<8x384xf32> to vector<8x128xf32>
    %216 = vector.extract_strided_slice %204 {offsets = [0, 128], sizes = [8, 128], strides = [1, 1]} : vector<8x384xf32> to vector<8x128xf32>
    %217 = arith.addf %215, %216 : vector<8x128xf32>
    %cst_79 = arith.constant 0.000000e+00 : f32
    %218 = vector.broadcast %cst_79 : f32 to vector<8x128xf32>
    %219 = arith.subf %218, %217 : vector<8x128xf32>
    %220 = math.exp %219 : vector<8x128xf32>
    %cst_80 = arith.constant 1.000000e+00 : f32
    %221 = vector.broadcast %cst_80 : f32 to vector<8x128xf32>
    %222 = arith.addf %221, %220 : vector<8x128xf32>
    %cst_81 = arith.constant 1.000000e+00 : f32
    %223 = vector.broadcast %cst_81 : f32 to vector<8x128xf32>
    %224 = arith.divf %223, %222 : vector<8x128xf32>
    %225 = vector.extract_strided_slice %202 {offsets = [0, 256], sizes = [8, 128], strides = [1, 1]} : vector<8x384xf32> to vector<8x128xf32>
    %226 = vector.extract_strided_slice %204 {offsets = [0, 256], sizes = [8, 128], strides = [1, 1]} : vector<8x384xf32> to vector<8x128xf32>
    %227 = arith.addf %226, %9 : vector<8x128xf32>
    %228 = arith.mulf %214, %227 : vector<8x128xf32>
    %229 = arith.addf %225, %228 : vector<8x128xf32>
    %230 = math.tanh %229 : vector<8x128xf32>
    %cst_82 = arith.constant 1.000000e+00 : f32
    %231 = vector.broadcast %cst_82 : f32 to vector<8x128xf32>
    %232 = arith.subf %231, %224 : vector<8x128xf32>
    %233 = arith.mulf %232, %230 : vector<8x128xf32>
    %234 = arith.mulf %224, %198 : vector<8x128xf32>
    %235 = arith.addf %233, %234 : vector<8x128xf32>
    %c6_i32 = arith.constant 6 : i32
    %c8_i32_83 = arith.constant 8 : i32
    %236 = arith.muli %c6_i32, %c8_i32_83 : i32
    %237 = tpu.assume_multiple %236, 8 : i32
    %238 = arith.index_cast %237 : i32 to index
    %c0_84 = arith.constant 0 : index
    %239 = vector.load %arg12[%238, %c0_84] : memref<64x384xf32, #tpu.memory_space<vmem>>, vector<8x384xf32>
    %c0_85 = arith.constant 0 : index
    %c0_86 = arith.constant 0 : index
    %240 = vector.load %arg5[%c0_85, %c0_86] : memref<128x384xf32, #tpu.memory_space<vmem>>, vector<128x384xf32>
    %cst_87 = arith.constant dense<0.000000e+00> : vector<8x384xf32>
    %241 = tpu.matmul %235, %240, %cst_87 {dimension_numbers = #tpu.dot_dimension_numbers<[1], [0], [0], [1], [0, 0, 1, 1], [], []>} : vector<8x128xf32>, vector<128x384xf32>, vector<8x384xf32> -> vector<8x384xf32>
    %242 = vector.extract_strided_slice %239 {offsets = [0, 0], sizes = [8, 128], strides = [1, 1]} : vector<8x384xf32> to vector<8x128xf32>
    %243 = vector.extract_strided_slice %241 {offsets = [0, 0], sizes = [8, 128], strides = [1, 1]} : vector<8x384xf32> to vector<8x128xf32>
    %244 = arith.addf %242, %243 : vector<8x128xf32>
    %cst_88 = arith.constant 0.000000e+00 : f32
    %245 = vector.broadcast %cst_88 : f32 to vector<8x128xf32>
    %246 = arith.subf %245, %244 : vector<8x128xf32>
    %247 = math.exp %246 : vector<8x128xf32>
    %cst_89 = arith.constant 1.000000e+00 : f32
    %248 = vector.broadcast %cst_89 : f32 to vector<8x128xf32>
    %249 = arith.addf %248, %247 : vector<8x128xf32>
    %cst_90 = arith.constant 1.000000e+00 : f32
    %250 = vector.broadcast %cst_90 : f32 to vector<8x128xf32>
    %251 = arith.divf %250, %249 : vector<8x128xf32>
    %252 = vector.extract_strided_slice %239 {offsets = [0, 128], sizes = [8, 128], strides = [1, 1]} : vector<8x384xf32> to vector<8x128xf32>
    %253 = vector.extract_strided_slice %241 {offsets = [0, 128], sizes = [8, 128], strides = [1, 1]} : vector<8x384xf32> to vector<8x128xf32>
    %254 = arith.addf %252, %253 : vector<8x128xf32>
    %cst_91 = arith.constant 0.000000e+00 : f32
    %255 = vector.broadcast %cst_91 : f32 to vector<8x128xf32>
    %256 = arith.subf %255, %254 : vector<8x128xf32>
    %257 = math.exp %256 : vector<8x128xf32>
    %cst_92 = arith.constant 1.000000e+00 : f32
    %258 = vector.broadcast %cst_92 : f32 to vector<8x128xf32>
    %259 = arith.addf %258, %257 : vector<8x128xf32>
    %cst_93 = arith.constant 1.000000e+00 : f32
    %260 = vector.broadcast %cst_93 : f32 to vector<8x128xf32>
    %261 = arith.divf %260, %259 : vector<8x128xf32>
    %262 = vector.extract_strided_slice %239 {offsets = [0, 256], sizes = [8, 128], strides = [1, 1]} : vector<8x384xf32> to vector<8x128xf32>
    %263 = vector.extract_strided_slice %241 {offsets = [0, 256], sizes = [8, 128], strides = [1, 1]} : vector<8x384xf32> to vector<8x128xf32>
    %264 = arith.addf %263, %9 : vector<8x128xf32>
    %265 = arith.mulf %251, %264 : vector<8x128xf32>
    %266 = arith.addf %262, %265 : vector<8x128xf32>
    %267 = math.tanh %266 : vector<8x128xf32>
    %cst_94 = arith.constant 1.000000e+00 : f32
    %268 = vector.broadcast %cst_94 : f32 to vector<8x128xf32>
    %269 = arith.subf %268, %261 : vector<8x128xf32>
    %270 = arith.mulf %269, %267 : vector<8x128xf32>
    %271 = arith.mulf %261, %235 : vector<8x128xf32>
    %272 = arith.addf %270, %271 : vector<8x128xf32>
    %c7_i32 = arith.constant 7 : i32
    %c8_i32_95 = arith.constant 8 : i32
    %273 = arith.muli %c7_i32, %c8_i32_95 : i32
    %274 = tpu.assume_multiple %273, 8 : i32
    %275 = arith.index_cast %274 : i32 to index
    %c0_96 = arith.constant 0 : index
    %276 = vector.load %arg12[%275, %c0_96] : memref<64x384xf32, #tpu.memory_space<vmem>>, vector<8x384xf32>
    %c0_97 = arith.constant 0 : index
    %c0_98 = arith.constant 0 : index
    %277 = vector.load %arg5[%c0_97, %c0_98] : memref<128x384xf32, #tpu.memory_space<vmem>>, vector<128x384xf32>
    %cst_99 = arith.constant dense<0.000000e+00> : vector<8x384xf32>
    %278 = tpu.matmul %272, %277, %cst_99 {dimension_numbers = #tpu.dot_dimension_numbers<[1], [0], [0], [1], [0, 0, 1, 1], [], []>} : vector<8x128xf32>, vector<128x384xf32>, vector<8x384xf32> -> vector<8x384xf32>
    %279 = vector.extract_strided_slice %276 {offsets = [0, 0], sizes = [8, 128], strides = [1, 1]} : vector<8x384xf32> to vector<8x128xf32>
    %280 = vector.extract_strided_slice %278 {offsets = [0, 0], sizes = [8, 128], strides = [1, 1]} : vector<8x384xf32> to vector<8x128xf32>
    %281 = arith.addf %279, %280 : vector<8x128xf32>
    %cst_100 = arith.constant 0.000000e+00 : f32
    %282 = vector.broadcast %cst_100 : f32 to vector<8x128xf32>
    %283 = arith.subf %282, %281 : vector<8x128xf32>
    %284 = math.exp %283 : vector<8x128xf32>
    %cst_101 = arith.constant 1.000000e+00 : f32
    %285 = vector.broadcast %cst_101 : f32 to vector<8x128xf32>
    %286 = arith.addf %285, %284 : vector<8x128xf32>
    %cst_102 = arith.constant 1.000000e+00 : f32
    %287 = vector.broadcast %cst_102 : f32 to vector<8x128xf32>
    %288 = arith.divf %287, %286 : vector<8x128xf32>
    %289 = vector.extract_strided_slice %276 {offsets = [0, 128], sizes = [8, 128], strides = [1, 1]} : vector<8x384xf32> to vector<8x128xf32>
    %290 = vector.extract_strided_slice %278 {offsets = [0, 128], sizes = [8, 128], strides = [1, 1]} : vector<8x384xf32> to vector<8x128xf32>
    %291 = arith.addf %289, %290 : vector<8x128xf32>
    %cst_103 = arith.constant 0.000000e+00 : f32
    %292 = vector.broadcast %cst_103 : f32 to vector<8x128xf32>
    %293 = arith.subf %292, %291 : vector<8x128xf32>
    %294 = math.exp %293 : vector<8x128xf32>
    %cst_104 = arith.constant 1.000000e+00 : f32
    %295 = vector.broadcast %cst_104 : f32 to vector<8x128xf32>
    %296 = arith.addf %295, %294 : vector<8x128xf32>
    %cst_105 = arith.constant 1.000000e+00 : f32
    %297 = vector.broadcast %cst_105 : f32 to vector<8x128xf32>
    %298 = arith.divf %297, %296 : vector<8x128xf32>
    %299 = vector.extract_strided_slice %276 {offsets = [0, 256], sizes = [8, 128], strides = [1, 1]} : vector<8x384xf32> to vector<8x128xf32>
    %300 = vector.extract_strided_slice %278 {offsets = [0, 256], sizes = [8, 128], strides = [1, 1]} : vector<8x384xf32> to vector<8x128xf32>
    %301 = arith.addf %300, %9 : vector<8x128xf32>
    %302 = arith.mulf %288, %301 : vector<8x128xf32>
    %303 = arith.addf %299, %302 : vector<8x128xf32>
    %304 = math.tanh %303 : vector<8x128xf32>
    %cst_106 = arith.constant 1.000000e+00 : f32
    %305 = vector.broadcast %cst_106 : f32 to vector<8x128xf32>
    %306 = arith.subf %305, %298 : vector<8x128xf32>
    %307 = arith.mulf %306, %304 : vector<8x128xf32>
    %308 = arith.mulf %298, %272 : vector<8x128xf32>
    %309 = arith.addf %307, %308 : vector<8x128xf32>
    %c8_i32_107 = arith.constant 8 : i32
    %c56 = arith.constant 56 : index
    %c0_108 = arith.constant 0 : index
    %310 = vector.load %arg0[%c56, %c0_108] : memref<64x256xf32, #tpu.memory_space<vmem>>, vector<8x256xf32>
    %c0_109 = arith.constant 0 : index
    %c0_110 = arith.constant 0 : index
    %311 = vector.load %arg3[%c0_109, %c0_110] : memref<256x384xf32, #tpu.memory_space<vmem>>, vector<256x384xf32>
    %cst_111 = arith.constant dense<0.000000e+00> : vector<8x384xf32>
    %312 = tpu.matmul %310, %311, %cst_111 {dimension_numbers = #tpu.dot_dimension_numbers<[1], [0], [0], [1], [0, 0, 1, 1], [], []>} : vector<8x256xf32>, vector<256x384xf32>, vector<8x384xf32> -> vector<8x384xf32>
    %c0_112 = arith.constant 0 : index
    %c0_113 = arith.constant 0 : index
    %313 = vector.load %arg4[%c0_112, %c0_113] : memref<1x384xf32, #tpu.memory_space<vmem>>, vector<1x384xf32>
    %314 = vector.broadcast %313 : vector<1x384xf32> to vector<8x384xf32>
    %315 = arith.addf %312, %314 : vector<8x384xf32>
    %cst_114 = arith.constant 0.000000e+00 : f32
    %316 = vector.broadcast %cst_114 : f32 to vector<8x384xf32>
    %cst_115 = arith.constant 0.000000e+00 : f32
    %317 = vector.broadcast %cst_115 : f32 to vector<8x128xf32>
    %318 = vector.extract_strided_slice %315 {offsets = [0, 0], sizes = [8, 128], strides = [1, 1]} : vector<8x384xf32> to vector<8x128xf32>
    %319 = vector.extract_strided_slice %316 {offsets = [0, 0], sizes = [8, 128], strides = [1, 1]} : vector<8x384xf32> to vector<8x128xf32>
    %320 = arith.addf %318, %319 : vector<8x128xf32>
    %cst_116 = arith.constant 0.000000e+00 : f32
    %321 = vector.broadcast %cst_116 : f32 to vector<8x128xf32>
    %322 = arith.subf %321, %320 : vector<8x128xf32>
    %323 = math.exp %322 : vector<8x128xf32>
    %cst_117 = arith.constant 1.000000e+00 : f32
    %324 = vector.broadcast %cst_117 : f32 to vector<8x128xf32>
    %325 = arith.addf %324, %323 : vector<8x128xf32>
    %cst_118 = arith.constant 1.000000e+00 : f32
    %326 = vector.broadcast %cst_118 : f32 to vector<8x128xf32>
    %327 = arith.divf %326, %325 : vector<8x128xf32>
    %328 = vector.extract_strided_slice %315 {offsets = [0, 128], sizes = [8, 128], strides = [1, 1]} : vector<8x384xf32> to vector<8x128xf32>
    %329 = vector.extract_strided_slice %316 {offsets = [0, 128], sizes = [8, 128], strides = [1, 1]} : vector<8x384xf32> to vector<8x128xf32>
    %330 = arith.addf %328, %329 : vector<8x128xf32>
    %cst_119 = arith.constant 0.000000e+00 : f32
    %331 = vector.broadcast %cst_119 : f32 to vector<8x128xf32>
    %332 = arith.subf %331, %330 : vector<8x128xf32>
    %333 = math.exp %332 : vector<8x128xf32>
    %cst_120 = arith.constant 1.000000e+00 : f32
    %334 = vector.broadcast %cst_120 : f32 to vector<8x128xf32>
    %335 = arith.addf %334, %333 : vector<8x128xf32>
    %cst_121 = arith.constant 1.000000e+00 : f32
    %336 = vector.broadcast %cst_121 : f32 to vector<8x128xf32>
    %337 = arith.divf %336, %335 : vector<8x128xf32>
    %338 = vector.extract_strided_slice %315 {offsets = [0, 256], sizes = [8, 128], strides = [1, 1]} : vector<8x384xf32> to vector<8x128xf32>
    %339 = vector.extract_strided_slice %316 {offsets = [0, 256], sizes = [8, 128], strides = [1, 1]} : vector<8x384xf32> to vector<8x128xf32>
    %340 = arith.addf %339, %12 : vector<8x128xf32>
    %341 = arith.mulf %327, %340 : vector<8x128xf32>
    %342 = arith.addf %338, %341 : vector<8x128xf32>
    %343 = math.tanh %342 : vector<8x128xf32>
    %cst_122 = arith.constant 1.000000e+00 : f32
    %344 = vector.broadcast %cst_122 : f32 to vector<8x128xf32>
    %345 = arith.subf %344, %337 : vector<8x128xf32>
    %346 = arith.mulf %345, %343 : vector<8x128xf32>
    %347 = arith.mulf %337, %317 : vector<8x128xf32>
    %348 = arith.addf %346, %347 : vector<8x128xf32>
    %c0_123 = arith.constant 0 : index
    %c0_124 = arith.constant 0 : index
    %349 = vector.load %arg8[%c0_123, %c0_124] : memref<128x3xf32, #tpu.memory_space<vmem>>, vector<128x3xf32>
    %cst_125 = arith.constant dense<0.000000e+00> : vector<8x3xf32>
    %350 = tpu.matmul %309, %349, %cst_125 {dimension_numbers = #tpu.dot_dimension_numbers<[1], [0], [0], [1], [0, 0, 1, 1], [], []>} : vector<8x128xf32>, vector<128x3xf32>, vector<8x3xf32> -> vector<8x3xf32>
    %c0_126 = arith.constant 0 : index
    %c0_127 = arith.constant 0 : index
    %351 = vector.load %arg9[%c0_126, %c0_127] : memref<128x3xf32, #tpu.memory_space<vmem>>, vector<128x3xf32>
    %cst_128 = arith.constant dense<0.000000e+00> : vector<8x3xf32>
    %352 = tpu.matmul %348, %351, %cst_128 {dimension_numbers = #tpu.dot_dimension_numbers<[1], [0], [0], [1], [0, 0, 1, 1], [], []>} : vector<8x128xf32>, vector<128x3xf32>, vector<8x3xf32> -> vector<8x3xf32>
    %353 = arith.addf %350, %352 : vector<8x3xf32>
    %c0_129 = arith.constant 0 : index
    %c0_130 = arith.constant 0 : index
    %354 = vector.load %arg10[%c0_129, %c0_130] : memref<1x3xf32, #tpu.memory_space<vmem>>, vector<1x3xf32>
    %355 = vector.broadcast %354 : vector<1x3xf32> to vector<8x3xf32>
    %356 = arith.addf %353, %355 : vector<8x3xf32>
    %c0_131 = arith.constant 0 : index
    %c0_132 = arith.constant 0 : index
    %357 = vector.load %arg11[%c0_131, %c0_132] : memref<8x3xf32, #tpu.memory_space<vmem>>, vector<8x3xf32>
    tpu.vector_store %arg11[%c0_131, %c0_132], %356 {strides = array<i32>} : memref<8x3xf32, #tpu.memory_space<vmem>>, vector<8x3xf32>,
    return
  }
}

</mosaic_0001>

<llo_original>
// kernel: grud_forward.5
$region0: #{grud_forward.5}
  #allocation0 [shape = 'u32[]', space=smem, size = 0x4, offset = 0x4, fixed_abs, tag = 'smem constant byte address 0x4 - core index']
  #allocation1 [shape = 'u32[72,128]{1,0:T(1,128)}', space=vmem, size = 0x9000, scoped, tag = 'internal scratch']
  #allocation2 [shape = 'f32[64,384]{1,0:T(8,128)}', space=vmem, size = 0x18000, scoped, tag = 'scratch operand']
  %s0 = inlined_call_operand.vmem [shape: f32[64,256], index: 0, kind: input, shape index: {}]
  %s1 = inlined_call_operand.vmem [shape: f32[256,384], index: 1, kind: input, shape index: {}]
  %s2 = inlined_call_operand.vmem [shape: f32[1,384], index: 2, kind: input, shape index: {}]
  %s3 = inlined_call_operand.vmem [shape: f32[256,384], index: 3, kind: input, shape index: {}]
  %s4 = inlined_call_operand.vmem [shape: f32[1,384], index: 4, kind: input, shape index: {}]
  %s5 = inlined_call_operand.vmem [shape: f32[128,384], index: 5, kind: input, shape index: {}]
  %s6 = inlined_call_operand.vmem [shape: f32[1,128], index: 6, kind: input, shape index: {}]
  %s7 = inlined_call_operand.vmem [shape: f32[1,128], index: 7, kind: input, shape index: {}]
  %s8 = inlined_call_operand.vmem [shape: f32[128,3], index: 8, kind: input, shape index: {}]
  %s9 = inlined_call_operand.vmem [shape: f32[128,3], index: 9, kind: input, shape index: {}]
  %s10 = inlined_call_operand.vmem [shape: f32[1,3], index: 10, kind: input, shape index: {}]
  %s11 = inlined_call_operand.vmem [shape: f32[8,3], index: 11, kind: output, shape index: {}]
  %s12 = sld [smem:[#allocation0]]
  $region54: #{grud_forward.5} parent=0
    _
  %s14 = ssub.s32 1, %s12
  %s15 = scalar_select 0, %s14, %s12
  // Predicated region
  $region2: #{grud_forward.5} parent=0 // pred_check
    _
  $region3: #{grud_forward.5} parent=0 // pred_check_branch
    %17 = sbr.rel (0) target = $region5
  $region4: #{grud_forward.5} parent=0 // pred_region
    _
  $region5: #{grud_forward.5} parent=0 // pred_fallthru
    _
  // Predicated region
  $region6: #{grud_forward.5} parent=0 // pred_check
    _
  $region7: #{grud_forward.5} parent=0 // pred_check_branch
    %19 = sbr.rel (0) target = $region9
  $region8: #{grud_forward.5} parent=0 // pred_region
    _
  $region9: #{grud_forward.5} parent=0 // pred_fallthru
    _
  // Predicated region
  $region10: #{grud_forward.5} parent=0 // pred_check
    _
  $region11: #{grud_forward.5} parent=0 // pred_check_branch
    %21 = sbr.rel (0) target = $region13
  $region12: #{grud_forward.5} parent=0 // pred_region
    _
  $region13: #{grud_forward.5} parent=0 // pred_fallthru
    _
  // Predicated region
  $region14: #{grud_forward.5} parent=0 // pred_check
    _
  $region15: #{grud_forward.5} parent=0 // pred_check_branch
    %23 = sbr.rel (0) target = $region17
  $region16: #{grud_forward.5} parent=0 // pred_region
    _
  $region17: #{grud_forward.5} parent=0 // pred_fallthru
    _
  // Predicated region
  $region18: #{grud_forward.5} parent=0 // pred_check
    _
  $region19: #{grud_forward.5} parent=0 // pred_check_branch
    %25 = sbr.rel (0) target = $region21
  $region20: #{grud_forward.5} parent=0 // pred_region
    _
  $region21: #{grud_forward.5} parent=0 // pred_fallthru
    _
  // Predicated region
  $region22: #{grud_forward.5} parent=0 // pred_check
    _
  $region23: #{grud_forward.5} parent=0 // pred_check_branch
    %27 = sbr.rel (0) target = $region25
  $region24: #{grud_forward.5} parent=0 // pred_region
    _
  $region25: #{grud_forward.5} parent=0 // pred_fallthru
    _
  // Predicated region
  $region26: #{grud_forward.5} parent=0 // pred_check
    _
  $region27: #{grud_forward.5} parent=0 // pred_check_branch
    %29 = sbr.rel (0) target = $region29
  $region28: #{grud_forward.5} parent=0 // pred_region
    _
  $region29: #{grud_forward.5} parent=0 // pred_fallthru
    _
  // Predicated region
  $region30: #{grud_forward.5} parent=0 // pred_check
    _
  $region31: #{grud_forward.5} parent=0 // pred_check_branch
    %31 = sbr.rel (0) target = $region33
  $region32: #{grud_forward.5} parent=0 // pred_region
    _
  $region33: #{grud_forward.5} parent=0 // pred_fallthru
    _
  // Predicated region
  $region34: #{grud_forward.5} parent=0 // pred_check
    _
  $region35: #{grud_forward.5} parent=0 // pred_check_branch
    %33 = sbr.rel (0) target = $region37
  $region36: #{grud_forward.5} parent=0 // pred_region
    _
  $region37: #{grud_forward.5} parent=0 // pred_fallthru
    _
  // Predicated region
  $region38: #{grud_forward.5} parent=0 // pred_check
    _
  $region39: #{grud_forward.5} parent=0 // pred_check_branch
    %35 = sbr.rel (0) target = $region41
  $region40: #{grud_forward.5} parent=0 // pred_region
    _
  $region41: #{grud_forward.5} parent=0 // pred_fallthru
    _
  // Predicated region
  $region42: #{grud_forward.5} parent=0 // pred_check
    _
  $region43: #{grud_forward.5} parent=0 // pred_check_branch
    %37 = sbr.rel (0) target = $region45
  $region44: #{grud_forward.5} parent=0 // pred_region
    _
  $region45: #{grud_forward.5} parent=0 // pred_fallthru
    _
  %v38 = vld [vmem:[%s0] sm:$0xff]
  %v39 = vld [vmem:[%s0 + $0x8] sm:$0xff]
  %v40 = vld [vmem:[%s0 + $0x10] sm:$0xff]
  %v41 = vld [vmem:[%s0 + $0x18] sm:$0xff]
  %v42 = vld [vmem:[%s0 + $0x20] sm:$0xff]
  %v43 = vld [vmem:[%s0 + $0x28] sm:$0xff]
  %v44 = vld [vmem:[%s0 + $0x30] sm:$0xff]
  %v45 = vld [vmem:[%s0 + $0x38] sm:$0xff]
  %v46 = vld [vmem:[%s0 + $0x40] sm:$0xff]
  %v47 = vld [vmem:[%s0 + $0x48] sm:$0xff]
  %v48 = vld [vmem:[%s0 + $0x50] sm:$0xff]
  %v49 = vld [vmem:[%s0 + $0x58] sm:$0xff]
  %v50 = vld [vmem:[%s0 + $0x60] sm:$0xff]
  %v51 = vld [vmem:[%s0 + $0x68] sm:$0xff]
  %v52 = vld [vmem:[%s0 + $0x70] sm:$0xff]
  %v53 = vld [vmem:[%s0 + $0x78] sm:$0xff]
  %v54 = vld [vmem:[%s1] sm:$0xff]
  %v55 = vld [vmem:[%s1 + $0x8] sm:$0xff]
  %v56 = vld [vmem:[%s1 + $0x10] sm:$0xff]
  %v57 = vld [vmem:[%s1 + $0x18] sm:$0xff]
  %v58 = vld [vmem:[%s1 + $0x20] sm:$0xff]
  %v59 = vld [vmem:[%s1 + $0x28] sm:$0xff]
  %v60 = vld [vmem:[%s1 + $0x30] sm:$0xff]
  %v61 = vld [vmem:[%s1 + $0x38] sm:$0xff]
  %v62 = vld [vmem:[%s1 + $0x40] sm:$0xff]
  %v63 = vld [vmem:[%s1 + $0x48] sm:$0xff]
  %v64 = vld [vmem:[%s1 + $0x50] sm:$0xff]
  %v65 = vld [vmem:[%s1 + $0x58] sm:$0xff]
  %v66 = vld [vmem:[%s1 + $0x60] sm:$0xff]
  %v67 = vld [vmem:[%s1 + $0x68] sm:$0xff]
  %v68 = vld [vmem:[%s1 + $0x70] sm:$0xff]
  %v69 = vld [vmem:[%s1 + $0x78] sm:$0xff]
  %v70 = vld [vmem:[%s1 + $0x80] sm:$0xff]
  %v71 = vld [vmem:[%s1 + $0x88] sm:$0xff]
  %v72 = vld [vmem:[%s1 + $0x90] sm:$0xff]
  %v73 = vld [vmem:[%s1 + $0x98] sm:$0xff]
  %v74 = vld [vmem:[%s1 + $0xa0] sm:$0xff]
  %v75 = vld [vmem:[%s1 + $0xa8] sm:$0xff]
  %v76 = vld [vmem:[%s1 + $0xb0] sm:$0xff]
  %v77 = vld [vmem:[%s1 + $0xb8] sm:$0xff]
  %v78 = vld [vmem:[%s1 + $0xc0] sm:$0xff]
  %v79 = vld [vmem:[%s1 + $0xc8] sm:$0xff]
  %v80 = vld [vmem:[%s1 + $0xd0] sm:$0xff]
  %v81 = vld [vmem:[%s1 + $0xd8] sm:$0xff]
  %v82 = vld [vmem:[%s1 + $0xe0] sm:$0xff]
  %v83 = vld [vmem:[%s1 + $0xe8] sm:$0xff]
  %v84 = vld [vmem:[%s1 + $0xf0] sm:$0xff]
  %v85 = vld [vmem:[%s1 + $0xf8] sm:$0xff]
  %v86 = vld [vmem:[%s1 + $0x100] sm:$0xff]
  %v87 = vld [vmem:[%s1 + $0x108] sm:$0xff]
  %v88 = vld [vmem:[%s1 + $0x110] sm:$0xff]
  %v89 = vld [vmem:[%s1 + $0x118] sm:$0xff]
  %v90 = vld [vmem:[%s1 + $0x120] sm:$0xff]
  %v91 = vld [vmem:[%s1 + $0x128] sm:$0xff]
  %v92 = vld [vmem:[%s1 + $0x130] sm:$0xff]
  %v93 = vld [vmem:[%s1 + $0x138] sm:$0xff]
  %v94 = vld [vmem:[%s1 + $0x140] sm:$0xff]
  %v95 = vld [vmem:[%s1 + $0x148] sm:$0xff]
  %v96 = vld [vmem:[%s1 + $0x150] sm:$0xff]
  %v97 = vld [vmem:[%s1 + $0x158] sm:$0xff]
  %v98 = vld [vmem:[%s1 + $0x160] sm:$0xff]
  %v99 = vld [vmem:[%s1 + $0x168] sm:$0xff]
  %v100 = vld [vmem:[%s1 + $0x170] sm:$0xff]
  %v101 = vld [vmem:[%s1 + $0x178] sm:$0xff]
  %v102 = vld [vmem:[%s1 + $0x180] sm:$0xff]
  %v103 = vld [vmem:[%s1 + $0x188] sm:$0xff]
  %v104 = vld [vmem:[%s1 + $0x190] sm:$0xff]
  %v105 = vld [vmem:[%s1 + $0x198] sm:$0xff]
  %v106 = vld [vmem:[%s1 + $0x1a0] sm:$0xff]
  %v107 = vld [vmem:[%s1 + $0x1a8] sm:$0xff]
  %v108 = vld [vmem:[%s1 + $0x1b0] sm:$0xff]
  %v109 = vld [vmem:[%s1 + $0x1b8] sm:$0xff]
  %v110 = vld [vmem:[%s1 + $0x1c0] sm:$0xff]
  %v111 = vld [vmem:[%s1 + $0x1c8] sm:$0xff]
  %v112 = vld [vmem:[%s1 + $0x1d0] sm:$0xff]
  %v113 = vld [vmem:[%s1 + $0x1d8] sm:$0xff]
  %v114 = vld [vmem:[%s1 + $0x1e0] sm:$0xff]
  %v115 = vld [vmem:[%s1 + $0x1e8] sm:$0xff]
  %v116 = vld [vmem:[%s1 + $0x1f0] sm:$0xff]
  %v117 = vld [vmem:[%s1 + $0x1f8] sm:$0xff]
  %v118 = vld [vmem:[%s1 + $0x200] sm:$0xff]
  %v119 = vld [vmem:[%s1 + $0x208] sm:$0xff]
  %v120 = vld [vmem:[%s1 + $0x210] sm:$0xff]
  %v121 = vld [vmem:[%s1 + $0x218] sm:$0xff]
  %v122 = vld [vmem:[%s1 + $0x220] sm:$0xff]
  %v123 = vld [vmem:[%s1 + $0x228] sm:$0xff]
  %v124 = vld [vmem:[%s1 + $0x230] sm:$0xff]
  %v125 = vld [vmem:[%s1 + $0x238] sm:$0xff]
  %v126 = vld [vmem:[%s1 + $0x240] sm:$0xff]
  %v127 = vld [vmem:[%s1 + $0x248] sm:$0xff]
  %v128 = vld [vmem:[%s1 + $0x250] sm:$0xff]
  %v129 = vld [vmem:[%s1 + $0x258] sm:$0xff]
  %v130 = vld [vmem:[%s1 + $0x260] sm:$0xff]
  %v131 = vld [vmem:[%s1 + $0x268] sm:$0xff]
  %v132 = vld [vmem:[%s1 + $0x270] sm:$0xff]
  %v133 = vld [vmem:[%s1 + $0x278] sm:$0xff]
  %v134 = vld [vmem:[%s1 + $0x280] sm:$0xff]
  %v135 = vld [vmem:[%s1 + $0x288] sm:$0xff]
  %v136 = vld [vmem:[%s1 + $0x290] sm:$0xff]
  %v137 = vld [vmem:[%s1 + $0x298] sm:$0xff]
  %v138 = vld [vmem:[%s1 + $0x2a0] sm:$0xff]
  %v139 = vld [vmem:[%s1 + $0x2a8] sm:$0xff]
  %v140 = vld [vmem:[%s1 + $0x2b0] sm:$0xff]
  %v141 = vld [vmem:[%s1 + $0x2b8] sm:$0xff]
  %v142 = vld [vmem:[%s1 + $0x2c0] sm:$0xff]
  %v143 = vld [vmem:[%s1 + $0x2c8] sm:$0xff]
  %v144 = vld [vmem:[%s1 + $0x2d0] sm:$0xff]
  %v145 = vld [vmem:[%s1 + $0x2d8] sm:$0xff]
  %v146 = vld [vmem:[%s1 + $0x2e0] sm:$0xff]
  %v147 = vld [vmem:[%s1 + $0x2e8] sm:$0xff]
  %v148 = vld [vmem:[%s1 + $0x2f0] sm:$0xff]
  %v149 = vld [vmem:[%s1 + $0x2f8] sm:$0xff]
  %v150 = vld [vmem:[%s2] sm:$0x7]
  %v152 = vperm.slane %v150, 0
  %v153 = vperm.slane %v150, 1
  %v154 = vperm.slane %v150, 2
  %158 = vmatpush.msra.mxu0 %v99
  %159 = vmatpush.msra.mxu0 %v96
  %160 = vmatpush.msra.mxu0 %v93
  %161 = vmatpush.msra.mxu0 %v90
  %162 = vmatpush.msra.mxu0 %v87
  %163 = vmatpush.msra.mxu0 %v84
  %164 = vmatpush.msra.mxu0 %v81
  %165 = vmatpush.msra.mxu0 %v78
  %166 = vmatpush.msra.mxu0 %v75
  %167 = vmatpush.msra.mxu0 %v72
  %168 = vmatpush.msra.mxu0 %v69
  %169 = vmatpush.msra.mxu0 %v66
  %170 = vmatpush.msra.mxu0 %v63
  %171 = vmatpush.msra.mxu0 %v60
  %172 = vmatpush.msra.mxu0 %v57
  %173 = vmatpush.msra.mxu0 %v54
  %174 = vmatmul.f32.gmra.mxu0 %v38
  %v175 = vpop.f32.mrf.mxu0
  %v176 = vadd.f32 %v152, %v175
  %177 = vmatmul.f32.gmra.mxu0 %v40
  %v178 = vpop.f32.mrf.mxu0
  %v179 = vadd.f32 %v152, %v178
  %180 = vmatmul.f32.gmra.mxu0 %v42
  %v181 = vpop.f32.mrf.mxu0
  %v182 = vadd.f32 %v152, %v181
  %183 = vmatmul.f32.gmra.mxu0 %v44
  %v184 = vpop.f32.mrf.mxu0
  %v185 = vadd.f32 %v152, %v184
  %186 = vmatmul.f32.gmra.mxu0 %v46
  %v187 = vpop.f32.mrf.mxu0
  %v188 = vadd.f32 %v152, %v187
  %189 = vmatmul.f32.gmra.mxu0 %v48
  %v190 = vpop.f32.mrf.mxu0
  %v191 = vadd.f32 %v152, %v190
  %192 = vmatmul.f32.gmra.mxu0 %v50
  %v193 = vpop.f32.mrf.mxu0
  %v194 = vadd.f32 %v152, %v193
  %195 = vmatmul.f32.gmra.mxu0 %v52
  %v196 = vpop.f32.mrf.mxu0
  %v197 = vadd.f32 %v152, %v196
  %198 = vdwg.mxu0
  %199 = vmatpush.msra.mxu0 %v147
  %200 = vmatpush.msra.mxu0 %v144
  %201 = vmatpush.msra.mxu0 %v141
  %202 = vmatpush.msra.mxu0 %v138
  %203 = vmatpush.msra.mxu0 %v135
  %204 = vmatpush.msra.mxu0 %v132
  %205 = vmatpush.msra.mxu0 %v129
  %206 = vmatpush.msra.mxu0 %v126
  %207 = vmatpush.msra.mxu0 %v123
  %208 = vmatpush.msra.mxu0 %v120
  %209 = vmatpush.msra.mxu0 %v117
  %210 = vmatpush.msra.mxu0 %v114
  %211 = vmatpush.msra.mxu0 %v111
  %212 = vmatpush.msra.mxu0 %v108
  %213 = vmatpush.msra.mxu0 %v105
  %214 = vmatpush.msra.mxu0 %v102
  %215 = vmatmul.f32.gmra.mxu0 %v39
  %v216 = vpop.f32.mrf.mxu0
  %v217 = vadd.f32 %v176, %v216
  %218 = vmatmul.f32.gmra.mxu0 %v41
  %v219 = vpop.f32.mrf.mxu0
  %v220 = vadd.f32 %v179, %v219
  %221 = vmatmul.f32.gmra.mxu0 %v43
  %v222 = vpop.f32.mrf.mxu0
  %v223 = vadd.f32 %v182, %v222
  %224 = vmatmul.f32.gmra.mxu0 %v45
  %v225 = vpop.f32.mrf.mxu0
  %v226 = vadd.f32 %v185, %v225
  %227 = vmatmul.f32.gmra.mxu0 %v47
  %v228 = vpop.f32.mrf.mxu0
  %v229 = vadd.f32 %v188, %v228
  %230 = vmatmul.f32.gmra.mxu0 %v49
  %v231 = vpop.f32.mrf.mxu0
  %v232 = vadd.f32 %v191, %v231
  %233 = vmatmul.f32.gmra.mxu0 %v51
  %v234 = vpop.f32.mrf.mxu0
  %v235 = vadd.f32 %v194, %v234
  %236 = vmatmul.f32.gmra.mxu0 %v53
  %v237 = vpop.f32.mrf.mxu0
  %v238 = vadd.f32 %v197, %v237
  %239 = vdwg.mxu0
  %240 = vmatpush.msra.mxu0 %v100
  %241 = vmatpush.msra.mxu0 %v97
  %242 = vmatpush.msra.mxu0 %v94
  %243 = vmatpush.msra.mxu0 %v91
  %244 = vmatpush.msra.mxu0 %v88
  %245 = vmatpush.msra.mxu0 %v85
  %246 = vmatpush.msra.mxu0 %v82
  %247 = vmatpush.msra.mxu0 %v79
  %248 = vmatpush.msra.mxu0 %v76
  %249 = vmatpush.msra.mxu0 %v73
  %250 = vmatpush.msra.mxu0 %v70
  %251 = vmatpush.msra.mxu0 %v67
  %252 = vmatpush.msra.mxu0 %v64
  %253 = vmatpush.msra.mxu0 %v61
  %254 = vmatpush.msra.mxu0 %v58
  %255 = vmatpush.msra.mxu0 %v55
  %256 = vmatmul.f32.gmra.mxu0 %v38
  %v257 = vpop.f32.mrf.mxu0
  %v258 = vadd.f32 %v153, %v257
  %259 = vmatmul.f32.gmra.mxu0 %v40
  %v260 = vpop.f32.mrf.mxu0
  %v261 = vadd.f32 %v153, %v260
  %262 = vmatmul.f32.gmra.mxu0 %v42
  %v263 = vpop.f32.mrf.mxu0
  %v264 = vadd.f32 %v153, %v263
  %265 = vmatmul.f32.gmra.mxu0 %v44
  %v266 = vpop.f32.mrf.mxu0
  %v267 = vadd.f32 %v153, %v266
  %268 = vmatmul.f32.gmra.mxu0 %v46
  %v269 = vpop.f32.mrf.mxu0
  %v270 = vadd.f32 %v153, %v269
  %271 = vmatmul.f32.gmra.mxu0 %v48
  %v272 = vpop.f32.mrf.mxu0
  %v273 = vadd.f32 %v153, %v272
  %274 = vmatmul.f32.gmra.mxu0 %v50
  %v275 = vpop.f32.mrf.mxu0
  %v276 = vadd.f32 %v153, %v275
  %277 = vmatmul.f32.gmra.mxu0 %v52
  %v278 = vpop.f32.mrf.mxu0
  %v279 = vadd.f32 %v153, %v278
  %280 = vdwg.mxu0
  %281 = vmatpush.msra.mxu0 %v148
  %282 = vmatpush.msra.mxu0 %v145
  %283 = vmatpush.msra.mxu0 %v142
  %284 = vmatpush.msra.mxu0 %v139
  %285 = vmatpush.msra.mxu0 %v136
  %286 = vmatpush.msra.mxu0 %v133
  %287 = vmatpush.msra.mxu0 %v130
  %288 = vmatpush.msra.mxu0 %v127
  %289 = vmatpush.msra.mxu0 %v124
  %290 = vmatpush.msra.mxu0 %v121
  %291 = vmatpush.msra.mxu0 %v118
  %292 = vmatpush.msra.mxu0 %v115
  %293 = vmatpush.msra.mxu0 %v112
  %294 = vmatpush.msra.mxu0 %v109
  %295 = vmatpush.msra.mxu0 %v106
  %296 = vmatpush.msra.mxu0 %v103
  %297 = vmatmul.f32.gmra.mxu0 %v39
  %v298 = vpop.f32.mrf.mxu0
  %v299 = vadd.f32 %v258, %v298
  %300 = vmatmul.f32.gmra.mxu0 %v41
  %v301 = vpop.f32.mrf.mxu0
  %v302 = vadd.f32 %v261, %v301
  %303 = vmatmul.f32.gmra.mxu0 %v43
  %v304 = vpop.f32.mrf.mxu0
  %v305 = vadd.f32 %v264, %v304
  %306 = vmatmul.f32.gmra.mxu0 %v45
  %v307 = vpop.f32.mrf.mxu0
  %v308 = vadd.f32 %v267, %v307
  %309 = vmatmul.f32.gmra.mxu0 %v47
  %v310 = vpop.f32.mrf.mxu0
  %v311 = vadd.f32 %v270, %v310
  %312 = vmatmul.f32.gmra.mxu0 %v49
  %v313 = vpop.f32.mrf.mxu0
  %v314 = vadd.f32 %v273, %v313
  %315 = vmatmul.f32.gmra.mxu0 %v51
  %v316 = vpop.f32.mrf.mxu0
  %v317 = vadd.f32 %v276, %v316
  %318 = vmatmul.f32.gmra.mxu0 %v53
  %v319 = vpop.f32.mrf.mxu0
  %v320 = vadd.f32 %v279, %v319
  %321 = vdwg.mxu0
  %322 = vmatpush.msra.mxu0 %v101
  %323 = vmatpush.msra.mxu0 %v98
  %324 = vmatpush.msra.mxu0 %v95
  %325 = vmatpush.msra.mxu0 %v92
  %326 = vmatpush.msra.mxu0 %v89
  %327 = vmatpush.msra.mxu0 %v86
  %328 = vmatpush.msra.mxu0 %v83
  %329 = vmatpush.msra.mxu0 %v80
  %330 = vmatpush.msra.mxu0 %v77
  %331 = vmatpush.msra.mxu0 %v74
  %332 = vmatpush.msra.mxu0 %v71
  %333 = vmatpush.msra.mxu0 %v68
  %334 = vmatpush.msra.mxu0 %v65
  %335 = vmatpush.msra.mxu0 %v62
  %336 = vmatpush.msra.mxu0 %v59
  %337 = vmatpush.msra.mxu0 %v56
  %338 = vmatmul.f32.gmra.mxu0 %v38
  %v339 = vpop.f32.mrf.mxu0
  %v340 = vadd.f32 %v154, %v339
  %341 = vmatmul.f32.gmra.mxu0 %v40
  %v342 = vpop.f32.mrf.mxu0
  %v343 = vadd.f32 %v154, %v342
  %344 = vmatmul.f32.gmra.mxu0 %v42
  %v345 = vpop.f32.mrf.mxu0
  %v346 = vadd.f32 %v154, %v345
  %347 = vmatmul.f32.gmra.mxu0 %v44
  %v348 = vpop.f32.mrf.mxu0
  %v349 = vadd.f32 %v154, %v348
  %350 = vmatmul.f32.gmra.mxu0 %v46
  %v351 = vpop.f32.mrf.mxu0
  %v352 = vadd.f32 %v154, %v351
  %353 = vmatmul.f32.gmra.mxu0 %v48
  %v354 = vpop.f32.mrf.mxu0
  %v355 = vadd.f32 %v154, %v354
  %356 = vmatmul.f32.gmra.mxu0 %v50
  %v357 = vpop.f32.mrf.mxu0
  %v358 = vadd.f32 %v154, %v357
  %359 = vmatmul.f32.gmra.mxu0 %v52
  %v360 = vpop.f32.mrf.mxu0
  %v361 = vadd.f32 %v154, %v360
  %362 = vdwg.mxu0
  %363 = vmatpush.msra.mxu0 %v149
  %364 = vmatpush.msra.mxu0 %v146
  %365 = vmatpush.msra.mxu0 %v143
  %366 = vmatpush.msra.mxu0 %v140
  %367 = vmatpush.msra.mxu0 %v137
  %368 = vmatpush.msra.mxu0 %v134
  %369 = vmatpush.msra.mxu0 %v131
  %370 = vmatpush.msra.mxu0 %v128
  %371 = vmatpush.msra.mxu0 %v125
  %372 = vmatpush.msra.mxu0 %v122
  %373 = vmatpush.msra.mxu0 %v119
  %374 = vmatpush.msra.mxu0 %v116
  %375 = vmatpush.msra.mxu0 %v113
  %376 = vmatpush.msra.mxu0 %v110
  %377 = vmatpush.msra.mxu0 %v107
  %378 = vmatpush.msra.mxu0 %v104
  %379 = vmatmul.f32.gmra.mxu0 %v39
  %v380 = vpop.f32.mrf.mxu0
  %v381 = vadd.f32 %v340, %v380
  %382 = vmatmul.f32.gmra.mxu0 %v41
  %v383 = vpop.f32.mrf.mxu0
  %v384 = vadd.f32 %v343, %v383
  %385 = vmatmul.f32.gmra.mxu0 %v43
  %v386 = vpop.f32.mrf.mxu0
  %v387 = vadd.f32 %v346, %v386
  %388 = vmatmul.f32.gmra.mxu0 %v45
  %v389 = vpop.f32.mrf.mxu0
  %v390 = vadd.f32 %v349, %v389
  %391 = vmatmul.f32.gmra.mxu0 %v47
  %v392 = vpop.f32.mrf.mxu0
  %v393 = vadd.f32 %v352, %v392
  %394 = vmatmul.f32.gmra.mxu0 %v49
  %v395 = vpop.f32.mrf.mxu0
  %v396 = vadd.f32 %v355, %v395
  %397 = vmatmul.f32.gmra.mxu0 %v51
  %v398 = vpop.f32.mrf.mxu0
  %v399 = vadd.f32 %v358, %v398
  %400 = vmatmul.f32.gmra.mxu0 %v53
  %v401 = vpop.f32.mrf.mxu0
  %v402 = vadd.f32 %v361, %v401
  %403 = vdwg.mxu0
  %404 = vst [vmem:[#allocation2] sm:$0xff] %v217
  %405 = vst [vmem:[#allocation2 + $0x8] sm:$0xff] %v299
  %406 = vst [vmem:[#allocation2 + $0x10] sm:$0xff] %v381
  %407 = vst [vmem:[#allocation2 + $0x18] sm:$0xff] %v220
  %408 = vst [vmem:[#allocation2 + $0x20] sm:$0xff] %v302
  %409 = vst [vmem:[#allocation2 + $0x28] sm:$0xff] %v384
  %410 = vst [vmem:[#allocation2 + $0x30] sm:$0xff] %v223
  %411 = vst [vmem:[#allocation2 + $0x38] sm:$0xff] %v305
  %412 = vst [vmem:[#allocation2 + $0x40] sm:$0xff] %v387
  %413 = vst [vmem:[#allocation2 + $0x48] sm:$0xff] %v226
  %414 = vst [vmem:[#allocation2 + $0x50] sm:$0xff] %v308
  %415 = vst [vmem:[#allocation2 + $0x58] sm:$0xff] %v390
  %416 = vst [vmem:[#allocation2 + $0x60] sm:$0xff] %v229
  %417 = vst [vmem:[#allocation2 + $0x68] sm:$0xff] %v311
  %418 = vst [vmem:[#allocation2 + $0x70] sm:$0xff] %v393
  %419 = vst [vmem:[#allocation2 + $0x78] sm:$0xff] %v232
  %420 = vst [vmem:[#allocation2 + $0x80] sm:$0xff] %v314
  %421 = vst [vmem:[#allocation2 + $0x88] sm:$0xff] %v396
  %422 = vst [vmem:[#allocation2 + $0x90] sm:$0xff] %v235
  %423 = vst [vmem:[#allocation2 + $0x98] sm:$0xff] %v317
  %424 = vst [vmem:[#allocation2 + $0xa0] sm:$0xff] %v399
  %425 = vst [vmem:[#allocation2 + $0xa8] sm:$0xff] %v238
  %426 = vst [vmem:[#allocation2 + $0xb0] sm:$0xff] %v320
  %427 = vst [vmem:[#allocation2 + $0xb8] sm:$0xff] %v402
  %v428 = vld [vmem:[%s6] sm:$0x1]
  %v430 = vperm.slane %v428, 0
  %v432 = vld [vmem:[%s7] sm:$0x1]
  %v434 = vperm.slane %v432, 0
  %s436 = smul.u32 0, 3
  %s437 = smul.addr %s436, 8
  %s438 = scalar_lea.vmem [#allocation2], %s437
  %v439 = vld [vmem:[%s438] sm:$0xff]
  %v440 = vld [vmem:[%s438 + $0x8] sm:$0xff]
  %v441 = vld [vmem:[%s438 + $0x10] sm:$0xff]
  %v442 = vld [vmem:[%s5] sm:$0xff]
  %v443 = vld [vmem:[%s5 + $0x8] sm:$0xff]
  %v444 = vld [vmem:[%s5 + $0x10] sm:$0xff]
  %v445 = vld [vmem:[%s5 + $0x18] sm:$0xff]
  %v446 = vld [vmem:[%s5 + $0x20] sm:$0xff]
  %v447 = vld [vmem:[%s5 + $0x28] sm:$0xff]
  %v448 = vld [vmem:[%s5 + $0x30] sm:$0xff]
  %v449 = vld [vmem:[%s5 + $0x38] sm:$0xff]
  %v450 = vld [vmem:[%s5 + $0x40] sm:$0xff]
  %v451 = vld [vmem:[%s5 + $0x48] sm:$0xff]
  %v452 = vld [vmem:[%s5 + $0x50] sm:$0xff]
  %v453 = vld [vmem:[%s5 + $0x58] sm:$0xff]
  %v454 = vld [vmem:[%s5 + $0x60] sm:$0xff]
  %v455 = vld [vmem:[%s5 + $0x68] sm:$0xff]
  %v456 = vld [vmem:[%s5 + $0x70] sm:$0xff]
  %v457 = vld [vmem:[%s5 + $0x78] sm:$0xff]
  %v458 = vld [vmem:[%s5 + $0x80] sm:$0xff]
  %v459 = vld [vmem:[%s5 + $0x88] sm:$0xff]
  %v460 = vld [vmem:[%s5 + $0x90] sm:$0xff]
  %v461 = vld [vmem:[%s5 + $0x98] sm:$0xff]
  %v462 = vld [vmem:[%s5 + $0xa0] sm:$0xff]
  %v463 = vld [vmem:[%s5 + $0xa8] sm:$0xff]
  %v464 = vld [vmem:[%s5 + $0xb0] sm:$0xff]
  %v465 = vld [vmem:[%s5 + $0xb8] sm:$0xff]
  %v466 = vld [vmem:[%s5 + $0xc0] sm:$0xff]
  %v467 = vld [vmem:[%s5 + $0xc8] sm:$0xff]
  %v468 = vld [vmem:[%s5 + $0xd0] sm:$0xff]
  %v469 = vld [vmem:[%s5 + $0xd8] sm:$0xff]
  %v470 = vld [vmem:[%s5 + $0xe0] sm:$0xff]
  %v471 = vld [vmem:[%s5 + $0xe8] sm:$0xff]
  %v472 = vld [vmem:[%s5 + $0xf0] sm:$0xff]
  %v473 = vld [vmem:[%s5 + $0xf8] sm:$0xff]
  %v474 = vld [vmem:[%s5 + $0x100] sm:$0xff]
  %v475 = vld [vmem:[%s5 + $0x108] sm:$0xff]
  %v476 = vld [vmem:[%s5 + $0x110] sm:$0xff]
  %v477 = vld [vmem:[%s5 + $0x118] sm:$0xff]
  %v478 = vld [vmem:[%s5 + $0x120] sm:$0xff]
  %v479 = vld [vmem:[%s5 + $0x128] sm:$0xff]
  %v480 = vld [vmem:[%s5 + $0x130] sm:$0xff]
  %v481 = vld [vmem:[%s5 + $0x138] sm:$0xff]
  %v482 = vld [vmem:[%s5 + $0x140] sm:$0xff]
  %v483 = vld [vmem:[%s5 + $0x148] sm:$0xff]
  %v484 = vld [vmem:[%s5 + $0x150] sm:$0xff]
  %v485 = vld [vmem:[%s5 + $0x158] sm:$0xff]
  %v486 = vld [vmem:[%s5 + $0x160] sm:$0xff]
  %v487 = vld [vmem:[%s5 + $0x168] sm:$0xff]
  %v488 = vld [vmem:[%s5 + $0x170] sm:$0xff]
  %v489 = vld [vmem:[%s5 + $0x178] sm:$0xff]
  %490 = vmatpush.msra.mxu0 %v487
  %491 = vmatpush.msra.mxu0 %v484
  %492 = vmatpush.msra.mxu0 %v481
  %493 = vmatpush.msra.mxu0 %v478
  %494 = vmatpush.msra.mxu0 %v475
  %495 = vmatpush.msra.mxu0 %v472
  %496 = vmatpush.msra.mxu0 %v469
  %497 = vmatpush.msra.mxu0 %v466
  %498 = vmatpush.msra.mxu0 %v463
  %499 = vmatpush.msra.mxu0 %v460
  %500 = vmatpush.msra.mxu0 %v457
  %501 = vmatpush.msra.mxu0 %v454
  %502 = vmatpush.msra.mxu0 %v451
  %503 = vmatpush.msra.mxu0 %v448
  %504 = vmatpush.msra.mxu0 %v445
  %505 = vmatpush.msra.mxu0 %v442
  %506 = vmatmul.f32.gmra.mxu0 0.0
  %v507 = vpop.f32.mrf.mxu0
  %v508 = vadd.f32 0.0, %v507
  %509 = vdwg.mxu0
  %510 = vmatpush.msra.mxu0 %v488
  %511 = vmatpush.msra.mxu0 %v485
  %512 = vmatpush.msra.mxu0 %v482
  %513 = vmatpush.msra.mxu0 %v479
  %514 = vmatpush.msra.mxu0 %v476
  %515 = vmatpush.msra.mxu0 %v473
  %516 = vmatpush.msra.mxu0 %v470
  %517 = vmatpush.msra.mxu0 %v467
  %518 = vmatpush.msra.mxu0 %v464
  %519 = vmatpush.msra.mxu0 %v461
  %520 = vmatpush.msra.mxu0 %v458
  %521 = vmatpush.msra.mxu0 %v455
  %522 = vmatpush.msra.mxu0 %v452
  %523 = vmatpush.msra.mxu0 %v449
  %524 = vmatpush.msra.mxu0 %v446
  %525 = vmatpush.msra.mxu0 %v443
  %526 = vmatmul.f32.gmra.mxu0 0.0
  %v527 = vpop.f32.mrf.mxu0
  %v528 = vadd.f32 0.0, %v527
  %529 = vdwg.mxu0
  %530 = vmatpush.msra.mxu0 %v489
  %531 = vmatpush.msra.mxu0 %v486
  %532 = vmatpush.msra.mxu0 %v483
  %533 = vmatpush.msra.mxu0 %v480
  %534 = vmatpush.msra.mxu0 %v477
  %535 = vmatpush.msra.mxu0 %v474
  %536 = vmatpush.msra.mxu0 %v471
  %537 = vmatpush.msra.mxu0 %v468
  %538 = vmatpush.msra.mxu0 %v465
  %539 = vmatpush.msra.mxu0 %v462
  %540 = vmatpush.msra.mxu0 %v459
  %541 = vmatpush.msra.mxu0 %v456
  %542 = vmatpush.msra.mxu0 %v453
  %543 = vmatpush.msra.mxu0 %v450
  %544 = vmatpush.msra.mxu0 %v447
  %545 = vmatpush.msra.mxu0 %v444
  %546 = vmatmul.f32.gmra.mxu0 0.0
  %v547 = vpop.f32.mrf.mxu0
  %v548 = vadd.f32 0.0, %v547
  %549 = vdwg.mxu0
  %v550 = vadd.f32 %v439, %v508
  %v551 = vsub.f32 0.0, %v550
  %v552 = vmul.f32 %v551, 1.442695
  %v553 = vpow.pop %v552
  %v554 = vadd.f32 %v553, 1.0
  %v555 = vrcp.pop %v554
  %v556 = vmul.f32 %v554, %v555
  %v557 = vsub.f32 1.0, %v556
  %v558 = vmul.f32 %v555, %v557
  %v559 = vadd.f32 %v555, %v558
  %vm560 = vweird.f32 %v554
  %vm561 = vweird.f32 %v555
  %vm562 = vmor %vm560, %vm561
  %v563 = vsel %vm562, %v555, %v559
  %v564 = vand.u32 2147483647, %v554
  %vm565 = vcmp.eq.f32.partialorder %v564, 8.507059e+37
  %v566 = vand.u32 %v554, 2147483648
  %v567 = vor.u32 1.1754944e-38, %v566
  %v568 = vsel %vm565, %v567, %v563
  %v569 = vmul.f32 1.0, %v568
  %v570 = vadd.f32 %v440, %v528
  %v571 = vsub.f32 0.0, %v570
  %v572 = vmul.f32 %v571, 1.442695
  %v573 = vpow.pop %v572
  %v574 = vadd.f32 %v573, 1.0
  %v575 = vrcp.pop %v574
  %v576 = vmul.f32 %v574, %v575
  %v577 = vsub.f32 1.0, %v576
  %v578 = vmul.f32 %v575, %v577
  %v579 = vadd.f32 %v575, %v578
  %vm580 = vweird.f32 %v574
  %vm581 = vweird.f32 %v575
  %vm582 = vmor %vm580, %vm581
  %v583 = vsel %vm582, %v575, %v579
  %v584 = vand.u32 2147483647, %v574
  %vm585 = vcmp.eq.f32.partialorder %v584, 8.507059e+37
  %v586 = vand.u32 %v574, 2147483648
  %v587 = vor.u32 1.1754944e-38, %v586
  %v588 = vsel %vm585, %v587, %v583
  %v589 = vmul.f32 1.0, %v588
  %v590 = vadd.f32 %v548, %v430
  %v591 = vmul.f32 %v569, %v590
  %v592 = vadd.f32 %v441, %v591
  %v593 = vtanh.pop %v592
  %v594 = vsub.f32 1.0, %v589
  %v595 = vmul.f32 %v594, %v593
  %v596 = vmul.f32 %v589, 0.0
  %v597 = vadd.f32 %v595, %v596
  %s598 = smul.u32 1, 3
  %s599 = smul.addr %s598, 8
  %s600 = scalar_lea.vmem [#allocation2], %s599
  %v601 = vld [vmem:[%s600] sm:$0xff]
  %v602 = vld [vmem:[%s600 + $0x8] sm:$0xff]
  %v603 = vld [vmem:[%s600 + $0x10] sm:$0xff]
  %604 = vmatpush.msra.mxu0 %v487
  %605 = vmatpush.msra.mxu0 %v484
  %606 = vmatpush.msra.mxu0 %v481
  %607 = vmatpush.msra.mxu0 %v478
  %608 = vmatpush.msra.mxu0 %v475
  %609 = vmatpush.msra.mxu0 %v472
  %610 = vmatpush.msra.mxu0 %v469
  %611 = vmatpush.msra.mxu0 %v466
  %612 = vmatpush.msra.mxu0 %v463
  %613 = vmatpush.msra.mxu0 %v460
  %614 = vmatpush.msra.mxu0 %v457
  %615 = vmatpush.msra.mxu0 %v454
  %616 = vmatpush.msra.mxu0 %v451
  %617 = vmatpush.msra.mxu0 %v448
  %618 = vmatpush.msra.mxu0 %v445
  %619 = vmatpush.msra.mxu0 %v442
  %620 = vmatmul.f32.gmra.mxu0 %v597
  %v621 = vpop.f32.mrf.mxu0
  %v622 = vadd.f32 0.0, %v621
  %623 = vdwg.mxu0
  %624 = vmatpush.msra.mxu0 %v488
  %625 = vmatpush.msra.mxu0 %v485
  %626 = vmatpush.msra.mxu0 %v482
  %627 = vmatpush.msra.mxu0 %v479
  %628 = vmatpush.msra.mxu0 %v476
  %629 = vmatpush.msra.mxu0 %v473
  %630 = vmatpush.msra.mxu0 %v470
  %631 = vmatpush.msra.mxu0 %v467
  %632 = vmatpush.msra.mxu0 %v464
  %633 = vmatpush.msra.mxu0 %v461
  %634 = vmatpush.msra.mxu0 %v458
  %635 = vmatpush.msra.mxu0 %v455
  %636 = vmatpush.msra.mxu0 %v452
  %637 = vmatpush.msra.mxu0 %v449
  %638 = vmatpush.msra.mxu0 %v446
  %639 = vmatpush.msra.mxu0 %v443
  %640 = vmatmul.f32.gmra.mxu0 %v597
  %v641 = vpop.f32.mrf.mxu0
  %v642 = vadd.f32 0.0, %v641
  %643 = vdwg.mxu0
  %644 = vmatpush.msra.mxu0 %v489
  %645 = vmatpush.msra.mxu0 %v486
  %646 = vmatpush.msra.mxu0 %v483
  %647 = vmatpush.msra.mxu0 %v480
  %648 = vmatpush.msra.mxu0 %v477
  %649 = vmatpush.msra.mxu0 %v474
  %650 = vmatpush.msra.mxu0 %v471
  %651 = vmatpush.msra.mxu0 %v468
  %652 = vmatpush.msra.mxu0 %v465
  %653 = vmatpush.msra.mxu0 %v462
  %654 = vmatpush.msra.mxu0 %v459
  %655 = vmatpush.msra.mxu0 %v456
  %656 = vmatpush.msra.mxu0 %v453
  %657 = vmatpush.msra.mxu0 %v450
  %658 = vmatpush.msra.mxu0 %v447
  %659 = vmatpush.msra.mxu0 %v444
  %660 = vmatmul.f32.gmra.mxu0 %v597
  %v661 = vpop.f32.mrf.mxu0
  %v662 = vadd.f32 0.0, %v661
  %663 = vdwg.mxu0
  %v664 = vadd.f32 %v601, %v622
  %v665 = vsub.f32 0.0, %v664
  %v666 = vmul.f32 %v665, 1.442695
  %v667 = vpow.pop %v666
  %v668 = vadd.f32 %v667, 1.0
  %v669 = vrcp.pop %v668
  %v670 = vmul.f32 %v668, %v669
  %v671 = vsub.f32 1.0, %v670
  %v672 = vmul.f32 %v669, %v671
  %v673 = vadd.f32 %v669, %v672
  %vm674 = vweird.f32 %v668
  %vm675 = vweird.f32 %v669
  %vm676 = vmor %vm674, %vm675
  %v677 = vsel %vm676, %v669, %v673
  %v678 = vand.u32 2147483647, %v668
  %vm679 = vcmp.eq.f32.partialorder %v678, 8.507059e+37
  %v680 = vand.u32 %v668, 2147483648
  %v681 = vor.u32 1.1754944e-38, %v680
  %v682 = vsel %vm679, %v681, %v677
  %v683 = vmul.f32 1.0, %v682
  %v684 = vadd.f32 %v602, %v642
  %v685 = vsub.f32 0.0, %v684
  %v686 = vmul.f32 %v685, 1.442695
  %v687 = vpow.pop %v686
  %v688 = vadd.f32 %v687, 1.0
  %v689 = vrcp.pop %v688
  %v690 = vmul.f32 %v688, %v689
  %v691 = vsub.f32 1.0, %v690
  %v692 = vmul.f32 %v689, %v691
  %v693 = vadd.f32 %v689, %v692
  %vm694 = vweird.f32 %v688
  %vm695 = vweird.f32 %v689
  %vm696 = vmor %vm694, %vm695
  %v697 = vsel %vm696, %v689, %v693
  %v698 = vand.u32 2147483647, %v688
  %vm699 = vcmp.eq.f32.partialorder %v698, 8.507059e+37
  %v700 = vand.u32 %v688, 2147483648
  %v701 = vor.u32 1.1754944e-38, %v700
  %v702 = vsel %vm699, %v701, %v697
  %v703 = vmul.f32 1.0, %v702
  %v704 = vadd.f32 %v662, %v430
  %v705 = vmul.f32 %v683, %v704
  %v706 = vadd.f32 %v603, %v705
  %v707 = vtanh.pop %v706
  %v708 = vsub.f32 1.0, %v703
  %v709 = vmul.f32 %v708, %v707
  %v710 = vmul.f32 %v703, %v597
  %v711 = vadd.f32 %v709, %v710
  %s712 = smul.u32 2, 3
  %s713 = smul.addr %s712, 8
  %s714 = scalar_lea.vmem [#allocation2], %s713
  %v715 = vld [vmem:[%s714] sm:$0xff]
  %v716 = vld [vmem:[%s714 + $0x8] sm:$0xff]
  %v717 = vld [vmem:[%s714 + $0x10] sm:$0xff]
  %718 = vmatpush.msra.mxu0 %v487
  %719 = vmatpush.msra.mxu0 %v484
  %720 = vmatpush.msra.mxu0 %v481
  %721 = vmatpush.msra.mxu0 %v478
  %722 = vmatpush.msra.mxu0 %v475
  %723 = vmatpush.msra.mxu0 %v472
  %724 = vmatpush.msra.mxu0 %v469
  %725 = vmatpush.msra.mxu0 %v466
  %726 = vmatpush.msra.mxu0 %v463
  %727 = vmatpush.msra.mxu0 %v460
  %728 = vmatpush.msra.mxu0 %v457
  %729 = vmatpush.msra.mxu0 %v454
  %730 = vmatpush.msra.mxu0 %v451
  %731 = vmatpush.msra.mxu0 %v448
  %732 = vmatpush.msra.mxu0 %v445
  %733 = vmatpush.msra.mxu0 %v442
  %734 = vmatmul.f32.gmra.mxu0 %v711
  %v735 = vpop.f32.mrf.mxu0
  %v736 = vadd.f32 0.0, %v735
  %737 = vdwg.mxu0
  %738 = vmatpush.msra.mxu0 %v488
  %739 = vmatpush.msra.mxu0 %v485
  %740 = vmatpush.msra.mxu0 %v482
  %741 = vmatpush.msra.mxu0 %v479
  %742 = vmatpush.msra.mxu0 %v476
  %743 = vmatpush.msra.mxu0 %v473
  %744 = vmatpush.msra.mxu0 %v470
  %745 = vmatpush.msra.mxu0 %v467
  %746 = vmatpush.msra.mxu0 %v464
  %747 = vmatpush.msra.mxu0 %v461
  %748 = vmatpush.msra.mxu0 %v458
  %749 = vmatpush.msra.mxu0 %v455
  %750 = vmatpush.msra.mxu0 %v452
  %751 = vmatpush.msra.mxu0 %v449
  %752 = vmatpush.msra.mxu0 %v446
  %753 = vmatpush.msra.mxu0 %v443
  %754 = vmatmul.f32.gmra.mxu0 %v711
  %v755 = vpop.f32.mrf.mxu0
  %v756 = vadd.f32 0.0, %v755
  %757 = vdwg.mxu0
  %758 = vmatpush.msra.mxu0 %v489
  %759 = vmatpush.msra.mxu0 %v486
  %760 = vmatpush.msra.mxu0 %v483
  %761 = vmatpush.msra.mxu0 %v480
  %762 = vmatpush.msra.mxu0 %v477
  %763 = vmatpush.msra.mxu0 %v474
  %764 = vmatpush.msra.mxu0 %v471
  %765 = vmatpush.msra.mxu0 %v468
  %766 = vmatpush.msra.mxu0 %v465
  %767 = vmatpush.msra.mxu0 %v462
  %768 = vmatpush.msra.mxu0 %v459
  %769 = vmatpush.msra.mxu0 %v456
  %770 = vmatpush.msra.mxu0 %v453
  %771 = vmatpush.msra.mxu0 %v450
  %772 = vmatpush.msra.mxu0 %v447
  %773 = vmatpush.msra.mxu0 %v444
  %774 = vmatmul.f32.gmra.mxu0 %v711
  %v775 = vpop.f32.mrf.mxu0
  %v776 = vadd.f32 0.0, %v775
  %777 = vdwg.mxu0
  %v778 = vadd.f32 %v715, %v736
  %v779 = vsub.f32 0.0, %v778
  %v780 = vmul.f32 %v779, 1.442695
  %v781 = vpow.pop %v780
  %v782 = vadd.f32 %v781, 1.0
  %v783 = vrcp.pop %v782
  %v784 = vmul.f32 %v782, %v783
  %v785 = vsub.f32 1.0, %v784
  %v786 = vmul.f32 %v783, %v785
  %v787 = vadd.f32 %v783, %v786
  %vm788 = vweird.f32 %v782
  %vm789 = vweird.f32 %v783
  %vm790 = vmor %vm788, %vm789
  %v791 = vsel %vm790, %v783, %v787
  %v792 = vand.u32 2147483647, %v782
  %vm793 = vcmp.eq.f32.partialorder %v792, 8.507059e+37
  %v794 = vand.u32 %v782, 2147483648
  %v795 = vor.u32 1.1754944e-38, %v794
  %v796 = vsel %vm793, %v795, %v791
  %v797 = vmul.f32 1.0, %v796
  %v798 = vadd.f32 %v716, %v756
  %v799 = vsub.f32 0.0, %v798
  %v800 = vmul.f32 %v799, 1.442695
  %v801 = vpow.pop %v800
  %v802 = vadd.f32 %v801, 1.0
  %v803 = vrcp.pop %v802
  %v804 = vmul.f32 %v802, %v803
  %v805 = vsub.f32 1.0, %v804
  %v806 = vmul.f32 %v803, %v805
  %v807 = vadd.f32 %v803, %v806
  %vm808 = vweird.f32 %v802
  %vm809 = vweird.f32 %v803
  %vm810 = vmor %vm808, %vm809
  %v811 = vsel %vm810, %v803, %v807
  %v812 = vand.u32 2147483647, %v802
  %vm813 = vcmp.eq.f32.partialorder %v812, 8.507059e+37
  %v814 = vand.u32 %v802, 2147483648
  %v815 = vor.u32 1.1754944e-38, %v814
  %v816 = vsel %vm813, %v815, %v811
  %v817 = vmul.f32 1.0, %v816
  %v818 = vadd.f32 %v776, %v430
  %v819 = vmul.f32 %v797, %v818
  %v820 = vadd.f32 %v717, %v819
  %v821 = vtanh.pop %v820
  %v822 = vsub.f32 1.0, %v817
  %v823 = vmul.f32 %v822, %v821
  %v824 = vmul.f32 %v817, %v711
  %v825 = vadd.f32 %v823, %v824
  %s826 = smul.u32 3, 3
  %s827 = smul.addr %s826, 8
  %s828 = scalar_lea.vmem [#allocation2], %s827
  %v829 = vld [vmem:[%s828] sm:$0xff]
  %v830 = vld [vmem:[%s828 + $0x8] sm:$0xff]
  %v831 = vld [vmem:[%s828 + $0x10] sm:$0xff]
  %832 = vmatpush.msra.mxu0 %v487
  %833 = vmatpush.msra.mxu0 %v484
  %834 = vmatpush.msra.mxu0 %v481
  %835 = vmatpush.msra.mxu0 %v478
  %836 = vmatpush.msra.mxu0 %v475
  %837 = vmatpush.msra.mxu0 %v472
  %838 = vmatpush.msra.mxu0 %v469
  %839 = vmatpush.msra.mxu0 %v466
  %840 = vmatpush.msra.mxu0 %v463
  %841 = vmatpush.msra.mxu0 %v460
  %842 = vmatpush.msra.mxu0 %v457
  %843 = vmatpush.msra.mxu0 %v454
  %844 = vmatpush.msra.mxu0 %v451
  %845 = vmatpush.msra.mxu0 %v448
  %846 = vmatpush.msra.mxu0 %v445
  %847 = vmatpush.msra.mxu0 %v442
  %848 = vmatmul.f32.gmra.mxu0 %v825
  %v849 = vpop.f32.mrf.mxu0
  %v850 = vadd.f32 0.0, %v849
  %851 = vdwg.mxu0
  %852 = vmatpush.msra.mxu0 %v488
  %853 = vmatpush.msra.mxu0 %v485
  %854 = vmatpush.msra.mxu0 %v482
  %855 = vmatpush.msra.mxu0 %v479
  %856 = vmatpush.msra.mxu0 %v476
  %857 = vmatpush.msra.mxu0 %v473
  %858 = vmatpush.msra.mxu0 %v470
  %859 = vmatpush.msra.mxu0 %v467
  %860 = vmatpush.msra.mxu0 %v464
  %861 = vmatpush.msra.mxu0 %v461
  %862 = vmatpush.msra.mxu0 %v458
  %863 = vmatpush.msra.mxu0 %v455
  %864 = vmatpush.msra.mxu0 %v452
  %865 = vmatpush.msra.mxu0 %v449
  %866 = vmatpush.msra.mxu0 %v446
  %867 = vmatpush.msra.mxu0 %v443
  %868 = vmatmul.f32.gmra.mxu0 %v825
  %v869 = vpop.f32.mrf.mxu0
  %v870 = vadd.f32 0.0, %v869
  %871 = vdwg.mxu0
  %872 = vmatpush.msra.mxu0 %v489
  %873 = vmatpush.msra.mxu0 %v486
  %874 = vmatpush.msra.mxu0 %v483
  %875 = vmatpush.msra.mxu0 %v480
  %876 = vmatpush.msra.mxu0 %v477
  %877 = vmatpush.msra.mxu0 %v474
  %878 = vmatpush.msra.mxu0 %v471
  %879 = vmatpush.msra.mxu0 %v468
  %880 = vmatpush.msra.mxu0 %v465
  %881 = vmatpush.msra.mxu0 %v462
  %882 = vmatpush.msra.mxu0 %v459
  %883 = vmatpush.msra.mxu0 %v456
  %884 = vmatpush.msra.mxu0 %v453
  %885 = vmatpush.msra.mxu0 %v450
  %886 = vmatpush.msra.mxu0 %v447
  %887 = vmatpush.msra.mxu0 %v444
  %888 = vmatmul.f32.gmra.mxu0 %v825
  %v889 = vpop.f32.mrf.mxu0
  %v890 = vadd.f32 0.0, %v889
  %891 = vdwg.mxu0
  %v892 = vadd.f32 %v829, %v850
  %v893 = vsub.f32 0.0, %v892
  %v894 = vmul.f32 %v893, 1.442695
  %v895 = vpow.pop %v894
  %v896 = vadd.f32 %v895, 1.0
  %v897 = vrcp.pop %v896
  %v898 = vmul.f32 %v896, %v897
  %v899 = vsub.f32 1.0, %v898
  %v900 = vmul.f32 %v897, %v899
  %v901 = vadd.f32 %v897, %v900
  %vm902 = vweird.f32 %v896
  %vm903 = vweird.f32 %v897
  %vm904 = vmor %vm902, %vm903
  %v905 = vsel %vm904, %v897, %v901
  %v906 = vand.u32 2147483647, %v896
  %vm907 = vcmp.eq.f32.partialorder %v906, 8.507059e+37
  %v908 = vand.u32 %v896, 2147483648
  %v909 = vor.u32 1.1754944e-38, %v908
  %v910 = vsel %vm907, %v909, %v905
  %v911 = vmul.f32 1.0, %v910
  %v912 = vadd.f32 %v830, %v870
  %v913 = vsub.f32 0.0, %v912
  %v914 = vmul.f32 %v913, 1.442695
  %v915 = vpow.pop %v914
  %v916 = vadd.f32 %v915, 1.0
  %v917 = vrcp.pop %v916
  %v918 = vmul.f32 %v916, %v917
  %v919 = vsub.f32 1.0, %v918
  %v920 = vmul.f32 %v917, %v919
  %v921 = vadd.f32 %v917, %v920
  %vm922 = vweird.f32 %v916
  %vm923 = vweird.f32 %v917
  %vm924 = vmor %vm922, %vm923
  %v925 = vsel %vm924, %v917, %v921
  %v926 = vand.u32 2147483647, %v916
  %vm927 = vcmp.eq.f32.partialorder %v926, 8.507059e+37
  %v928 = vand.u32 %v916, 2147483648
  %v929 = vor.u32 1.1754944e-38, %v928
  %v930 = vsel %vm927, %v929, %v925
  %v931 = vmul.f32 1.0, %v930
  %v932 = vadd.f32 %v890, %v430
  %v933 = vmul.f32 %v911, %v932
  %v934 = vadd.f32 %v831, %v933
  %v935 = vtanh.pop %v934
  %v936 = vsub.f32 1.0, %v931
  %v937 = vmul.f32 %v936, %v935
  %v938 = vmul.f32 %v931, %v825
  %v939 = vadd.f32 %v937, %v938
  %s940 = smul.u32 4, 3
  %s941 = smul.addr %s940, 8
  %s942 = scalar_lea.vmem [#allocation2], %s941
  %v943 = vld [vmem:[%s942] sm:$0xff]
  %v944 = vld [vmem:[%s942 + $0x8] sm:$0xff]
  %v945 = vld [vmem:[%s942 + $0x10] sm:$0xff]
  %946 = vmatpush.msra.mxu0 %v487
  %947 = vmatpush.msra.mxu0 %v484
  %948 = vmatpush.msra.mxu0 %v481
  %949 = vmatpush.msra.mxu0 %v478
  %950 = vmatpush.msra.mxu0 %v475
  %951 = vmatpush.msra.mxu0 %v472
  %952 = vmatpush.msra.mxu0 %v469
  %953 = vmatpush.msra.mxu0 %v466
  %954 = vmatpush.msra.mxu0 %v463
  %955 = vmatpush.msra.mxu0 %v460
  %956 = vmatpush.msra.mxu0 %v457
  %957 = vmatpush.msra.mxu0 %v454
  %958 = vmatpush.msra.mxu0 %v451
  %959 = vmatpush.msra.mxu0 %v448
  %960 = vmatpush.msra.mxu0 %v445
  %961 = vmatpush.msra.mxu0 %v442
  %962 = vmatmul.f32.gmra.mxu0 %v939
  %v963 = vpop.f32.mrf.mxu0
  %v964 = vadd.f32 0.0, %v963
  %965 = vdwg.mxu0
  %966 = vmatpush.msra.mxu0 %v488
  %967 = vmatpush.msra.mxu0 %v485
  %968 = vmatpush.msra.mxu0 %v482
  %969 = vmatpush.msra.mxu0 %v479
  %970 = vmatpush.msra.mxu0 %v476
  %971 = vmatpush.msra.mxu0 %v473
  %972 = vmatpush.msra.mxu0 %v470
  %973 = vmatpush.msra.mxu0 %v467
  %974 = vmatpush.msra.mxu0 %v464
  %975 = vmatpush.msra.mxu0 %v461
  %976 = vmatpush.msra.mxu0 %v458
  %977 = vmatpush.msra.mxu0 %v455
  %978 = vmatpush.msra.mxu0 %v452
  %979 = vmatpush.msra.mxu0 %v449
  %980 = vmatpush.msra.mxu0 %v446
  %981 = vmatpush.msra.mxu0 %v443
  %982 = vmatmul.f32.gmra.mxu0 %v939
  %v983 = vpop.f32.mrf.mxu0
  %v984 = vadd.f32 0.0, %v983
  %985 = vdwg.mxu0
  %986 = vmatpush.msra.mxu0 %v489
  %987 = vmatpush.msra.mxu0 %v486
  %988 = vmatpush.msra.mxu0 %v483
  %989 = vmatpush.msra.mxu0 %v480
  %990 = vmatpush.msra.mxu0 %v477
  %991 = vmatpush.msra.mxu0 %v474
  %992 = vmatpush.msra.mxu0 %v471
  %993 = vmatpush.msra.mxu0 %v468
  %994 = vmatpush.msra.mxu0 %v465
  %995 = vmatpush.msra.mxu0 %v462
  %996 = vmatpush.msra.mxu0 %v459
  %997 = vmatpush.msra.mxu0 %v456
  %998 = vmatpush.msra.mxu0 %v453
  %999 = vmatpush.msra.mxu0 %v450
  %1000 = vmatpush.msra.mxu0 %v447
  %1001 = vmatpush.msra.mxu0 %v444
  %1002 = vmatmul.f32.gmra.mxu0 %v939
  %v1003 = vpop.f32.mrf.mxu0
  %v1004 = vadd.f32 0.0, %v1003
  %1005 = vdwg.mxu0
  %v1006 = vadd.f32 %v943, %v964
  %v1007 = vsub.f32 0.0, %v1006
  %v1008 = vmul.f32 %v1007, 1.442695
  %v1009 = vpow.pop %v1008
  %v1010 = vadd.f32 %v1009, 1.0
  %v1011 = vrcp.pop %v1010
  %v1012 = vmul.f32 %v1010, %v1011
  %v1013 = vsub.f32 1.0, %v1012
  %v1014 = vmul.f32 %v1011, %v1013
  %v1015 = vadd.f32 %v1011, %v1014
  %vm1016 = vweird.f32 %v1010
  %vm1017 = vweird.f32 %v1011
  %vm1018 = vmor %vm1016, %vm1017
  %v1019 = vsel %vm1018, %v1011, %v1015
  %v1020 = vand.u32 2147483647, %v1010
  %vm1021 = vcmp.eq.f32.partialorder %v1020, 8.507059e+37
  %v1022 = vand.u32 %v1010, 2147483648
  %v1023 = vor.u32 1.1754944e-38, %v1022
  %v1024 = vsel %vm1021, %v1023, %v1019
  %v1025 = vmul.f32 1.0, %v1024
  %v1026 = vadd.f32 %v944, %v984
  %v1027 = vsub.f32 0.0, %v1026
  %v1028 = vmul.f32 %v1027, 1.442695
  %v1029 = vpow.pop %v1028
  %v1030 = vadd.f32 %v1029, 1.0
  %v1031 = vrcp.pop %v1030
  %v1032 = vmul.f32 %v1030, %v1031
  %v1033 = vsub.f32 1.0, %v1032
  %v1034 = vmul.f32 %v1031, %v1033
  %v1035 = vadd.f32 %v1031, %v1034
  %vm1036 = vweird.f32 %v1030
  %vm1037 = vweird.f32 %v1031
  %vm1038 = vmor %vm1036, %vm1037
  %v1039 = vsel %vm1038, %v1031, %v1035
  %v1040 = vand.u32 2147483647, %v1030
  %vm1041 = vcmp.eq.f32.partialorder %v1040, 8.507059e+37
  %v1042 = vand.u32 %v1030, 2147483648
  %v1043 = vor.u32 1.1754944e-38, %v1042
  %v1044 = vsel %vm1041, %v1043, %v1039
  %v1045 = vmul.f32 1.0, %v1044
  %v1046 = vadd.f32 %v1004, %v430
  %v1047 = vmul.f32 %v1025, %v1046
  %v1048 = vadd.f32 %v945, %v1047
  %v1049 = vtanh.pop %v1048
  %v1050 = vsub.f32 1.0, %v1045
  %v1051 = vmul.f32 %v1050, %v1049
  %v1052 = vmul.f32 %v1045, %v939
  %v1053 = vadd.f32 %v1051, %v1052
  %s1054 = smul.u32 5, 3
  %s1055 = smul.addr %s1054, 8
  %s1056 = scalar_lea.vmem [#allocation2], %s1055
  %v1057 = vld [vmem:[%s1056] sm:$0xff]
  %v1058 = vld [vmem:[%s1056 + $0x8] sm:$0xff]
  %v1059 = vld [vmem:[%s1056 + $0x10] sm:$0xff]
  %1060 = vmatpush.msra.mxu0 %v487
  %1061 = vmatpush.msra.mxu0 %v484
  %1062 = vmatpush.msra.mxu0 %v481
  %1063 = vmatpush.msra.mxu0 %v478
  %1064 = vmatpush.msra.mxu0 %v475
  %1065 = vmatpush.msra.mxu0 %v472
  %1066 = vmatpush.msra.mxu0 %v469
  %1067 = vmatpush.msra.mxu0 %v466
  %1068 = vmatpush.msra.mxu0 %v463
  %1069 = vmatpush.msra.mxu0 %v460
  %1070 = vmatpush.msra.mxu0 %v457
  %1071 = vmatpush.msra.mxu0 %v454
  %1072 = vmatpush.msra.mxu0 %v451
  %1073 = vmatpush.msra.mxu0 %v448
  %1074 = vmatpush.msra.mxu0 %v445
  %1075 = vmatpush.msra.mxu0 %v442
  %1076 = vmatmul.f32.gmra.mxu0 %v1053
  %v1077 = vpop.f32.mrf.mxu0
  %v1078 = vadd.f32 0.0, %v1077
  %1079 = vdwg.mxu0
  %1080 = vmatpush.msra.mxu0 %v488
  %1081 = vmatpush.msra.mxu0 %v485
  %1082 = vmatpush.msra.mxu0 %v482
  %1083 = vmatpush.msra.mxu0 %v479
  %1084 = vmatpush.msra.mxu0 %v476
  %1085 = vmatpush.msra.mxu0 %v473
  %1086 = vmatpush.msra.mxu0 %v470
  %1087 = vmatpush.msra.mxu0 %v467
  %1088 = vmatpush.msra.mxu0 %v464
  %1089 = vmatpush.msra.mxu0 %v461
  %1090 = vmatpush.msra.mxu0 %v458
  %1091 = vmatpush.msra.mxu0 %v455
  %1092 = vmatpush.msra.mxu0 %v452
  %1093 = vmatpush.msra.mxu0 %v449
  %1094 = vmatpush.msra.mxu0 %v446
  %1095 = vmatpush.msra.mxu0 %v443
  %1096 = vmatmul.f32.gmra.mxu0 %v1053
  %v1097 = vpop.f32.mrf.mxu0
  %v1098 = vadd.f32 0.0, %v1097
  %1099 = vdwg.mxu0
  %1100 = vmatpush.msra.mxu0 %v489
  %1101 = vmatpush.msra.mxu0 %v486
  %1102 = vmatpush.msra.mxu0 %v483
  %1103 = vmatpush.msra.mxu0 %v480
  %1104 = vmatpush.msra.mxu0 %v477
  %1105 = vmatpush.msra.mxu0 %v474
  %1106 = vmatpush.msra.mxu0 %v471
  %1107 = vmatpush.msra.mxu0 %v468
  %1108 = vmatpush.msra.mxu0 %v465
  %1109 = vmatpush.msra.mxu0 %v462
  %1110 = vmatpush.msra.mxu0 %v459
  %1111 = vmatpush.msra.mxu0 %v456
  %1112 = vmatpush.msra.mxu0 %v453
  %1113 = vmatpush.msra.mxu0 %v450
  %1114 = vmatpush.msra.mxu0 %v447
  %1115 = vmatpush.msra.mxu0 %v444
  %1116 = vmatmul.f32.gmra.mxu0 %v1053
  %v1117 = vpop.f32.mrf.mxu0
  %v1118 = vadd.f32 0.0, %v1117
  %1119 = vdwg.mxu0
  %v1120 = vadd.f32 %v1057, %v1078
  %v1121 = vsub.f32 0.0, %v1120
  %v1122 = vmul.f32 %v1121, 1.442695
  %v1123 = vpow.pop %v1122
  %v1124 = vadd.f32 %v1123, 1.0
  %v1125 = vrcp.pop %v1124
  %v1126 = vmul.f32 %v1124, %v1125
  %v1127 = vsub.f32 1.0, %v1126
  %v1128 = vmul.f32 %v1125, %v1127
  %v1129 = vadd.f32 %v1125, %v1128
  %vm1130 = vweird.f32 %v1124
  %vm1131 = vweird.f32 %v1125
  %vm1132 = vmor %vm1130, %vm1131
  %v1133 = vsel %vm1132, %v1125, %v1129
  %v1134 = vand.u32 2147483647, %v1124
  %vm1135 = vcmp.eq.f32.partialorder %v1134, 8.507059e+37
  %v1136 = vand.u32 %v1124, 2147483648
  %v1137 = vor.u32 1.1754944e-38, %v1136
  %v1138 = vsel %vm1135, %v1137, %v1133
  %v1139 = vmul.f32 1.0, %v1138
  %v1140 = vadd.f32 %v1058, %v1098
  %v1141 = vsub.f32 0.0, %v1140
  %v1142 = vmul.f32 %v1141, 1.442695
  %v1143 = vpow.pop %v1142
  %v1144 = vadd.f32 %v1143, 1.0
  %v1145 = vrcp.pop %v1144
  %v1146 = vmul.f32 %v1144, %v1145
  %v1147 = vsub.f32 1.0, %v1146
  %v1148 = vmul.f32 %v1145, %v1147
  %v1149 = vadd.f32 %v1145, %v1148
  %vm1150 = vweird.f32 %v1144
  %vm1151 = vweird.f32 %v1145
  %vm1152 = vmor %vm1150, %vm1151
  %v1153 = vsel %vm1152, %v1145, %v1149
  %v1154 = vand.u32 2147483647, %v1144
  %vm1155 = vcmp.eq.f32.partialorder %v1154, 8.507059e+37
  %v1156 = vand.u32 %v1144, 2147483648
  %v1157 = vor.u32 1.1754944e-38, %v1156
  %v1158 = vsel %vm1155, %v1157, %v1153
  %v1159 = vmul.f32 1.0, %v1158
  %v1160 = vadd.f32 %v1118, %v430
  %v1161 = vmul.f32 %v1139, %v1160
  %v1162 = vadd.f32 %v1059, %v1161
  %v1163 = vtanh.pop %v1162
  %v1164 = vsub.f32 1.0, %v1159
  %v1165 = vmul.f32 %v1164, %v1163
  %v1166 = vmul.f32 %v1159, %v1053
  %v1167 = vadd.f32 %v1165, %v1166
  %s1168 = smul.u32 6, 3
  %s1169 = smul.addr %s1168, 8
  %s1170 = scalar_lea.vmem [#allocation2], %s1169
  %v1171 = vld [vmem:[%s1170] sm:$0xff]
  %v1172 = vld [vmem:[%s1170 + $0x8] sm:$0xff]
  %v1173 = vld [vmem:[%s1170 + $0x10] sm:$0xff]
  %1174 = vmatpush.msra.mxu0 %v487
  %1175 = vmatpush.msra.mxu0 %v484
  %1176 = vmatpush.msra.mxu0 %v481
  %1177 = vmatpush.msra.mxu0 %v478
  %1178 = vmatpush.msra.mxu0 %v475
  %1179 = vmatpush.msra.mxu0 %v472
  %1180 = vmatpush.msra.mxu0 %v469
  %1181 = vmatpush.msra.mxu0 %v466
  %1182 = vmatpush.msra.mxu0 %v463
  %1183 = vmatpush.msra.mxu0 %v460
  %1184 = vmatpush.msra.mxu0 %v457
  %1185 = vmatpush.msra.mxu0 %v454
  %1186 = vmatpush.msra.mxu0 %v451
  %1187 = vmatpush.msra.mxu0 %v448
  %1188 = vmatpush.msra.mxu0 %v445
  %1189 = vmatpush.msra.mxu0 %v442
  %1190 = vmatmul.f32.gmra.mxu0 %v1167
  %v1191 = vpop.f32.mrf.mxu0
  %v1192 = vadd.f32 0.0, %v1191
  %1193 = vdwg.mxu0
  %1194 = vmatpush.msra.mxu0 %v488
  %1195 = vmatpush.msra.mxu0 %v485
  %1196 = vmatpush.msra.mxu0 %v482
  %1197 = vmatpush.msra.mxu0 %v479
  %1198 = vmatpush.msra.mxu0 %v476
  %1199 = vmatpush.msra.mxu0 %v473
  %1200 = vmatpush.msra.mxu0 %v470
  %1201 = vmatpush.msra.mxu0 %v467
  %1202 = vmatpush.msra.mxu0 %v464
  %1203 = vmatpush.msra.mxu0 %v461
  %1204 = vmatpush.msra.mxu0 %v458
  %1205 = vmatpush.msra.mxu0 %v455
  %1206 = vmatpush.msra.mxu0 %v452
  %1207 = vmatpush.msra.mxu0 %v449
  %1208 = vmatpush.msra.mxu0 %v446
  %1209 = vmatpush.msra.mxu0 %v443
  %1210 = vmatmul.f32.gmra.mxu0 %v1167
  %v1211 = vpop.f32.mrf.mxu0
  %v1212 = vadd.f32 0.0, %v1211
  %1213 = vdwg.mxu0
  %1214 = vmatpush.msra.mxu0 %v489
  %1215 = vmatpush.msra.mxu0 %v486
  %1216 = vmatpush.msra.mxu0 %v483
  %1217 = vmatpush.msra.mxu0 %v480
  %1218 = vmatpush.msra.mxu0 %v477
  %1219 = vmatpush.msra.mxu0 %v474
  %1220 = vmatpush.msra.mxu0 %v471
  %1221 = vmatpush.msra.mxu0 %v468
  %1222 = vmatpush.msra.mxu0 %v465
  %1223 = vmatpush.msra.mxu0 %v462
  %1224 = vmatpush.msra.mxu0 %v459
  %1225 = vmatpush.msra.mxu0 %v456
  %1226 = vmatpush.msra.mxu0 %v453
  %1227 = vmatpush.msra.mxu0 %v450
  %1228 = vmatpush.msra.mxu0 %v447
  %1229 = vmatpush.msra.mxu0 %v444
  %1230 = vmatmul.f32.gmra.mxu0 %v1167
  %v1231 = vpop.f32.mrf.mxu0
  %v1232 = vadd.f32 0.0, %v1231
  %1233 = vdwg.mxu0
  %v1234 = vadd.f32 %v1171, %v1192
  %v1235 = vsub.f32 0.0, %v1234
  %v1236 = vmul.f32 %v1235, 1.442695
  %v1237 = vpow.pop %v1236
  %v1238 = vadd.f32 %v1237, 1.0
  %v1239 = vrcp.pop %v1238
  %v1240 = vmul.f32 %v1238, %v1239
  %v1241 = vsub.f32 1.0, %v1240
  %v1242 = vmul.f32 %v1239, %v1241
  %v1243 = vadd.f32 %v1239, %v1242
  %vm1244 = vweird.f32 %v1238
  %vm1245 = vweird.f32 %v1239
  %vm1246 = vmor %vm1244, %vm1245
  %v1247 = vsel %vm1246, %v1239, %v1243
  %v1248 = vand.u32 2147483647, %v1238
  %vm1249 = vcmp.eq.f32.partialorder %v1248, 8.507059e+37
  %v1250 = vand.u32 %v1238, 2147483648
  %v1251 = vor.u32 1.1754944e-38, %v1250
  %v1252 = vsel %vm1249, %v1251, %v1247
  %v1253 = vmul.f32 1.0, %v1252
  %v1254 = vadd.f32 %v1172, %v1212
  %v1255 = vsub.f32 0.0, %v1254
  %v1256 = vmul.f32 %v1255, 1.442695
  %v1257 = vpow.pop %v1256
  %v1258 = vadd.f32 %v1257, 1.0
  %v1259 = vrcp.pop %v1258
  %v1260 = vmul.f32 %v1258, %v1259
  %v1261 = vsub.f32 1.0, %v1260
  %v1262 = vmul.f32 %v1259, %v1261
  %v1263 = vadd.f32 %v1259, %v1262
  %vm1264 = vweird.f32 %v1258
  %vm1265 = vweird.f32 %v1259
  %vm1266 = vmor %vm1264, %vm1265
  %v1267 = vsel %vm1266, %v1259, %v1263
  %v1268 = vand.u32 2147483647, %v1258
  %vm1269 = vcmp.eq.f32.partialorder %v1268, 8.507059e+37
  %v1270 = vand.u32 %v1258, 2147483648
  %v1271 = vor.u32 1.1754944e-38, %v1270
  %v1272 = vsel %vm1269, %v1271, %v1267
  %v1273 = vmul.f32 1.0, %v1272
  %v1274 = vadd.f32 %v1232, %v430
  %v1275 = vmul.f32 %v1253, %v1274
  %v1276 = vadd.f32 %v1173, %v1275
  %v1277 = vtanh.pop %v1276
  %v1278 = vsub.f32 1.0, %v1273
  %v1279 = vmul.f32 %v1278, %v1277
  %v1280 = vmul.f32 %v1273, %v1167
  %v1281 = vadd.f32 %v1279, %v1280
  %s1282 = smul.u32 7, 3
  %s1283 = smul.addr %s1282, 8
  %s1284 = scalar_lea.vmem [#allocation2], %s1283
  %v1285 = vld [vmem:[%s1284] sm:$0xff]
  %v1286 = vld [vmem:[%s1284 + $0x8] sm:$0xff]
  %v1287 = vld [vmem:[%s1284 + $0x10] sm:$0xff]
  %1288 = vmatpush.msra.mxu0 %v487
  %1289 = vmatpush.msra.mxu0 %v484
  %1290 = vmatpush.msra.mxu0 %v481
  %1291 = vmatpush.msra.mxu0 %v478
  %1292 = vmatpush.msra.mxu0 %v475
  %1293 = vmatpush.msra.mxu0 %v472
  %1294 = vmatpush.msra.mxu0 %v469
  %1295 = vmatpush.msra.mxu0 %v466
  %1296 = vmatpush.msra.mxu0 %v463
  %1297 = vmatpush.msra.mxu0 %v460
  %1298 = vmatpush.msra.mxu0 %v457
  %1299 = vmatpush.msra.mxu0 %v454
  %1300 = vmatpush.msra.mxu0 %v451
  %1301 = vmatpush.msra.mxu0 %v448
  %1302 = vmatpush.msra.mxu0 %v445
  %1303 = vmatpush.msra.mxu0 %v442
  %1304 = vmatmul.f32.gmra.mxu0 %v1281
  %v1305 = vpop.f32.mrf.mxu0
  %v1306 = vadd.f32 0.0, %v1305
  %1307 = vdwg.mxu0
  %1308 = vmatpush.msra.mxu0 %v488
  %1309 = vmatpush.msra.mxu0 %v485
  %1310 = vmatpush.msra.mxu0 %v482
  %1311 = vmatpush.msra.mxu0 %v479
  %1312 = vmatpush.msra.mxu0 %v476
  %1313 = vmatpush.msra.mxu0 %v473
  %1314 = vmatpush.msra.mxu0 %v470
  %1315 = vmatpush.msra.mxu0 %v467
  %1316 = vmatpush.msra.mxu0 %v464
  %1317 = vmatpush.msra.mxu0 %v461
  %1318 = vmatpush.msra.mxu0 %v458
  %1319 = vmatpush.msra.mxu0 %v455
  %1320 = vmatpush.msra.mxu0 %v452
  %1321 = vmatpush.msra.mxu0 %v449
  %1322 = vmatpush.msra.mxu0 %v446
  %1323 = vmatpush.msra.mxu0 %v443
  %1324 = vmatmul.f32.gmra.mxu0 %v1281
  %v1325 = vpop.f32.mrf.mxu0
  %v1326 = vadd.f32 0.0, %v1325
  %1327 = vdwg.mxu0
  %1328 = vmatpush.msra.mxu0 %v489
  %1329 = vmatpush.msra.mxu0 %v486
  %1330 = vmatpush.msra.mxu0 %v483
  %1331 = vmatpush.msra.mxu0 %v480
  %1332 = vmatpush.msra.mxu0 %v477
  %1333 = vmatpush.msra.mxu0 %v474
  %1334 = vmatpush.msra.mxu0 %v471
  %1335 = vmatpush.msra.mxu0 %v468
  %1336 = vmatpush.msra.mxu0 %v465
  %1337 = vmatpush.msra.mxu0 %v462
  %1338 = vmatpush.msra.mxu0 %v459
  %1339 = vmatpush.msra.mxu0 %v456
  %1340 = vmatpush.msra.mxu0 %v453
  %1341 = vmatpush.msra.mxu0 %v450
  %1342 = vmatpush.msra.mxu0 %v447
  %1343 = vmatpush.msra.mxu0 %v444
  %1344 = vmatmul.f32.gmra.mxu0 %v1281
  %v1345 = vpop.f32.mrf.mxu0
  %v1346 = vadd.f32 0.0, %v1345
  %1347 = vdwg.mxu0
  %v1348 = vadd.f32 %v1285, %v1306
  %v1349 = vsub.f32 0.0, %v1348
  %v1350 = vmul.f32 %v1349, 1.442695
  %v1351 = vpow.pop %v1350
  %v1352 = vadd.f32 %v1351, 1.0
  %v1353 = vrcp.pop %v1352
  %v1354 = vmul.f32 %v1352, %v1353
  %v1355 = vsub.f32 1.0, %v1354
  %v1356 = vmul.f32 %v1353, %v1355
  %v1357 = vadd.f32 %v1353, %v1356
  %vm1358 = vweird.f32 %v1352
  %vm1359 = vweird.f32 %v1353
  %vm1360 = vmor %vm1358, %vm1359
  %v1361 = vsel %vm1360, %v1353, %v1357
  %v1362 = vand.u32 2147483647, %v1352
  %vm1363 = vcmp.eq.f32.partialorder %v1362, 8.507059e+37
  %v1364 = vand.u32 %v1352, 2147483648
  %v1365 = vor.u32 1.1754944e-38, %v1364
  %v1366 = vsel %vm1363, %v1365, %v1361
  %v1367 = vmul.f32 1.0, %v1366
  %v1368 = vadd.f32 %v1286, %v1326
  %v1369 = vsub.f32 0.0, %v1368
  %v1370 = vmul.f32 %v1369, 1.442695
  %v1371 = vpow.pop %v1370
  %v1372 = vadd.f32 %v1371, 1.0
  %v1373 = vrcp.pop %v1372
  %v1374 = vmul.f32 %v1372, %v1373
  %v1375 = vsub.f32 1.0, %v1374
  %v1376 = vmul.f32 %v1373, %v1375
  %v1377 = vadd.f32 %v1373, %v1376
  %vm1378 = vweird.f32 %v1372
  %vm1379 = vweird.f32 %v1373
  %vm1380 = vmor %vm1378, %vm1379
  %v1381 = vsel %vm1380, %v1373, %v1377
  %v1382 = vand.u32 2147483647, %v1372
  %vm1383 = vcmp.eq.f32.partialorder %v1382, 8.507059e+37
  %v1384 = vand.u32 %v1372, 2147483648
  %v1385 = vor.u32 1.1754944e-38, %v1384
  %v1386 = vsel %vm1383, %v1385, %v1381
  %v1387 = vmul.f32 1.0, %v1386
  %v1388 = vadd.f32 %v1346, %v430
  %v1389 = vmul.f32 %v1367, %v1388
  %v1390 = vadd.f32 %v1287, %v1389
  %v1391 = vtanh.pop %v1390
  %v1392 = vsub.f32 1.0, %v1387
  %v1393 = vmul.f32 %v1392, %v1391
  %v1394 = vmul.f32 %v1387, %v1281
  %v1395 = vadd.f32 %v1393, %v1394
  %v1396 = vld [vmem:[%s0 + $0x70] sm:$0xff]
  %v1397 = vld [vmem:[%s0 + $0x78] sm:$0xff]
  %v1398 = vld [vmem:[%s3] sm:$0xff]
  %v1399 = vld [vmem:[%s3 + $0x8] sm:$0xff]
  %v1400 = vld [vmem:[%s3 + $0x10] sm:$0xff]
  %v1401 = vld [vmem:[%s3 + $0x18] sm:$0xff]
  %v1402 = vld [vmem:[%s3 + $0x20] sm:$0xff]
  %v1403 = vld [vmem:[%s3 + $0x28] sm:$0xff]
  %v1404 = vld [vmem:[%s3 + $0x30] sm:$0xff]
  %v1405 = vld [vmem:[%s3 + $0x38] sm:$0xff]
  %v1406 = vld [vmem:[%s3 + $0x40] sm:$0xff]
  %v1407 = vld [vmem:[%s3 + $0x48] sm:$0xff]
  %v1408 = vld [vmem:[%s3 + $0x50] sm:$0xff]
  %v1409 = vld [vmem:[%s3 + $0x58] sm:$0xff]
  %v1410 = vld [vmem:[%s3 + $0x60] sm:$0xff]
  %v1411 = vld [vmem:[%s3 + $0x68] sm:$0xff]
  %v1412 = vld [vmem:[%s3 + $0x70] sm:$0xff]
  %v1413 = vld [vmem:[%s3 + $0x78] sm:$0xff]
  %v1414 = vld [vmem:[%s3 + $0x80] sm:$0xff]
  %v1415 = vld [vmem:[%s3 + $0x88] sm:$0xff]
  %v1416 = vld [vmem:[%s3 + $0x90] sm:$0xff]
  %v1417 = vld [vmem:[%s3 + $0x98] sm:$0xff]
  %v1418 = vld [vmem:[%s3 + $0xa0] sm:$0xff]
  %v1419 = vld [vmem:[%s3 + $0xa8] sm:$0xff]
  %v1420 = vld [vmem:[%s3 + $0xb0] sm:$0xff]
  %v1421 = vld [vmem:[%s3 + $0xb8] sm:$0xff]
  %v1422 = vld [vmem:[%s3 + $0xc0] sm:$0xff]
  %v1423 = vld [vmem:[%s3 + $0xc8] sm:$0xff]
  %v1424 = vld [vmem:[%s3 + $0xd0] sm:$0xff]
  %v1425 = vld [vmem:[%s3 + $0xd8] sm:$0xff]
  %v1426 = vld [vmem:[%s3 + $0xe0] sm:$0xff]
  %v1427 = vld [vmem:[%s3 + $0xe8] sm:$0xff]
  %v1428 = vld [vmem:[%s3 + $0xf0] sm:$0xff]
  %v1429 = vld [vmem:[%s3 + $0xf8] sm:$0xff]
  %v1430 = vld [vmem:[%s3 + $0x100] sm:$0xff]
  %v1431 = vld [vmem:[%s3 + $0x108] sm:$0xff]
  %v1432 = vld [vmem:[%s3 + $0x110] sm:$0xff]
  %v1433 = vld [vmem:[%s3 + $0x118] sm:$0xff]
  %v1434 = vld [vmem:[%s3 + $0x120] sm:$0xff]
  %v1435 = vld [vmem:[%s3 + $0x128] sm:$0xff]
  %v1436 = vld [vmem:[%s3 + $0x130] sm:$0xff]
  %v1437 = vld [vmem:[%s3 + $0x138] sm:$0xff]
  %v1438 = vld [vmem:[%s3 + $0x140] sm:$0xff]
  %v1439 = vld [vmem:[%s3 + $0x148] sm:$0xff]
  %v1440 = vld [vmem:[%s3 + $0x150] sm:$0xff]
  %v1441 = vld [vmem:[%s3 + $0x158] sm:$0xff]
  %v1442 = vld [vmem:[%s3 + $0x160] sm:$0xff]
  %v1443 = vld [vmem:[%s3 + $0x168] sm:$0xff]
  %v1444 = vld [vmem:[%s3 + $0x170] sm:$0xff]
  %v1445 = vld [vmem:[%s3 + $0x178] sm:$0xff]
  %v1446 = vld [vmem:[%s3 + $0x180] sm:$0xff]
  %v1447 = vld [vmem:[%s3 + $0x188] sm:$0xff]
  %v1448 = vld [vmem:[%s3 + $0x190] sm:$0xff]
  %v1449 = vld [vmem:[%s3 + $0x198] sm:$0xff]
  %v1450 = vld [vmem:[%s3 + $0x1a0] sm:$0xff]
  %v1451 = vld [vmem:[%s3 + $0x1a8] sm:$0xff]
  %v1452 = vld [vmem:[%s3 + $0x1b0] sm:$0xff]
  %v1453 = vld [vmem:[%s3 + $0x1b8] sm:$0xff]
  %v1454 = vld [vmem:[%s3 + $0x1c0] sm:$0xff]
  %v1455 = vld [vmem:[%s3 + $0x1c8] sm:$0xff]
  %v1456 = vld [vmem:[%s3 + $0x1d0] sm:$0xff]
  %v1457 = vld [vmem:[%s3 + $0x1d8] sm:$0xff]
  %v1458 = vld [vmem:[%s3 + $0x1e0] sm:$0xff]
  %v1459 = vld [vmem:[%s3 + $0x1e8] sm:$0xff]
  %v1460 = vld [vmem:[%s3 + $0x1f0] sm:$0xff]
  %v1461 = vld [vmem:[%s3 + $0x1f8] sm:$0xff]
  %v1462 = vld [vmem:[%s3 + $0x200] sm:$0xff]
  %v1463 = vld [vmem:[%s3 + $0x208] sm:$0xff]
  %v1464 = vld [vmem:[%s3 + $0x210] sm:$0xff]
  %v1465 = vld [vmem:[%s3 + $0x218] sm:$0xff]
  %v1466 = vld [vmem:[%s3 + $0x220] sm:$0xff]
  %v1467 = vld [vmem:[%s3 + $0x228] sm:$0xff]
  %v1468 = vld [vmem:[%s3 + $0x230] sm:$0xff]
  %v1469 = vld [vmem:[%s3 + $0x238] sm:$0xff]
  %v1470 = vld [vmem:[%s3 + $0x240] sm:$0xff]
  %v1471 = vld [vmem:[%s3 + $0x248] sm:$0xff]
  %v1472 = vld [vmem:[%s3 + $0x250] sm:$0xff]
  %v1473 = vld [vmem:[%s3 + $0x258] sm:$0xff]
  %v1474 = vld [vmem:[%s3 + $0x260] sm:$0xff]
  %v1475 = vld [vmem:[%s3 + $0x268] sm:$0xff]
  %v1476 = vld [vmem:[%s3 + $0x270] sm:$0xff]
  %v1477 = vld [vmem:[%s3 + $0x278] sm:$0xff]
  %v1478 = vld [vmem:[%s3 + $0x280] sm:$0xff]
  %v1479 = vld [vmem:[%s3 + $0x288] sm:$0xff]
  %v1480 = vld [vmem:[%s3 + $0x290] sm:$0xff]
  %v1481 = vld [vmem:[%s3 + $0x298] sm:$0xff]
  %v1482 = vld [vmem:[%s3 + $0x2a0] sm:$0xff]
  %v1483 = vld [vmem:[%s3 + $0x2a8] sm:$0xff]
  %v1484 = vld [vmem:[%s3 + $0x2b0] sm:$0xff]
  %v1485 = vld [vmem:[%s3 + $0x2b8] sm:$0xff]
  %v1486 = vld [vmem:[%s3 + $0x2c0] sm:$0xff]
  %v1487 = vld [vmem:[%s3 + $0x2c8] sm:$0xff]
  %v1488 = vld [vmem:[%s3 + $0x2d0] sm:$0xff]
  %v1489 = vld [vmem:[%s3 + $0x2d8] sm:$0xff]
  %v1490 = vld [vmem:[%s3 + $0x2e0] sm:$0xff]
  %v1491 = vld [vmem:[%s3 + $0x2e8] sm:$0xff]
  %v1492 = vld [vmem:[%s3 + $0x2f0] sm:$0xff]
  %v1493 = vld [vmem:[%s3 + $0x2f8] sm:$0xff]
  %v1494 = vld [vmem:[%s4] sm:$0x7]
  %v1496 = vperm.slane %v1494, 0
  %v1497 = vperm.slane %v1494, 1
  %v1498 = vperm.slane %v1494, 2
  %1502 = vmatpush.msra.mxu0 %v1443
  %1503 = vmatpush.msra.mxu0 %v1440
  %1504 = vmatpush.msra.mxu0 %v1437
  %1505 = vmatpush.msra.mxu0 %v1434
  %1506 = vmatpush.msra.mxu0 %v1431
  %1507 = vmatpush.msra.mxu0 %v1428
  %1508 = vmatpush.msra.mxu0 %v1425
  %1509 = vmatpush.msra.mxu0 %v1422
  %1510 = vmatpush.msra.mxu0 %v1419
  %1511 = vmatpush.msra.mxu0 %v1416
  %1512 = vmatpush.msra.mxu0 %v1413
  %1513 = vmatpush.msra.mxu0 %v1410
  %1514 = vmatpush.msra.mxu0 %v1407
  %1515 = vmatpush.msra.mxu0 %v1404
  %1516 = vmatpush.msra.mxu0 %v1401
  %1517 = vmatpush.msra.mxu0 %v1398
  %1518 = vmatmul.f32.gmra.mxu0 %v1396
  %v1519 = vpop.f32.mrf.mxu0
  %v1520 = vadd.f32 %v1496, %v1519
  %1521 = vdwg.mxu0
  %1522 = vmatpush.msra.mxu0 %v1491
  %1523 = vmatpush.msra.mxu0 %v1488
  %1524 = vmatpush.msra.mxu0 %v1485
  %1525 = vmatpush.msra.mxu0 %v1482
  %1526 = vmatpush.msra.mxu0 %v1479
  %1527 = vmatpush.msra.mxu0 %v1476
  %1528 = vmatpush.msra.mxu0 %v1473
  %1529 = vmatpush.msra.mxu0 %v1470
  %1530 = vmatpush.msra.mxu0 %v1467
  %1531 = vmatpush.msra.mxu0 %v1464
  %1532 = vmatpush.msra.mxu0 %v1461
  %1533 = vmatpush.msra.mxu0 %v1458
  %1534 = vmatpush.msra.mxu0 %v1455
  %1535 = vmatpush.msra.mxu0 %v1452
  %1536 = vmatpush.msra.mxu0 %v1449
  %1537 = vmatpush.msra.mxu0 %v1446
  %1538 = vmatmul.f32.gmra.mxu0 %v1397
  %v1539 = vpop.f32.mrf.mxu0
  %v1540 = vadd.f32 %v1520, %v1539
  %1541 = vdwg.mxu0
  %1542 = vmatpush.msra.mxu0 %v1444
  %1543 = vmatpush.msra.mxu0 %v1441
  %1544 = vmatpush.msra.mxu0 %v1438
  %1545 = vmatpush.msra.mxu0 %v1435
  %1546 = vmatpush.msra.mxu0 %v1432
  %1547 = vmatpush.msra.mxu0 %v1429
  %1548 = vmatpush.msra.mxu0 %v1426
  %1549 = vmatpush.msra.mxu0 %v1423
  %1550 = vmatpush.msra.mxu0 %v1420
  %1551 = vmatpush.msra.mxu0 %v1417
  %1552 = vmatpush.msra.mxu0 %v1414
  %1553 = vmatpush.msra.mxu0 %v1411
  %1554 = vmatpush.msra.mxu0 %v1408
  %1555 = vmatpush.msra.mxu0 %v1405
  %1556 = vmatpush.msra.mxu0 %v1402
  %1557 = vmatpush.msra.mxu0 %v1399
  %1558 = vmatmul.f32.gmra.mxu0 %v1396
  %v1559 = vpop.f32.mrf.mxu0
  %v1560 = vadd.f32 %v1497, %v1559
  %1561 = vdwg.mxu0
  %1562 = vmatpush.msra.mxu0 %v1492
  %1563 = vmatpush.msra.mxu0 %v1489
  %1564 = vmatpush.msra.mxu0 %v1486
  %1565 = vmatpush.msra.mxu0 %v1483
  %1566 = vmatpush.msra.mxu0 %v1480
  %1567 = vmatpush.msra.mxu0 %v1477
  %1568 = vmatpush.msra.mxu0 %v1474
  %1569 = vmatpush.msra.mxu0 %v1471
  %1570 = vmatpush.msra.mxu0 %v1468
  %1571 = vmatpush.msra.mxu0 %v1465
  %1572 = vmatpush.msra.mxu0 %v1462
  %1573 = vmatpush.msra.mxu0 %v1459
  %1574 = vmatpush.msra.mxu0 %v1456
  %1575 = vmatpush.msra.mxu0 %v1453
  %1576 = vmatpush.msra.mxu0 %v1450
  %1577 = vmatpush.msra.mxu0 %v1447
  %1578 = vmatmul.f32.gmra.mxu0 %v1397
  %v1579 = vpop.f32.mrf.mxu0
  %v1580 = vadd.f32 %v1560, %v1579
  %1581 = vdwg.mxu0
  %1582 = vmatpush.msra.mxu0 %v1445
  %1583 = vmatpush.msra.mxu0 %v1442
  %1584 = vmatpush.msra.mxu0 %v1439
  %1585 = vmatpush.msra.mxu0 %v1436
  %1586 = vmatpush.msra.mxu0 %v1433
  %1587 = vmatpush.msra.mxu0 %v1430
  %1588 = vmatpush.msra.mxu0 %v1427
  %1589 = vmatpush.msra.mxu0 %v1424
  %1590 = vmatpush.msra.mxu0 %v1421
  %1591 = vmatpush.msra.mxu0 %v1418
  %1592 = vmatpush.msra.mxu0 %v1415
  %1593 = vmatpush.msra.mxu0 %v1412
  %1594 = vmatpush.msra.mxu0 %v1409
  %1595 = vmatpush.msra.mxu0 %v1406
  %1596 = vmatpush.msra.mxu0 %v1403
  %1597 = vmatpush.msra.mxu0 %v1400
  %1598 = vmatmul.f32.gmra.mxu0 %v1396
  %v1599 = vpop.f32.mrf.mxu0
  %v1600 = vadd.f32 %v1498, %v1599
  %1601 = vdwg.mxu0
  %1602 = vmatpush.msra.mxu0 %v1493
  %1603 = vmatpush.msra.mxu0 %v1490
  %1604 = vmatpush.msra.mxu0 %v1487
  %1605 = vmatpush.msra.mxu0 %v1484
  %1606 = vmatpush.msra.mxu0 %v1481
  %1607 = vmatpush.msra.mxu0 %v1478
  %1608 = vmatpush.msra.mxu0 %v1475
  %1609 = vmatpush.msra.mxu0 %v1472
  %1610 = vmatpush.msra.mxu0 %v1469
  %1611 = vmatpush.msra.mxu0 %v1466
  %1612 = vmatpush.msra.mxu0 %v1463
  %1613 = vmatpush.msra.mxu0 %v1460
  %1614 = vmatpush.msra.mxu0 %v1457
  %1615 = vmatpush.msra.mxu0 %v1454
  %1616 = vmatpush.msra.mxu0 %v1451
  %1617 = vmatpush.msra.mxu0 %v1448
  %1618 = vmatmul.f32.gmra.mxu0 %v1397
  %v1619 = vpop.f32.mrf.mxu0
  %v1620 = vadd.f32 %v1600, %v1619
  %1621 = vdwg.mxu0
  %v1622 = vadd.f32 %v1540, 0.0
  %v1623 = vsub.f32 0.0, %v1622
  %v1624 = vmul.f32 %v1623, 1.442695
  %v1625 = vpow.pop %v1624
  %v1626 = vadd.f32 %v1625, 1.0
  %v1627 = vrcp.pop %v1626
  %v1628 = vmul.f32 %v1626, %v1627
  %v1629 = vsub.f32 1.0, %v1628
  %v1630 = vmul.f32 %v1627, %v1629
  %v1631 = vadd.f32 %v1627, %v1630
  %vm1632 = vweird.f32 %v1626
  %vm1633 = vweird.f32 %v1627
  %vm1634 = vmor %vm1632, %vm1633
  %v1635 = vsel %vm1634, %v1627, %v1631
  %v1636 = vand.u32 2147483647, %v1626
  %vm1637 = vcmp.eq.f32.partialorder %v1636, 8.507059e+37
  %v1638 = vand.u32 %v1626, 2147483648
  %v1639 = vor.u32 1.1754944e-38, %v1638
  %v1640 = vsel %vm1637, %v1639, %v1635
  %v1641 = vmul.f32 1.0, %v1640
  %v1642 = vadd.f32 %v1580, 0.0
  %v1643 = vsub.f32 0.0, %v1642
  %v1644 = vmul.f32 %v1643, 1.442695
  %v1645 = vpow.pop %v1644
  %v1646 = vadd.f32 %v1645, 1.0
  %v1647 = vrcp.pop %v1646
  %v1648 = vmul.f32 %v1646, %v1647
  %v1649 = vsub.f32 1.0, %v1648
  %v1650 = vmul.f32 %v1647, %v1649
  %v1651 = vadd.f32 %v1647, %v1650
  %vm1652 = vweird.f32 %v1646
  %vm1653 = vweird.f32 %v1647
  %vm1654 = vmor %vm1652, %vm1653
  %v1655 = vsel %vm1654, %v1647, %v1651
  %v1656 = vand.u32 2147483647, %v1646
  %vm1657 = vcmp.eq.f32.partialorder %v1656, 8.507059e+37
  %v1658 = vand.u32 %v1646, 2147483648
  %v1659 = vor.u32 1.1754944e-38, %v1658
  %v1660 = vsel %vm1657, %v1659, %v1655
  %v1661 = vmul.f32 1.0, %v1660
  %v1662 = vadd.f32 %v434, 0.0
  %v1663 = vmul.f32 %v1641, %v1662
  %v1664 = vadd.f32 %v1620, %v1663
  %v1665 = vtanh.pop %v1664
  %v1666 = vsub.f32 1.0, %v1661
  %v1667 = vmul.f32 %v1666, %v1665
  %v1668 = vmul.f32 %v1661, 0.0
  %v1669 = vadd.f32 %v1667, %v1668
  %v1670 = vld [vmem:[%s8] sm:$0xff]
  %v1671 = vld [vmem:[%s8 + $0x8] sm:$0xff]
  %v1672 = vld [vmem:[%s8 + $0x10] sm:$0xff]
  %v1673 = vld [vmem:[%s8 + $0x18] sm:$0xff]
  %v1674 = vld [vmem:[%s8 + $0x20] sm:$0xff]
  %v1675 = vld [vmem:[%s8 + $0x28] sm:$0xff]
  %v1676 = vld [vmem:[%s8 + $0x30] sm:$0xff]
  %v1677 = vld [vmem:[%s8 + $0x38] sm:$0xff]
  %v1678 = vld [vmem:[%s8 + $0x40] sm:$0xff]
  %v1679 = vld [vmem:[%s8 + $0x48] sm:$0xff]
  %v1680 = vld [vmem:[%s8 + $0x50] sm:$0xff]
  %v1681 = vld [vmem:[%s8 + $0x58] sm:$0xff]
  %v1682 = vld [vmem:[%s8 + $0x60] sm:$0xff]
  %v1683 = vld [vmem:[%s8 + $0x68] sm:$0xff]
  %v1684 = vld [vmem:[%s8 + $0x70] sm:$0xff]
  %v1685 = vld [vmem:[%s8 + $0x78] sm:$0xff]
  %v1686 = vld [vmem:[%s9] sm:$0xff]
  %v1687 = vld [vmem:[%s9 + $0x8] sm:$0xff]
  %v1688 = vld [vmem:[%s9 + $0x10] sm:$0xff]
  %v1689 = vld [vmem:[%s9 + $0x18] sm:$0xff]
  %v1690 = vld [vmem:[%s9 + $0x20] sm:$0xff]
  %v1691 = vld [vmem:[%s9 + $0x28] sm:$0xff]
  %v1692 = vld [vmem:[%s9 + $0x30] sm:$0xff]
  %v1693 = vld [vmem:[%s9 + $0x38] sm:$0xff]
  %v1694 = vld [vmem:[%s9 + $0x40] sm:$0xff]
  %v1695 = vld [vmem:[%s9 + $0x48] sm:$0xff]
  %v1696 = vld [vmem:[%s9 + $0x50] sm:$0xff]
  %v1697 = vld [vmem:[%s9 + $0x58] sm:$0xff]
  %v1698 = vld [vmem:[%s9 + $0x60] sm:$0xff]
  %v1699 = vld [vmem:[%s9 + $0x68] sm:$0xff]
  %v1700 = vld [vmem:[%s9 + $0x70] sm:$0xff]
  %v1701 = vld [vmem:[%s9 + $0x78] sm:$0xff]
  %1702 = vmatpush.msra.mxu0 %v1701
  %1703 = vmatpush.msra.mxu0 %v1700
  %1704 = vmatpush.msra.mxu0 %v1699
  %1705 = vmatpush.msra.mxu0 %v1698
  %1706 = vmatpush.msra.mxu0 %v1697
  %1707 = vmatpush.msra.mxu0 %v1696
  %1708 = vmatpush.msra.mxu0 %v1695
  %1709 = vmatpush.msra.mxu0 %v1694
  %1710 = vmatpush.msra.mxu0 %v1693
  %1711 = vmatpush.msra.mxu0 %v1692
  %1712 = vmatpush.msra.mxu0 %v1691
  %1713 = vmatpush.msra.mxu0 %v1690
  %1714 = vmatpush.msra.mxu0 %v1689
  %1715 = vmatpush.msra.mxu0 %v1688
  %1716 = vmatpush.msra.mxu0 %v1687
  %1717 = vmatpush.msra.mxu0 %v1686
  %1718 = vmatmul.f32.gmra.mxu0 %v1669
  %v1719 = vpop.f32.mrf.mxu0
  %v1720 = vadd.f32 0.0, %v1719
  %1721 = vdwg.mxu0
  %1722 = vmatpush.msra.mxu0 %v1685
  %1723 = vmatpush.msra.mxu0 %v1684
  %1724 = vmatpush.msra.mxu0 %v1683
  %1725 = vmatpush.msra.mxu0 %v1682
  %1726 = vmatpush.msra.mxu0 %v1681
  %1727 = vmatpush.msra.mxu0 %v1680
  %1728 = vmatpush.msra.mxu0 %v1679
  %1729 = vmatpush.msra.mxu0 %v1678
  %1730 = vmatpush.msra.mxu0 %v1677
  %1731 = vmatpush.msra.mxu0 %v1676
  %1732 = vmatpush.msra.mxu0 %v1675
  %1733 = vmatpush.msra.mxu0 %v1674
  %1734 = vmatpush.msra.mxu0 %v1673
  %1735 = vmatpush.msra.mxu0 %v1672
  %1736 = vmatpush.msra.mxu0 %v1671
  %1737 = vmatpush.msra.mxu0 %v1670
  %1738 = vmatmul.f32.gmra.mxu0 %v1395
  %v1739 = vpop.f32.mrf.mxu0
  %v1740 = vadd.f32 %v1720, %v1739
  %1741 = vdwg.mxu0
  %v1742 = vld [vmem:[%s10] sm:$0x1]
  %v1744 = vperm.slane %v1742, 0
  %v1746 = vadd.f32 %v1740, %v1744
  %vm1747 = vcmask 23552
  %1748 = vst.msk [vmem:[%s11] sm:$0xff] %vm1747, %v1746
  // Predicated region
  $region46: #{grud_forward.5} parent=0 // pred_check
    _
  $region47: #{grud_forward.5} parent=0 // pred_check_branch
    %1750 = sbr.rel (0) target = $region49
  $region48: #{grud_forward.5} parent=0 // pred_region
    _
  $region49: #{grud_forward.5} parent=0 // pred_fallthru
    _
  // Predicated region
  $region50: #{grud_forward.5} parent=0 // pred_check
    _
  $region51: #{grud_forward.5} parent=0 // pred_check_branch
    %1752 = sbr.rel (0) target = $region53
  $region52: #{grud_forward.5} parent=0 // pred_region
    _
  $region53: #{grud_forward.5} parent=0 // pred_fallthru
    _

// kernel: grud_forward.3
$region0: #{grud_forward.3}
  #allocation0 [shape = 'u32[]', space=smem, size = 0x4, offset = 0x4, fixed_abs, tag = 'smem constant byte address 0x4 - core index']
  #allocation1 [shape = 'u32[72,128]{1,0:T(1,128)}', space=vmem, size = 0x9000, scoped, tag = 'internal scratch']
  #allocation2 [shape = 'f32[64,768]{1,0:T(8,128)}', space=vmem, size = 0x30000, scoped, tag = 'scratch operand']
  %s0 = inlined_call_operand.vmem [shape: f32[64,4], index: 0, kind: input, shape index: {}]
  %s1 = inlined_call_operand.vmem [shape: f32[4,768], index: 1, kind: input, shape index: {}]
  %s2 = inlined_call_operand.vmem [shape: f32[1,768], index: 2, kind: input, shape index: {}]
  %s3 = inlined_call_operand.vmem [shape: f32[128,384], index: 3, kind: input, shape index: {}]
  %s4 = inlined_call_operand.vmem [shape: f32[128,384], index: 4, kind: input, shape index: {}]
  %s5 = inlined_call_operand.vmem [shape: f32[1,128], index: 5, kind: input, shape index: {}]
  %s6 = inlined_call_operand.vmem [shape: f32[1,128], index: 6, kind: input, shape index: {}]
  %s7 = inlined_call_operand.vmem [shape: f32[8,8,256], index: 7, kind: output, shape index: {}]
  %s8 = sld [smem:[#allocation0]]
  $region38: #{grud_forward.3} parent=0
    _
  %s10 = ssub.s32 1, %s8
  %s11 = scalar_select 0, %s10, %s8
  // Predicated region
  $region2: #{grud_forward.3} parent=0 // pred_check
    _
  $region3: #{grud_forward.3} parent=0 // pred_check_branch
    %13 = sbr.rel (0) target = $region5
  $region4: #{grud_forward.3} parent=0 // pred_region
    _
  $region5: #{grud_forward.3} parent=0 // pred_fallthru
    _
  // Predicated region
  $region6: #{grud_forward.3} parent=0 // pred_check
    _
  $region7: #{grud_forward.3} parent=0 // pred_check_branch
    %15 = sbr.rel (0) target = $region9
  $region8: #{grud_forward.3} parent=0 // pred_region
    _
  $region9: #{grud_forward.3} parent=0 // pred_fallthru
    _
  // Predicated region
  $region10: #{grud_forward.3} parent=0 // pred_check
    _
  $region11: #{grud_forward.3} parent=0 // pred_check_branch
    %17 = sbr.rel (0) target = $region13
  $region12: #{grud_forward.3} parent=0 // pred_region
    _
  $region13: #{grud_forward.3} parent=0 // pred_fallthru
    _
  // Predicated region
  $region14: #{grud_forward.3} parent=0 // pred_check
    _
  $region15: #{grud_forward.3} parent=0 // pred_check_branch
    %19 = sbr.rel (0) target = $region17
  $region16: #{grud_forward.3} parent=0 // pred_region
    _
  $region17: #{grud_forward.3} parent=0 // pred_fallthru
    _
  // Predicated region
  $region18: #{grud_forward.3} parent=0 // pred_check
    _
  $region19: #{grud_forward.3} parent=0 // pred_check_branch
    %21 = sbr.rel (0) target = $region21
  $region20: #{grud_forward.3} parent=0 // pred_region
    _
  $region21: #{grud_forward.3} parent=0 // pred_fallthru
    _
  // Predicated region
  $region22: #{grud_forward.3} parent=0 // pred_check
    _
  $region23: #{grud_forward.3} parent=0 // pred_check_branch
    %23 = sbr.rel (0) target = $region25
  $region24: #{grud_forward.3} parent=0 // pred_region
    _
  $region25: #{grud_forward.3} parent=0 // pred_fallthru
    _
  // Predicated region
  $region26: #{grud_forward.3} parent=0 // pred_check
    _
  $region27: #{grud_forward.3} parent=0 // pred_check_branch
    %25 = sbr.rel (0) target = $region29
  $region28: #{grud_forward.3} parent=0 // pred_region
    _
  $region29: #{grud_forward.3} parent=0 // pred_fallthru
    _
  %v26 = vld [vmem:[%s0] sm:$0xff]
  %v27 = vld [vmem:[%s0 + $0x8] sm:$0xff]
  %v28 = vld [vmem:[%s0 + $0x10] sm:$0xff]
  %v29 = vld [vmem:[%s0 + $0x18] sm:$0xff]
  %v30 = vld [vmem:[%s0 + $0x20] sm:$0xff]
  %v31 = vld [vmem:[%s0 + $0x28] sm:$0xff]
  %v32 = vld [vmem:[%s0 + $0x30] sm:$0xff]
  %v33 = vld [vmem:[%s0 + $0x38] sm:$0xff]
  %v34 = vld [vmem:[%s1] sm:$0xff]
  %v35 = vld [vmem:[%s1 + $0x8] sm:$0xff]
  %v36 = vld [vmem:[%s1 + $0x10] sm:$0xff]
  %v37 = vld [vmem:[%s2] sm:$0x3f]
  %v39 = vperm.slane %v37, 0
  %v40 = vperm.slane %v37, 1
  %v41 = vperm.slane %v37, 2
  %v42 = vperm.slane %v37, 3
  %v43 = vperm.slane %v37, 4
  %v44 = vperm.slane %v37, 5
  %54 = vst [vmem:[#allocation1] ss:$2 sm:$0xff] %v34
  %s55 = scalar_lea.vmem [#allocation1], 16
  %56 = vst [vmem:[%s55] ss:$2 sm:$0xff] %v35
  %s57 = scalar_lea.vmem [#allocation1], 32
  %58 = vst [vmem:[%s57] ss:$2 sm:$0xff] %v36
  %v59 = vld.sshfl [vmem:[#allocation1] sm:$0xff pattern:$0x75316420]
  %v60 = vld.sshfl [vmem:[#allocation1 + $0x8] sm:$0xff pattern:$0x75316420]
  %v61 = vld.sshfl [vmem:[#allocation1 + $0x10] sm:$0xff pattern:$0x75316420]
  %v62 = vld.sshfl [vmem:[#allocation1 + $0x18] sm:$0xff pattern:$0x75316420]
  %v63 = vld.sshfl [vmem:[#allocation1 + $0x20] sm:$0xff pattern:$0x75316420]
  %v64 = vld.sshfl [vmem:[#allocation1 + $0x28] sm:$0xff pattern:$0x75316420]
  %vm65 = vcmask 31744
  %v67 = vsel %vm65, %v26, 0
  %v70 = vsel %vm65, %v27, 0
  %v73 = vsel %vm65, %v28, 0
  %v76 = vsel %vm65, %v29, 0
  %v79 = vsel %vm65, %v30, 0
  %v82 = vsel %vm65, %v31, 0
  %v85 = vsel %vm65, %v32, 0
  %v88 = vsel %vm65, %v33, 0
  %vm90 = vcmask 1043456
  %v91 = vsel %vm90, %v59, 0
  %v93 = vsel %vm90, %v60, 0
  %v95 = vsel %vm90, %v61, 0
  %v97 = vsel %vm90, %v62, 0
  %v99 = vsel %vm90, %v63, 0
  %v101 = vsel %vm90, %v64, 0
  %103 = vmatpush.msra.mxu0 0.0
  %104 = vmatpush.msra.mxu0 0.0
  %105 = vmatpush.msra.mxu0 0.0
  %106 = vmatpush.msra.mxu0 0.0
  %107 = vmatpush.msra.mxu0 0.0
  %108 = vmatpush.msra.mxu0 0.0
  %109 = vmatpush.msra.mxu0 0.0
  %110 = vmatpush.msra.mxu0 0.0
  %111 = vmatpush.msra.mxu0 0.0
  %112 = vmatpush.msra.mxu0 0.0
  %113 = vmatpush.msra.mxu0 0.0
  %114 = vmatpush.msra.mxu0 0.0
  %115 = vmatpush.msra.mxu0 0.0
  %116 = vmatpush.msra.mxu0 0.0
  %117 = vmatpush.msra.mxu0 0.0
  %118 = vmatpush.msra.mxu0 %v91
  %119 = vmatmul.f32.gmra.mxu0 %v67
  %v120 = vpop.f32.mrf.mxu0
  %v121 = vadd.f32 %v39, %v120
  %122 = vmatmul.f32.gmra.mxu0 %v70
  %v123 = vpop.f32.mrf.mxu0
  %v124 = vadd.f32 %v39, %v123
  %125 = vmatmul.f32.gmra.mxu0 %v73
  %v126 = vpop.f32.mrf.mxu0
  %v127 = vadd.f32 %v39, %v126
  %128 = vmatmul.f32.gmra.mxu0 %v76
  %v129 = vpop.f32.mrf.mxu0
  %v130 = vadd.f32 %v39, %v129
  %131 = vmatmul.f32.gmra.mxu0 %v79
  %v132 = vpop.f32.mrf.mxu0
  %v133 = vadd.f32 %v39, %v132
  %134 = vmatmul.f32.gmra.mxu0 %v82
  %v135 = vpop.f32.mrf.mxu0
  %v136 = vadd.f32 %v39, %v135
  %137 = vmatmul.f32.gmra.mxu0 %v85
  %v138 = vpop.f32.mrf.mxu0
  %v139 = vadd.f32 %v39, %v138
  %140 = vmatmul.f32.gmra.mxu0 %v88
  %v141 = vpop.f32.mrf.mxu0
  %v142 = vadd.f32 %v39, %v141
  %143 = vdwg.mxu0
  %144 = vmatpush.msra.mxu0 0.0
  %145 = vmatpush.msra.mxu0 0.0
  %146 = vmatpush.msra.mxu0 0.0
  %147 = vmatpush.msra.mxu0 0.0
  %148 = vmatpush.msra.mxu0 0.0
  %149 = vmatpush.msra.mxu0 0.0
  %150 = vmatpush.msra.mxu0 0.0
  %151 = vmatpush.msra.mxu0 0.0
  %152 = vmatpush.msra.mxu0 0.0
  %153 = vmatpush.msra.mxu0 0.0
  %154 = vmatpush.msra.mxu0 0.0
  %155 = vmatpush.msra.mxu0 0.0
  %156 = vmatpush.msra.mxu0 0.0
  %157 = vmatpush.msra.mxu0 0.0
  %158 = vmatpush.msra.mxu0 0.0
  %159 = vmatpush.msra.mxu0 %v93
  %160 = vmatmul.f32.gmra.mxu0 %v67
  %v161 = vpop.f32.mrf.mxu0
  %v162 = vadd.f32 %v40, %v161
  %163 = vmatmul.f32.gmra.mxu0 %v70
  %v164 = vpop.f32.mrf.mxu0
  %v165 = vadd.f32 %v40, %v164
  %166 = vmatmul.f32.gmra.mxu0 %v73
  %v167 = vpop.f32.mrf.mxu0
  %v168 = vadd.f32 %v40, %v167
  %169 = vmatmul.f32.gmra.mxu0 %v76
  %v170 = vpop.f32.mrf.mxu0
  %v171 = vadd.f32 %v40, %v170
  %172 = vmatmul.f32.gmra.mxu0 %v79
  %v173 = vpop.f32.mrf.mxu0
  %v174 = vadd.f32 %v40, %v173
  %175 = vmatmul.f32.gmra.mxu0 %v82
  %v176 = vpop.f32.mrf.mxu0
  %v177 = vadd.f32 %v40, %v176
  %178 = vmatmul.f32.gmra.mxu0 %v85
  %v179 = vpop.f32.mrf.mxu0
  %v180 = vadd.f32 %v40, %v179
  %181 = vmatmul.f32.gmra.mxu0 %v88
  %v182 = vpop.f32.mrf.mxu0
  %v183 = vadd.f32 %v40, %v182
  %184 = vdwg.mxu0
  %185 = vmatpush.msra.mxu0 0.0
  %186 = vmatpush.msra.mxu0 0.0
  %187 = vmatpush.msra.mxu0 0.0
  %188 = vmatpush.msra.mxu0 0.0
  %189 = vmatpush.msra.mxu0 0.0
  %190 = vmatpush.msra.mxu0 0.0
  %191 = vmatpush.msra.mxu0 0.0
  %192 = vmatpush.msra.mxu0 0.0
  %193 = vmatpush.msra.mxu0 0.0
  %194 = vmatpush.msra.mxu0 0.0
  %195 = vmatpush.msra.mxu0 0.0
  %196 = vmatpush.msra.mxu0 0.0
  %197 = vmatpush.msra.mxu0 0.0
  %198 = vmatpush.msra.mxu0 0.0
  %199 = vmatpush.msra.mxu0 0.0
  %200 = vmatpush.msra.mxu0 %v95
  %201 = vmatmul.f32.gmra.mxu0 %v67
  %v202 = vpop.f32.mrf.mxu0
  %v203 = vadd.f32 %v41, %v202
  %204 = vmatmul.f32.gmra.mxu0 %v70
  %v205 = vpop.f32.mrf.mxu0
  %v206 = vadd.f32 %v41, %v205
  %207 = vmatmul.f32.gmra.mxu0 %v73
  %v208 = vpop.f32.mrf.mxu0
  %v209 = vadd.f32 %v41, %v208
  %210 = vmatmul.f32.gmra.mxu0 %v76
  %v211 = vpop.f32.mrf.mxu0
  %v212 = vadd.f32 %v41, %v211
  %213 = vmatmul.f32.gmra.mxu0 %v79
  %v214 = vpop.f32.mrf.mxu0
  %v215 = vadd.f32 %v41, %v214
  %216 = vmatmul.f32.gmra.mxu0 %v82
  %v217 = vpop.f32.mrf.mxu0
  %v218 = vadd.f32 %v41, %v217
  %219 = vmatmul.f32.gmra.mxu0 %v85
  %v220 = vpop.f32.mrf.mxu0
  %v221 = vadd.f32 %v41, %v220
  %222 = vmatmul.f32.gmra.mxu0 %v88
  %v223 = vpop.f32.mrf.mxu0
  %v224 = vadd.f32 %v41, %v223
  %225 = vdwg.mxu0
  %226 = vmatpush.msra.mxu0 0.0
  %227 = vmatpush.msra.mxu0 0.0
  %228 = vmatpush.msra.mxu0 0.0
  %229 = vmatpush.msra.mxu0 0.0
  %230 = vmatpush.msra.mxu0 0.0
  %231 = vmatpush.msra.mxu0 0.0
  %232 = vmatpush.msra.mxu0 0.0
  %233 = vmatpush.msra.mxu0 0.0
  %234 = vmatpush.msra.mxu0 0.0
  %235 = vmatpush.msra.mxu0 0.0
  %236 = vmatpush.msra.mxu0 0.0
  %237 = vmatpush.msra.mxu0 0.0
  %238 = vmatpush.msra.mxu0 0.0
  %239 = vmatpush.msra.mxu0 0.0
  %240 = vmatpush.msra.mxu0 0.0
  %241 = vmatpush.msra.mxu0 %v97
  %242 = vmatmul.f32.gmra.mxu0 %v67
  %v243 = vpop.f32.mrf.mxu0
  %v244 = vadd.f32 %v42, %v243
  %245 = vmatmul.f32.gmra.mxu0 %v70
  %v246 = vpop.f32.mrf.mxu0
  %v247 = vadd.f32 %v42, %v246
  %248 = vmatmul.f32.gmra.mxu0 %v73
  %v249 = vpop.f32.mrf.mxu0
  %v250 = vadd.f32 %v42, %v249
  %251 = vmatmul.f32.gmra.mxu0 %v76
  %v252 = vpop.f32.mrf.mxu0
  %v253 = vadd.f32 %v42, %v252
  %254 = vmatmul.f32.gmra.mxu0 %v79
  %v255 = vpop.f32.mrf.mxu0
  %v256 = vadd.f32 %v42, %v255
  %257 = vmatmul.f32.gmra.mxu0 %v82
  %v258 = vpop.f32.mrf.mxu0
  %v259 = vadd.f32 %v42, %v258
  %260 = vmatmul.f32.gmra.mxu0 %v85
  %v261 = vpop.f32.mrf.mxu0
  %v262 = vadd.f32 %v42, %v261
  %263 = vmatmul.f32.gmra.mxu0 %v88
  %v264 = vpop.f32.mrf.mxu0
  %v265 = vadd.f32 %v42, %v264
  %266 = vdwg.mxu0
  %267 = vmatpush.msra.mxu0 0.0
  %268 = vmatpush.msra.mxu0 0.0
  %269 = vmatpush.msra.mxu0 0.0
  %270 = vmatpush.msra.mxu0 0.0
  %271 = vmatpush.msra.mxu0 0.0
  %272 = vmatpush.msra.mxu0 0.0
  %273 = vmatpush.msra.mxu0 0.0
  %274 = vmatpush.msra.mxu0 0.0
  %275 = vmatpush.msra.mxu0 0.0
  %276 = vmatpush.msra.mxu0 0.0
  %277 = vmatpush.msra.mxu0 0.0
  %278 = vmatpush.msra.mxu0 0.0
  %279 = vmatpush.msra.mxu0 0.0
  %280 = vmatpush.msra.mxu0 0.0
  %281 = vmatpush.msra.mxu0 0.0
  %282 = vmatpush.msra.mxu0 %v99
  %283 = vmatmul.f32.gmra.mxu0 %v67
  %v284 = vpop.f32.mrf.mxu0
  %v285 = vadd.f32 %v43, %v284
  %286 = vmatmul.f32.gmra.mxu0 %v70
  %v287 = vpop.f32.mrf.mxu0
  %v288 = vadd.f32 %v43, %v287
  %289 = vmatmul.f32.gmra.mxu0 %v73
  %v290 = vpop.f32.mrf.mxu0
  %v291 = vadd.f32 %v43, %v290
  %292 = vmatmul.f32.gmra.mxu0 %v76
  %v293 = vpop.f32.mrf.mxu0
  %v294 = vadd.f32 %v43, %v293
  %295 = vmatmul.f32.gmra.mxu0 %v79
  %v296 = vpop.f32.mrf.mxu0
  %v297 = vadd.f32 %v43, %v296
  %298 = vmatmul.f32.gmra.mxu0 %v82
  %v299 = vpop.f32.mrf.mxu0
  %v300 = vadd.f32 %v43, %v299
  %301 = vmatmul.f32.gmra.mxu0 %v85
  %v302 = vpop.f32.mrf.mxu0
  %v303 = vadd.f32 %v43, %v302
  %304 = vmatmul.f32.gmra.mxu0 %v88
  %v305 = vpop.f32.mrf.mxu0
  %v306 = vadd.f32 %v43, %v305
  %307 = vdwg.mxu0
  %308 = vmatpush.msra.mxu0 0.0
  %309 = vmatpush.msra.mxu0 0.0
  %310 = vmatpush.msra.mxu0 0.0
  %311 = vmatpush.msra.mxu0 0.0
  %312 = vmatpush.msra.mxu0 0.0
  %313 = vmatpush.msra.mxu0 0.0
  %314 = vmatpush.msra.mxu0 0.0
  %315 = vmatpush.msra.mxu0 0.0
  %316 = vmatpush.msra.mxu0 0.0
  %317 = vmatpush.msra.mxu0 0.0
  %318 = vmatpush.msra.mxu0 0.0
  %319 = vmatpush.msra.mxu0 0.0
  %320 = vmatpush.msra.mxu0 0.0
  %321 = vmatpush.msra.mxu0 0.0
  %322 = vmatpush.msra.mxu0 0.0
  %323 = vmatpush.msra.mxu0 %v101
  %324 = vmatmul.f32.gmra.mxu0 %v67
  %v325 = vpop.f32.mrf.mxu0
  %v326 = vadd.f32 %v44, %v325
  %327 = vmatmul.f32.gmra.mxu0 %v70
  %v328 = vpop.f32.mrf.mxu0
  %v329 = vadd.f32 %v44, %v328
  %330 = vmatmul.f32.gmra.mxu0 %v73
  %v331 = vpop.f32.mrf.mxu0
  %v332 = vadd.f32 %v44, %v331
  %333 = vmatmul.f32.gmra.mxu0 %v76
  %v334 = vpop.f32.mrf.mxu0
  %v335 = vadd.f32 %v44, %v334
  %336 = vmatmul.f32.gmra.mxu0 %v79
  %v337 = vpop.f32.mrf.mxu0
  %v338 = vadd.f32 %v44, %v337
  %339 = vmatmul.f32.gmra.mxu0 %v82
  %v340 = vpop.f32.mrf.mxu0
  %v341 = vadd.f32 %v44, %v340
  %342 = vmatmul.f32.gmra.mxu0 %v85
  %v343 = vpop.f32.mrf.mxu0
  %v344 = vadd.f32 %v44, %v343
  %345 = vmatmul.f32.gmra.mxu0 %v88
  %v346 = vpop.f32.mrf.mxu0
  %v347 = vadd.f32 %v44, %v346
  %348 = vdwg.mxu0
  %349 = vst [vmem:[#allocation2] sm:$0xff] %v121
  %350 = vst [vmem:[#allocation2 + $0x8] sm:$0xff] %v162
  %351 = vst [vmem:[#allocation2 + $0x10] sm:$0xff] %v203
  %352 = vst [vmem:[#allocation2 + $0x18] sm:$0xff] %v244
  %353 = vst [vmem:[#allocation2 + $0x20] sm:$0xff] %v285
  %354 = vst [vmem:[#allocation2 + $0x28] sm:$0xff] %v326
  %355 = vst [vmem:[#allocation2 + $0x30] sm:$0xff] %v124
  %356 = vst [vmem:[#allocation2 + $0x38] sm:$0xff] %v165
  %357 = vst [vmem:[#allocation2 + $0x40] sm:$0xff] %v206
  %358 = vst [vmem:[#allocation2 + $0x48] sm:$0xff] %v247
  %359 = vst [vmem:[#allocation2 + $0x50] sm:$0xff] %v288
  %360 = vst [vmem:[#allocation2 + $0x58] sm:$0xff] %v329
  %361 = vst [vmem:[#allocation2 + $0x60] sm:$0xff] %v127
  %362 = vst [vmem:[#allocation2 + $0x68] sm:$0xff] %v168
  %363 = vst [vmem:[#allocation2 + $0x70] sm:$0xff] %v209
  %364 = vst [vmem:[#allocation2 + $0x78] sm:$0xff] %v250
  %365 = vst [vmem:[#allocation2 + $0x80] sm:$0xff] %v291
  %366 = vst [vmem:[#allocation2 + $0x88] sm:$0xff] %v332
  %367 = vst [vmem:[#allocation2 + $0x90] sm:$0xff] %v130
  %368 = vst [vmem:[#allocation2 + $0x98] sm:$0xff] %v171
  %369 = vst [vmem:[#allocation2 + $0xa0] sm:$0xff] %v212
  %370 = vst [vmem:[#allocation2 + $0xa8] sm:$0xff] %v253
  %371 = vst [vmem:[#allocation2 + $0xb0] sm:$0xff] %v294
  %372 = vst [vmem:[#allocation2 + $0xb8] sm:$0xff] %v335
  %373 = vst [vmem:[#allocation2 + $0xc0] sm:$0xff] %v133
  %374 = vst [vmem:[#allocation2 + $0xc8] sm:$0xff] %v174
  %375 = vst [vmem:[#allocation2 + $0xd0] sm:$0xff] %v215
  %376 = vst [vmem:[#allocation2 + $0xd8] sm:$0xff] %v256
  %377 = vst [vmem:[#allocation2 + $0xe0] sm:$0xff] %v297
  %378 = vst [vmem:[#allocation2 + $0xe8] sm:$0xff] %v338
  %379 = vst [vmem:[#allocation2 + $0xf0] sm:$0xff] %v136
  %380 = vst [vmem:[#allocation2 + $0xf8] sm:$0xff] %v177
  %381 = vst [vmem:[#allocation2 + $0x100] sm:$0xff] %v218
  %382 = vst [vmem:[#allocation2 + $0x108] sm:$0xff] %v259
  %383 = vst [vmem:[#allocation2 + $0x110] sm:$0xff] %v300
  %384 = vst [vmem:[#allocation2 + $0x118] sm:$0xff] %v341
  %385 = vst [vmem:[#allocation2 + $0x120] sm:$0xff] %v139
  %386 = vst [vmem:[#allocation2 + $0x128] sm:$0xff] %v180
  %387 = vst [vmem:[#allocation2 + $0x130] sm:$0xff] %v221
  %388 = vst [vmem:[#allocation2 + $0x138] sm:$0xff] %v262
  %389 = vst [vmem:[#allocation2 + $0x140] sm:$0xff] %v303
  %390 = vst [vmem:[#allocation2 + $0x148] sm:$0xff] %v344
  %391 = vst [vmem:[#allocation2 + $0x150] sm:$0xff] %v142
  %392 = vst [vmem:[#allocation2 + $0x158] sm:$0xff] %v183
  %393 = vst [vmem:[#allocation2 + $0x160] sm:$0xff] %v224
  %394 = vst [vmem:[#allocation2 + $0x168] sm:$0xff] %v265
  %395 = vst [vmem:[#allocation2 + $0x170] sm:$0xff] %v306
  %396 = vst [vmem:[#allocation2 + $0x178] sm:$0xff] %v347
  %v397 = vld [vmem:[%s5] sm:$0x1]
  %v399 = vperm.slane %v397, 0
  %v401 = vld [vmem:[%s6] sm:$0x1]
  %v403 = vperm.slane %v401, 0
  %s405 = smul.u32 0, 6
  %s406 = smul.addr %s405, 8
  %s407 = scalar_lea.vmem [#allocation2], %s406
  %v408 = vld [vmem:[%s407] sm:$0xff]
  %v409 = vld [vmem:[%s407 + $0x8] sm:$0xff]
  %v410 = vld [vmem:[%s407 + $0x10] sm:$0xff]
  %v411 = vld [vmem:[%s3] sm:$0xff]
  %v412 = vld [vmem:[%s3 + $0x8] sm:$0xff]
  %v413 = vld [vmem:[%s3 + $0x10] sm:$0xff]
  %v414 = vld [vmem:[%s3 + $0x18] sm:$0xff]
  %v415 = vld [vmem:[%s3 + $0x20] sm:$0xff]
  %v416 = vld [vmem:[%s3 + $0x28] sm:$0xff]
  %v417 = vld [vmem:[%s3 + $0x30] sm:$0xff]
  %v418 = vld [vmem:[%s3 + $0x38] sm:$0xff]
  %v419 = vld [vmem:[%s3 + $0x40] sm:$0xff]
  %v420 = vld [vmem:[%s3 + $0x48] sm:$0xff]
  %v421 = vld [vmem:[%s3 + $0x50] sm:$0xff]
  %v422 = vld [vmem:[%s3 + $0x58] sm:$0xff]
  %v423 = vld [vmem:[%s3 + $0x60] sm:$0xff]
  %v424 = vld [vmem:[%s3 + $0x68] sm:$0xff]
  %v425 = vld [vmem:[%s3 + $0x70] sm:$0xff]
  %v426 = vld [vmem:[%s3 + $0x78] sm:$0xff]
  %v427 = vld [vmem:[%s3 + $0x80] sm:$0xff]
  %v428 = vld [vmem:[%s3 + $0x88] sm:$0xff]
  %v429 = vld [vmem:[%s3 + $0x90] sm:$0xff]
  %v430 = vld [vmem:[%s3 + $0x98] sm:$0xff]
  %v431 = vld [vmem:[%s3 + $0xa0] sm:$0xff]
  %v432 = vld [vmem:[%s3 + $0xa8] sm:$0xff]
  %v433 = vld [vmem:[%s3 + $0xb0] sm:$0xff]
  %v434 = vld [vmem:[%s3 + $0xb8] sm:$0xff]
  %v435 = vld [vmem:[%s3 + $0xc0] sm:$0xff]
  %v436 = vld [vmem:[%s3 + $0xc8] sm:$0xff]
  %v437 = vld [vmem:[%s3 + $0xd0] sm:$0xff]
  %v438 = vld [vmem:[%s3 + $0xd8] sm:$0xff]
  %v439 = vld [vmem:[%s3 + $0xe0] sm:$0xff]
  %v440 = vld [vmem:[%s3 + $0xe8] sm:$0xff]
  %v441 = vld [vmem:[%s3 + $0xf0] sm:$0xff]
  %v442 = vld [vmem:[%s3 + $0xf8] sm:$0xff]
  %v443 = vld [vmem:[%s3 + $0x100] sm:$0xff]
  %v444 = vld [vmem:[%s3 + $0x108] sm:$0xff]
  %v445 = vld [vmem:[%s3 + $0x110] sm:$0xff]
  %v446 = vld [vmem:[%s3 + $0x118] sm:$0xff]
  %v447 = vld [vmem:[%s3 + $0x120] sm:$0xff]
  %v448 = vld [vmem:[%s3 + $0x128] sm:$0xff]
  %v449 = vld [vmem:[%s3 + $0x130] sm:$0xff]
  %v450 = vld [vmem:[%s3 + $0x138] sm:$0xff]
  %v451 = vld [vmem:[%s3 + $0x140] sm:$0xff]
  %v452 = vld [vmem:[%s3 + $0x148] sm:$0xff]
  %v453 = vld [vmem:[%s3 + $0x150] sm:$0xff]
  %v454 = vld [vmem:[%s3 + $0x158] sm:$0xff]
  %v455 = vld [vmem:[%s3 + $0x160] sm:$0xff]
  %v456 = vld [vmem:[%s3 + $0x168] sm:$0xff]
  %v457 = vld [vmem:[%s3 + $0x170] sm:$0xff]
  %v458 = vld [vmem:[%s3 + $0x178] sm:$0xff]
  %459 = vmatpush.msra.mxu0 %v456
  %460 = vmatpush.msra.mxu0 %v453
  %461 = vmatpush.msra.mxu0 %v450
  %462 = vmatpush.msra.mxu0 %v447
  %463 = vmatpush.msra.mxu0 %v444
  %464 = vmatpush.msra.mxu0 %v441
  %465 = vmatpush.msra.mxu0 %v438
  %466 = vmatpush.msra.mxu0 %v435
  %467 = vmatpush.msra.mxu0 %v432
  %468 = vmatpush.msra.mxu0 %v429
  %469 = vmatpush.msra.mxu0 %v426
  %470 = vmatpush.msra.mxu0 %v423
  %471 = vmatpush.msra.mxu0 %v420
  %472 = vmatpush.msra.mxu0 %v417
  %473 = vmatpush.msra.mxu0 %v414
  %474 = vmatpush.msra.mxu0 %v411
  %475 = vmatmul.f32.gmra.mxu0 0.0
  %v476 = vpop.f32.mrf.mxu0
  %v477 = vadd.f32 0.0, %v476
  %478 = vdwg.mxu0
  %479 = vmatpush.msra.mxu0 %v457
  %480 = vmatpush.msra.mxu0 %v454
  %481 = vmatpush.msra.mxu0 %v451
  %482 = vmatpush.msra.mxu0 %v448
  %483 = vmatpush.msra.mxu0 %v445
  %484 = vmatpush.msra.mxu0 %v442
  %485 = vmatpush.msra.mxu0 %v439
  %486 = vmatpush.msra.mxu0 %v436
  %487 = vmatpush.msra.mxu0 %v433
  %488 = vmatpush.msra.mxu0 %v430
  %489 = vmatpush.msra.mxu0 %v427
  %490 = vmatpush.msra.mxu0 %v424
  %491 = vmatpush.msra.mxu0 %v421
  %492 = vmatpush.msra.mxu0 %v418
  %493 = vmatpush.msra.mxu0 %v415
  %494 = vmatpush.msra.mxu0 %v412
  %495 = vmatmul.f32.gmra.mxu0 0.0
  %v496 = vpop.f32.mrf.mxu0
  %v497 = vadd.f32 0.0, %v496
  %498 = vdwg.mxu0
  %499 = vmatpush.msra.mxu0 %v458
  %500 = vmatpush.msra.mxu0 %v455
  %501 = vmatpush.msra.mxu0 %v452
  %502 = vmatpush.msra.mxu0 %v449
  %503 = vmatpush.msra.mxu0 %v446
  %504 = vmatpush.msra.mxu0 %v443
  %505 = vmatpush.msra.mxu0 %v440
  %506 = vmatpush.msra.mxu0 %v437
  %507 = vmatpush.msra.mxu0 %v434
  %508 = vmatpush.msra.mxu0 %v431
  %509 = vmatpush.msra.mxu0 %v428
  %510 = vmatpush.msra.mxu0 %v425
  %511 = vmatpush.msra.mxu0 %v422
  %512 = vmatpush.msra.mxu0 %v419
  %513 = vmatpush.msra.mxu0 %v416
  %514 = vmatpush.msra.mxu0 %v413
  %515 = vmatmul.f32.gmra.mxu0 0.0
  %v516 = vpop.f32.mrf.mxu0
  %v517 = vadd.f32 0.0, %v516
  %518 = vdwg.mxu0
  %v519 = vadd.f32 %v408, %v477
  %v520 = vsub.f32 0.0, %v519
  %v521 = vmul.f32 %v520, 1.442695
  %v522 = vpow.pop %v521
  %v523 = vadd.f32 %v522, 1.0
  %v524 = vrcp.pop %v523
  %v525 = vmul.f32 %v523, %v524
  %v526 = vsub.f32 1.0, %v525
  %v527 = vmul.f32 %v524, %v526
  %v528 = vadd.f32 %v524, %v527
  %vm529 = vweird.f32 %v523
  %vm530 = vweird.f32 %v524
  %vm531 = vmor %vm529, %vm530
  %v532 = vsel %vm531, %v524, %v528
  %v533 = vand.u32 2147483647, %v523
  %vm534 = vcmp.eq.f32.partialorder %v533, 8.507059e+37
  %v535 = vand.u32 %v523, 2147483648
  %v536 = vor.u32 1.1754944e-38, %v535
  %v537 = vsel %vm534, %v536, %v532
  %v538 = vmul.f32 1.0, %v537
  %v539 = vadd.f32 %v409, %v497
  %v540 = vsub.f32 0.0, %v539
  %v541 = vmul.f32 %v540, 1.442695
  %v542 = vpow.pop %v541
  %v543 = vadd.f32 %v542, 1.0
  %v544 = vrcp.pop %v543
  %v545 = vmul.f32 %v543, %v544
  %v546 = vsub.f32 1.0, %v545
  %v547 = vmul.f32 %v544, %v546
  %v548 = vadd.f32 %v544, %v547
  %vm549 = vweird.f32 %v543
  %vm550 = vweird.f32 %v544
  %vm551 = vmor %vm549, %vm550
  %v552 = vsel %vm551, %v544, %v548
  %v553 = vand.u32 2147483647, %v543
  %vm554 = vcmp.eq.f32.partialorder %v553, 8.507059e+37
  %v555 = vand.u32 %v543, 2147483648
  %v556 = vor.u32 1.1754944e-38, %v555
  %v557 = vsel %vm554, %v556, %v552
  %v558 = vmul.f32 1.0, %v557
  %v559 = vadd.f32 %v517, %v399
  %v560 = vmul.f32 %v538, %v559
  %v561 = vadd.f32 %v410, %v560
  %v562 = vtanh.pop %v561
  %v563 = vsub.f32 1.0, %v558
  %v564 = vmul.f32 %v563, %v562
  %v565 = vmul.f32 %v558, 0.0
  %v566 = vadd.f32 %v564, %v565
  %s567 = smul.u32 7, 6
  %s568 = smul.addr %s567, 8
  %s569 = scalar_lea.vmem [#allocation2], %s568
  %v570 = vld [vmem:[%s569 + $0x18] sm:$0xff]
  %v571 = vld [vmem:[%s569 + $0x20] sm:$0xff]
  %v572 = vld [vmem:[%s569 + $0x28] sm:$0xff]
  %v573 = vld [vmem:[%s4] sm:$0xff]
  %v574 = vld [vmem:[%s4 + $0x8] sm:$0xff]
  %v575 = vld [vmem:[%s4 + $0x10] sm:$0xff]
  %v576 = vld [vmem:[%s4 + $0x18] sm:$0xff]
  %v577 = vld [vmem:[%s4 + $0x20] sm:$0xff]
  %v578 = vld [vmem:[%s4 + $0x28] sm:$0xff]
  %v579 = vld [vmem:[%s4 + $0x30] sm:$0xff]
  %v580 = vld [vmem:[%s4 + $0x38] sm:$0xff]
  %v581 = vld [vmem:[%s4 + $0x40] sm:$0xff]
  %v582 = vld [vmem:[%s4 + $0x48] sm:$0xff]
  %v583 = vld [vmem:[%s4 + $0x50] sm:$0xff]
  %v584 = vld [vmem:[%s4 + $0x58] sm:$0xff]
  %v585 = vld [vmem:[%s4 + $0x60] sm:$0xff]
  %v586 = vld [vmem:[%s4 + $0x68] sm:$0xff]
  %v587 = vld [vmem:[%s4 + $0x70] sm:$0xff]
  %v588 = vld [vmem:[%s4 + $0x78] sm:$0xff]
  %v589 = vld [vmem:[%s4 + $0x80] sm:$0xff]
  %v590 = vld [vmem:[%s4 + $0x88] sm:$0xff]
  %v591 = vld [vmem:[%s4 + $0x90] sm:$0xff]
  %v592 = vld [vmem:[%s4 + $0x98] sm:$0xff]
  %v593 = vld [vmem:[%s4 + $0xa0] sm:$0xff]
  %v594 = vld [vmem:[%s4 + $0xa8] sm:$0xff]
  %v595 = vld [vmem:[%s4 + $0xb0] sm:$0xff]
  %v596 = vld [vmem:[%s4 + $0xb8] sm:$0xff]
  %v597 = vld [vmem:[%s4 + $0xc0] sm:$0xff]
  %v598 = vld [vmem:[%s4 + $0xc8] sm:$0xff]
  %v599 = vld [vmem:[%s4 + $0xd0] sm:$0xff]
  %v600 = vld [vmem:[%s4 + $0xd8] sm:$0xff]
  %v601 = vld [vmem:[%s4 + $0xe0] sm:$0xff]
  %v602 = vld [vmem:[%s4 + $0xe8] sm:$0xff]
  %v603 = vld [vmem:[%s4 + $0xf0] sm:$0xff]
  %v604 = vld [vmem:[%s4 + $0xf8] sm:$0xff]
  %v605 = vld [vmem:[%s4 + $0x100] sm:$0xff]
  %v606 = vld [vmem:[%s4 + $0x108] sm:$0xff]
  %v607 = vld [vmem:[%s4 + $0x110] sm:$0xff]
  %v608 = vld [vmem:[%s4 + $0x118] sm:$0xff]
  %v609 = vld [vmem:[%s4 + $0x120] sm:$0xff]
  %v610 = vld [vmem:[%s4 + $0x128] sm:$0xff]
  %v611 = vld [vmem:[%s4 + $0x130] sm:$0xff]
  %v612 = vld [vmem:[%s4 + $0x138] sm:$0xff]
  %v613 = vld [vmem:[%s4 + $0x140] sm:$0xff]
  %v614 = vld [vmem:[%s4 + $0x148] sm:$0xff]
  %v615 = vld [vmem:[%s4 + $0x150] sm:$0xff]
  %v616 = vld [vmem:[%s4 + $0x158] sm:$0xff]
  %v617 = vld [vmem:[%s4 + $0x160] sm:$0xff]
  %v618 = vld [vmem:[%s4 + $0x168] sm:$0xff]
  %v619 = vld [vmem:[%s4 + $0x170] sm:$0xff]
  %v620 = vld [vmem:[%s4 + $0x178] sm:$0xff]
  %621 = vmatpush.msra.mxu0 %v618
  %622 = vmatpush.msra.mxu0 %v615
  %623 = vmatpush.msra.mxu0 %v612
  %624 = vmatpush.msra.mxu0 %v609
  %625 = vmatpush.msra.mxu0 %v606
  %626 = vmatpush.msra.mxu0 %v603
  %627 = vmatpush.msra.mxu0 %v600
  %628 = vmatpush.msra.mxu0 %v597
  %629 = vmatpush.msra.mxu0 %v594
  %630 = vmatpush.msra.mxu0 %v591
  %631 = vmatpush.msra.mxu0 %v588
  %632 = vmatpush.msra.mxu0 %v585
  %633 = vmatpush.msra.mxu0 %v582
  %634 = vmatpush.msra.mxu0 %v579
  %635 = vmatpush.msra.mxu0 %v576
  %636 = vmatpush.msra.mxu0 %v573
  %637 = vmatmul.f32.gmra.mxu0 0.0
  %v638 = vpop.f32.mrf.mxu0
  %v639 = vadd.f32 0.0, %v638
  %640 = vdwg.mxu0
  %641 = vmatpush.msra.mxu0 %v619
  %642 = vmatpush.msra.mxu0 %v616
  %643 = vmatpush.msra.mxu0 %v613
  %644 = vmatpush.msra.mxu0 %v610
  %645 = vmatpush.msra.mxu0 %v607
  %646 = vmatpush.msra.mxu0 %v604
  %647 = vmatpush.msra.mxu0 %v601
  %648 = vmatpush.msra.mxu0 %v598
  %649 = vmatpush.msra.mxu0 %v595
  %650 = vmatpush.msra.mxu0 %v592
  %651 = vmatpush.msra.mxu0 %v589
  %652 = vmatpush.msra.mxu0 %v586
  %653 = vmatpush.msra.mxu0 %v583
  %654 = vmatpush.msra.mxu0 %v580
  %655 = vmatpush.msra.mxu0 %v577
  %656 = vmatpush.msra.mxu0 %v574
  %657 = vmatmul.f32.gmra.mxu0 0.0
  %v658 = vpop.f32.mrf.mxu0
  %v659 = vadd.f32 0.0, %v658
  %660 = vdwg.mxu0
  %661 = vmatpush.msra.mxu0 %v620
  %662 = vmatpush.msra.mxu0 %v617
  %663 = vmatpush.msra.mxu0 %v614
  %664 = vmatpush.msra.mxu0 %v611
  %665 = vmatpush.msra.mxu0 %v608
  %666 = vmatpush.msra.mxu0 %v605
  %667 = vmatpush.msra.mxu0 %v602
  %668 = vmatpush.msra.mxu0 %v599
  %669 = vmatpush.msra.mxu0 %v596
  %670 = vmatpush.msra.mxu0 %v593
  %671 = vmatpush.msra.mxu0 %v590
  %672 = vmatpush.msra.mxu0 %v587
  %673 = vmatpush.msra.mxu0 %v584
  %674 = vmatpush.msra.mxu0 %v581
  %675 = vmatpush.msra.mxu0 %v578
  %676 = vmatpush.msra.mxu0 %v575
  %677 = vmatmul.f32.gmra.mxu0 0.0
  %v678 = vpop.f32.mrf.mxu0
  %v679 = vadd.f32 0.0, %v678
  %680 = vdwg.mxu0
  %v681 = vadd.f32 %v570, %v639
  %v682 = vsub.f32 0.0, %v681
  %v683 = vmul.f32 %v682, 1.442695
  %v684 = vpow.pop %v683
  %v685 = vadd.f32 %v684, 1.0
  %v686 = vrcp.pop %v685
  %v687 = vmul.f32 %v685, %v686
  %v688 = vsub.f32 1.0, %v687
  %v689 = vmul.f32 %v686, %v688
  %v690 = vadd.f32 %v686, %v689
  %vm691 = vweird.f32 %v685
  %vm692 = vweird.f32 %v686
  %vm693 = vmor %vm691, %vm692
  %v694 = vsel %vm693, %v686, %v690
  %v695 = vand.u32 2147483647, %v685
  %vm696 = vcmp.eq.f32.partialorder %v695, 8.507059e+37
  %v697 = vand.u32 %v685, 2147483648
  %v698 = vor.u32 1.1754944e-38, %v697
  %v699 = vsel %vm696, %v698, %v694
  %v700 = vmul.f32 1.0, %v699
  %v701 = vadd.f32 %v571, %v659
  %v702 = vsub.f32 0.0, %v701
  %v703 = vmul.f32 %v702, 1.442695
  %v704 = vpow.pop %v703
  %v705 = vadd.f32 %v704, 1.0
  %v706 = vrcp.pop %v705
  %v707 = vmul.f32 %v705, %v706
  %v708 = vsub.f32 1.0, %v707
  %v709 = vmul.f32 %v706, %v708
  %v710 = vadd.f32 %v706, %v709
  %vm711 = vweird.f32 %v705
  %vm712 = vweird.f32 %v706
  %vm713 = vmor %vm711, %vm712
  %v714 = vsel %vm713, %v706, %v710
  %v715 = vand.u32 2147483647, %v705
  %vm716 = vcmp.eq.f32.partialorder %v715, 8.507059e+37
  %v717 = vand.u32 %v705, 2147483648
  %v718 = vor.u32 1.1754944e-38, %v717
  %v719 = vsel %vm716, %v718, %v714
  %v720 = vmul.f32 1.0, %v719
  %v721 = vadd.f32 %v679, %v403
  %v722 = vmul.f32 %v700, %v721
  %v723 = vadd.f32 %v572, %v722
  %v724 = vtanh.pop %v723
  %v725 = vsub.f32 1.0, %v720
  %v726 = vmul.f32 %v725, %v724
  %v727 = vmul.f32 %v720, 0.0
  %v728 = vadd.f32 %v726, %v727
  %729 = vst [vmem:[%s7] sm:$0xff] %v566
  %s730 = scalar_lea.vmem %s7, 112
  %731 = vst [vmem:[%s730 + $0x8] sm:$0xff] %v728
  %s732 = smul.u32 1, 6
  %s733 = smul.addr %s732, 8
  %s734 = scalar_lea.vmem [#allocation2], %s733
  %v735 = vld [vmem:[%s734] sm:$0xff]
  %v736 = vld [vmem:[%s734 + $0x8] sm:$0xff]
  %v737 = vld [vmem:[%s734 + $0x10] sm:$0xff]
  %v738 = vld [vmem:[%s3] sm:$0xff]
  %v739 = vld [vmem:[%s3 + $0x8] sm:$0xff]
  %v740 = vld [vmem:[%s3 + $0x10] sm:$0xff]
  %v741 = vld [vmem:[%s3 + $0x18] sm:$0xff]
  %v742 = vld [vmem:[%s3 + $0x20] sm:$0xff]
  %v743 = vld [vmem:[%s3 + $0x28] sm:$0xff]
  %v744 = vld [vmem:[%s3 + $0x30] sm:$0xff]
  %v745 = vld [vmem:[%s3 + $0x38] sm:$0xff]
  %v746 = vld [vmem:[%s3 + $0x40] sm:$0xff]
  %v747 = vld [vmem:[%s3 + $0x48] sm:$0xff]
  %v748 = vld [vmem:[%s3 + $0x50] sm:$0xff]
  %v749 = vld [vmem:[%s3 + $0x58] sm:$0xff]
  %v750 = vld [vmem:[%s3 + $0x60] sm:$0xff]
  %v751 = vld [vmem:[%s3 + $0x68] sm:$0xff]
  %v752 = vld [vmem:[%s3 + $0x70] sm:$0xff]
  %v753 = vld [vmem:[%s3 + $0x78] sm:$0xff]
  %v754 = vld [vmem:[%s3 + $0x80] sm:$0xff]
  %v755 = vld [vmem:[%s3 + $0x88] sm:$0xff]
  %v756 = vld [vmem:[%s3 + $0x90] sm:$0xff]
  %v757 = vld [vmem:[%s3 + $0x98] sm:$0xff]
  %v758 = vld [vmem:[%s3 + $0xa0] sm:$0xff]
  %v759 = vld [vmem:[%s3 + $0xa8] sm:$0xff]
  %v760 = vld [vmem:[%s3 + $0xb0] sm:$0xff]
  %v761 = vld [vmem:[%s3 + $0xb8] sm:$0xff]
  %v762 = vld [vmem:[%s3 + $0xc0] sm:$0xff]
  %v763 = vld [vmem:[%s3 + $0xc8] sm:$0xff]
  %v764 = vld [vmem:[%s3 + $0xd0] sm:$0xff]
  %v765 = vld [vmem:[%s3 + $0xd8] sm:$0xff]
  %v766 = vld [vmem:[%s3 + $0xe0] sm:$0xff]
  %v767 = vld [vmem:[%s3 + $0xe8] sm:$0xff]
  %v768 = vld [vmem:[%s3 + $0xf0] sm:$0xff]
  %v769 = vld [vmem:[%s3 + $0xf8] sm:$0xff]
  %v770 = vld [vmem:[%s3 + $0x100] sm:$0xff]
  %v771 = vld [vmem:[%s3 + $0x108] sm:$0xff]
  %v772 = vld [vmem:[%s3 + $0x110] sm:$0xff]
  %v773 = vld [vmem:[%s3 + $0x118] sm:$0xff]
  %v774 = vld [vmem:[%s3 + $0x120] sm:$0xff]
  %v775 = vld [vmem:[%s3 + $0x128] sm:$0xff]
  %v776 = vld [vmem:[%s3 + $0x130] sm:$0xff]
  %v777 = vld [vmem:[%s3 + $0x138] sm:$0xff]
  %v778 = vld [vmem:[%s3 + $0x140] sm:$0xff]
  %v779 = vld [vmem:[%s3 + $0x148] sm:$0xff]
  %v780 = vld [vmem:[%s3 + $0x150] sm:$0xff]
  %v781 = vld [vmem:[%s3 + $0x158] sm:$0xff]
  %v782 = vld [vmem:[%s3 + $0x160] sm:$0xff]
  %v783 = vld [vmem:[%s3 + $0x168] sm:$0xff]
  %v784 = vld [vmem:[%s3 + $0x170] sm:$0xff]
  %v785 = vld [vmem:[%s3 + $0x178] sm:$0xff]
  %786 = vmatpush.msra.mxu0 %v783
  %787 = vmatpush.msra.mxu0 %v780
  %788 = vmatpush.msra.mxu0 %v777
  %789 = vmatpush.msra.mxu0 %v774
  %790 = vmatpush.msra.mxu0 %v771
  %791 = vmatpush.msra.mxu0 %v768
  %792 = vmatpush.msra.mxu0 %v765
  %793 = vmatpush.msra.mxu0 %v762
  %794 = vmatpush.msra.mxu0 %v759
  %795 = vmatpush.msra.mxu0 %v756
  %796 = vmatpush.msra.mxu0 %v753
  %797 = vmatpush.msra.mxu0 %v750
  %798 = vmatpush.msra.mxu0 %v747
  %799 = vmatpush.msra.mxu0 %v744
  %800 = vmatpush.msra.mxu0 %v741
  %801 = vmatpush.msra.mxu0 %v738
  %802 = vmatmul.f32.gmra.mxu0 %v566
  %v803 = vpop.f32.mrf.mxu0
  %v804 = vadd.f32 0.0, %v803
  %805 = vdwg.mxu0
  %806 = vmatpush.msra.mxu0 %v784
  %807 = vmatpush.msra.mxu0 %v781
  %808 = vmatpush.msra.mxu0 %v778
  %809 = vmatpush.msra.mxu0 %v775
  %810 = vmatpush.msra.mxu0 %v772
  %811 = vmatpush.msra.mxu0 %v769
  %812 = vmatpush.msra.mxu0 %v766
  %813 = vmatpush.msra.mxu0 %v763
  %814 = vmatpush.msra.mxu0 %v760
  %815 = vmatpush.msra.mxu0 %v757
  %816 = vmatpush.msra.mxu0 %v754
  %817 = vmatpush.msra.mxu0 %v751
  %818 = vmatpush.msra.mxu0 %v748
  %819 = vmatpush.msra.mxu0 %v745
  %820 = vmatpush.msra.mxu0 %v742
  %821 = vmatpush.msra.mxu0 %v739
  %822 = vmatmul.f32.gmra.mxu0 %v566
  %v823 = vpop.f32.mrf.mxu0
  %v824 = vadd.f32 0.0, %v823
  %825 = vdwg.mxu0
  %826 = vmatpush.msra.mxu0 %v785
  %827 = vmatpush.msra.mxu0 %v782
  %828 = vmatpush.msra.mxu0 %v779
  %829 = vmatpush.msra.mxu0 %v776
  %830 = vmatpush.msra.mxu0 %v773
  %831 = vmatpush.msra.mxu0 %v770
  %832 = vmatpush.msra.mxu0 %v767
  %833 = vmatpush.msra.mxu0 %v764
  %834 = vmatpush.msra.mxu0 %v761
  %835 = vmatpush.msra.mxu0 %v758
  %836 = vmatpush.msra.mxu0 %v755
  %837 = vmatpush.msra.mxu0 %v752
  %838 = vmatpush.msra.mxu0 %v749
  %839 = vmatpush.msra.mxu0 %v746
  %840 = vmatpush.msra.mxu0 %v743
  %841 = vmatpush.msra.mxu0 %v740
  %842 = vmatmul.f32.gmra.mxu0 %v566
  %v843 = vpop.f32.mrf.mxu0
  %v844 = vadd.f32 0.0, %v843
  %845 = vdwg.mxu0
  %v846 = vadd.f32 %v735, %v804
  %v847 = vsub.f32 0.0, %v846
  %v848 = vmul.f32 %v847, 1.442695
  %v849 = vpow.pop %v848
  %v850 = vadd.f32 %v849, 1.0
  %v851 = vrcp.pop %v850
  %v852 = vmul.f32 %v850, %v851
  %v853 = vsub.f32 1.0, %v852
  %v854 = vmul.f32 %v851, %v853
  %v855 = vadd.f32 %v851, %v854
  %vm856 = vweird.f32 %v850
  %vm857 = vweird.f32 %v851
  %vm858 = vmor %vm856, %vm857
  %v859 = vsel %vm858, %v851, %v855
  %v860 = vand.u32 2147483647, %v850
  %vm861 = vcmp.eq.f32.partialorder %v860, 8.507059e+37
  %v862 = vand.u32 %v850, 2147483648
  %v863 = vor.u32 1.1754944e-38, %v862
  %v864 = vsel %vm861, %v863, %v859
  %v865 = vmul.f32 1.0, %v864
  %v866 = vadd.f32 %v736, %v824
  %v867 = vsub.f32 0.0, %v866
  %v868 = vmul.f32 %v867, 1.442695
  %v869 = vpow.pop %v868
  %v870 = vadd.f32 %v869, 1.0
  %v871 = vrcp.pop %v870
  %v872 = vmul.f32 %v870, %v871
  %v873 = vsub.f32 1.0, %v872
  %v874 = vmul.f32 %v871, %v873
  %v875 = vadd.f32 %v871, %v874
  %vm876 = vweird.f32 %v870
  %vm877 = vweird.f32 %v871
  %vm878 = vmor %vm876, %vm877
  %v879 = vsel %vm878, %v871, %v875
  %v880 = vand.u32 2147483647, %v870
  %vm881 = vcmp.eq.f32.partialorder %v880, 8.507059e+37
  %v882 = vand.u32 %v870, 2147483648
  %v883 = vor.u32 1.1754944e-38, %v882
  %v884 = vsel %vm881, %v883, %v879
  %v885 = vmul.f32 1.0, %v884
  %v886 = vadd.f32 %v844, %v399
  %v887 = vmul.f32 %v865, %v886
  %v888 = vadd.f32 %v737, %v887
  %v889 = vtanh.pop %v888
  %v890 = vsub.f32 1.0, %v885
  %v891 = vmul.f32 %v890, %v889
  %v892 = vmul.f32 %v885, %v566
  %v893 = vadd.f32 %v891, %v892
  %s894 = smul.u32 6, 6
  %s895 = smul.addr %s894, 8
  %s896 = scalar_lea.vmem [#allocation2], %s895
  %v897 = vld [vmem:[%s896 + $0x18] sm:$0xff]
  %v898 = vld [vmem:[%s896 + $0x20] sm:$0xff]
  %v899 = vld [vmem:[%s896 + $0x28] sm:$0xff]
  %v900 = vld [vmem:[%s4] sm:$0xff]
  %v901 = vld [vmem:[%s4 + $0x8] sm:$0xff]
  %v902 = vld [vmem:[%s4 + $0x10] sm:$0xff]
  %v903 = vld [vmem:[%s4 + $0x18] sm:$0xff]
  %v904 = vld [vmem:[%s4 + $0x20] sm:$0xff]
  %v905 = vld [vmem:[%s4 + $0x28] sm:$0xff]
  %v906 = vld [vmem:[%s4 + $0x30] sm:$0xff]
  %v907 = vld [vmem:[%s4 + $0x38] sm:$0xff]
  %v908 = vld [vmem:[%s4 + $0x40] sm:$0xff]
  %v909 = vld [vmem:[%s4 + $0x48] sm:$0xff]
  %v910 = vld [vmem:[%s4 + $0x50] sm:$0xff]
  %v911 = vld [vmem:[%s4 + $0x58] sm:$0xff]
  %v912 = vld [vmem:[%s4 + $0x60] sm:$0xff]
  %v913 = vld [vmem:[%s4 + $0x68] sm:$0xff]
  %v914 = vld [vmem:[%s4 + $0x70] sm:$0xff]
  %v915 = vld [vmem:[%s4 + $0x78] sm:$0xff]
  %v916 = vld [vmem:[%s4 + $0x80] sm:$0xff]
  %v917 = vld [vmem:[%s4 + $0x88] sm:$0xff]
  %v918 = vld [vmem:[%s4 + $0x90] sm:$0xff]
  %v919 = vld [vmem:[%s4 + $0x98] sm:$0xff]
  %v920 = vld [vmem:[%s4 + $0xa0] sm:$0xff]
  %v921 = vld [vmem:[%s4 + $0xa8] sm:$0xff]
  %v922 = vld [vmem:[%s4 + $0xb0] sm:$0xff]
  %v923 = vld [vmem:[%s4 + $0xb8] sm:$0xff]
  %v924 = vld [vmem:[%s4 + $0xc0] sm:$0xff]
  %v925 = vld [vmem:[%s4 + $0xc8] sm:$0xff]
  %v926 = vld [vmem:[%s4 + $0xd0] sm:$0xff]
  %v927 = vld [vmem:[%s4 + $0xd8] sm:$0xff]
  %v928 = vld [vmem:[%s4 + $0xe0] sm:$0xff]
  %v929 = vld [vmem:[%s4 + $0xe8] sm:$0xff]
  %v930 = vld [vmem:[%s4 + $0xf0] sm:$0xff]
  %v931 = vld [vmem:[%s4 + $0xf8] sm:$0xff]
  %v932 = vld [vmem:[%s4 + $0x100] sm:$0xff]
  %v933 = vld [vmem:[%s4 + $0x108] sm:$0xff]
  %v934 = vld [vmem:[%s4 + $0x110] sm:$0xff]
  %v935 = vld [vmem:[%s4 + $0x118] sm:$0xff]
  %v936 = vld [vmem:[%s4 + $0x120] sm:$0xff]
  %v937 = vld [vmem:[%s4 + $0x128] sm:$0xff]
  %v938 = vld [vmem:[%s4 + $0x130] sm:$0xff]
  %v939 = vld [vmem:[%s4 + $0x138] sm:$0xff]
  %v940 = vld [vmem:[%s4 + $0x140] sm:$0xff]
  %v941 = vld [vmem:[%s4 + $0x148] sm:$0xff]
  %v942 = vld [vmem:[%s4 + $0x150] sm:$0xff]
  %v943 = vld [vmem:[%s4 + $0x158] sm:$0xff]
  %v944 = vld [vmem:[%s4 + $0x160] sm:$0xff]
  %v945 = vld [vmem:[%s4 + $0x168] sm:$0xff]
  %v946 = vld [vmem:[%s4 + $0x170] sm:$0xff]
  %v947 = vld [vmem:[%s4 + $0x178] sm:$0xff]
  %948 = vmatpush.msra.mxu0 %v945
  %949 = vmatpush.msra.mxu0 %v942
  %950 = vmatpush.msra.mxu0 %v939
  %951 = vmatpush.msra.mxu0 %v936
  %952 = vmatpush.msra.mxu0 %v933
  %953 = vmatpush.msra.mxu0 %v930
  %954 = vmatpush.msra.mxu0 %v927
  %955 = vmatpush.msra.mxu0 %v924
  %956 = vmatpush.msra.mxu0 %v921
  %957 = vmatpush.msra.mxu0 %v918
  %958 = vmatpush.msra.mxu0 %v915
  %959 = vmatpush.msra.mxu0 %v912
  %960 = vmatpush.msra.mxu0 %v909
  %961 = vmatpush.msra.mxu0 %v906
  %962 = vmatpush.msra.mxu0 %v903
  %963 = vmatpush.msra.mxu0 %v900
  %964 = vmatmul.f32.gmra.mxu0 %v728
  %v965 = vpop.f32.mrf.mxu0
  %v966 = vadd.f32 0.0, %v965
  %967 = vdwg.mxu0
  %968 = vmatpush.msra.mxu0 %v946
  %969 = vmatpush.msra.mxu0 %v943
  %970 = vmatpush.msra.mxu0 %v940
  %971 = vmatpush.msra.mxu0 %v937
  %972 = vmatpush.msra.mxu0 %v934
  %973 = vmatpush.msra.mxu0 %v931
  %974 = vmatpush.msra.mxu0 %v928
  %975 = vmatpush.msra.mxu0 %v925
  %976 = vmatpush.msra.mxu0 %v922
  %977 = vmatpush.msra.mxu0 %v919
  %978 = vmatpush.msra.mxu0 %v916
  %979 = vmatpush.msra.mxu0 %v913
  %980 = vmatpush.msra.mxu0 %v910
  %981 = vmatpush.msra.mxu0 %v907
  %982 = vmatpush.msra.mxu0 %v904
  %983 = vmatpush.msra.mxu0 %v901
  %984 = vmatmul.f32.gmra.mxu0 %v728
  %v985 = vpop.f32.mrf.mxu0
  %v986 = vadd.f32 0.0, %v985
  %987 = vdwg.mxu0
  %988 = vmatpush.msra.mxu0 %v947
  %989 = vmatpush.msra.mxu0 %v944
  %990 = vmatpush.msra.mxu0 %v941
  %991 = vmatpush.msra.mxu0 %v938
  %992 = vmatpush.msra.mxu0 %v935
  %993 = vmatpush.msra.mxu0 %v932
  %994 = vmatpush.msra.mxu0 %v929
  %995 = vmatpush.msra.mxu0 %v926
  %996 = vmatpush.msra.mxu0 %v923
  %997 = vmatpush.msra.mxu0 %v920
  %998 = vmatpush.msra.mxu0 %v917
  %999 = vmatpush.msra.mxu0 %v914
  %1000 = vmatpush.msra.mxu0 %v911
  %1001 = vmatpush.msra.mxu0 %v908
  %1002 = vmatpush.msra.mxu0 %v905
  %1003 = vmatpush.msra.mxu0 %v902
  %1004 = vmatmul.f32.gmra.mxu0 %v728
  %v1005 = vpop.f32.mrf.mxu0
  %v1006 = vadd.f32 0.0, %v1005
  %1007 = vdwg.mxu0
  %v1008 = vadd.f32 %v897, %v966
  %v1009 = vsub.f32 0.0, %v1008
  %v1010 = vmul.f32 %v1009, 1.442695
  %v1011 = vpow.pop %v1010
  %v1012 = vadd.f32 %v1011, 1.0
  %v1013 = vrcp.pop %v1012
  %v1014 = vmul.f32 %v1012, %v1013
  %v1015 = vsub.f32 1.0, %v1014
  %v1016 = vmul.f32 %v1013, %v1015
  %v1017 = vadd.f32 %v1013, %v1016
  %vm1018 = vweird.f32 %v1012
  %vm1019 = vweird.f32 %v1013
  %vm1020 = vmor %vm1018, %vm1019
  %v1021 = vsel %vm1020, %v1013, %v1017
  %v1022 = vand.u32 2147483647, %v1012
  %vm1023 = vcmp.eq.f32.partialorder %v1022, 8.507059e+37
  %v1024 = vand.u32 %v1012, 2147483648
  %v1025 = vor.u32 1.1754944e-38, %v1024
  %v1026 = vsel %vm1023, %v1025, %v1021
  %v1027 = vmul.f32 1.0, %v1026
  %v1028 = vadd.f32 %v898, %v986
  %v1029 = vsub.f32 0.0, %v1028
  %v1030 = vmul.f32 %v1029, 1.442695
  %v1031 = vpow.pop %v1030
  %v1032 = vadd.f32 %v1031, 1.0
  %v1033 = vrcp.pop %v1032
  %v1034 = vmul.f32 %v1032, %v1033
  %v1035 = vsub.f32 1.0, %v1034
  %v1036 = vmul.f32 %v1033, %v1035
  %v1037 = vadd.f32 %v1033, %v1036
  %vm1038 = vweird.f32 %v1032
  %vm1039 = vweird.f32 %v1033
  %vm1040 = vmor %vm1038, %vm1039
  %v1041 = vsel %vm1040, %v1033, %v1037
  %v1042 = vand.u32 2147483647, %v1032
  %vm1043 = vcmp.eq.f32.partialorder %v1042, 8.507059e+37
  %v1044 = vand.u32 %v1032, 2147483648
  %v1045 = vor.u32 1.1754944e-38, %v1044
  %v1046 = vsel %vm1043, %v1045, %v1041
  %v1047 = vmul.f32 1.0, %v1046
  %v1048 = vadd.f32 %v1006, %v403
  %v1049 = vmul.f32 %v1027, %v1048
  %v1050 = vadd.f32 %v899, %v1049
  %v1051 = vtanh.pop %v1050
  %v1052 = vsub.f32 1.0, %v1047
  %v1053 = vmul.f32 %v1052, %v1051
  %v1054 = vmul.f32 %v1047, %v728
  %v1055 = vadd.f32 %v1053, %v1054
  %s1056 = scalar_lea.vmem %s7, 16
  %1057 = vst [vmem:[%s1056] sm:$0xff] %v893
  %s1058 = scalar_lea.vmem %s7, 96
  %1059 = vst [vmem:[%s1058 + $0x8] sm:$0xff] %v1055
  %s1060 = smul.u32 2, 6
  %s1061 = smul.addr %s1060, 8
  %s1062 = scalar_lea.vmem [#allocation2], %s1061
  %v1063 = vld [vmem:[%s1062] sm:$0xff]
  %v1064 = vld [vmem:[%s1062 + $0x8] sm:$0xff]
  %v1065 = vld [vmem:[%s1062 + $0x10] sm:$0xff]
  %v1066 = vld [vmem:[%s3] sm:$0xff]
  %v1067 = vld [vmem:[%s3 + $0x8] sm:$0xff]
  %v1068 = vld [vmem:[%s3 + $0x10] sm:$0xff]
  %v1069 = vld [vmem:[%s3 + $0x18] sm:$0xff]
  %v1070 = vld [vmem:[%s3 + $0x20] sm:$0xff]
  %v1071 = vld [vmem:[%s3 + $0x28] sm:$0xff]
  %v1072 = vld [vmem:[%s3 + $0x30] sm:$0xff]
  %v1073 = vld [vmem:[%s3 + $0x38] sm:$0xff]
  %v1074 = vld [vmem:[%s3 + $0x40] sm:$0xff]
  %v1075 = vld [vmem:[%s3 + $0x48] sm:$0xff]
  %v1076 = vld [vmem:[%s3 + $0x50] sm:$0xff]
  %v1077 = vld [vmem:[%s3 + $0x58] sm:$0xff]
  %v1078 = vld [vmem:[%s3 + $0x60] sm:$0xff]
  %v1079 = vld [vmem:[%s3 + $0x68] sm:$0xff]
  %v1080 = vld [vmem:[%s3 + $0x70] sm:$0xff]
  %v1081 = vld [vmem:[%s3 + $0x78] sm:$0xff]
  %v1082 = vld [vmem:[%s3 + $0x80] sm:$0xff]
  %v1083 = vld [vmem:[%s3 + $0x88] sm:$0xff]
  %v1084 = vld [vmem:[%s3 + $0x90] sm:$0xff]
  %v1085 = vld [vmem:[%s3 + $0x98] sm:$0xff]
  %v1086 = vld [vmem:[%s3 + $0xa0] sm:$0xff]
  %v1087 = vld [vmem:[%s3 + $0xa8] sm:$0xff]
  %v1088 = vld [vmem:[%s3 + $0xb0] sm:$0xff]
  %v1089 = vld [vmem:[%s3 + $0xb8] sm:$0xff]
  %v1090 = vld [vmem:[%s3 + $0xc0] sm:$0xff]
  %v1091 = vld [vmem:[%s3 + $0xc8] sm:$0xff]
  %v1092 = vld [vmem:[%s3 + $0xd0] sm:$0xff]
  %v1093 = vld [vmem:[%s3 + $0xd8] sm:$0xff]
  %v1094 = vld [vmem:[%s3 + $0xe0] sm:$0xff]
  %v1095 = vld [vmem:[%s3 + $0xe8] sm:$0xff]
  %v1096 = vld [vmem:[%s3 + $0xf0] sm:$0xff]
  %v1097 = vld [vmem:[%s3 + $0xf8] sm:$0xff]
  %v1098 = vld [vmem:[%s3 + $0x100] sm:$0xff]
  %v1099 = vld [vmem:[%s3 + $0x108] sm:$0xff]
  %v1100 = vld [vmem:[%s3 + $0x110] sm:$0xff]
  %v1101 = vld [vmem:[%s3 + $0x118] sm:$0xff]
  %v1102 = vld [vmem:[%s3 + $0x120] sm:$0xff]
  %v1103 = vld [vmem:[%s3 + $0x128] sm:$0xff]
  %v1104 = vld [vmem:[%s3 + $0x130] sm:$0xff]
  %v1105 = vld [vmem:[%s3 + $0x138] sm:$0xff]
  %v1106 = vld [vmem:[%s3 + $0x140] sm:$0xff]
  %v1107 = vld [vmem:[%s3 + $0x148] sm:$0xff]
  %v1108 = vld [vmem:[%s3 + $0x150] sm:$0xff]
  %v1109 = vld [vmem:[%s3 + $0x158] sm:$0xff]
  %v1110 = vld [vmem:[%s3 + $0x160] sm:$0xff]
  %v1111 = vld [vmem:[%s3 + $0x168] sm:$0xff]
  %v1112 = vld [vmem:[%s3 + $0x170] sm:$0xff]
  %v1113 = vld [vmem:[%s3 + $0x178] sm:$0xff]
  %1114 = vmatpush.msra.mxu0 %v1111
  %1115 = vmatpush.msra.mxu0 %v1108
  %1116 = vmatpush.msra.mxu0 %v1105
  %1117 = vmatpush.msra.mxu0 %v1102
  %1118 = vmatpush.msra.mxu0 %v1099
  %1119 = vmatpush.msra.mxu0 %v1096
  %1120 = vmatpush.msra.mxu0 %v1093
  %1121 = vmatpush.msra.mxu0 %v1090
  %1122 = vmatpush.msra.mxu0 %v1087
  %1123 = vmatpush.msra.mxu0 %v1084
  %1124 = vmatpush.msra.mxu0 %v1081
  %1125 = vmatpush.msra.mxu0 %v1078
  %1126 = vmatpush.msra.mxu0 %v1075
  %1127 = vmatpush.msra.mxu0 %v1072
  %1128 = vmatpush.msra.mxu0 %v1069
  %1129 = vmatpush.msra.mxu0 %v1066
  %1130 = vmatmul.f32.gmra.mxu0 %v893
  %v1131 = vpop.f32.mrf.mxu0
  %v1132 = vadd.f32 0.0, %v1131
  %1133 = vdwg.mxu0
  %1134 = vmatpush.msra.mxu0 %v1112
  %1135 = vmatpush.msra.mxu0 %v1109
  %1136 = vmatpush.msra.mxu0 %v1106
  %1137 = vmatpush.msra.mxu0 %v1103
  %1138 = vmatpush.msra.mxu0 %v1100
  %1139 = vmatpush.msra.mxu0 %v1097
  %1140 = vmatpush.msra.mxu0 %v1094
  %1141 = vmatpush.msra.mxu0 %v1091
  %1142 = vmatpush.msra.mxu0 %v1088
  %1143 = vmatpush.msra.mxu0 %v1085
  %1144 = vmatpush.msra.mxu0 %v1082
  %1145 = vmatpush.msra.mxu0 %v1079
  %1146 = vmatpush.msra.mxu0 %v1076
  %1147 = vmatpush.msra.mxu0 %v1073
  %1148 = vmatpush.msra.mxu0 %v1070
  %1149 = vmatpush.msra.mxu0 %v1067
  %1150 = vmatmul.f32.gmra.mxu0 %v893
  %v1151 = vpop.f32.mrf.mxu0
  %v1152 = vadd.f32 0.0, %v1151
  %1153 = vdwg.mxu0
  %1154 = vmatpush.msra.mxu0 %v1113
  %1155 = vmatpush.msra.mxu0 %v1110
  %1156 = vmatpush.msra.mxu0 %v1107
  %1157 = vmatpush.msra.mxu0 %v1104
  %1158 = vmatpush.msra.mxu0 %v1101
  %1159 = vmatpush.msra.mxu0 %v1098
  %1160 = vmatpush.msra.mxu0 %v1095
  %1161 = vmatpush.msra.mxu0 %v1092
  %1162 = vmatpush.msra.mxu0 %v1089
  %1163 = vmatpush.msra.mxu0 %v1086
  %1164 = vmatpush.msra.mxu0 %v1083
  %1165 = vmatpush.msra.mxu0 %v1080
  %1166 = vmatpush.msra.mxu0 %v1077
  %1167 = vmatpush.msra.mxu0 %v1074
  %1168 = vmatpush.msra.mxu0 %v1071
  %1169 = vmatpush.msra.mxu0 %v1068
  %1170 = vmatmul.f32.gmra.mxu0 %v893
  %v1171 = vpop.f32.mrf.mxu0
  %v1172 = vadd.f32 0.0, %v1171
  %1173 = vdwg.mxu0
  %v1174 = vadd.f32 %v1063, %v1132
  %v1175 = vsub.f32 0.0, %v1174
  %v1176 = vmul.f32 %v1175, 1.442695
  %v1177 = vpow.pop %v1176
  %v1178 = vadd.f32 %v1177, 1.0
  %v1179 = vrcp.pop %v1178
  %v1180 = vmul.f32 %v1178, %v1179
  %v1181 = vsub.f32 1.0, %v1180
  %v1182 = vmul.f32 %v1179, %v1181
  %v1183 = vadd.f32 %v1179, %v1182
  %vm1184 = vweird.f32 %v1178
  %vm1185 = vweird.f32 %v1179
  %vm1186 = vmor %vm1184, %vm1185
  %v1187 = vsel %vm1186, %v1179, %v1183
  %v1188 = vand.u32 2147483647, %v1178
  %vm1189 = vcmp.eq.f32.partialorder %v1188, 8.507059e+37
  %v1190 = vand.u32 %v1178, 2147483648
  %v1191 = vor.u32 1.1754944e-38, %v1190
  %v1192 = vsel %vm1189, %v1191, %v1187
  %v1193 = vmul.f32 1.0, %v1192
  %v1194 = vadd.f32 %v1064, %v1152
  %v1195 = vsub.f32 0.0, %v1194
  %v1196 = vmul.f32 %v1195, 1.442695
  %v1197 = vpow.pop %v1196
  %v1198 = vadd.f32 %v1197, 1.0
  %v1199 = vrcp.pop %v1198
  %v1200 = vmul.f32 %v1198, %v1199
  %v1201 = vsub.f32 1.0, %v1200
  %v1202 = vmul.f32 %v1199, %v1201
  %v1203 = vadd.f32 %v1199, %v1202
  %vm1204 = vweird.f32 %v1198
  %vm1205 = vweird.f32 %v1199
  %vm1206 = vmor %vm1204, %vm1205
  %v1207 = vsel %vm1206, %v1199, %v1203
  %v1208 = vand.u32 2147483647, %v1198
  %vm1209 = vcmp.eq.f32.partialorder %v1208, 8.507059e+37
  %v1210 = vand.u32 %v1198, 2147483648
  %v1211 = vor.u32 1.1754944e-38, %v1210
  %v1212 = vsel %vm1209, %v1211, %v1207
  %v1213 = vmul.f32 1.0, %v1212
  %v1214 = vadd.f32 %v1172, %v399
  %v1215 = vmul.f32 %v1193, %v1214
  %v1216 = vadd.f32 %v1065, %v1215
  %v1217 = vtanh.pop %v1216
  %v1218 = vsub.f32 1.0, %v1213
  %v1219 = vmul.f32 %v1218, %v1217
  %v1220 = vmul.f32 %v1213, %v893
  %v1221 = vadd.f32 %v1219, %v1220
  %s1222 = smul.u32 5, 6
  %s1223 = smul.addr %s1222, 8
  %s1224 = scalar_lea.vmem [#allocation2], %s1223
  %v1225 = vld [vmem:[%s1224 + $0x18] sm:$0xff]
  %v1226 = vld [vmem:[%s1224 + $0x20] sm:$0xff]
  %v1227 = vld [vmem:[%s1224 + $0x28] sm:$0xff]
  %v1228 = vld [vmem:[%s4] sm:$0xff]
  %v1229 = vld [vmem:[%s4 + $0x8] sm:$0xff]
  %v1230 = vld [vmem:[%s4 + $0x10] sm:$0xff]
  %v1231 = vld [vmem:[%s4 + $0x18] sm:$0xff]
  %v1232 = vld [vmem:[%s4 + $0x20] sm:$0xff]
  %v1233 = vld [vmem:[%s4 + $0x28] sm:$0xff]
  %v1234 = vld [vmem:[%s4 + $0x30] sm:$0xff]
  %v1235 = vld [vmem:[%s4 + $0x38] sm:$0xff]
  %v1236 = vld [vmem:[%s4 + $0x40] sm:$0xff]
  %v1237 = vld [vmem:[%s4 + $0x48] sm:$0xff]
  %v1238 = vld [vmem:[%s4 + $0x50] sm:$0xff]
  %v1239 = vld [vmem:[%s4 + $0x58] sm:$0xff]
  %v1240 = vld [vmem:[%s4 + $0x60] sm:$0xff]
  %v1241 = vld [vmem:[%s4 + $0x68] sm:$0xff]
  %v1242 = vld [vmem:[%s4 + $0x70] sm:$0xff]
  %v1243 = vld [vmem:[%s4 + $0x78] sm:$0xff]
  %v1244 = vld [vmem:[%s4 + $0x80] sm:$0xff]
  %v1245 = vld [vmem:[%s4 + $0x88] sm:$0xff]
  %v1246 = vld [vmem:[%s4 + $0x90] sm:$0xff]
  %v1247 = vld [vmem:[%s4 + $0x98] sm:$0xff]
  %v1248 = vld [vmem:[%s4 + $0xa0] sm:$0xff]
  %v1249 = vld [vmem:[%s4 + $0xa8] sm:$0xff]
  %v1250 = vld [vmem:[%s4 + $0xb0] sm:$0xff]
  %v1251 = vld [vmem:[%s4 + $0xb8] sm:$0xff]
  %v1252 = vld [vmem:[%s4 + $0xc0] sm:$0xff]
  %v1253 = vld [vmem:[%s4 + $0xc8] sm:$0xff]
  %v1254 = vld [vmem:[%s4 + $0xd0] sm:$0xff]
  %v1255 = vld [vmem:[%s4 + $0xd8] sm:$0xff]
  %v1256 = vld [vmem:[%s4 + $0xe0] sm:$0xff]
  %v1257 = vld [vmem:[%s4 + $0xe8] sm:$0xff]
  %v1258 = vld [vmem:[%s4 + $0xf0] sm:$0xff]
  %v1259 = vld [vmem:[%s4 + $0xf8] sm:$0xff]
  %v1260 = vld [vmem:[%s4 + $0x100] sm:$0xff]
  %v1261 = vld [vmem:[%s4 + $0x108] sm:$0xff]
  %v1262 = vld [vmem:[%s4 + $0x110] sm:$0xff]
  %v1263 = vld [vmem:[%s4 + $0x118] sm:$0xff]
  %v1264 = vld [vmem:[%s4 + $0x120] sm:$0xff]
  %v1265 = vld [vmem:[%s4 + $0x128] sm:$0xff]
  %v1266 = vld [vmem:[%s4 + $0x130] sm:$0xff]
  %v1267 = vld [vmem:[%s4 + $0x138] sm:$0xff]
  %v1268 = vld [vmem:[%s4 + $0x140] sm:$0xff]
  %v1269 = vld [vmem:[%s4 + $0x148] sm:$0xff]
  %v1270 = vld [vmem:[%s4 + $0x150] sm:$0xff]
  %v1271 = vld [vmem:[%s4 + $0x158] sm:$0xff]
  %v1272 = vld [vmem:[%s4 + $0x160] sm:$0xff]
  %v1273 = vld [vmem:[%s4 + $0x168] sm:$0xff]
  %v1274 = vld [vmem:[%s4 + $0x170] sm:$0xff]
  %v1275 = vld [vmem:[%s4 + $0x178] sm:$0xff]
  %1276 = vmatpush.msra.mxu0 %v1273
  %1277 = vmatpush.msra.mxu0 %v1270
  %1278 = vmatpush.msra.mxu0 %v1267
  %1279 = vmatpush.msra.mxu0 %v1264
  %1280 = vmatpush.msra.mxu0 %v1261
  %1281 = vmatpush.msra.mxu0 %v1258
  %1282 = vmatpush.msra.mxu0 %v1255
  %1283 = vmatpush.msra.mxu0 %v1252
  %1284 = vmatpush.msra.mxu0 %v1249
  %1285 = vmatpush.msra.mxu0 %v1246
  %1286 = vmatpush.msra.mxu0 %v1243
  %1287 = vmatpush.msra.mxu0 %v1240
  %1288 = vmatpush.msra.mxu0 %v1237
  %1289 = vmatpush.msra.mxu0 %v1234
  %1290 = vmatpush.msra.mxu0 %v1231
  %1291 = vmatpush.msra.mxu0 %v1228
  %1292 = vmatmul.f32.gmra.mxu0 %v1055
  %v1293 = vpop.f32.mrf.mxu0
  %v1294 = vadd.f32 0.0, %v1293
  %1295 = vdwg.mxu0
  %1296 = vmatpush.msra.mxu0 %v1274
  %1297 = vmatpush.msra.mxu0 %v1271
  %1298 = vmatpush.msra.mxu0 %v1268
  %1299 = vmatpush.msra.mxu0 %v1265
  %1300 = vmatpush.msra.mxu0 %v1262
  %1301 = vmatpush.msra.mxu0 %v1259
  %1302 = vmatpush.msra.mxu0 %v1256
  %1303 = vmatpush.msra.mxu0 %v1253
  %1304 = vmatpush.msra.mxu0 %v1250
  %1305 = vmatpush.msra.mxu0 %v1247
  %1306 = vmatpush.msra.mxu0 %v1244
  %1307 = vmatpush.msra.mxu0 %v1241
  %1308 = vmatpush.msra.mxu0 %v1238
  %1309 = vmatpush.msra.mxu0 %v1235
  %1310 = vmatpush.msra.mxu0 %v1232
  %1311 = vmatpush.msra.mxu0 %v1229
  %1312 = vmatmul.f32.gmra.mxu0 %v1055
  %v1313 = vpop.f32.mrf.mxu0
  %v1314 = vadd.f32 0.0, %v1313
  %1315 = vdwg.mxu0
  %1316 = vmatpush.msra.mxu0 %v1275
  %1317 = vmatpush.msra.mxu0 %v1272
  %1318 = vmatpush.msra.mxu0 %v1269
  %1319 = vmatpush.msra.mxu0 %v1266
  %1320 = vmatpush.msra.mxu0 %v1263
  %1321 = vmatpush.msra.mxu0 %v1260
  %1322 = vmatpush.msra.mxu0 %v1257
  %1323 = vmatpush.msra.mxu0 %v1254
  %1324 = vmatpush.msra.mxu0 %v1251
  %1325 = vmatpush.msra.mxu0 %v1248
  %1326 = vmatpush.msra.mxu0 %v1245
  %1327 = vmatpush.msra.mxu0 %v1242
  %1328 = vmatpush.msra.mxu0 %v1239
  %1329 = vmatpush.msra.mxu0 %v1236
  %1330 = vmatpush.msra.mxu0 %v1233
  %1331 = vmatpush.msra.mxu0 %v1230
  %1332 = vmatmul.f32.gmra.mxu0 %v1055
  %v1333 = vpop.f32.mrf.mxu0
  %v1334 = vadd.f32 0.0, %v1333
  %1335 = vdwg.mxu0
  %v1336 = vadd.f32 %v1225, %v1294
  %v1337 = vsub.f32 0.0, %v1336
  %v1338 = vmul.f32 %v1337, 1.442695
  %v1339 = vpow.pop %v1338
  %v1340 = vadd.f32 %v1339, 1.0
  %v1341 = vrcp.pop %v1340
  %v1342 = vmul.f32 %v1340, %v1341
  %v1343 = vsub.f32 1.0, %v1342
  %v1344 = vmul.f32 %v1341, %v1343
  %v1345 = vadd.f32 %v1341, %v1344
  %vm1346 = vweird.f32 %v1340
  %vm1347 = vweird.f32 %v1341
  %vm1348 = vmor %vm1346, %vm1347
  %v1349 = vsel %vm1348, %v1341, %v1345
  %v1350 = vand.u32 2147483647, %v1340
  %vm1351 = vcmp.eq.f32.partialorder %v1350, 8.507059e+37
  %v1352 = vand.u32 %v1340, 2147483648
  %v1353 = vor.u32 1.1754944e-38, %v1352
  %v1354 = vsel %vm1351, %v1353, %v1349
  %v1355 = vmul.f32 1.0, %v1354
  %v1356 = vadd.f32 %v1226, %v1314
  %v1357 = vsub.f32 0.0, %v1356
  %v1358 = vmul.f32 %v1357, 1.442695
  %v1359 = vpow.pop %v1358
  %v1360 = vadd.f32 %v1359, 1.0
  %v1361 = vrcp.pop %v1360
  %v1362 = vmul.f32 %v1360, %v1361
  %v1363 = vsub.f32 1.0, %v1362
  %v1364 = vmul.f32 %v1361, %v1363
  %v1365 = vadd.f32 %v1361, %v1364
  %vm1366 = vweird.f32 %v1360
  %vm1367 = vweird.f32 %v1361
  %vm1368 = vmor %vm1366, %vm1367
  %v1369 = vsel %vm1368, %v1361, %v1365
  %v1370 = vand.u32 2147483647, %v1360
  %vm1371 = vcmp.eq.f32.partialorder %v1370, 8.507059e+37
  %v1372 = vand.u32 %v1360, 2147483648
  %v1373 = vor.u32 1.1754944e-38, %v1372
  %v1374 = vsel %vm1371, %v1373, %v1369
  %v1375 = vmul.f32 1.0, %v1374
  %v1376 = vadd.f32 %v1334, %v403
  %v1377 = vmul.f32 %v1355, %v1376
  %v1378 = vadd.f32 %v1227, %v1377
  %v1379 = vtanh.pop %v1378
  %v1380 = vsub.f32 1.0, %v1375
  %v1381 = vmul.f32 %v1380, %v1379
  %v1382 = vmul.f32 %v1375, %v1055
  %v1383 = vadd.f32 %v1381, %v1382
  %s1384 = scalar_lea.vmem %s7, 32
  %1385 = vst [vmem:[%s1384] sm:$0xff] %v1221
  %s1386 = scalar_lea.vmem %s7, 80
  %1387 = vst [vmem:[%s1386 + $0x8] sm:$0xff] %v1383
  %s1388 = smul.u32 3, 6
  %s1389 = smul.addr %s1388, 8
  %s1390 = scalar_lea.vmem [#allocation2], %s1389
  %v1391 = vld [vmem:[%s1390] sm:$0xff]
  %v1392 = vld [vmem:[%s1390 + $0x8] sm:$0xff]
  %v1393 = vld [vmem:[%s1390 + $0x10] sm:$0xff]
  %v1394 = vld [vmem:[%s3] sm:$0xff]
  %v1395 = vld [vmem:[%s3 + $0x8] sm:$0xff]
  %v1396 = vld [vmem:[%s3 + $0x10] sm:$0xff]
  %v1397 = vld [vmem:[%s3 + $0x18] sm:$0xff]
  %v1398 = vld [vmem:[%s3 + $0x20] sm:$0xff]
  %v1399 = vld [vmem:[%s3 + $0x28] sm:$0xff]
  %v1400 = vld [vmem:[%s3 + $0x30] sm:$0xff]
  %v1401 = vld [vmem:[%s3 + $0x38] sm:$0xff]
  %v1402 = vld [vmem:[%s3 + $0x40] sm:$0xff]
  %v1403 = vld [vmem:[%s3 + $0x48] sm:$0xff]
  %v1404 = vld [vmem:[%s3 + $0x50] sm:$0xff]
  %v1405 = vld [vmem:[%s3 + $0x58] sm:$0xff]
  %v1406 = vld [vmem:[%s3 + $0x60] sm:$0xff]
  %v1407 = vld [vmem:[%s3 + $0x68] sm:$0xff]
  %v1408 = vld [vmem:[%s3 + $0x70] sm:$0xff]
  %v1409 = vld [vmem:[%s3 + $0x78] sm:$0xff]
  %v1410 = vld [vmem:[%s3 + $0x80] sm:$0xff]
  %v1411 = vld [vmem:[%s3 + $0x88] sm:$0xff]
  %v1412 = vld [vmem:[%s3 + $0x90] sm:$0xff]
  %v1413 = vld [vmem:[%s3 + $0x98] sm:$0xff]
  %v1414 = vld [vmem:[%s3 + $0xa0] sm:$0xff]
  %v1415 = vld [vmem:[%s3 + $0xa8] sm:$0xff]
  %v1416 = vld [vmem:[%s3 + $0xb0] sm:$0xff]
  %v1417 = vld [vmem:[%s3 + $0xb8] sm:$0xff]
  %v1418 = vld [vmem:[%s3 + $0xc0] sm:$0xff]
  %v1419 = vld [vmem:[%s3 + $0xc8] sm:$0xff]
  %v1420 = vld [vmem:[%s3 + $0xd0] sm:$0xff]
  %v1421 = vld [vmem:[%s3 + $0xd8] sm:$0xff]
  %v1422 = vld [vmem:[%s3 + $0xe0] sm:$0xff]
  %v1423 = vld [vmem:[%s3 + $0xe8] sm:$0xff]
  %v1424 = vld [vmem:[%s3 + $0xf0] sm:$0xff]
  %v1425 = vld [vmem:[%s3 + $0xf8] sm:$0xff]
  %v1426 = vld [vmem:[%s3 + $0x100] sm:$0xff]
  %v1427 = vld [vmem:[%s3 + $0x108] sm:$0xff]
  %v1428 = vld [vmem:[%s3 + $0x110] sm:$0xff]
  %v1429 = vld [vmem:[%s3 + $0x118] sm:$0xff]
  %v1430 = vld [vmem:[%s3 + $0x120] sm:$0xff]
  %v1431 = vld [vmem:[%s3 + $0x128] sm:$0xff]
  %v1432 = vld [vmem:[%s3 + $0x130] sm:$0xff]
  %v1433 = vld [vmem:[%s3 + $0x138] sm:$0xff]
  %v1434 = vld [vmem:[%s3 + $0x140] sm:$0xff]
  %v1435 = vld [vmem:[%s3 + $0x148] sm:$0xff]
  %v1436 = vld [vmem:[%s3 + $0x150] sm:$0xff]
  %v1437 = vld [vmem:[%s3 + $0x158] sm:$0xff]
  %v1438 = vld [vmem:[%s3 + $0x160] sm:$0xff]
  %v1439 = vld [vmem:[%s3 + $0x168] sm:$0xff]
  %v1440 = vld [vmem:[%s3 + $0x170] sm:$0xff]
  %v1441 = vld [vmem:[%s3 + $0x178] sm:$0xff]
  %1442 = vmatpush.msra.mxu0 %v1439
  %1443 = vmatpush.msra.mxu0 %v1436
  %1444 = vmatpush.msra.mxu0 %v1433
  %1445 = vmatpush.msra.mxu0 %v1430
  %1446 = vmatpush.msra.mxu0 %v1427
  %1447 = vmatpush.msra.mxu0 %v1424
  %1448 = vmatpush.msra.mxu0 %v1421
  %1449 = vmatpush.msra.mxu0 %v1418
  %1450 = vmatpush.msra.mxu0 %v1415
  %1451 = vmatpush.msra.mxu0 %v1412
  %1452 = vmatpush.msra.mxu0 %v1409
  %1453 = vmatpush.msra.mxu0 %v1406
  %1454 = vmatpush.msra.mxu0 %v1403
  %1455 = vmatpush.msra.mxu0 %v1400
  %1456 = vmatpush.msra.mxu0 %v1397
  %1457 = vmatpush.msra.mxu0 %v1394
  %1458 = vmatmul.f32.gmra.mxu0 %v1221
  %v1459 = vpop.f32.mrf.mxu0
  %v1460 = vadd.f32 0.0, %v1459
  %1461 = vdwg.mxu0
  %1462 = vmatpush.msra.mxu0 %v1440
  %1463 = vmatpush.msra.mxu0 %v1437
  %1464 = vmatpush.msra.mxu0 %v1434
  %1465 = vmatpush.msra.mxu0 %v1431
  %1466 = vmatpush.msra.mxu0 %v1428
  %1467 = vmatpush.msra.mxu0 %v1425
  %1468 = vmatpush.msra.mxu0 %v1422
  %1469 = vmatpush.msra.mxu0 %v1419
  %1470 = vmatpush.msra.mxu0 %v1416
  %1471 = vmatpush.msra.mxu0 %v1413
  %1472 = vmatpush.msra.mxu0 %v1410
  %1473 = vmatpush.msra.mxu0 %v1407
  %1474 = vmatpush.msra.mxu0 %v1404
  %1475 = vmatpush.msra.mxu0 %v1401
  %1476 = vmatpush.msra.mxu0 %v1398
  %1477 = vmatpush.msra.mxu0 %v1395
  %1478 = vmatmul.f32.gmra.mxu0 %v1221
  %v1479 = vpop.f32.mrf.mxu0
  %v1480 = vadd.f32 0.0, %v1479
  %1481 = vdwg.mxu0
  %1482 = vmatpush.msra.mxu0 %v1441
  %1483 = vmatpush.msra.mxu0 %v1438
  %1484 = vmatpush.msra.mxu0 %v1435
  %1485 = vmatpush.msra.mxu0 %v1432
  %1486 = vmatpush.msra.mxu0 %v1429
  %1487 = vmatpush.msra.mxu0 %v1426
  %1488 = vmatpush.msra.mxu0 %v1423
  %1489 = vmatpush.msra.mxu0 %v1420
  %1490 = vmatpush.msra.mxu0 %v1417
  %1491 = vmatpush.msra.mxu0 %v1414
  %1492 = vmatpush.msra.mxu0 %v1411
  %1493 = vmatpush.msra.mxu0 %v1408
  %1494 = vmatpush.msra.mxu0 %v1405
  %1495 = vmatpush.msra.mxu0 %v1402
  %1496 = vmatpush.msra.mxu0 %v1399
  %1497 = vmatpush.msra.mxu0 %v1396
  %1498 = vmatmul.f32.gmra.mxu0 %v1221
  %v1499 = vpop.f32.mrf.mxu0
  %v1500 = vadd.f32 0.0, %v1499
  %1501 = vdwg.mxu0
  %v1502 = vadd.f32 %v1391, %v1460
  %v1503 = vsub.f32 0.0, %v1502
  %v1504 = vmul.f32 %v1503, 1.442695
  %v1505 = vpow.pop %v1504
  %v1506 = vadd.f32 %v1505, 1.0
  %v1507 = vrcp.pop %v1506
  %v1508 = vmul.f32 %v1506, %v1507
  %v1509 = vsub.f32 1.0, %v1508
  %v1510 = vmul.f32 %v1507, %v1509
  %v1511 = vadd.f32 %v1507, %v1510
  %vm1512 = vweird.f32 %v1506
  %vm1513 = vweird.f32 %v1507
  %vm1514 = vmor %vm1512, %vm1513
  %v1515 = vsel %vm1514, %v1507, %v1511
  %v1516 = vand.u32 2147483647, %v1506
  %vm1517 = vcmp.eq.f32.partialorder %v1516, 8.507059e+37
  %v1518 = vand.u32 %v1506, 2147483648
  %v1519 = vor.u32 1.1754944e-38, %v1518
  %v1520 = vsel %vm1517, %v1519, %v1515
  %v1521 = vmul.f32 1.0, %v1520
  %v1522 = vadd.f32 %v1392, %v1480
  %v1523 = vsub.f32 0.0, %v1522
  %v1524 = vmul.f32 %v1523, 1.442695
  %v1525 = vpow.pop %v1524
  %v1526 = vadd.f32 %v1525, 1.0
  %v1527 = vrcp.pop %v1526
  %v1528 = vmul.f32 %v1526, %v1527
  %v1529 = vsub.f32 1.0, %v1528
  %v1530 = vmul.f32 %v1527, %v1529
  %v1531 = vadd.f32 %v1527, %v1530
  %vm1532 = vweird.f32 %v1526
  %vm1533 = vweird.f32 %v1527
  %vm1534 = vmor %vm1532, %vm1533
  %v1535 = vsel %vm1534, %v1527, %v1531
  %v1536 = vand.u32 2147483647, %v1526
  %vm1537 = vcmp.eq.f32.partialorder %v1536, 8.507059e+37
  %v1538 = vand.u32 %v1526, 2147483648
  %v1539 = vor.u32 1.1754944e-38, %v1538
  %v1540 = vsel %vm1537, %v1539, %v1535
  %v1541 = vmul.f32 1.0, %v1540
  %v1542 = vadd.f32 %v1500, %v399
  %v1543 = vmul.f32 %v1521, %v1542
  %v1544 = vadd.f32 %v1393, %v1543
  %v1545 = vtanh.pop %v1544
  %v1546 = vsub.f32 1.0, %v1541
  %v1547 = vmul.f32 %v1546, %v1545
  %v1548 = vmul.f32 %v1541, %v1221
  %v1549 = vadd.f32 %v1547, %v1548
  %s1550 = smul.u32 4, 6
  %s1551 = smul.addr %s1550, 8
  %s1552 = scalar_lea.vmem [#allocation2], %s1551
  %v1553 = vld [vmem:[%s1552 + $0x18] sm:$0xff]
  %v1554 = vld [vmem:[%s1552 + $0x20] sm:$0xff]
  %v1555 = vld [vmem:[%s1552 + $0x28] sm:$0xff]
  %v1556 = vld [vmem:[%s4] sm:$0xff]
  %v1557 = vld [vmem:[%s4 + $0x8] sm:$0xff]
  %v1558 = vld [vmem:[%s4 + $0x10] sm:$0xff]
  %v1559 = vld [vmem:[%s4 + $0x18] sm:$0xff]
  %v1560 = vld [vmem:[%s4 + $0x20] sm:$0xff]
  %v1561 = vld [vmem:[%s4 + $0x28] sm:$0xff]
  %v1562 = vld [vmem:[%s4 + $0x30] sm:$0xff]
  %v1563 = vld [vmem:[%s4 + $0x38] sm:$0xff]
  %v1564 = vld [vmem:[%s4 + $0x40] sm:$0xff]
  %v1565 = vld [vmem:[%s4 + $0x48] sm:$0xff]
  %v1566 = vld [vmem:[%s4 + $0x50] sm:$0xff]
  %v1567 = vld [vmem:[%s4 + $0x58] sm:$0xff]
  %v1568 = vld [vmem:[%s4 + $0x60] sm:$0xff]
  %v1569 = vld [vmem:[%s4 + $0x68] sm:$0xff]
  %v1570 = vld [vmem:[%s4 + $0x70] sm:$0xff]
  %v1571 = vld [vmem:[%s4 + $0x78] sm:$0xff]
  %v1572 = vld [vmem:[%s4 + $0x80] sm:$0xff]
  %v1573 = vld [vmem:[%s4 + $0x88] sm:$0xff]
  %v1574 = vld [vmem:[%s4 + $0x90] sm:$0xff]
  %v1575 = vld [vmem:[%s4 + $0x98] sm:$0xff]
  %v1576 = vld [vmem:[%s4 + $0xa0] sm:$0xff]
  %v1577 = vld [vmem:[%s4 + $0xa8] sm:$0xff]
  %v1578 = vld [vmem:[%s4 + $0xb0] sm:$0xff]
  %v1579 = vld [vmem:[%s4 + $0xb8] sm:$0xff]
  %v1580 = vld [vmem:[%s4 + $0xc0] sm:$0xff]
  %v1581 = vld [vmem:[%s4 + $0xc8] sm:$0xff]
  %v1582 = vld [vmem:[%s4 + $0xd0] sm:$0xff]
  %v1583 = vld [vmem:[%s4 + $0xd8] sm:$0xff]
  %v1584 = vld [vmem:[%s4 + $0xe0] sm:$0xff]
  %v1585 = vld [vmem:[%s4 + $0xe8] sm:$0xff]
  %v1586 = vld [vmem:[%s4 + $0xf0] sm:$0xff]
  %v1587 = vld [vmem:[%s4 + $0xf8] sm:$0xff]
  %v1588 = vld [vmem:[%s4 + $0x100] sm:$0xff]
  %v1589 = vld [vmem:[%s4 + $0x108] sm:$0xff]
  %v1590 = vld [vmem:[%s4 + $0x110] sm:$0xff]
  %v1591 = vld [vmem:[%s4 + $0x118] sm:$0xff]
  %v1592 = vld [vmem:[%s4 + $0x120] sm:$0xff]
  %v1593 = vld [vmem:[%s4 + $0x128] sm:$0xff]
  %v1594 = vld [vmem:[%s4 + $0x130] sm:$0xff]
  %v1595 = vld [vmem:[%s4 + $0x138] sm:$0xff]
  %v1596 = vld [vmem:[%s4 + $0x140] sm:$0xff]
  %v1597 = vld [vmem:[%s4 + $0x148] sm:$0xff]
  %v1598 = vld [vmem:[%s4 + $0x150] sm:$0xff]
  %v1599 = vld [vmem:[%s4 + $0x158] sm:$0xff]
  %v1600 = vld [vmem:[%s4 + $0x160] sm:$0xff]
  %v1601 = vld [vmem:[%s4 + $0x168] sm:$0xff]
  %v1602 = vld [vmem:[%s4 + $0x170] sm:$0xff]
  %v1603 = vld [vmem:[%s4 + $0x178] sm:$0xff]
  %1604 = vmatpush.msra.mxu0 %v1601
  %1605 = vmatpush.msra.mxu0 %v1598
  %1606 = vmatpush.msra.mxu0 %v1595
  %1607 = vmatpush.msra.mxu0 %v1592
  %1608 = vmatpush.msra.mxu0 %v1589
  %1609 = vmatpush.msra.mxu0 %v1586
  %1610 = vmatpush.msra.mxu0 %v1583
  %1611 = vmatpush.msra.mxu0 %v1580
  %1612 = vmatpush.msra.mxu0 %v1577
  %1613 = vmatpush.msra.mxu0 %v1574
  %1614 = vmatpush.msra.mxu0 %v1571
  %1615 = vmatpush.msra.mxu0 %v1568
  %1616 = vmatpush.msra.mxu0 %v1565
  %1617 = vmatpush.msra.mxu0 %v1562
  %1618 = vmatpush.msra.mxu0 %v1559
  %1619 = vmatpush.msra.mxu0 %v1556
  %1620 = vmatmul.f32.gmra.mxu0 %v1383
  %v1621 = vpop.f32.mrf.mxu0
  %v1622 = vadd.f32 0.0, %v1621
  %1623 = vdwg.mxu0
  %1624 = vmatpush.msra.mxu0 %v1602
  %1625 = vmatpush.msra.mxu0 %v1599
  %1626 = vmatpush.msra.mxu0 %v1596
  %1627 = vmatpush.msra.mxu0 %v1593
  %1628 = vmatpush.msra.mxu0 %v1590
  %1629 = vmatpush.msra.mxu0 %v1587
  %1630 = vmatpush.msra.mxu0 %v1584
  %1631 = vmatpush.msra.mxu0 %v1581
  %1632 = vmatpush.msra.mxu0 %v1578
  %1633 = vmatpush.msra.mxu0 %v1575
  %1634 = vmatpush.msra.mxu0 %v1572
  %1635 = vmatpush.msra.mxu0 %v1569
  %1636 = vmatpush.msra.mxu0 %v1566
  %1637 = vmatpush.msra.mxu0 %v1563
  %1638 = vmatpush.msra.mxu0 %v1560
  %1639 = vmatpush.msra.mxu0 %v1557
  %1640 = vmatmul.f32.gmra.mxu0 %v1383
  %v1641 = vpop.f32.mrf.mxu0
  %v1642 = vadd.f32 0.0, %v1641
  %1643 = vdwg.mxu0
  %1644 = vmatpush.msra.mxu0 %v1603
  %1645 = vmatpush.msra.mxu0 %v1600
  %1646 = vmatpush.msra.mxu0 %v1597
  %1647 = vmatpush.msra.mxu0 %v1594
  %1648 = vmatpush.msra.mxu0 %v1591
  %1649 = vmatpush.msra.mxu0 %v1588
  %1650 = vmatpush.msra.mxu0 %v1585
  %1651 = vmatpush.msra.mxu0 %v1582
  %1652 = vmatpush.msra.mxu0 %v1579
  %1653 = vmatpush.msra.mxu0 %v1576
  %1654 = vmatpush.msra.mxu0 %v1573
  %1655 = vmatpush.msra.mxu0 %v1570
  %1656 = vmatpush.msra.mxu0 %v1567
  %1657 = vmatpush.msra.mxu0 %v1564
  %1658 = vmatpush.msra.mxu0 %v1561
  %1659 = vmatpush.msra.mxu0 %v1558
  %1660 = vmatmul.f32.gmra.mxu0 %v1383
  %v1661 = vpop.f32.mrf.mxu0
  %v1662 = vadd.f32 0.0, %v1661
  %1663 = vdwg.mxu0
  %v1664 = vadd.f32 %v1553, %v1622
  %v1665 = vsub.f32 0.0, %v1664
  %v1666 = vmul.f32 %v1665, 1.442695
  %v1667 = vpow.pop %v1666
  %v1668 = vadd.f32 %v1667, 1.0
  %v1669 = vrcp.pop %v1668
  %v1670 = vmul.f32 %v1668, %v1669
  %v1671 = vsub.f32 1.0, %v1670
  %v1672 = vmul.f32 %v1669, %v1671
  %v1673 = vadd.f32 %v1669, %v1672
  %vm1674 = vweird.f32 %v1668
  %vm1675 = vweird.f32 %v1669
  %vm1676 = vmor %vm1674, %vm1675
  %v1677 = vsel %vm1676, %v1669, %v1673
  %v1678 = vand.u32 2147483647, %v1668
  %vm1679 = vcmp.eq.f32.partialorder %v1678, 8.507059e+37
  %v1680 = vand.u32 %v1668, 2147483648
  %v1681 = vor.u32 1.1754944e-38, %v1680
  %v1682 = vsel %vm1679, %v1681, %v1677
  %v1683 = vmul.f32 1.0, %v1682
  %v1684 = vadd.f32 %v1554, %v1642
  %v1685 = vsub.f32 0.0, %v1684
  %v1686 = vmul.f32 %v1685, 1.442695
  %v1687 = vpow.pop %v1686
  %v1688 = vadd.f32 %v1687, 1.0
  %v1689 = vrcp.pop %v1688
  %v1690 = vmul.f32 %v1688, %v1689
  %v1691 = vsub.f32 1.0, %v1690
  %v1692 = vmul.f32 %v1689, %v1691
  %v1693 = vadd.f32 %v1689, %v1692
  %vm1694 = vweird.f32 %v1688
  %vm1695 = vweird.f32 %v1689
  %vm1696 = vmor %vm1694, %vm1695
  %v1697 = vsel %vm1696, %v1689, %v1693
  %v1698 = vand.u32 2147483647, %v1688
  %vm1699 = vcmp.eq.f32.partialorder %v1698, 8.507059e+37
  %v1700 = vand.u32 %v1688, 2147483648
  %v1701 = vor.u32 1.1754944e-38, %v1700
  %v1702 = vsel %vm1699, %v1701, %v1697
  %v1703 = vmul.f32 1.0, %v1702
  %v1704 = vadd.f32 %v1662, %v403
  %v1705 = vmul.f32 %v1683, %v1704
  %v1706 = vadd.f32 %v1555, %v1705
  %v1707 = vtanh.pop %v1706
  %v1708 = vsub.f32 1.0, %v1703
  %v1709 = vmul.f32 %v1708, %v1707
  %v1710 = vmul.f32 %v1703, %v1383
  %v1711 = vadd.f32 %v1709, %v1710
  %s1712 = scalar_lea.vmem %s7, 48
  %1713 = vst [vmem:[%s1712] sm:$0xff] %v1549
  %s1714 = scalar_lea.vmem %s7, 64
  %1715 = vst [vmem:[%s1714 + $0x8] sm:$0xff] %v1711
  %v1716 = vld [vmem:[%s1552] sm:$0xff]
  %v1717 = vld [vmem:[%s1552 + $0x8] sm:$0xff]
  %v1718 = vld [vmem:[%s1552 + $0x10] sm:$0xff]
  %v1719 = vld [vmem:[%s3] sm:$0xff]
  %v1720 = vld [vmem:[%s3 + $0x8] sm:$0xff]
  %v1721 = vld [vmem:[%s3 + $0x10] sm:$0xff]
  %v1722 = vld [vmem:[%s3 + $0x18] sm:$0xff]
  %v1723 = vld [vmem:[%s3 + $0x20] sm:$0xff]
  %v1724 = vld [vmem:[%s3 + $0x28] sm:$0xff]
  %v1725 = vld [vmem:[%s3 + $0x30] sm:$0xff]
  %v1726 = vld [vmem:[%s3 + $0x38] sm:$0xff]
  %v1727 = vld [vmem:[%s3 + $0x40] sm:$0xff]
  %v1728 = vld [vmem:[%s3 + $0x48] sm:$0xff]
  %v1729 = vld [vmem:[%s3 + $0x50] sm:$0xff]
  %v1730 = vld [vmem:[%s3 + $0x58] sm:$0xff]
  %v1731 = vld [vmem:[%s3 + $0x60] sm:$0xff]
  %v1732 = vld [vmem:[%s3 + $0x68] sm:$0xff]
  %v1733 = vld [vmem:[%s3 + $0x70] sm:$0xff]
  %v1734 = vld [vmem:[%s3 + $0x78] sm:$0xff]
  %v1735 = vld [vmem:[%s3 + $0x80] sm:$0xff]
  %v1736 = vld [vmem:[%s3 + $0x88] sm:$0xff]
  %v1737 = vld [vmem:[%s3 + $0x90] sm:$0xff]
  %v1738 = vld [vmem:[%s3 + $0x98] sm:$0xff]
  %v1739 = vld [vmem:[%s3 + $0xa0] sm:$0xff]
  %v1740 = vld [vmem:[%s3 + $0xa8] sm:$0xff]
  %v1741 = vld [vmem:[%s3 + $0xb0] sm:$0xff]
  %v1742 = vld [vmem:[%s3 + $0xb8] sm:$0xff]
  %v1743 = vld [vmem:[%s3 + $0xc0] sm:$0xff]
  %v1744 = vld [vmem:[%s3 + $0xc8] sm:$0xff]
  %v1745 = vld [vmem:[%s3 + $0xd0] sm:$0xff]
  %v1746 = vld [vmem:[%s3 + $0xd8] sm:$0xff]
  %v1747 = vld [vmem:[%s3 + $0xe0] sm:$0xff]
  %v1748 = vld [vmem:[%s3 + $0xe8] sm:$0xff]
  %v1749 = vld [vmem:[%s3 + $0xf0] sm:$0xff]
  %v1750 = vld [vmem:[%s3 + $0xf8] sm:$0xff]
  %v1751 = vld [vmem:[%s3 + $0x100] sm:$0xff]
  %v1752 = vld [vmem:[%s3 + $0x108] sm:$0xff]
  %v1753 = vld [vmem:[%s3 + $0x110] sm:$0xff]
  %v1754 = vld [vmem:[%s3 + $0x118] sm:$0xff]
  %v1755 = vld [vmem:[%s3 + $0x120] sm:$0xff]
  %v1756 = vld [vmem:[%s3 + $0x128] sm:$0xff]
  %v1757 = vld [vmem:[%s3 + $0x130] sm:$0xff]
  %v1758 = vld [vmem:[%s3 + $0x138] sm:$0xff]
  %v1759 = vld [vmem:[%s3 + $0x140] sm:$0xff]
  %v1760 = vld [vmem:[%s3 + $0x148] sm:$0xff]
  %v1761 = vld [vmem:[%s3 + $0x150] sm:$0xff]
  %v1762 = vld [vmem:[%s3 + $0x158] sm:$0xff]
  %v1763 = vld [vmem:[%s3 + $0x160] sm:$0xff]
  %v1764 = vld [vmem:[%s3 + $0x168] sm:$0xff]
  %v1765 = vld [vmem:[%s3 + $0x170] sm:$0xff]
  %v1766 = vld [vmem:[%s3 + $0x178] sm:$0xff]
  %1767 = vmatpush.msra.mxu0 %v1764
  %1768 = vmatpush.msra.mxu0 %v1761
  %1769 = vmatpush.msra.mxu0 %v1758
  %1770 = vmatpush.msra.mxu0 %v1755
  %1771 = vmatpush.msra.mxu0 %v1752
  %1772 = vmatpush.msra.mxu0 %v1749
  %1773 = vmatpush.msra.mxu0 %v1746
  %1774 = vmatpush.msra.mxu0 %v1743
  %1775 = vmatpush.msra.mxu0 %v1740
  %1776 = vmatpush.msra.mxu0 %v1737
  %1777 = vmatpush.msra.mxu0 %v1734
  %1778 = vmatpush.msra.mxu0 %v1731
  %1779 = vmatpush.msra.mxu0 %v1728
  %1780 = vmatpush.msra.mxu0 %v1725
  %1781 = vmatpush.msra.mxu0 %v1722
  %1782 = vmatpush.msra.mxu0 %v1719
  %1783 = vmatmul.f32.gmra.mxu0 %v1549
  %v1784 = vpop.f32.mrf.mxu0
  %v1785 = vadd.f32 0.0, %v1784
  %1786 = vdwg.mxu0
  %1787 = vmatpush.msra.mxu0 %v1765
  %1788 = vmatpush.msra.mxu0 %v1762
  %1789 = vmatpush.msra.mxu0 %v1759
  %1790 = vmatpush.msra.mxu0 %v1756
  %1791 = vmatpush.msra.mxu0 %v1753
  %1792 = vmatpush.msra.mxu0 %v1750
  %1793 = vmatpush.msra.mxu0 %v1747
  %1794 = vmatpush.msra.mxu0 %v1744
  %1795 = vmatpush.msra.mxu0 %v1741
  %1796 = vmatpush.msra.mxu0 %v1738
  %1797 = vmatpush.msra.mxu0 %v1735
  %1798 = vmatpush.msra.mxu0 %v1732
  %1799 = vmatpush.msra.mxu0 %v1729
  %1800 = vmatpush.msra.mxu0 %v1726
  %1801 = vmatpush.msra.mxu0 %v1723
  %1802 = vmatpush.msra.mxu0 %v1720
  %1803 = vmatmul.f32.gmra.mxu0 %v1549
  %v1804 = vpop.f32.mrf.mxu0
  %v1805 = vadd.f32 0.0, %v1804
  %1806 = vdwg.mxu0
  %1807 = vmatpush.msra.mxu0 %v1766
  %1808 = vmatpush.msra.mxu0 %v1763
  %1809 = vmatpush.msra.mxu0 %v1760
  %1810 = vmatpush.msra.mxu0 %v1757
  %1811 = vmatpush.msra.mxu0 %v1754
  %1812 = vmatpush.msra.mxu0 %v1751
  %1813 = vmatpush.msra.mxu0 %v1748
  %1814 = vmatpush.msra.mxu0 %v1745
  %1815 = vmatpush.msra.mxu0 %v1742
  %1816 = vmatpush.msra.mxu0 %v1739
  %1817 = vmatpush.msra.mxu0 %v1736
  %1818 = vmatpush.msra.mxu0 %v1733
  %1819 = vmatpush.msra.mxu0 %v1730
  %1820 = vmatpush.msra.mxu0 %v1727
  %1821 = vmatpush.msra.mxu0 %v1724
  %1822 = vmatpush.msra.mxu0 %v1721
  %1823 = vmatmul.f32.gmra.mxu0 %v1549
  %v1824 = vpop.f32.mrf.mxu0
  %v1825 = vadd.f32 0.0, %v1824
  %1826 = vdwg.mxu0
  %v1827 = vadd.f32 %v1716, %v1785
  %v1828 = vsub.f32 0.0, %v1827
  %v1829 = vmul.f32 %v1828, 1.442695
  %v1830 = vpow.pop %v1829
  %v1831 = vadd.f32 %v1830, 1.0
  %v1832 = vrcp.pop %v1831
  %v1833 = vmul.f32 %v1831, %v1832
  %v1834 = vsub.f32 1.0, %v1833
  %v1835 = vmul.f32 %v1832, %v1834
  %v1836 = vadd.f32 %v1832, %v1835
  %vm1837 = vweird.f32 %v1831
  %vm1838 = vweird.f32 %v1832
  %vm1839 = vmor %vm1837, %vm1838
  %v1840 = vsel %vm1839, %v1832, %v1836
  %v1841 = vand.u32 2147483647, %v1831
  %vm1842 = vcmp.eq.f32.partialorder %v1841, 8.507059e+37
  %v1843 = vand.u32 %v1831, 2147483648
  %v1844 = vor.u32 1.1754944e-38, %v1843
  %v1845 = vsel %vm1842, %v1844, %v1840
  %v1846 = vmul.f32 1.0, %v1845
  %v1847 = vadd.f32 %v1717, %v1805
  %v1848 = vsub.f32 0.0, %v1847
  %v1849 = vmul.f32 %v1848, 1.442695
  %v1850 = vpow.pop %v1849
  %v1851 = vadd.f32 %v1850, 1.0
  %v1852 = vrcp.pop %v1851
  %v1853 = vmul.f32 %v1851, %v1852
  %v1854 = vsub.f32 1.0, %v1853
  %v1855 = vmul.f32 %v1852, %v1854
  %v1856 = vadd.f32 %v1852, %v1855
  %vm1857 = vweird.f32 %v1851
  %vm1858 = vweird.f32 %v1852
  %vm1859 = vmor %vm1857, %vm1858
  %v1860 = vsel %vm1859, %v1852, %v1856
  %v1861 = vand.u32 2147483647, %v1851
  %vm1862 = vcmp.eq.f32.partialorder %v1861, 8.507059e+37
  %v1863 = vand.u32 %v1851, 2147483648
  %v1864 = vor.u32 1.1754944e-38, %v1863
  %v1865 = vsel %vm1862, %v1864, %v1860
  %v1866 = vmul.f32 1.0, %v1865
  %v1867 = vadd.f32 %v1825, %v399
  %v1868 = vmul.f32 %v1846, %v1867
  %v1869 = vadd.f32 %v1718, %v1868
  %v1870 = vtanh.pop %v1869
  %v1871 = vsub.f32 1.0, %v1866
  %v1872 = vmul.f32 %v1871, %v1870
  %v1873 = vmul.f32 %v1866, %v1549
  %v1874 = vadd.f32 %v1872, %v1873
  %v1875 = vld [vmem:[%s1390 + $0x18] sm:$0xff]
  %v1876 = vld [vmem:[%s1390 + $0x20] sm:$0xff]
  %v1877 = vld [vmem:[%s1390 + $0x28] sm:$0xff]
  %v1878 = vld [vmem:[%s4] sm:$0xff]
  %v1879 = vld [vmem:[%s4 + $0x8] sm:$0xff]
  %v1880 = vld [vmem:[%s4 + $0x10] sm:$0xff]
  %v1881 = vld [vmem:[%s4 + $0x18] sm:$0xff]
  %v1882 = vld [vmem:[%s4 + $0x20] sm:$0xff]
  %v1883 = vld [vmem:[%s4 + $0x28] sm:$0xff]
  %v1884 = vld [vmem:[%s4 + $0x30] sm:$0xff]
  %v1885 = vld [vmem:[%s4 + $0x38] sm:$0xff]
  %v1886 = vld [vmem:[%s4 + $0x40] sm:$0xff]
  %v1887 = vld [vmem:[%s4 + $0x48] sm:$0xff]
  %v1888 = vld [vmem:[%s4 + $0x50] sm:$0xff]
  %v1889 = vld [vmem:[%s4 + $0x58] sm:$0xff]
  %v1890 = vld [vmem:[%s4 + $0x60] sm:$0xff]
  %v1891 = vld [vmem:[%s4 + $0x68] sm:$0xff]
  %v1892 = vld [vmem:[%s4 + $0x70] sm:$0xff]
  %v1893 = vld [vmem:[%s4 + $0x78] sm:$0xff]
  %v1894 = vld [vmem:[%s4 + $0x80] sm:$0xff]
  %v1895 = vld [vmem:[%s4 + $0x88] sm:$0xff]
  %v1896 = vld [vmem:[%s4 + $0x90] sm:$0xff]
  %v1897 = vld [vmem:[%s4 + $0x98] sm:$0xff]
  %v1898 = vld [vmem:[%s4 + $0xa0] sm:$0xff]
  %v1899 = vld [vmem:[%s4 + $0xa8] sm:$0xff]
  %v1900 = vld [vmem:[%s4 + $0xb0] sm:$0xff]
  %v1901 = vld [vmem:[%s4 + $0xb8] sm:$0xff]
  %v1902 = vld [vmem:[%s4 + $0xc0] sm:$0xff]
  %v1903 = vld [vmem:[%s4 + $0xc8] sm:$0xff]
  %v1904 = vld [vmem:[%s4 + $0xd0] sm:$0xff]
  %v1905 = vld [vmem:[%s4 + $0xd8] sm:$0xff]
  %v1906 = vld [vmem:[%s4 + $0xe0] sm:$0xff]
  %v1907 = vld [vmem:[%s4 + $0xe8] sm:$0xff]
  %v1908 = vld [vmem:[%s4 + $0xf0] sm:$0xff]
  %v1909 = vld [vmem:[%s4 + $0xf8] sm:$0xff]
  %v1910 = vld [vmem:[%s4 + $0x100] sm:$0xff]
  %v1911 = vld [vmem:[%s4 + $0x108] sm:$0xff]
  %v1912 = vld [vmem:[%s4 + $0x110] sm:$0xff]
  %v1913 = vld [vmem:[%s4 + $0x118] sm:$0xff]
  %v1914 = vld [vmem:[%s4 + $0x120] sm:$0xff]
  %v1915 = vld [vmem:[%s4 + $0x128] sm:$0xff]
  %v1916 = vld [vmem:[%s4 + $0x130] sm:$0xff]
  %v1917 = vld [vmem:[%s4 + $0x138] sm:$0xff]
  %v1918 = vld [vmem:[%s4 + $0x140] sm:$0xff]
  %v1919 = vld [vmem:[%s4 + $0x148] sm:$0xff]
  %v1920 = vld [vmem:[%s4 + $0x150] sm:$0xff]
  %v1921 = vld [vmem:[%s4 + $0x158] sm:$0xff]
  %v1922 = vld [vmem:[%s4 + $0x160] sm:$0xff]
  %v1923 = vld [vmem:[%s4 + $0x168] sm:$0xff]
  %v1924 = vld [vmem:[%s4 + $0x170] sm:$0xff]
  %v1925 = vld [vmem:[%s4 + $0x178] sm:$0xff]
  %1926 = vmatpush.msra.mxu0 %v1923
  %1927 = vmatpush.msra.mxu0 %v1920
  %1928 = vmatpush.msra.mxu0 %v1917
  %1929 = vmatpush.msra.mxu0 %v1914
  %1930 = vmatpush.msra.mxu0 %v1911
  %1931 = vmatpush.msra.mxu0 %v1908
  %1932 = vmatpush.msra.mxu0 %v1905
  %1933 = vmatpush.msra.mxu0 %v1902
  %1934 = vmatpush.msra.mxu0 %v1899
  %1935 = vmatpush.msra.mxu0 %v1896
  %1936 = vmatpush.msra.mxu0 %v1893
  %1937 = vmatpush.msra.mxu0 %v1890
  %1938 = vmatpush.msra.mxu0 %v1887
  %1939 = vmatpush.msra.mxu0 %v1884
  %1940 = vmatpush.msra.mxu0 %v1881
  %1941 = vmatpush.msra.mxu0 %v1878
  %1942 = vmatmul.f32.gmra.mxu0 %v1711
  %v1943 = vpop.f32.mrf.mxu0
  %v1944 = vadd.f32 0.0, %v1943
  %1945 = vdwg.mxu0
  %1946 = vmatpush.msra.mxu0 %v1924
  %1947 = vmatpush.msra.mxu0 %v1921
  %1948 = vmatpush.msra.mxu0 %v1918
  %1949 = vmatpush.msra.mxu0 %v1915
  %1950 = vmatpush.msra.mxu0 %v1912
  %1951 = vmatpush.msra.mxu0 %v1909
  %1952 = vmatpush.msra.mxu0 %v1906
  %1953 = vmatpush.msra.mxu0 %v1903
  %1954 = vmatpush.msra.mxu0 %v1900
  %1955 = vmatpush.msra.mxu0 %v1897
  %1956 = vmatpush.msra.mxu0 %v1894
  %1957 = vmatpush.msra.mxu0 %v1891
  %1958 = vmatpush.msra.mxu0 %v1888
  %1959 = vmatpush.msra.mxu0 %v1885
  %1960 = vmatpush.msra.mxu0 %v1882
  %1961 = vmatpush.msra.mxu0 %v1879
  %1962 = vmatmul.f32.gmra.mxu0 %v1711
  %v1963 = vpop.f32.mrf.mxu0
  %v1964 = vadd.f32 0.0, %v1963
  %1965 = vdwg.mxu0
  %1966 = vmatpush.msra.mxu0 %v1925
  %1967 = vmatpush.msra.mxu0 %v1922
  %1968 = vmatpush.msra.mxu0 %v1919
  %1969 = vmatpush.msra.mxu0 %v1916
  %1970 = vmatpush.msra.mxu0 %v1913
  %1971 = vmatpush.msra.mxu0 %v1910
  %1972 = vmatpush.msra.mxu0 %v1907
  %1973 = vmatpush.msra.mxu0 %v1904
  %1974 = vmatpush.msra.mxu0 %v1901
  %1975 = vmatpush.msra.mxu0 %v1898
  %1976 = vmatpush.msra.mxu0 %v1895
  %1977 = vmatpush.msra.mxu0 %v1892
  %1978 = vmatpush.msra.mxu0 %v1889
  %1979 = vmatpush.msra.mxu0 %v1886
  %1980 = vmatpush.msra.mxu0 %v1883
  %1981 = vmatpush.msra.mxu0 %v1880
  %1982 = vmatmul.f32.gmra.mxu0 %v1711
  %v1983 = vpop.f32.mrf.mxu0
  %v1984 = vadd.f32 0.0, %v1983
  %1985 = vdwg.mxu0
  %v1986 = vadd.f32 %v1875, %v1944
  %v1987 = vsub.f32 0.0, %v1986
  %v1988 = vmul.f32 %v1987, 1.442695
  %v1989 = vpow.pop %v1988
  %v1990 = vadd.f32 %v1989, 1.0
  %v1991 = vrcp.pop %v1990
  %v1992 = vmul.f32 %v1990, %v1991
  %v1993 = vsub.f32 1.0, %v1992
  %v1994 = vmul.f32 %v1991, %v1993
  %v1995 = vadd.f32 %v1991, %v1994
  %vm1996 = vweird.f32 %v1990
  %vm1997 = vweird.f32 %v1991
  %vm1998 = vmor %vm1996, %vm1997
  %v1999 = vsel %vm1998, %v1991, %v1995
  %v2000 = vand.u32 2147483647, %v1990
  %vm2001 = vcmp.eq.f32.partialorder %v2000, 8.507059e+37
  %v2002 = vand.u32 %v1990, 2147483648
  %v2003 = vor.u32 1.1754944e-38, %v2002
  %v2004 = vsel %vm2001, %v2003, %v1999
  %v2005 = vmul.f32 1.0, %v2004
  %v2006 = vadd.f32 %v1876, %v1964
  %v2007 = vsub.f32 0.0, %v2006
  %v2008 = vmul.f32 %v2007, 1.442695
  %v2009 = vpow.pop %v2008
  %v2010 = vadd.f32 %v2009, 1.0
  %v2011 = vrcp.pop %v2010
  %v2012 = vmul.f32 %v2010, %v2011
  %v2013 = vsub.f32 1.0, %v2012
  %v2014 = vmul.f32 %v2011, %v2013
  %v2015 = vadd.f32 %v2011, %v2014
  %vm2016 = vweird.f32 %v2010
  %vm2017 = vweird.f32 %v2011
  %vm2018 = vmor %vm2016, %vm2017
  %v2019 = vsel %vm2018, %v2011, %v2015
  %v2020 = vand.u32 2147483647, %v2010
  %vm2021 = vcmp.eq.f32.partialorder %v2020, 8.507059e+37
  %v2022 = vand.u32 %v2010, 2147483648
  %v2023 = vor.u32 1.1754944e-38, %v2022
  %v2024 = vsel %vm2021, %v2023, %v2019
  %v2025 = vmul.f32 1.0, %v2024
  %v2026 = vadd.f32 %v1984, %v403
  %v2027 = vmul.f32 %v2005, %v2026
  %v2028 = vadd.f32 %v1877, %v2027
  %v2029 = vtanh.pop %v2028
  %v2030 = vsub.f32 1.0, %v2025
  %v2031 = vmul.f32 %v2030, %v2029
  %v2032 = vmul.f32 %v2025, %v1711
  %v2033 = vadd.f32 %v2031, %v2032
  %2034 = vst [vmem:[%s1714] sm:$0xff] %v1874
  %2035 = vst [vmem:[%s1712 + $0x8] sm:$0xff] %v2033
  %v2036 = vld [vmem:[%s1224] sm:$0xff]
  %v2037 = vld [vmem:[%s1224 + $0x8] sm:$0xff]
  %v2038 = vld [vmem:[%s1224 + $0x10] sm:$0xff]
  %v2039 = vld [vmem:[%s3] sm:$0xff]
  %v2040 = vld [vmem:[%s3 + $0x8] sm:$0xff]
  %v2041 = vld [vmem:[%s3 + $0x10] sm:$0xff]
  %v2042 = vld [vmem:[%s3 + $0x18] sm:$0xff]
  %v2043 = vld [vmem:[%s3 + $0x20] sm:$0xff]
  %v2044 = vld [vmem:[%s3 + $0x28] sm:$0xff]
  %v2045 = vld [vmem:[%s3 + $0x30] sm:$0xff]
  %v2046 = vld [vmem:[%s3 + $0x38] sm:$0xff]
  %v2047 = vld [vmem:[%s3 + $0x40] sm:$0xff]
  %v2048 = vld [vmem:[%s3 + $0x48] sm:$0xff]
  %v2049 = vld [vmem:[%s3 + $0x50] sm:$0xff]
  %v2050 = vld [vmem:[%s3 + $0x58] sm:$0xff]
  %v2051 = vld [vmem:[%s3 + $0x60] sm:$0xff]
  %v2052 = vld [vmem:[%s3 + $0x68] sm:$0xff]
  %v2053 = vld [vmem:[%s3 + $0x70] sm:$0xff]
  %v2054 = vld [vmem:[%s3 + $0x78] sm:$0xff]
  %v2055 = vld [vmem:[%s3 + $0x80] sm:$0xff]
  %v2056 = vld [vmem:[%s3 + $0x88] sm:$0xff]
  %v2057 = vld [vmem:[%s3 + $0x90] sm:$0xff]
  %v2058 = vld [vmem:[%s3 + $0x98] sm:$0xff]
  %v2059 = vld [vmem:[%s3 + $0xa0] sm:$0xff]
  %v2060 = vld [vmem:[%s3 + $0xa8] sm:$0xff]
  %v2061 = vld [vmem:[%s3 + $0xb0] sm:$0xff]
  %v2062 = vld [vmem:[%s3 + $0xb8] sm:$0xff]
  %v2063 = vld [vmem:[%s3 + $0xc0] sm:$0xff]
  %v2064 = vld [vmem:[%s3 + $0xc8] sm:$0xff]
  %v2065 = vld [vmem:[%s3 + $0xd0] sm:$0xff]
  %v2066 = vld [vmem:[%s3 + $0xd8] sm:$0xff]
  %v2067 = vld [vmem:[%s3 + $0xe0] sm:$0xff]
  %v2068 = vld [vmem:[%s3 + $0xe8] sm:$0xff]
  %v2069 = vld [vmem:[%s3 + $0xf0] sm:$0xff]
  %v2070 = vld [vmem:[%s3 + $0xf8] sm:$0xff]
  %v2071 = vld [vmem:[%s3 + $0x100] sm:$0xff]
  %v2072 = vld [vmem:[%s3 + $0x108] sm:$0xff]
  %v2073 = vld [vmem:[%s3 + $0x110] sm:$0xff]
  %v2074 = vld [vmem:[%s3 + $0x118] sm:$0xff]
  %v2075 = vld [vmem:[%s3 + $0x120] sm:$0xff]
  %v2076 = vld [vmem:[%s3 + $0x128] sm:$0xff]
  %v2077 = vld [vmem:[%s3 + $0x130] sm:$0xff]
  %v2078 = vld [vmem:[%s3 + $0x138] sm:$0xff]
  %v2079 = vld [vmem:[%s3 + $0x140] sm:$0xff]
  %v2080 = vld [vmem:[%s3 + $0x148] sm:$0xff]
  %v2081 = vld [vmem:[%s3 + $0x150] sm:$0xff]
  %v2082 = vld [vmem:[%s3 + $0x158] sm:$0xff]
  %v2083 = vld [vmem:[%s3 + $0x160] sm:$0xff]
  %v2084 = vld [vmem:[%s3 + $0x168] sm:$0xff]
  %v2085 = vld [vmem:[%s3 + $0x170] sm:$0xff]
  %v2086 = vld [vmem:[%s3 + $0x178] sm:$0xff]
  %2087 = vmatpush.msra.mxu0 %v2084
  %2088 = vmatpush.msra.mxu0 %v2081
  %2089 = vmatpush.msra.mxu0 %v2078
  %2090 = vmatpush.msra.mxu0 %v2075
  %2091 = vmatpush.msra.mxu0 %v2072
  %2092 = vmatpush.msra.mxu0 %v2069
  %2093 = vmatpush.msra.mxu0 %v2066
  %2094 = vmatpush.msra.mxu0 %v2063
  %2095 = vmatpush.msra.mxu0 %v2060
  %2096 = vmatpush.msra.mxu0 %v2057
  %2097 = vmatpush.msra.mxu0 %v2054
  %2098 = vmatpush.msra.mxu0 %v2051
  %2099 = vmatpush.msra.mxu0 %v2048
  %2100 = vmatpush.msra.mxu0 %v2045
  %2101 = vmatpush.msra.mxu0 %v2042
  %2102 = vmatpush.msra.mxu0 %v2039
  %2103 = vmatmul.f32.gmra.mxu0 %v1874
  %v2104 = vpop.f32.mrf.mxu0
  %v2105 = vadd.f32 0.0, %v2104
  %2106 = vdwg.mxu0
  %2107 = vmatpush.msra.mxu0 %v2085
  %2108 = vmatpush.msra.mxu0 %v2082
  %2109 = vmatpush.msra.mxu0 %v2079
  %2110 = vmatpush.msra.mxu0 %v2076
  %2111 = vmatpush.msra.mxu0 %v2073
  %2112 = vmatpush.msra.mxu0 %v2070
  %2113 = vmatpush.msra.mxu0 %v2067
  %2114 = vmatpush.msra.mxu0 %v2064
  %2115 = vmatpush.msra.mxu0 %v2061
  %2116 = vmatpush.msra.mxu0 %v2058
  %2117 = vmatpush.msra.mxu0 %v2055
  %2118 = vmatpush.msra.mxu0 %v2052
  %2119 = vmatpush.msra.mxu0 %v2049
  %2120 = vmatpush.msra.mxu0 %v2046
  %2121 = vmatpush.msra.mxu0 %v2043
  %2122 = vmatpush.msra.mxu0 %v2040
  %2123 = vmatmul.f32.gmra.mxu0 %v1874
  %v2124 = vpop.f32.mrf.mxu0
  %v2125 = vadd.f32 0.0, %v2124
  %2126 = vdwg.mxu0
  %2127 = vmatpush.msra.mxu0 %v2086
  %2128 = vmatpush.msra.mxu0 %v2083
  %2129 = vmatpush.msra.mxu0 %v2080
  %2130 = vmatpush.msra.mxu0 %v2077
  %2131 = vmatpush.msra.mxu0 %v2074
  %2132 = vmatpush.msra.mxu0 %v2071
  %2133 = vmatpush.msra.mxu0 %v2068
  %2134 = vmatpush.msra.mxu0 %v2065
  %2135 = vmatpush.msra.mxu0 %v2062
  %2136 = vmatpush.msra.mxu0 %v2059
  %2137 = vmatpush.msra.mxu0 %v2056
  %2138 = vmatpush.msra.mxu0 %v2053
  %2139 = vmatpush.msra.mxu0 %v2050
  %2140 = vmatpush.msra.mxu0 %v2047
  %2141 = vmatpush.msra.mxu0 %v2044
  %2142 = vmatpush.msra.mxu0 %v2041
  %2143 = vmatmul.f32.gmra.mxu0 %v1874
  %v2144 = vpop.f32.mrf.mxu0
  %v2145 = vadd.f32 0.0, %v2144
  %2146 = vdwg.mxu0
  %v2147 = vadd.f32 %v2036, %v2105
  %v2148 = vsub.f32 0.0, %v2147
  %v2149 = vmul.f32 %v2148, 1.442695
  %v2150 = vpow.pop %v2149
  %v2151 = vadd.f32 %v2150, 1.0
  %v2152 = vrcp.pop %v2151
  %v2153 = vmul.f32 %v2151, %v2152
  %v2154 = vsub.f32 1.0, %v2153
  %v2155 = vmul.f32 %v2152, %v2154
  %v2156 = vadd.f32 %v2152, %v2155
  %vm2157 = vweird.f32 %v2151
  %vm2158 = vweird.f32 %v2152
  %vm2159 = vmor %vm2157, %vm2158
  %v2160 = vsel %vm2159, %v2152, %v2156
  %v2161 = vand.u32 2147483647, %v2151
  %vm2162 = vcmp.eq.f32.partialorder %v2161, 8.507059e+37
  %v2163 = vand.u32 %v2151, 2147483648
  %v2164 = vor.u32 1.1754944e-38, %v2163
  %v2165 = vsel %vm2162, %v2164, %v2160
  %v2166 = vmul.f32 1.0, %v2165
  %v2167 = vadd.f32 %v2037, %v2125
  %v2168 = vsub.f32 0.0, %v2167
  %v2169 = vmul.f32 %v2168, 1.442695
  %v2170 = vpow.pop %v2169
  %v2171 = vadd.f32 %v2170, 1.0
  %v2172 = vrcp.pop %v2171
  %v2173 = vmul.f32 %v2171, %v2172
  %v2174 = vsub.f32 1.0, %v2173
  %v2175 = vmul.f32 %v2172, %v2174
  %v2176 = vadd.f32 %v2172, %v2175
  %vm2177 = vweird.f32 %v2171
  %vm2178 = vweird.f32 %v2172
  %vm2179 = vmor %vm2177, %vm2178
  %v2180 = vsel %vm2179, %v2172, %v2176
  %v2181 = vand.u32 2147483647, %v2171
  %vm2182 = vcmp.eq.f32.partialorder %v2181, 8.507059e+37
  %v2183 = vand.u32 %v2171, 2147483648
  %v2184 = vor.u32 1.1754944e-38, %v2183
  %v2185 = vsel %vm2182, %v2184, %v2180
  %v2186 = vmul.f32 1.0, %v2185
  %v2187 = vadd.f32 %v2145, %v399
  %v2188 = vmul.f32 %v2166, %v2187
  %v2189 = vadd.f32 %v2038, %v2188
  %v2190 = vtanh.pop %v2189
  %v2191 = vsub.f32 1.0, %v2186
  %v2192 = vmul.f32 %v2191, %v2190
  %v2193 = vmul.f32 %v2186, %v1874
  %v2194 = vadd.f32 %v2192, %v2193
  %v2195 = vld [vmem:[%s1062 + $0x18] sm:$0xff]
  %v2196 = vld [vmem:[%s1062 + $0x20] sm:$0xff]
  %v2197 = vld [vmem:[%s1062 + $0x28] sm:$0xff]
  %v2198 = vld [vmem:[%s4] sm:$0xff]
  %v2199 = vld [vmem:[%s4 + $0x8] sm:$0xff]
  %v2200 = vld [vmem:[%s4 + $0x10] sm:$0xff]
  %v2201 = vld [vmem:[%s4 + $0x18] sm:$0xff]
  %v2202 = vld [vmem:[%s4 + $0x20] sm:$0xff]
  %v2203 = vld [vmem:[%s4 + $0x28] sm:$0xff]
  %v2204 = vld [vmem:[%s4 + $0x30] sm:$0xff]
  %v2205 = vld [vmem:[%s4 + $0x38] sm:$0xff]
  %v2206 = vld [vmem:[%s4 + $0x40] sm:$0xff]
  %v2207 = vld [vmem:[%s4 + $0x48] sm:$0xff]
  %v2208 = vld [vmem:[%s4 + $0x50] sm:$0xff]
  %v2209 = vld [vmem:[%s4 + $0x58] sm:$0xff]
  %v2210 = vld [vmem:[%s4 + $0x60] sm:$0xff]
  %v2211 = vld [vmem:[%s4 + $0x68] sm:$0xff]
  %v2212 = vld [vmem:[%s4 + $0x70] sm:$0xff]
  %v2213 = vld [vmem:[%s4 + $0x78] sm:$0xff]
  %v2214 = vld [vmem:[%s4 + $0x80] sm:$0xff]
  %v2215 = vld [vmem:[%s4 + $0x88] sm:$0xff]
  %v2216 = vld [vmem:[%s4 + $0x90] sm:$0xff]
  %v2217 = vld [vmem:[%s4 + $0x98] sm:$0xff]
  %v2218 = vld [vmem:[%s4 + $0xa0] sm:$0xff]
  %v2219 = vld [vmem:[%s4 + $0xa8] sm:$0xff]
  %v2220 = vld [vmem:[%s4 + $0xb0] sm:$0xff]
  %v2221 = vld [vmem:[%s4 + $0xb8] sm:$0xff]
  %v2222 = vld [vmem:[%s4 + $0xc0] sm:$0xff]
  %v2223 = vld [vmem:[%s4 + $0xc8] sm:$0xff]
  %v2224 = vld [vmem:[%s4 + $0xd0] sm:$0xff]
  %v2225 = vld [vmem:[%s4 + $0xd8] sm:$0xff]
  %v2226 = vld [vmem:[%s4 + $0xe0] sm:$0xff]
  %v2227 = vld [vmem:[%s4 + $0xe8] sm:$0xff]
  %v2228 = vld [vmem:[%s4 + $0xf0] sm:$0xff]
  %v2229 = vld [vmem:[%s4 + $0xf8] sm:$0xff]
  %v2230 = vld [vmem:[%s4 + $0x100] sm:$0xff]
  %v2231 = vld [vmem:[%s4 + $0x108] sm:$0xff]
  %v2232 = vld [vmem:[%s4 + $0x110] sm:$0xff]
  %v2233 = vld [vmem:[%s4 + $0x118] sm:$0xff]
  %v2234 = vld [vmem:[%s4 + $0x120] sm:$0xff]
  %v2235 = vld [vmem:[%s4 + $0x128] sm:$0xff]
  %v2236 = vld [vmem:[%s4 + $0x130] sm:$0xff]
  %v2237 = vld [vmem:[%s4 + $0x138] sm:$0xff]
  %v2238 = vld [vmem:[%s4 + $0x140] sm:$0xff]
  %v2239 = vld [vmem:[%s4 + $0x148] sm:$0xff]
  %v2240 = vld [vmem:[%s4 + $0x150] sm:$0xff]
  %v2241 = vld [vmem:[%s4 + $0x158] sm:$0xff]
  %v2242 = vld [vmem:[%s4 + $0x160] sm:$0xff]
  %v2243 = vld [vmem:[%s4 + $0x168] sm:$0xff]
  %v2244 = vld [vmem:[%s4 + $0x170] sm:$0xff]
  %v2245 = vld [vmem:[%s4 + $0x178] sm:$0xff]
  %2246 = vmatpush.msra.mxu0 %v2243
  %2247 = vmatpush.msra.mxu0 %v2240
  %2248 = vmatpush.msra.mxu0 %v2237
  %2249 = vmatpush.msra.mxu0 %v2234
  %2250 = vmatpush.msra.mxu0 %v2231
  %2251 = vmatpush.msra.mxu0 %v2228
  %2252 = vmatpush.msra.mxu0 %v2225
  %2253 = vmatpush.msra.mxu0 %v2222
  %2254 = vmatpush.msra.mxu0 %v2219
  %2255 = vmatpush.msra.mxu0 %v2216
  %2256 = vmatpush.msra.mxu0 %v2213
  %2257 = vmatpush.msra.mxu0 %v2210
  %2258 = vmatpush.msra.mxu0 %v2207
  %2259 = vmatpush.msra.mxu0 %v2204
  %2260 = vmatpush.msra.mxu0 %v2201
  %2261 = vmatpush.msra.mxu0 %v2198
  %2262 = vmatmul.f32.gmra.mxu0 %v2033
  %v2263 = vpop.f32.mrf.mxu0
  %v2264 = vadd.f32 0.0, %v2263
  %2265 = vdwg.mxu0
  %2266 = vmatpush.msra.mxu0 %v2244
  %2267 = vmatpush.msra.mxu0 %v2241
  %2268 = vmatpush.msra.mxu0 %v2238
  %2269 = vmatpush.msra.mxu0 %v2235
  %2270 = vmatpush.msra.mxu0 %v2232
  %2271 = vmatpush.msra.mxu0 %v2229
  %2272 = vmatpush.msra.mxu0 %v2226
  %2273 = vmatpush.msra.mxu0 %v2223
  %2274 = vmatpush.msra.mxu0 %v2220
  %2275 = vmatpush.msra.mxu0 %v2217
  %2276 = vmatpush.msra.mxu0 %v2214
  %2277 = vmatpush.msra.mxu0 %v2211
  %2278 = vmatpush.msra.mxu0 %v2208
  %2279 = vmatpush.msra.mxu0 %v2205
  %2280 = vmatpush.msra.mxu0 %v2202
  %2281 = vmatpush.msra.mxu0 %v2199
  %2282 = vmatmul.f32.gmra.mxu0 %v2033
  %v2283 = vpop.f32.mrf.mxu0
  %v2284 = vadd.f32 0.0, %v2283
  %2285 = vdwg.mxu0
  %2286 = vmatpush.msra.mxu0 %v2245
  %2287 = vmatpush.msra.mxu0 %v2242
  %2288 = vmatpush.msra.mxu0 %v2239
  %2289 = vmatpush.msra.mxu0 %v2236
  %2290 = vmatpush.msra.mxu0 %v2233
  %2291 = vmatpush.msra.mxu0 %v2230
  %2292 = vmatpush.msra.mxu0 %v2227
  %2293 = vmatpush.msra.mxu0 %v2224
  %2294 = vmatpush.msra.mxu0 %v2221
  %2295 = vmatpush.msra.mxu0 %v2218
  %2296 = vmatpush.msra.mxu0 %v2215
  %2297 = vmatpush.msra.mxu0 %v2212
  %2298 = vmatpush.msra.mxu0 %v2209
  %2299 = vmatpush.msra.mxu0 %v2206
  %2300 = vmatpush.msra.mxu0 %v2203
  %2301 = vmatpush.msra.mxu0 %v2200
  %2302 = vmatmul.f32.gmra.mxu0 %v2033
  %v2303 = vpop.f32.mrf.mxu0
  %v2304 = vadd.f32 0.0, %v2303
  %2305 = vdwg.mxu0
  %v2306 = vadd.f32 %v2195, %v2264
  %v2307 = vsub.f32 0.0, %v2306
  %v2308 = vmul.f32 %v2307, 1.442695
  %v2309 = vpow.pop %v2308
  %v2310 = vadd.f32 %v2309, 1.0
  %v2311 = vrcp.pop %v2310
  %v2312 = vmul.f32 %v2310, %v2311
  %v2313 = vsub.f32 1.0, %v2312
  %v2314 = vmul.f32 %v2311, %v2313
  %v2315 = vadd.f32 %v2311, %v2314
  %vm2316 = vweird.f32 %v2310
  %vm2317 = vweird.f32 %v2311
  %vm2318 = vmor %vm2316, %vm2317
  %v2319 = vsel %vm2318, %v2311, %v2315
  %v2320 = vand.u32 2147483647, %v2310
  %vm2321 = vcmp.eq.f32.partialorder %v2320, 8.507059e+37
  %v2322 = vand.u32 %v2310, 2147483648
  %v2323 = vor.u32 1.1754944e-38, %v2322
  %v2324 = vsel %vm2321, %v2323, %v2319
  %v2325 = vmul.f32 1.0, %v2324
  %v2326 = vadd.f32 %v2196, %v2284
  %v2327 = vsub.f32 0.0, %v2326
  %v2328 = vmul.f32 %v2327, 1.442695
  %v2329 = vpow.pop %v2328
  %v2330 = vadd.f32 %v2329, 1.0
  %v2331 = vrcp.pop %v2330
  %v2332 = vmul.f32 %v2330, %v2331
  %v2333 = vsub.f32 1.0, %v2332
  %v2334 = vmul.f32 %v2331, %v2333
  %v2335 = vadd.f32 %v2331, %v2334
  %vm2336 = vweird.f32 %v2330
  %vm2337 = vweird.f32 %v2331
  %vm2338 = vmor %vm2336, %vm2337
  %v2339 = vsel %vm2338, %v2331, %v2335
  %v2340 = vand.u32 2147483647, %v2330
  %vm2341 = vcmp.eq.f32.partialorder %v2340, 8.507059e+37
  %v2342 = vand.u32 %v2330, 2147483648
  %v2343 = vor.u32 1.1754944e-38, %v2342
  %v2344 = vsel %vm2341, %v2343, %v2339
  %v2345 = vmul.f32 1.0, %v2344
  %v2346 = vadd.f32 %v2304, %v403
  %v2347 = vmul.f32 %v2325, %v2346
  %v2348 = vadd.f32 %v2197, %v2347
  %v2349 = vtanh.pop %v2348
  %v2350 = vsub.f32 1.0, %v2345
  %v2351 = vmul.f32 %v2350, %v2349
  %v2352 = vmul.f32 %v2345, %v2033
  %v2353 = vadd.f32 %v2351, %v2352
  %2354 = vst [vmem:[%s1386] sm:$0xff] %v2194
  %2355 = vst [vmem:[%s1384 + $0x8] sm:$0xff] %v2353
  %v2356 = vld [vmem:[%s896] sm:$0xff]
  %v2357 = vld [vmem:[%s896 + $0x8] sm:$0xff]
  %v2358 = vld [vmem:[%s896 + $0x10] sm:$0xff]
  %v2359 = vld [vmem:[%s3] sm:$0xff]
  %v2360 = vld [vmem:[%s3 + $0x8] sm:$0xff]
  %v2361 = vld [vmem:[%s3 + $0x10] sm:$0xff]
  %v2362 = vld [vmem:[%s3 + $0x18] sm:$0xff]
  %v2363 = vld [vmem:[%s3 + $0x20] sm:$0xff]
  %v2364 = vld [vmem:[%s3 + $0x28] sm:$0xff]
  %v2365 = vld [vmem:[%s3 + $0x30] sm:$0xff]
  %v2366 = vld [vmem:[%s3 + $0x38] sm:$0xff]
  %v2367 = vld [vmem:[%s3 + $0x40] sm:$0xff]
  %v2368 = vld [vmem:[%s3 + $0x48] sm:$0xff]
  %v2369 = vld [vmem:[%s3 + $0x50] sm:$0xff]
  %v2370 = vld [vmem:[%s3 + $0x58] sm:$0xff]
  %v2371 = vld [vmem:[%s3 + $0x60] sm:$0xff]
  %v2372 = vld [vmem:[%s3 + $0x68] sm:$0xff]
  %v2373 = vld [vmem:[%s3 + $0x70] sm:$0xff]
  %v2374 = vld [vmem:[%s3 + $0x78] sm:$0xff]
  %v2375 = vld [vmem:[%s3 + $0x80] sm:$0xff]
  %v2376 = vld [vmem:[%s3 + $0x88] sm:$0xff]
  %v2377 = vld [vmem:[%s3 + $0x90] sm:$0xff]
  %v2378 = vld [vmem:[%s3 + $0x98] sm:$0xff]
  %v2379 = vld [vmem:[%s3 + $0xa0] sm:$0xff]
  %v2380 = vld [vmem:[%s3 + $0xa8] sm:$0xff]
  %v2381 = vld [vmem:[%s3 + $0xb0] sm:$0xff]
  %v2382 = vld [vmem:[%s3 + $0xb8] sm:$0xff]
  %v2383 = vld [vmem:[%s3 + $0xc0] sm:$0xff]
  %v2384 = vld [vmem:[%s3 + $0xc8] sm:$0xff]
  %v2385 = vld [vmem:[%s3 + $0xd0] sm:$0xff]
  %v2386 = vld [vmem:[%s3 + $0xd8] sm:$0xff]
  %v2387 = vld [vmem:[%s3 + $0xe0] sm:$0xff]
  %v2388 = vld [vmem:[%s3 + $0xe8] sm:$0xff]
  %v2389 = vld [vmem:[%s3 + $0xf0] sm:$0xff]
  %v2390 = vld [vmem:[%s3 + $0xf8] sm:$0xff]
  %v2391 = vld [vmem:[%s3 + $0x100] sm:$0xff]
  %v2392 = vld [vmem:[%s3 + $0x108] sm:$0xff]
  %v2393 = vld [vmem:[%s3 + $0x110] sm:$0xff]
  %v2394 = vld [vmem:[%s3 + $0x118] sm:$0xff]
  %v2395 = vld [vmem:[%s3 + $0x120] sm:$0xff]
  %v2396 = vld [vmem:[%s3 + $0x128] sm:$0xff]
  %v2397 = vld [vmem:[%s3 + $0x130] sm:$0xff]
  %v2398 = vld [vmem:[%s3 + $0x138] sm:$0xff]
  %v2399 = vld [vmem:[%s3 + $0x140] sm:$0xff]
  %v2400 = vld [vmem:[%s3 + $0x148] sm:$0xff]
  %v2401 = vld [vmem:[%s3 + $0x150] sm:$0xff]
  %v2402 = vld [vmem:[%s3 + $0x158] sm:$0xff]
  %v2403 = vld [vmem:[%s3 + $0x160] sm:$0xff]
  %v2404 = vld [vmem:[%s3 + $0x168] sm:$0xff]
  %v2405 = vld [vmem:[%s3 + $0x170] sm:$0xff]
  %v2406 = vld [vmem:[%s3 + $0x178] sm:$0xff]
  %2407 = vmatpush.msra.mxu0 %v2404
  %2408 = vmatpush.msra.mxu0 %v2401
  %2409 = vmatpush.msra.mxu0 %v2398
  %2410 = vmatpush.msra.mxu0 %v2395
  %2411 = vmatpush.msra.mxu0 %v2392
  %2412 = vmatpush.msra.mxu0 %v2389
  %2413 = vmatpush.msra.mxu0 %v2386
  %2414 = vmatpush.msra.mxu0 %v2383
  %2415 = vmatpush.msra.mxu0 %v2380
  %2416 = vmatpush.msra.mxu0 %v2377
  %2417 = vmatpush.msra.mxu0 %v2374
  %2418 = vmatpush.msra.mxu0 %v2371
  %2419 = vmatpush.msra.mxu0 %v2368
  %2420 = vmatpush.msra.mxu0 %v2365
  %2421 = vmatpush.msra.mxu0 %v2362
  %2422 = vmatpush.msra.mxu0 %v2359
  %2423 = vmatmul.f32.gmra.mxu0 %v2194
  %v2424 = vpop.f32.mrf.mxu0
  %v2425 = vadd.f32 0.0, %v2424
  %2426 = vdwg.mxu0
  %2427 = vmatpush.msra.mxu0 %v2405
  %2428 = vmatpush.msra.mxu0 %v2402
  %2429 = vmatpush.msra.mxu0 %v2399
  %2430 = vmatpush.msra.mxu0 %v2396
  %2431 = vmatpush.msra.mxu0 %v2393
  %2432 = vmatpush.msra.mxu0 %v2390
  %2433 = vmatpush.msra.mxu0 %v2387
  %2434 = vmatpush.msra.mxu0 %v2384
  %2435 = vmatpush.msra.mxu0 %v2381
  %2436 = vmatpush.msra.mxu0 %v2378
  %2437 = vmatpush.msra.mxu0 %v2375
  %2438 = vmatpush.msra.mxu0 %v2372
  %2439 = vmatpush.msra.mxu0 %v2369
  %2440 = vmatpush.msra.mxu0 %v2366
  %2441 = vmatpush.msra.mxu0 %v2363
  %2442 = vmatpush.msra.mxu0 %v2360
  %2443 = vmatmul.f32.gmra.mxu0 %v2194
  %v2444 = vpop.f32.mrf.mxu0
  %v2445 = vadd.f32 0.0, %v2444
  %2446 = vdwg.mxu0
  %2447 = vmatpush.msra.mxu0 %v2406
  %2448 = vmatpush.msra.mxu0 %v2403
  %2449 = vmatpush.msra.mxu0 %v2400
  %2450 = vmatpush.msra.mxu0 %v2397
  %2451 = vmatpush.msra.mxu0 %v2394
  %2452 = vmatpush.msra.mxu0 %v2391
  %2453 = vmatpush.msra.mxu0 %v2388
  %2454 = vmatpush.msra.mxu0 %v2385
  %2455 = vmatpush.msra.mxu0 %v2382
  %2456 = vmatpush.msra.mxu0 %v2379
  %2457 = vmatpush.msra.mxu0 %v2376
  %2458 = vmatpush.msra.mxu0 %v2373
  %2459 = vmatpush.msra.mxu0 %v2370
  %2460 = vmatpush.msra.mxu0 %v2367
  %2461 = vmatpush.msra.mxu0 %v2364
  %2462 = vmatpush.msra.mxu0 %v2361
  %2463 = vmatmul.f32.gmra.mxu0 %v2194
  %v2464 = vpop.f32.mrf.mxu0
  %v2465 = vadd.f32 0.0, %v2464
  %2466 = vdwg.mxu0
  %v2467 = vadd.f32 %v2356, %v2425
  %v2468 = vsub.f32 0.0, %v2467
  %v2469 = vmul.f32 %v2468, 1.442695
  %v2470 = vpow.pop %v2469
  %v2471 = vadd.f32 %v2470, 1.0
  %v2472 = vrcp.pop %v2471
  %v2473 = vmul.f32 %v2471, %v2472
  %v2474 = vsub.f32 1.0, %v2473
  %v2475 = vmul.f32 %v2472, %v2474
  %v2476 = vadd.f32 %v2472, %v2475
  %vm2477 = vweird.f32 %v2471
  %vm2478 = vweird.f32 %v2472
  %vm2479 = vmor %vm2477, %vm2478
  %v2480 = vsel %vm2479, %v2472, %v2476
  %v2481 = vand.u32 2147483647, %v2471
  %vm2482 = vcmp.eq.f32.partialorder %v2481, 8.507059e+37
  %v2483 = vand.u32 %v2471, 2147483648
  %v2484 = vor.u32 1.1754944e-38, %v2483
  %v2485 = vsel %vm2482, %v2484, %v2480
  %v2486 = vmul.f32 1.0, %v2485
  %v2487 = vadd.f32 %v2357, %v2445
  %v2488 = vsub.f32 0.0, %v2487
  %v2489 = vmul.f32 %v2488, 1.442695
  %v2490 = vpow.pop %v2489
  %v2491 = vadd.f32 %v2490, 1.0
  %v2492 = vrcp.pop %v2491
  %v2493 = vmul.f32 %v2491, %v2492
  %v2494 = vsub.f32 1.0, %v2493
  %v2495 = vmul.f32 %v2492, %v2494
  %v2496 = vadd.f32 %v2492, %v2495
  %vm2497 = vweird.f32 %v2491
  %vm2498 = vweird.f32 %v2492
  %vm2499 = vmor %vm2497, %vm2498
  %v2500 = vsel %vm2499, %v2492, %v2496
  %v2501 = vand.u32 2147483647, %v2491
  %vm2502 = vcmp.eq.f32.partialorder %v2501, 8.507059e+37
  %v2503 = vand.u32 %v2491, 2147483648
  %v2504 = vor.u32 1.1754944e-38, %v2503
  %v2505 = vsel %vm2502, %v2504, %v2500
  %v2506 = vmul.f32 1.0, %v2505
  %v2507 = vadd.f32 %v2465, %v399
  %v2508 = vmul.f32 %v2486, %v2507
  %v2509 = vadd.f32 %v2358, %v2508
  %v2510 = vtanh.pop %v2509
  %v2511 = vsub.f32 1.0, %v2506
  %v2512 = vmul.f32 %v2511, %v2510
  %v2513 = vmul.f32 %v2506, %v2194
  %v2514 = vadd.f32 %v2512, %v2513
  %v2515 = vld [vmem:[%s734 + $0x18] sm:$0xff]
  %v2516 = vld [vmem:[%s734 + $0x20] sm:$0xff]
  %v2517 = vld [vmem:[%s734 + $0x28] sm:$0xff]
  %v2518 = vld [vmem:[%s4] sm:$0xff]
  %v2519 = vld [vmem:[%s4 + $0x8] sm:$0xff]
  %v2520 = vld [vmem:[%s4 + $0x10] sm:$0xff]
  %v2521 = vld [vmem:[%s4 + $0x18] sm:$0xff]
  %v2522 = vld [vmem:[%s4 + $0x20] sm:$0xff]
  %v2523 = vld [vmem:[%s4 + $0x28] sm:$0xff]
  %v2524 = vld [vmem:[%s4 + $0x30] sm:$0xff]
  %v2525 = vld [vmem:[%s4 + $0x38] sm:$0xff]
  %v2526 = vld [vmem:[%s4 + $0x40] sm:$0xff]
  %v2527 = vld [vmem:[%s4 + $0x48] sm:$0xff]
  %v2528 = vld [vmem:[%s4 + $0x50] sm:$0xff]
  %v2529 = vld [vmem:[%s4 + $0x58] sm:$0xff]
  %v2530 = vld [vmem:[%s4 + $0x60] sm:$0xff]
  %v2531 = vld [vmem:[%s4 + $0x68] sm:$0xff]
  %v2532 = vld [vmem:[%s4 + $0x70] sm:$0xff]
  %v2533 = vld [vmem:[%s4 + $0x78] sm:$0xff]
  %v2534 = vld [vmem:[%s4 + $0x80] sm:$0xff]
  %v2535 = vld [vmem:[%s4 + $0x88] sm:$0xff]
  %v2536 = vld [vmem:[%s4 + $0x90] sm:$0xff]
  %v2537 = vld [vmem:[%s4 + $0x98] sm:$0xff]
  %v2538 = vld [vmem:[%s4 + $0xa0] sm:$0xff]
  %v2539 = vld [vmem:[%s4 + $0xa8] sm:$0xff]
  %v2540 = vld [vmem:[%s4 + $0xb0] sm:$0xff]
  %v2541 = vld [vmem:[%s4 + $0xb8] sm:$0xff]
  %v2542 = vld [vmem:[%s4 + $0xc0] sm:$0xff]
  %v2543 = vld [vmem:[%s4 + $0xc8] sm:$0xff]
  %v2544 = vld [vmem:[%s4 + $0xd0] sm:$0xff]
  %v2545 = vld [vmem:[%s4 + $0xd8] sm:$0xff]
  %v2546 = vld [vmem:[%s4 + $0xe0] sm:$0xff]
  %v2547 = vld [vmem:[%s4 + $0xe8] sm:$0xff]
  %v2548 = vld [vmem:[%s4 + $0xf0] sm:$0xff]
  %v2549 = vld [vmem:[%s4 + $0xf8] sm:$0xff]
  %v2550 = vld [vmem:[%s4 + $0x100] sm:$0xff]
  %v2551 = vld [vmem:[%s4 + $0x108] sm:$0xff]
  %v2552 = vld [vmem:[%s4 + $0x110] sm:$0xff]
  %v2553 = vld [vmem:[%s4 + $0x118] sm:$0xff]
  %v2554 = vld [vmem:[%s4 + $0x120] sm:$0xff]
  %v2555 = vld [vmem:[%s4 + $0x128] sm:$0xff]
  %v2556 = vld [vmem:[%s4 + $0x130] sm:$0xff]
  %v2557 = vld [vmem:[%s4 + $0x138] sm:$0xff]
  %v2558 = vld [vmem:[%s4 + $0x140] sm:$0xff]
  %v2559 = vld [vmem:[%s4 + $0x148] sm:$0xff]
  %v2560 = vld [vmem:[%s4 + $0x150] sm:$0xff]
  %v2561 = vld [vmem:[%s4 + $0x158] sm:$0xff]
  %v2562 = vld [vmem:[%s4 + $0x160] sm:$0xff]
  %v2563 = vld [vmem:[%s4 + $0x168] sm:$0xff]
  %v2564 = vld [vmem:[%s4 + $0x170] sm:$0xff]
  %v2565 = vld [vmem:[%s4 + $0x178] sm:$0xff]
  %2566 = vmatpush.msra.mxu0 %v2563
  %2567 = vmatpush.msra.mxu0 %v2560
  %2568 = vmatpush.msra.mxu0 %v2557
  %2569 = vmatpush.msra.mxu0 %v2554
  %2570 = vmatpush.msra.mxu0 %v2551
  %2571 = vmatpush.msra.mxu0 %v2548
  %2572 = vmatpush.msra.mxu0 %v2545
  %2573 = vmatpush.msra.mxu0 %v2542
  %2574 = vmatpush.msra.mxu0 %v2539
  %2575 = vmatpush.msra.mxu0 %v2536
  %2576 = vmatpush.msra.mxu0 %v2533
  %2577 = vmatpush.msra.mxu0 %v2530
  %2578 = vmatpush.msra.mxu0 %v2527
  %2579 = vmatpush.msra.mxu0 %v2524
  %2580 = vmatpush.msra.mxu0 %v2521
  %2581 = vmatpush.msra.mxu0 %v2518
  %2582 = vmatmul.f32.gmra.mxu0 %v2353
  %v2583 = vpop.f32.mrf.mxu0
  %v2584 = vadd.f32 0.0, %v2583
  %2585 = vdwg.mxu0
  %2586 = vmatpush.msra.mxu0 %v2564
  %2587 = vmatpush.msra.mxu0 %v2561
  %2588 = vmatpush.msra.mxu0 %v2558
  %2589 = vmatpush.msra.mxu0 %v2555
  %2590 = vmatpush.msra.mxu0 %v2552
  %2591 = vmatpush.msra.mxu0 %v2549
  %2592 = vmatpush.msra.mxu0 %v2546
  %2593 = vmatpush.msra.mxu0 %v2543
  %2594 = vmatpush.msra.mxu0 %v2540
  %2595 = vmatpush.msra.mxu0 %v2537
  %2596 = vmatpush.msra.mxu0 %v2534
  %2597 = vmatpush.msra.mxu0 %v2531
  %2598 = vmatpush.msra.mxu0 %v2528
  %2599 = vmatpush.msra.mxu0 %v2525
  %2600 = vmatpush.msra.mxu0 %v2522
  %2601 = vmatpush.msra.mxu0 %v2519
  %2602 = vmatmul.f32.gmra.mxu0 %v2353
  %v2603 = vpop.f32.mrf.mxu0
  %v2604 = vadd.f32 0.0, %v2603
  %2605 = vdwg.mxu0
  %2606 = vmatpush.msra.mxu0 %v2565
  %2607 = vmatpush.msra.mxu0 %v2562
  %2608 = vmatpush.msra.mxu0 %v2559
  %2609 = vmatpush.msra.mxu0 %v2556
  %2610 = vmatpush.msra.mxu0 %v2553
  %2611 = vmatpush.msra.mxu0 %v2550
  %2612 = vmatpush.msra.mxu0 %v2547
  %2613 = vmatpush.msra.mxu0 %v2544
  %2614 = vmatpush.msra.mxu0 %v2541
  %2615 = vmatpush.msra.mxu0 %v2538
  %2616 = vmatpush.msra.mxu0 %v2535
  %2617 = vmatpush.msra.mxu0 %v2532
  %2618 = vmatpush.msra.mxu0 %v2529
  %2619 = vmatpush.msra.mxu0 %v2526
  %2620 = vmatpush.msra.mxu0 %v2523
  %2621 = vmatpush.msra.mxu0 %v2520
  %2622 = vmatmul.f32.gmra.mxu0 %v2353
  %v2623 = vpop.f32.mrf.mxu0
  %v2624 = vadd.f32 0.0, %v2623
  %2625 = vdwg.mxu0
  %v2626 = vadd.f32 %v2515, %v2584
  %v2627 = vsub.f32 0.0, %v2626
  %v2628 = vmul.f32 %v2627, 1.442695
  %v2629 = vpow.pop %v2628
  %v2630 = vadd.f32 %v2629, 1.0
  %v2631 = vrcp.pop %v2630
  %v2632 = vmul.f32 %v2630, %v2631
  %v2633 = vsub.f32 1.0, %v2632
  %v2634 = vmul.f32 %v2631, %v2633
  %v2635 = vadd.f32 %v2631, %v2634
  %vm2636 = vweird.f32 %v2630
  %vm2637 = vweird.f32 %v2631
  %vm2638 = vmor %vm2636, %vm2637
  %v2639 = vsel %vm2638, %v2631, %v2635
  %v2640 = vand.u32 2147483647, %v2630
  %vm2641 = vcmp.eq.f32.partialorder %v2640, 8.507059e+37
  %v2642 = vand.u32 %v2630, 2147483648
  %v2643 = vor.u32 1.1754944e-38, %v2642
  %v2644 = vsel %vm2641, %v2643, %v2639
  %v2645 = vmul.f32 1.0, %v2644
  %v2646 = vadd.f32 %v2516, %v2604
  %v2647 = vsub.f32 0.0, %v2646
  %v2648 = vmul.f32 %v2647, 1.442695
  %v2649 = vpow.pop %v2648
  %v2650 = vadd.f32 %v2649, 1.0
  %v2651 = vrcp.pop %v2650
  %v2652 = vmul.f32 %v2650, %v2651
  %v2653 = vsub.f32 1.0, %v2652
  %v2654 = vmul.f32 %v2651, %v2653
  %v2655 = vadd.f32 %v2651, %v2654
  %vm2656 = vweird.f32 %v2650
  %vm2657 = vweird.f32 %v2651
  %vm2658 = vmor %vm2656, %vm2657
  %v2659 = vsel %vm2658, %v2651, %v2655
  %v2660 = vand.u32 2147483647, %v2650
  %vm2661 = vcmp.eq.f32.partialorder %v2660, 8.507059e+37
  %v2662 = vand.u32 %v2650, 2147483648
  %v2663 = vor.u32 1.1754944e-38, %v2662
  %v2664 = vsel %vm2661, %v2663, %v2659
  %v2665 = vmul.f32 1.0, %v2664
  %v2666 = vadd.f32 %v2624, %v403
  %v2667 = vmul.f32 %v2645, %v2666
  %v2668 = vadd.f32 %v2517, %v2667
  %v2669 = vtanh.pop %v2668
  %v2670 = vsub.f32 1.0, %v2665
  %v2671 = vmul.f32 %v2670, %v2669
  %v2672 = vmul.f32 %v2665, %v2353
  %v2673 = vadd.f32 %v2671, %v2672
  %2674 = vst [vmem:[%s1058] sm:$0xff] %v2514
  %2675 = vst [vmem:[%s1056 + $0x8] sm:$0xff] %v2673
  %v2676 = vld [vmem:[%s569] sm:$0xff]
  %v2677 = vld [vmem:[%s569 + $0x8] sm:$0xff]
  %v2678 = vld [vmem:[%s569 + $0x10] sm:$0xff]
  %v2679 = vld [vmem:[%s3] sm:$0xff]
  %v2680 = vld [vmem:[%s3 + $0x8] sm:$0xff]
  %v2681 = vld [vmem:[%s3 + $0x10] sm:$0xff]
  %v2682 = vld [vmem:[%s3 + $0x18] sm:$0xff]
  %v2683 = vld [vmem:[%s3 + $0x20] sm:$0xff]
  %v2684 = vld [vmem:[%s3 + $0x28] sm:$0xff]
  %v2685 = vld [vmem:[%s3 + $0x30] sm:$0xff]
  %v2686 = vld [vmem:[%s3 + $0x38] sm:$0xff]
  %v2687 = vld [vmem:[%s3 + $0x40] sm:$0xff]
  %v2688 = vld [vmem:[%s3 + $0x48] sm:$0xff]
  %v2689 = vld [vmem:[%s3 + $0x50] sm:$0xff]
  %v2690 = vld [vmem:[%s3 + $0x58] sm:$0xff]
  %v2691 = vld [vmem:[%s3 + $0x60] sm:$0xff]
  %v2692 = vld [vmem:[%s3 + $0x68] sm:$0xff]
  %v2693 = vld [vmem:[%s3 + $0x70] sm:$0xff]
  %v2694 = vld [vmem:[%s3 + $0x78] sm:$0xff]
  %v2695 = vld [vmem:[%s3 + $0x80] sm:$0xff]
  %v2696 = vld [vmem:[%s3 + $0x88] sm:$0xff]
  %v2697 = vld [vmem:[%s3 + $0x90] sm:$0xff]
  %v2698 = vld [vmem:[%s3 + $0x98] sm:$0xff]
  %v2699 = vld [vmem:[%s3 + $0xa0] sm:$0xff]
  %v2700 = vld [vmem:[%s3 + $0xa8] sm:$0xff]
  %v2701 = vld [vmem:[%s3 + $0xb0] sm:$0xff]
  %v2702 = vld [vmem:[%s3 + $0xb8] sm:$0xff]
  %v2703 = vld [vmem:[%s3 + $0xc0] sm:$0xff]
  %v2704 = vld [vmem:[%s3 + $0xc8] sm:$0xff]
  %v2705 = vld [vmem:[%s3 + $0xd0] sm:$0xff]
  %v2706 = vld [vmem:[%s3 + $0xd8] sm:$0xff]
  %v2707 = vld [vmem:[%s3 + $0xe0] sm:$0xff]
  %v2708 = vld [vmem:[%s3 + $0xe8] sm:$0xff]
  %v2709 = vld [vmem:[%s3 + $0xf0] sm:$0xff]
  %v2710 = vld [vmem:[%s3 + $0xf8] sm:$0xff]
  %v2711 = vld [vmem:[%s3 + $0x100] sm:$0xff]
  %v2712 = vld [vmem:[%s3 + $0x108] sm:$0xff]
  %v2713 = vld [vmem:[%s3 + $0x110] sm:$0xff]
  %v2714 = vld [vmem:[%s3 + $0x118] sm:$0xff]
  %v2715 = vld [vmem:[%s3 + $0x120] sm:$0xff]
  %v2716 = vld [vmem:[%s3 + $0x128] sm:$0xff]
  %v2717 = vld [vmem:[%s3 + $0x130] sm:$0xff]
  %v2718 = vld [vmem:[%s3 + $0x138] sm:$0xff]
  %v2719 = vld [vmem:[%s3 + $0x140] sm:$0xff]
  %v2720 = vld [vmem:[%s3 + $0x148] sm:$0xff]
  %v2721 = vld [vmem:[%s3 + $0x150] sm:$0xff]
  %v2722 = vld [vmem:[%s3 + $0x158] sm:$0xff]
  %v2723 = vld [vmem:[%s3 + $0x160] sm:$0xff]
  %v2724 = vld [vmem:[%s3 + $0x168] sm:$0xff]
  %v2725 = vld [vmem:[%s3 + $0x170] sm:$0xff]
  %v2726 = vld [vmem:[%s3 + $0x178] sm:$0xff]
  %2727 = vmatpush.msra.mxu0 %v2724
  %2728 = vmatpush.msra.mxu0 %v2721
  %2729 = vmatpush.msra.mxu0 %v2718
  %2730 = vmatpush.msra.mxu0 %v2715
  %2731 = vmatpush.msra.mxu0 %v2712
  %2732 = vmatpush.msra.mxu0 %v2709
  %2733 = vmatpush.msra.mxu0 %v2706
  %2734 = vmatpush.msra.mxu0 %v2703
  %2735 = vmatpush.msra.mxu0 %v2700
  %2736 = vmatpush.msra.mxu0 %v2697
  %2737 = vmatpush.msra.mxu0 %v2694
  %2738 = vmatpush.msra.mxu0 %v2691
  %2739 = vmatpush.msra.mxu0 %v2688
  %2740 = vmatpush.msra.mxu0 %v2685
  %2741 = vmatpush.msra.mxu0 %v2682
  %2742 = vmatpush.msra.mxu0 %v2679
  %2743 = vmatmul.f32.gmra.mxu0 %v2514
  %v2744 = vpop.f32.mrf.mxu0
  %v2745 = vadd.f32 0.0, %v2744
  %2746 = vdwg.mxu0
  %2747 = vmatpush.msra.mxu0 %v2725
  %2748 = vmatpush.msra.mxu0 %v2722
  %2749 = vmatpush.msra.mxu0 %v2719
  %2750 = vmatpush.msra.mxu0 %v2716
  %2751 = vmatpush.msra.mxu0 %v2713
  %2752 = vmatpush.msra.mxu0 %v2710
  %2753 = vmatpush.msra.mxu0 %v2707
  %2754 = vmatpush.msra.mxu0 %v2704
  %2755 = vmatpush.msra.mxu0 %v2701
  %2756 = vmatpush.msra.mxu0 %v2698
  %2757 = vmatpush.msra.mxu0 %v2695
  %2758 = vmatpush.msra.mxu0 %v2692
  %2759 = vmatpush.msra.mxu0 %v2689
  %2760 = vmatpush.msra.mxu0 %v2686
  %2761 = vmatpush.msra.mxu0 %v2683
  %2762 = vmatpush.msra.mxu0 %v2680
  %2763 = vmatmul.f32.gmra.mxu0 %v2514
  %v2764 = vpop.f32.mrf.mxu0
  %v2765 = vadd.f32 0.0, %v2764
  %2766 = vdwg.mxu0
  %2767 = vmatpush.msra.mxu0 %v2726
  %2768 = vmatpush.msra.mxu0 %v2723
  %2769 = vmatpush.msra.mxu0 %v2720
  %2770 = vmatpush.msra.mxu0 %v2717
  %2771 = vmatpush.msra.mxu0 %v2714
  %2772 = vmatpush.msra.mxu0 %v2711
  %2773 = vmatpush.msra.mxu0 %v2708
  %2774 = vmatpush.msra.mxu0 %v2705
  %2775 = vmatpush.msra.mxu0 %v2702
  %2776 = vmatpush.msra.mxu0 %v2699
  %2777 = vmatpush.msra.mxu0 %v2696
  %2778 = vmatpush.msra.mxu0 %v2693
  %2779 = vmatpush.msra.mxu0 %v2690
  %2780 = vmatpush.msra.mxu0 %v2687
  %2781 = vmatpush.msra.mxu0 %v2684
  %2782 = vmatpush.msra.mxu0 %v2681
  %2783 = vmatmul.f32.gmra.mxu0 %v2514
  %v2784 = vpop.f32.mrf.mxu0
  %v2785 = vadd.f32 0.0, %v2784
  %2786 = vdwg.mxu0
  %v2787 = vadd.f32 %v2676, %v2745
  %v2788 = vsub.f32 0.0, %v2787
  %v2789 = vmul.f32 %v2788, 1.442695
  %v2790 = vpow.pop %v2789
  %v2791 = vadd.f32 %v2790, 1.0
  %v2792 = vrcp.pop %v2791
  %v2793 = vmul.f32 %v2791, %v2792
  %v2794 = vsub.f32 1.0, %v2793
  %v2795 = vmul.f32 %v2792, %v2794
  %v2796 = vadd.f32 %v2792, %v2795
  %vm2797 = vweird.f32 %v2791
  %vm2798 = vweird.f32 %v2792
  %vm2799 = vmor %vm2797, %vm2798
  %v2800 = vsel %vm2799, %v2792, %v2796
  %v2801 = vand.u32 2147483647, %v2791
  %vm2802 = vcmp.eq.f32.partialorder %v2801, 8.507059e+37
  %v2803 = vand.u32 %v2791, 2147483648
  %v2804 = vor.u32 1.1754944e-38, %v2803
  %v2805 = vsel %vm2802, %v2804, %v2800
  %v2806 = vmul.f32 1.0, %v2805
  %v2807 = vadd.f32 %v2677, %v2765
  %v2808 = vsub.f32 0.0, %v2807
  %v2809 = vmul.f32 %v2808, 1.442695
  %v2810 = vpow.pop %v2809
  %v2811 = vadd.f32 %v2810, 1.0
  %v2812 = vrcp.pop %v2811
  %v2813 = vmul.f32 %v2811, %v2812
  %v2814 = vsub.f32 1.0, %v2813
  %v2815 = vmul.f32 %v2812, %v2814
  %v2816 = vadd.f32 %v2812, %v2815
  %vm2817 = vweird.f32 %v2811
  %vm2818 = vweird.f32 %v2812
  %vm2819 = vmor %vm2817, %vm2818
  %v2820 = vsel %vm2819, %v2812, %v2816
  %v2821 = vand.u32 2147483647, %v2811
  %vm2822 = vcmp.eq.f32.partialorder %v2821, 8.507059e+37
  %v2823 = vand.u32 %v2811, 2147483648
  %v2824 = vor.u32 1.1754944e-38, %v2823
  %v2825 = vsel %vm2822, %v2824, %v2820
  %v2826 = vmul.f32 1.0, %v2825
  %v2827 = vadd.f32 %v2785, %v399
  %v2828 = vmul.f32 %v2806, %v2827
  %v2829 = vadd.f32 %v2678, %v2828
  %v2830 = vtanh.pop %v2829
  %v2831 = vsub.f32 1.0, %v2826
  %v2832 = vmul.f32 %v2831, %v2830
  %v2833 = vmul.f32 %v2826, %v2514
  %v2834 = vadd.f32 %v2832, %v2833
  %v2835 = vld [vmem:[%s407 + $0x18] sm:$0xff]
  %v2836 = vld [vmem:[%s407 + $0x20] sm:$0xff]
  %v2837 = vld [vmem:[%s407 + $0x28] sm:$0xff]
  %v2838 = vld [vmem:[%s4] sm:$0xff]
  %v2839 = vld [vmem:[%s4 + $0x8] sm:$0xff]
  %v2840 = vld [vmem:[%s4 + $0x10] sm:$0xff]
  %v2841 = vld [vmem:[%s4 + $0x18] sm:$0xff]
  %v2842 = vld [vmem:[%s4 + $0x20] sm:$0xff]
  %v2843 = vld [vmem:[%s4 + $0x28] sm:$0xff]
  %v2844 = vld [vmem:[%s4 + $0x30] sm:$0xff]
  %v2845 = vld [vmem:[%s4 + $0x38] sm:$0xff]
  %v2846 = vld [vmem:[%s4 + $0x40] sm:$0xff]
  %v2847 = vld [vmem:[%s4 + $0x48] sm:$0xff]
  %v2848 = vld [vmem:[%s4 + $0x50] sm:$0xff]
  %v2849 = vld [vmem:[%s4 + $0x58] sm:$0xff]
  %v2850 = vld [vmem:[%s4 + $0x60] sm:$0xff]
  %v2851 = vld [vmem:[%s4 + $0x68] sm:$0xff]
  %v2852 = vld [vmem:[%s4 + $0x70] sm:$0xff]
  %v2853 = vld [vmem:[%s4 + $0x78] sm:$0xff]
  %v2854 = vld [vmem:[%s4 + $0x80] sm:$0xff]
  %v2855 = vld [vmem:[%s4 + $0x88] sm:$0xff]
  %v2856 = vld [vmem:[%s4 + $0x90] sm:$0xff]
  %v2857 = vld [vmem:[%s4 + $0x98] sm:$0xff]
  %v2858 = vld [vmem:[%s4 + $0xa0] sm:$0xff]
  %v2859 = vld [vmem:[%s4 + $0xa8] sm:$0xff]
  %v2860 = vld [vmem:[%s4 + $0xb0] sm:$0xff]
  %v2861 = vld [vmem:[%s4 + $0xb8] sm:$0xff]
  %v2862 = vld [vmem:[%s4 + $0xc0] sm:$0xff]
  %v2863 = vld [vmem:[%s4 + $0xc8] sm:$0xff]
  %v2864 = vld [vmem:[%s4 + $0xd0] sm:$0xff]
  %v2865 = vld [vmem:[%s4 + $0xd8] sm:$0xff]
  %v2866 = vld [vmem:[%s4 + $0xe0] sm:$0xff]
  %v2867 = vld [vmem:[%s4 + $0xe8] sm:$0xff]
  %v2868 = vld [vmem:[%s4 + $0xf0] sm:$0xff]
  %v2869 = vld [vmem:[%s4 + $0xf8] sm:$0xff]
  %v2870 = vld [vmem:[%s4 + $0x100] sm:$0xff]
  %v2871 = vld [vmem:[%s4 + $0x108] sm:$0xff]
  %v2872 = vld [vmem:[%s4 + $0x110] sm:$0xff]
  %v2873 = vld [vmem:[%s4 + $0x118] sm:$0xff]
  %v2874 = vld [vmem:[%s4 + $0x120] sm:$0xff]
  %v2875 = vld [vmem:[%s4 + $0x128] sm:$0xff]
  %v2876 = vld [vmem:[%s4 + $0x130] sm:$0xff]
  %v2877 = vld [vmem:[%s4 + $0x138] sm:$0xff]
  %v2878 = vld [vmem:[%s4 + $0x140] sm:$0xff]
  %v2879 = vld [vmem:[%s4 + $0x148] sm:$0xff]
  %v2880 = vld [vmem:[%s4 + $0x150] sm:$0xff]
  %v2881 = vld [vmem:[%s4 + $0x158] sm:$0xff]
  %v2882 = vld [vmem:[%s4 + $0x160] sm:$0xff]
  %v2883 = vld [vmem:[%s4 + $0x168] sm:$0xff]
  %v2884 = vld [vmem:[%s4 + $0x170] sm:$0xff]
  %v2885 = vld [vmem:[%s4 + $0x178] sm:$0xff]
  %2886 = vmatpush.msra.mxu0 %v2883
  %2887 = vmatpush.msra.mxu0 %v2880
  %2888 = vmatpush.msra.mxu0 %v2877
  %2889 = vmatpush.msra.mxu0 %v2874
  %2890 = vmatpush.msra.mxu0 %v2871
  %2891 = vmatpush.msra.mxu0 %v2868
  %2892 = vmatpush.msra.mxu0 %v2865
  %2893 = vmatpush.msra.mxu0 %v2862
  %2894 = vmatpush.msra.mxu0 %v2859
  %2895 = vmatpush.msra.mxu0 %v2856
  %2896 = vmatpush.msra.mxu0 %v2853
  %2897 = vmatpush.msra.mxu0 %v2850
  %2898 = vmatpush.msra.mxu0 %v2847
  %2899 = vmatpush.msra.mxu0 %v2844
  %2900 = vmatpush.msra.mxu0 %v2841
  %2901 = vmatpush.msra.mxu0 %v2838
  %2902 = vmatmul.f32.gmra.mxu0 %v2673
  %v2903 = vpop.f32.mrf.mxu0
  %v2904 = vadd.f32 0.0, %v2903
  %2905 = vdwg.mxu0
  %2906 = vmatpush.msra.mxu0 %v2884
  %2907 = vmatpush.msra.mxu0 %v2881
  %2908 = vmatpush.msra.mxu0 %v2878
  %2909 = vmatpush.msra.mxu0 %v2875
  %2910 = vmatpush.msra.mxu0 %v2872
  %2911 = vmatpush.msra.mxu0 %v2869
  %2912 = vmatpush.msra.mxu0 %v2866
  %2913 = vmatpush.msra.mxu0 %v2863
  %2914 = vmatpush.msra.mxu0 %v2860
  %2915 = vmatpush.msra.mxu0 %v2857
  %2916 = vmatpush.msra.mxu0 %v2854
  %2917 = vmatpush.msra.mxu0 %v2851
  %2918 = vmatpush.msra.mxu0 %v2848
  %2919 = vmatpush.msra.mxu0 %v2845
  %2920 = vmatpush.msra.mxu0 %v2842
  %2921 = vmatpush.msra.mxu0 %v2839
  %2922 = vmatmul.f32.gmra.mxu0 %v2673
  %v2923 = vpop.f32.mrf.mxu0
  %v2924 = vadd.f32 0.0, %v2923
  %2925 = vdwg.mxu0
  %2926 = vmatpush.msra.mxu0 %v2885
  %2927 = vmatpush.msra.mxu0 %v2882
  %2928 = vmatpush.msra.mxu0 %v2879
  %2929 = vmatpush.msra.mxu0 %v2876
  %2930 = vmatpush.msra.mxu0 %v2873
  %2931 = vmatpush.msra.mxu0 %v2870
  %2932 = vmatpush.msra.mxu0 %v2867
  %2933 = vmatpush.msra.mxu0 %v2864
  %2934 = vmatpush.msra.mxu0 %v2861
  %2935 = vmatpush.msra.mxu0 %v2858
  %2936 = vmatpush.msra.mxu0 %v2855
  %2937 = vmatpush.msra.mxu0 %v2852
  %2938 = vmatpush.msra.mxu0 %v2849
  %2939 = vmatpush.msra.mxu0 %v2846
  %2940 = vmatpush.msra.mxu0 %v2843
  %2941 = vmatpush.msra.mxu0 %v2840
  %2942 = vmatmul.f32.gmra.mxu0 %v2673
  %v2943 = vpop.f32.mrf.mxu0
  %v2944 = vadd.f32 0.0, %v2943
  %2945 = vdwg.mxu0
  %v2946 = vadd.f32 %v2835, %v2904
  %v2947 = vsub.f32 0.0, %v2946
  %v2948 = vmul.f32 %v2947, 1.442695
  %v2949 = vpow.pop %v2948
  %v2950 = vadd.f32 %v2949, 1.0
  %v2951 = vrcp.pop %v2950
  %v2952 = vmul.f32 %v2950, %v2951
  %v2953 = vsub.f32 1.0, %v2952
  %v2954 = vmul.f32 %v2951, %v2953
  %v2955 = vadd.f32 %v2951, %v2954
  %vm2956 = vweird.f32 %v2950
  %vm2957 = vweird.f32 %v2951
  %vm2958 = vmor %vm2956, %vm2957
  %v2959 = vsel %vm2958, %v2951, %v2955
  %v2960 = vand.u32 2147483647, %v2950
  %vm2961 = vcmp.eq.f32.partialorder %v2960, 8.507059e+37
  %v2962 = vand.u32 %v2950, 2147483648
  %v2963 = vor.u32 1.1754944e-38, %v2962
  %v2964 = vsel %vm2961, %v2963, %v2959
  %v2965 = vmul.f32 1.0, %v2964
  %v2966 = vadd.f32 %v2836, %v2924
  %v2967 = vsub.f32 0.0, %v2966
  %v2968 = vmul.f32 %v2967, 1.442695
  %v2969 = vpow.pop %v2968
  %v2970 = vadd.f32 %v2969, 1.0
  %v2971 = vrcp.pop %v2970
  %v2972 = vmul.f32 %v2970, %v2971
  %v2973 = vsub.f32 1.0, %v2972
  %v2974 = vmul.f32 %v2971, %v2973
  %v2975 = vadd.f32 %v2971, %v2974
  %vm2976 = vweird.f32 %v2970
  %vm2977 = vweird.f32 %v2971
  %vm2978 = vmor %vm2976, %vm2977
  %v2979 = vsel %vm2978, %v2971, %v2975
  %v2980 = vand.u32 2147483647, %v2970
  %vm2981 = vcmp.eq.f32.partialorder %v2980, 8.507059e+37
  %v2982 = vand.u32 %v2970, 2147483648
  %v2983 = vor.u32 1.1754944e-38, %v2982
  %v2984 = vsel %vm2981, %v2983, %v2979
  %v2985 = vmul.f32 1.0, %v2984
  %v2986 = vadd.f32 %v2944, %v403
  %v2987 = vmul.f32 %v2965, %v2986
  %v2988 = vadd.f32 %v2837, %v2987
  %v2989 = vtanh.pop %v2988
  %v2990 = vsub.f32 1.0, %v2985
  %v2991 = vmul.f32 %v2990, %v2989
  %v2992 = vmul.f32 %v2985, %v2673
  %v2993 = vadd.f32 %v2991, %v2992
  %2994 = vst [vmem:[%s730] sm:$0xff] %v2834
  %2995 = vst [vmem:[%s7 + $0x8] sm:$0xff] %v2993
  // Predicated region
  $region30: #{grud_forward.3} parent=0 // pred_check
    _
  $region31: #{grud_forward.3} parent=0 // pred_check_branch
    %2997 = sbr.rel (0) target = $region33
  $region32: #{grud_forward.3} parent=0 // pred_region
    _
  $region33: #{grud_forward.3} parent=0 // pred_fallthru
    _
  // Predicated region
  $region34: #{grud_forward.3} parent=0 // pred_check
    _
  $region35: #{grud_forward.3} parent=0 // pred_check_branch
    %2999 = sbr.rel (0) target = $region37
  $region36: #{grud_forward.3} parent=0 // pred_region
    _
  $region37: #{grud_forward.3} parent=0 // pred_fallthru
    _

// kernel: grud_forward.4
$region0: #{grud_forward.4}
  #allocation0 [shape = 'u32[]', space=smem, size = 0x4, offset = 0x4, fixed_abs, tag = 'smem constant byte address 0x4 - core index']
  #allocation1 [shape = 'u32[72,128]{1,0:T(1,128)}', space=vmem, size = 0x9000, scoped, tag = 'internal scratch']
  #allocation2 [shape = 'f32[64,768]{1,0:T(8,128)}', space=vmem, size = 0x30000, scoped, tag = 'scratch operand']
  %s0 = inlined_call_operand.vmem [shape: f32[64,256], index: 0, kind: input, shape index: {}]
  %s1 = inlined_call_operand.vmem [shape: f32[256,768], index: 1, kind: input, shape index: {}]
  %s2 = inlined_call_operand.vmem [shape: f32[1,768], index: 2, kind: input, shape index: {}]
  %s3 = inlined_call_operand.vmem [shape: f32[128,384], index: 3, kind: input, shape index: {}]
  %s4 = inlined_call_operand.vmem [shape: f32[128,384], index: 4, kind: input, shape index: {}]
  %s5 = inlined_call_operand.vmem [shape: f32[1,128], index: 5, kind: input, shape index: {}]
  %s6 = inlined_call_operand.vmem [shape: f32[1,128], index: 6, kind: input, shape index: {}]
  %s7 = inlined_call_operand.vmem [shape: f32[8,8,256], index: 7, kind: output, shape index: {}]
  %s8 = sld [smem:[#allocation0]]
  $region38: #{grud_forward.4} parent=0
    _
  %s10 = ssub.s32 1, %s8
  %s11 = scalar_select 0, %s10, %s8
  // Predicated region
  $region2: #{grud_forward.4} parent=0 // pred_check
    _
  $region3: #{grud_forward.4} parent=0 // pred_check_branch
    %13 = sbr.rel (0) target = $region5
  $region4: #{grud_forward.4} parent=0 // pred_region
    _
  $region5: #{grud_forward.4} parent=0 // pred_fallthru
    _
  // Predicated region
  $region6: #{grud_forward.4} parent=0 // pred_check
    _
  $region7: #{grud_forward.4} parent=0 // pred_check_branch
    %15 = sbr.rel (0) target = $region9
  $region8: #{grud_forward.4} parent=0 // pred_region
    _
  $region9: #{grud_forward.4} parent=0 // pred_fallthru
    _
  // Predicated region
  $region10: #{grud_forward.4} parent=0 // pred_check
    _
  $region11: #{grud_forward.4} parent=0 // pred_check_branch
    %17 = sbr.rel (0) target = $region13
  $region12: #{grud_forward.4} parent=0 // pred_region
    _
  $region13: #{grud_forward.4} parent=0 // pred_fallthru
    _
  // Predicated region
  $region14: #{grud_forward.4} parent=0 // pred_check
    _
  $region15: #{grud_forward.4} parent=0 // pred_check_branch
    %19 = sbr.rel (0) target = $region17
  $region16: #{grud_forward.4} parent=0 // pred_region
    _
  $region17: #{grud_forward.4} parent=0 // pred_fallthru
    _
  // Predicated region
  $region18: #{grud_forward.4} parent=0 // pred_check
    _
  $region19: #{grud_forward.4} parent=0 // pred_check_branch
    %21 = sbr.rel (0) target = $region21
  $region20: #{grud_forward.4} parent=0 // pred_region
    _
  $region21: #{grud_forward.4} parent=0 // pred_fallthru
    _
  // Predicated region
  $region22: #{grud_forward.4} parent=0 // pred_check
    _
  $region23: #{grud_forward.4} parent=0 // pred_check_branch
    %23 = sbr.rel (0) target = $region25
  $region24: #{grud_forward.4} parent=0 // pred_region
    _
  $region25: #{grud_forward.4} parent=0 // pred_fallthru
    _
  // Predicated region
  $region26: #{grud_forward.4} parent=0 // pred_check
    _
  $region27: #{grud_forward.4} parent=0 // pred_check_branch
    %25 = sbr.rel (0) target = $region29
  $region28: #{grud_forward.4} parent=0 // pred_region
    _
  $region29: #{grud_forward.4} parent=0 // pred_fallthru
    _
  %v26 = vld [vmem:[%s0] sm:$0xff]
  %v27 = vld [vmem:[%s0 + $0x8] sm:$0xff]
  %v28 = vld [vmem:[%s0 + $0x10] sm:$0xff]
  %v29 = vld [vmem:[%s0 + $0x18] sm:$0xff]
  %v30 = vld [vmem:[%s0 + $0x20] sm:$0xff]
  %v31 = vld [vmem:[%s0 + $0x28] sm:$0xff]
  %v32 = vld [vmem:[%s0 + $0x30] sm:$0xff]
  %v33 = vld [vmem:[%s0 + $0x38] sm:$0xff]
  %v34 = vld [vmem:[%s0 + $0x40] sm:$0xff]
  %v35 = vld [vmem:[%s0 + $0x48] sm:$0xff]
  %v36 = vld [vmem:[%s0 + $0x50] sm:$0xff]
  %v37 = vld [vmem:[%s0 + $0x58] sm:$0xff]
  %v38 = vld [vmem:[%s0 + $0x60] sm:$0xff]
  %v39 = vld [vmem:[%s0 + $0x68] sm:$0xff]
  %v40 = vld [vmem:[%s0 + $0x70] sm:$0xff]
  %v41 = vld [vmem:[%s0 + $0x78] sm:$0xff]
  %v42 = vld [vmem:[%s1] sm:$0xff]
  %v43 = vld [vmem:[%s1 + $0x8] sm:$0xff]
  %v44 = vld [vmem:[%s1 + $0x10] sm:$0xff]
  %v45 = vld [vmem:[%s1 + $0x18] sm:$0xff]
  %v46 = vld [vmem:[%s1 + $0x20] sm:$0xff]
  %v47 = vld [vmem:[%s1 + $0x28] sm:$0xff]
  %v48 = vld [vmem:[%s1 + $0x30] sm:$0xff]
  %v49 = vld [vmem:[%s1 + $0x38] sm:$0xff]
  %v50 = vld [vmem:[%s1 + $0x40] sm:$0xff]
  %v51 = vld [vmem:[%s1 + $0x48] sm:$0xff]
  %v52 = vld [vmem:[%s1 + $0x50] sm:$0xff]
  %v53 = vld [vmem:[%s1 + $0x58] sm:$0xff]
  %v54 = vld [vmem:[%s1 + $0x60] sm:$0xff]
  %v55 = vld [vmem:[%s1 + $0x68] sm:$0xff]
  %v56 = vld [vmem:[%s1 + $0x70] sm:$0xff]
  %v57 = vld [vmem:[%s1 + $0x78] sm:$0xff]
  %v58 = vld [vmem:[%s1 + $0x80] sm:$0xff]
  %v59 = vld [vmem:[%s1 + $0x88] sm:$0xff]
  %v60 = vld [vmem:[%s1 + $0x90] sm:$0xff]
  %v61 = vld [vmem:[%s1 + $0x98] sm:$0xff]
  %v62 = vld [vmem:[%s1 + $0xa0] sm:$0xff]
  %v63 = vld [vmem:[%s1 + $0xa8] sm:$0xff]
  %v64 = vld [vmem:[%s1 + $0xb0] sm:$0xff]
  %v65 = vld [vmem:[%s1 + $0xb8] sm:$0xff]
  %v66 = vld [vmem:[%s1 + $0xc0] sm:$0xff]
  %v67 = vld [vmem:[%s1 + $0xc8] sm:$0xff]
  %v68 = vld [vmem:[%s1 + $0xd0] sm:$0xff]
  %v69 = vld [vmem:[%s1 + $0xd8] sm:$0xff]
  %v70 = vld [vmem:[%s1 + $0xe0] sm:$0xff]
  %v71 = vld [vmem:[%s1 + $0xe8] sm:$0xff]
  %v72 = vld [vmem:[%s1 + $0xf0] sm:$0xff]
  %v73 = vld [vmem:[%s1 + $0xf8] sm:$0xff]
  %v74 = vld [vmem:[%s1 + $0x100] sm:$0xff]
  %v75 = vld [vmem:[%s1 + $0x108] sm:$0xff]
  %v76 = vld [vmem:[%s1 + $0x110] sm:$0xff]
  %v77 = vld [vmem:[%s1 + $0x118] sm:$0xff]
  %v78 = vld [vmem:[%s1 + $0x120] sm:$0xff]
  %v79 = vld [vmem:[%s1 + $0x128] sm:$0xff]
  %v80 = vld [vmem:[%s1 + $0x130] sm:$0xff]
  %v81 = vld [vmem:[%s1 + $0x138] sm:$0xff]
  %v82 = vld [vmem:[%s1 + $0x140] sm:$0xff]
  %v83 = vld [vmem:[%s1 + $0x148] sm:$0xff]
  %v84 = vld [vmem:[%s1 + $0x150] sm:$0xff]
  %v85 = vld [vmem:[%s1 + $0x158] sm:$0xff]
  %v86 = vld [vmem:[%s1 + $0x160] sm:$0xff]
  %v87 = vld [vmem:[%s1 + $0x168] sm:$0xff]
  %v88 = vld [vmem:[%s1 + $0x170] sm:$0xff]
  %v89 = vld [vmem:[%s1 + $0x178] sm:$0xff]
  %v90 = vld [vmem:[%s1 + $0x180] sm:$0xff]
  %v91 = vld [vmem:[%s1 + $0x188] sm:$0xff]
  %v92 = vld [vmem:[%s1 + $0x190] sm:$0xff]
  %v93 = vld [vmem:[%s1 + $0x198] sm:$0xff]
  %v94 = vld [vmem:[%s1 + $0x1a0] sm:$0xff]
  %v95 = vld [vmem:[%s1 + $0x1a8] sm:$0xff]
  %v96 = vld [vmem:[%s1 + $0x1b0] sm:$0xff]
  %v97 = vld [vmem:[%s1 + $0x1b8] sm:$0xff]
  %v98 = vld [vmem:[%s1 + $0x1c0] sm:$0xff]
  %v99 = vld [vmem:[%s1 + $0x1c8] sm:$0xff]
  %v100 = vld [vmem:[%s1 + $0x1d0] sm:$0xff]
  %v101 = vld [vmem:[%s1 + $0x1d8] sm:$0xff]
  %v102 = vld [vmem:[%s1 + $0x1e0] sm:$0xff]
  %v103 = vld [vmem:[%s1 + $0x1e8] sm:$0xff]
  %v104 = vld [vmem:[%s1 + $0x1f0] sm:$0xff]
  %v105 = vld [vmem:[%s1 + $0x1f8] sm:$0xff]
  %v106 = vld [vmem:[%s1 + $0x200] sm:$0xff]
  %v107 = vld [vmem:[%s1 + $0x208] sm:$0xff]
  %v108 = vld [vmem:[%s1 + $0x210] sm:$0xff]
  %v109 = vld [vmem:[%s1 + $0x218] sm:$0xff]
  %v110 = vld [vmem:[%s1 + $0x220] sm:$0xff]
  %v111 = vld [vmem:[%s1 + $0x228] sm:$0xff]
  %v112 = vld [vmem:[%s1 + $0x230] sm:$0xff]
  %v113 = vld [vmem:[%s1 + $0x238] sm:$0xff]
  %v114 = vld [vmem:[%s1 + $0x240] sm:$0xff]
  %v115 = vld [vmem:[%s1 + $0x248] sm:$0xff]
  %v116 = vld [vmem:[%s1 + $0x250] sm:$0xff]
  %v117 = vld [vmem:[%s1 + $0x258] sm:$0xff]
  %v118 = vld [vmem:[%s1 + $0x260] sm:$0xff]
  %v119 = vld [vmem:[%s1 + $0x268] sm:$0xff]
  %v120 = vld [vmem:[%s1 + $0x270] sm:$0xff]
  %v121 = vld [vmem:[%s1 + $0x278] sm:$0xff]
  %v122 = vld [vmem:[%s1 + $0x280] sm:$0xff]
  %v123 = vld [vmem:[%s1 + $0x288] sm:$0xff]
  %v124 = vld [vmem:[%s1 + $0x290] sm:$0xff]
  %v125 = vld [vmem:[%s1 + $0x298] sm:$0xff]
  %v126 = vld [vmem:[%s1 + $0x2a0] sm:$0xff]
  %v127 = vld [vmem:[%s1 + $0x2a8] sm:$0xff]
  %v128 = vld [vmem:[%s1 + $0x2b0] sm:$0xff]
  %v129 = vld [vmem:[%s1 + $0x2b8] sm:$0xff]
  %v130 = vld [vmem:[%s1 + $0x2c0] sm:$0xff]
  %v131 = vld [vmem:[%s1 + $0x2c8] sm:$0xff]
  %v132 = vld [vmem:[%s1 + $0x2d0] sm:$0xff]
  %v133 = vld [vmem:[%s1 + $0x2d8] sm:$0xff]
  %v134 = vld [vmem:[%s1 + $0x2e0] sm:$0xff]
  %v135 = vld [vmem:[%s1 + $0x2e8] sm:$0xff]
  %v136 = vld [vmem:[%s1 + $0x2f0] sm:$0xff]
  %v137 = vld [vmem:[%s1 + $0x2f8] sm:$0xff]
  %v138 = vld [vmem:[%s1 + $0x300] sm:$0xff]
  %v139 = vld [vmem:[%s1 + $0x308] sm:$0xff]
  %v140 = vld [vmem:[%s1 + $0x310] sm:$0xff]
  %v141 = vld [vmem:[%s1 + $0x318] sm:$0xff]
  %v142 = vld [vmem:[%s1 + $0x320] sm:$0xff]
  %v143 = vld [vmem:[%s1 + $0x328] sm:$0xff]
  %v144 = vld [vmem:[%s1 + $0x330] sm:$0xff]
  %v145 = vld [vmem:[%s1 + $0x338] sm:$0xff]
  %v146 = vld [vmem:[%s1 + $0x340] sm:$0xff]
  %v147 = vld [vmem:[%s1 + $0x348] sm:$0xff]
  %v148 = vld [vmem:[%s1 + $0x350] sm:$0xff]
  %v149 = vld [vmem:[%s1 + $0x358] sm:$0xff]
  %v150 = vld [vmem:[%s1 + $0x360] sm:$0xff]
  %v151 = vld [vmem:[%s1 + $0x368] sm:$0xff]
  %v152 = vld [vmem:[%s1 + $0x370] sm:$0xff]
  %v153 = vld [vmem:[%s1 + $0x378] sm:$0xff]
  %v154 = vld [vmem:[%s1 + $0x380] sm:$0xff]
  %v155 = vld [vmem:[%s1 + $0x388] sm:$0xff]
  %v156 = vld [vmem:[%s1 + $0x390] sm:$0xff]
  %v157 = vld [vmem:[%s1 + $0x398] sm:$0xff]
  %v158 = vld [vmem:[%s1 + $0x3a0] sm:$0xff]
  %v159 = vld [vmem:[%s1 + $0x3a8] sm:$0xff]
  %v160 = vld [vmem:[%s1 + $0x3b0] sm:$0xff]
  %v161 = vld [vmem:[%s1 + $0x3b8] sm:$0xff]
  %v162 = vld [vmem:[%s1 + $0x3c0] sm:$0xff]
  %v163 = vld [vmem:[%s1 + $0x3c8] sm:$0xff]
  %v164 = vld [vmem:[%s1 + $0x3d0] sm:$0xff]
  %v165 = vld [vmem:[%s1 + $0x3d8] sm:$0xff]
  %v166 = vld [vmem:[%s1 + $0x3e0] sm:$0xff]
  %v167 = vld [vmem:[%s1 + $0x3e8] sm:$0xff]
  %v168 = vld [vmem:[%s1 + $0x3f0] sm:$0xff]
  %v169 = vld [vmem:[%s1 + $0x3f8] sm:$0xff]
  %v170 = vld [vmem:[%s1 + $0x400] sm:$0xff]
  %v171 = vld [vmem:[%s1 + $0x408] sm:$0xff]
  %v172 = vld [vmem:[%s1 + $0x410] sm:$0xff]
  %v173 = vld [vmem:[%s1 + $0x418] sm:$0xff]
  %v174 = vld [vmem:[%s1 + $0x420] sm:$0xff]
  %v175 = vld [vmem:[%s1 + $0x428] sm:$0xff]
  %v176 = vld [vmem:[%s1 + $0x430] sm:$0xff]
  %v177 = vld [vmem:[%s1 + $0x438] sm:$0xff]
  %v178 = vld [vmem:[%s1 + $0x440] sm:$0xff]
  %v179 = vld [vmem:[%s1 + $0x448] sm:$0xff]
  %v180 = vld [vmem:[%s1 + $0x450] sm:$0xff]
  %v181 = vld [vmem:[%s1 + $0x458] sm:$0xff]
  %v182 = vld [vmem:[%s1 + $0x460] sm:$0xff]
  %v183 = vld [vmem:[%s1 + $0x468] sm:$0xff]
  %v184 = vld [vmem:[%s1 + $0x470] sm:$0xff]
  %v185 = vld [vmem:[%s1 + $0x478] sm:$0xff]
  %v186 = vld [vmem:[%s1 + $0x480] sm:$0xff]
  %v187 = vld [vmem:[%s1 + $0x488] sm:$0xff]
  %v188 = vld [vmem:[%s1 + $0x490] sm:$0xff]
  %v189 = vld [vmem:[%s1 + $0x498] sm:$0xff]
  %v190 = vld [vmem:[%s1 + $0x4a0] sm:$0xff]
  %v191 = vld [vmem:[%s1 + $0x4a8] sm:$0xff]
  %v192 = vld [vmem:[%s1 + $0x4b0] sm:$0xff]
  %v193 = vld [vmem:[%s1 + $0x4b8] sm:$0xff]
  %v194 = vld [vmem:[%s1 + $0x4c0] sm:$0xff]
  %v195 = vld [vmem:[%s1 + $0x4c8] sm:$0xff]
  %v196 = vld [vmem:[%s1 + $0x4d0] sm:$0xff]
  %v197 = vld [vmem:[%s1 + $0x4d8] sm:$0xff]
  %v198 = vld [vmem:[%s1 + $0x4e0] sm:$0xff]
  %v199 = vld [vmem:[%s1 + $0x4e8] sm:$0xff]
  %v200 = vld [vmem:[%s1 + $0x4f0] sm:$0xff]
  %v201 = vld [vmem:[%s1 + $0x4f8] sm:$0xff]
  %v202 = vld [vmem:[%s1 + $0x500] sm:$0xff]
  %v203 = vld [vmem:[%s1 + $0x508] sm:$0xff]
  %v204 = vld [vmem:[%s1 + $0x510] sm:$0xff]
  %v205 = vld [vmem:[%s1 + $0x518] sm:$0xff]
  %v206 = vld [vmem:[%s1 + $0x520] sm:$0xff]
  %v207 = vld [vmem:[%s1 + $0x528] sm:$0xff]
  %v208 = vld [vmem:[%s1 + $0x530] sm:$0xff]
  %v209 = vld [vmem:[%s1 + $0x538] sm:$0xff]
  %v210 = vld [vmem:[%s1 + $0x540] sm:$0xff]
  %v211 = vld [vmem:[%s1 + $0x548] sm:$0xff]
  %v212 = vld [vmem:[%s1 + $0x550] sm:$0xff]
  %v213 = vld [vmem:[%s1 + $0x558] sm:$0xff]
  %v214 = vld [vmem:[%s1 + $0x560] sm:$0xff]
  %v215 = vld [vmem:[%s1 + $0x568] sm:$0xff]
  %v216 = vld [vmem:[%s1 + $0x570] sm:$0xff]
  %v217 = vld [vmem:[%s1 + $0x578] sm:$0xff]
  %v218 = vld [vmem:[%s1 + $0x580] sm:$0xff]
  %v219 = vld [vmem:[%s1 + $0x588] sm:$0xff]
  %v220 = vld [vmem:[%s1 + $0x590] sm:$0xff]
  %v221 = vld [vmem:[%s1 + $0x598] sm:$0xff]
  %v222 = vld [vmem:[%s1 + $0x5a0] sm:$0xff]
  %v223 = vld [vmem:[%s1 + $0x5a8] sm:$0xff]
  %v224 = vld [vmem:[%s1 + $0x5b0] sm:$0xff]
  %v225 = vld [vmem:[%s1 + $0x5b8] sm:$0xff]
  %v226 = vld [vmem:[%s1 + $0x5c0] sm:$0xff]
  %v227 = vld [vmem:[%s1 + $0x5c8] sm:$0xff]
  %v228 = vld [vmem:[%s1 + $0x5d0] sm:$0xff]
  %v229 = vld [vmem:[%s1 + $0x5d8] sm:$0xff]
  %v230 = vld [vmem:[%s1 + $0x5e0] sm:$0xff]
  %v231 = vld [vmem:[%s1 + $0x5e8] sm:$0xff]
  %v232 = vld [vmem:[%s1 + $0x5f0] sm:$0xff]
  %v233 = vld [vmem:[%s1 + $0x5f8] sm:$0xff]
  %v234 = vld [vmem:[%s2] sm:$0x3f]
  %v236 = vperm.slane %v234, 0
  %v237 = vperm.slane %v234, 1
  %v238 = vperm.slane %v234, 2
  %v239 = vperm.slane %v234, 3
  %v240 = vperm.slane %v234, 4
  %v241 = vperm.slane %v234, 5
  %248 = vmatpush.msra.mxu0 %v132
  %249 = vmatpush.msra.mxu0 %v126
  %250 = vmatpush.msra.mxu0 %v120
  %251 = vmatpush.msra.mxu0 %v114
  %252 = vmatpush.msra.mxu0 %v108
  %253 = vmatpush.msra.mxu0 %v102
  %254 = vmatpush.msra.mxu0 %v96
  %255 = vmatpush.msra.mxu0 %v90
  %256 = vmatpush.msra.mxu0 %v84
  %257 = vmatpush.msra.mxu0 %v78
  %258 = vmatpush.msra.mxu0 %v72
  %259 = vmatpush.msra.mxu0 %v66
  %260 = vmatpush.msra.mxu0 %v60
  %261 = vmatpush.msra.mxu0 %v54
  %262 = vmatpush.msra.mxu0 %v48
  %263 = vmatpush.msra.mxu0 %v42
  %264 = vmatmul.f32.gmra.mxu0 %v26
  %v265 = vpop.f32.mrf.mxu0
  %v266 = vadd.f32 %v236, %v265
  %267 = vmatmul.f32.gmra.mxu0 %v28
  %v268 = vpop.f32.mrf.mxu0
  %v269 = vadd.f32 %v236, %v268
  %270 = vmatmul.f32.gmra.mxu0 %v30
  %v271 = vpop.f32.mrf.mxu0
  %v272 = vadd.f32 %v236, %v271
  %273 = vmatmul.f32.gmra.mxu0 %v32
  %v274 = vpop.f32.mrf.mxu0
  %v275 = vadd.f32 %v236, %v274
  %276 = vmatmul.f32.gmra.mxu0 %v34
  %v277 = vpop.f32.mrf.mxu0
  %v278 = vadd.f32 %v236, %v277
  %279 = vmatmul.f32.gmra.mxu0 %v36
  %v280 = vpop.f32.mrf.mxu0
  %v281 = vadd.f32 %v236, %v280
  %282 = vmatmul.f32.gmra.mxu0 %v38
  %v283 = vpop.f32.mrf.mxu0
  %v284 = vadd.f32 %v236, %v283
  %285 = vmatmul.f32.gmra.mxu0 %v40
  %v286 = vpop.f32.mrf.mxu0
  %v287 = vadd.f32 %v236, %v286
  %288 = vdwg.mxu0
  %289 = vmatpush.msra.mxu0 %v228
  %290 = vmatpush.msra.mxu0 %v222
  %291 = vmatpush.msra.mxu0 %v216
  %292 = vmatpush.msra.mxu0 %v210
  %293 = vmatpush.msra.mxu0 %v204
  %294 = vmatpush.msra.mxu0 %v198
  %295 = vmatpush.msra.mxu0 %v192
  %296 = vmatpush.msra.mxu0 %v186
  %297 = vmatpush.msra.mxu0 %v180
  %298 = vmatpush.msra.mxu0 %v174
  %299 = vmatpush.msra.mxu0 %v168
  %300 = vmatpush.msra.mxu0 %v162
  %301 = vmatpush.msra.mxu0 %v156
  %302 = vmatpush.msra.mxu0 %v150
  %303 = vmatpush.msra.mxu0 %v144
  %304 = vmatpush.msra.mxu0 %v138
  %305 = vmatmul.f32.gmra.mxu0 %v27
  %v306 = vpop.f32.mrf.mxu0
  %v307 = vadd.f32 %v266, %v306
  %308 = vmatmul.f32.gmra.mxu0 %v29
  %v309 = vpop.f32.mrf.mxu0
  %v310 = vadd.f32 %v269, %v309
  %311 = vmatmul.f32.gmra.mxu0 %v31
  %v312 = vpop.f32.mrf.mxu0
  %v313 = vadd.f32 %v272, %v312
  %314 = vmatmul.f32.gmra.mxu0 %v33
  %v315 = vpop.f32.mrf.mxu0
  %v316 = vadd.f32 %v275, %v315
  %317 = vmatmul.f32.gmra.mxu0 %v35
  %v318 = vpop.f32.mrf.mxu0
  %v319 = vadd.f32 %v278, %v318
  %320 = vmatmul.f32.gmra.mxu0 %v37
  %v321 = vpop.f32.mrf.mxu0
  %v322 = vadd.f32 %v281, %v321
  %323 = vmatmul.f32.gmra.mxu0 %v39
  %v324 = vpop.f32.mrf.mxu0
  %v325 = vadd.f32 %v284, %v324
  %326 = vmatmul.f32.gmra.mxu0 %v41
  %v327 = vpop.f32.mrf.mxu0
  %v328 = vadd.f32 %v287, %v327
  %329 = vdwg.mxu0
  %330 = vmatpush.msra.mxu0 %v133
  %331 = vmatpush.msra.mxu0 %v127
  %332 = vmatpush.msra.mxu0 %v121
  %333 = vmatpush.msra.mxu0 %v115
  %334 = vmatpush.msra.mxu0 %v109
  %335 = vmatpush.msra.mxu0 %v103
  %336 = vmatpush.msra.mxu0 %v97
  %337 = vmatpush.msra.mxu0 %v91
  %338 = vmatpush.msra.mxu0 %v85
  %339 = vmatpush.msra.mxu0 %v79
  %340 = vmatpush.msra.mxu0 %v73
  %341 = vmatpush.msra.mxu0 %v67
  %342 = vmatpush.msra.mxu0 %v61
  %343 = vmatpush.msra.mxu0 %v55
  %344 = vmatpush.msra.mxu0 %v49
  %345 = vmatpush.msra.mxu0 %v43
  %346 = vmatmul.f32.gmra.mxu0 %v26
  %v347 = vpop.f32.mrf.mxu0
  %v348 = vadd.f32 %v237, %v347
  %349 = vmatmul.f32.gmra.mxu0 %v28
  %v350 = vpop.f32.mrf.mxu0
  %v351 = vadd.f32 %v237, %v350
  %352 = vmatmul.f32.gmra.mxu0 %v30
  %v353 = vpop.f32.mrf.mxu0
  %v354 = vadd.f32 %v237, %v353
  %355 = vmatmul.f32.gmra.mxu0 %v32
  %v356 = vpop.f32.mrf.mxu0
  %v357 = vadd.f32 %v237, %v356
  %358 = vmatmul.f32.gmra.mxu0 %v34
  %v359 = vpop.f32.mrf.mxu0
  %v360 = vadd.f32 %v237, %v359
  %361 = vmatmul.f32.gmra.mxu0 %v36
  %v362 = vpop.f32.mrf.mxu0
  %v363 = vadd.f32 %v237, %v362
  %364 = vmatmul.f32.gmra.mxu0 %v38
  %v365 = vpop.f32.mrf.mxu0
  %v366 = vadd.f32 %v237, %v365
  %367 = vmatmul.f32.gmra.mxu0 %v40
  %v368 = vpop.f32.mrf.mxu0
  %v369 = vadd.f32 %v237, %v368
  %370 = vdwg.mxu0
  %371 = vmatpush.msra.mxu0 %v229
  %372 = vmatpush.msra.mxu0 %v223
  %373 = vmatpush.msra.mxu0 %v217
  %374 = vmatpush.msra.mxu0 %v211
  %375 = vmatpush.msra.mxu0 %v205
  %376 = vmatpush.msra.mxu0 %v199
  %377 = vmatpush.msra.mxu0 %v193
  %378 = vmatpush.msra.mxu0 %v187
  %379 = vmatpush.msra.mxu0 %v181
  %380 = vmatpush.msra.mxu0 %v175
  %381 = vmatpush.msra.mxu0 %v169
  %382 = vmatpush.msra.mxu0 %v163
  %383 = vmatpush.msra.mxu0 %v157
  %384 = vmatpush.msra.mxu0 %v151
  %385 = vmatpush.msra.mxu0 %v145
  %386 = vmatpush.msra.mxu0 %v139
  %387 = vmatmul.f32.gmra.mxu0 %v27
  %v388 = vpop.f32.mrf.mxu0
  %v389 = vadd.f32 %v348, %v388
  %390 = vmatmul.f32.gmra.mxu0 %v29
  %v391 = vpop.f32.mrf.mxu0
  %v392 = vadd.f32 %v351, %v391
  %393 = vmatmul.f32.gmra.mxu0 %v31
  %v394 = vpop.f32.mrf.mxu0
  %v395 = vadd.f32 %v354, %v394
  %396 = vmatmul.f32.gmra.mxu0 %v33
  %v397 = vpop.f32.mrf.mxu0
  %v398 = vadd.f32 %v357, %v397
  %399 = vmatmul.f32.gmra.mxu0 %v35
  %v400 = vpop.f32.mrf.mxu0
  %v401 = vadd.f32 %v360, %v400
  %402 = vmatmul.f32.gmra.mxu0 %v37
  %v403 = vpop.f32.mrf.mxu0
  %v404 = vadd.f32 %v363, %v403
  %405 = vmatmul.f32.gmra.mxu0 %v39
  %v406 = vpop.f32.mrf.mxu0
  %v407 = vadd.f32 %v366, %v406
  %408 = vmatmul.f32.gmra.mxu0 %v41
  %v409 = vpop.f32.mrf.mxu0
  %v410 = vadd.f32 %v369, %v409
  %411 = vdwg.mxu0
  %412 = vmatpush.msra.mxu0 %v134
  %413 = vmatpush.msra.mxu0 %v128
  %414 = vmatpush.msra.mxu0 %v122
  %415 = vmatpush.msra.mxu0 %v116
  %416 = vmatpush.msra.mxu0 %v110
  %417 = vmatpush.msra.mxu0 %v104
  %418 = vmatpush.msra.mxu0 %v98
  %419 = vmatpush.msra.mxu0 %v92
  %420 = vmatpush.msra.mxu0 %v86
  %421 = vmatpush.msra.mxu0 %v80
  %422 = vmatpush.msra.mxu0 %v74
  %423 = vmatpush.msra.mxu0 %v68
  %424 = vmatpush.msra.mxu0 %v62
  %425 = vmatpush.msra.mxu0 %v56
  %426 = vmatpush.msra.mxu0 %v50
  %427 = vmatpush.msra.mxu0 %v44
  %428 = vmatmul.f32.gmra.mxu0 %v26
  %v429 = vpop.f32.mrf.mxu0
  %v430 = vadd.f32 %v238, %v429
  %431 = vmatmul.f32.gmra.mxu0 %v28
  %v432 = vpop.f32.mrf.mxu0
  %v433 = vadd.f32 %v238, %v432
  %434 = vmatmul.f32.gmra.mxu0 %v30
  %v435 = vpop.f32.mrf.mxu0
  %v436 = vadd.f32 %v238, %v435
  %437 = vmatmul.f32.gmra.mxu0 %v32
  %v438 = vpop.f32.mrf.mxu0
  %v439 = vadd.f32 %v238, %v438
  %440 = vmatmul.f32.gmra.mxu0 %v34
  %v441 = vpop.f32.mrf.mxu0
  %v442 = vadd.f32 %v238, %v441
  %443 = vmatmul.f32.gmra.mxu0 %v36
  %v444 = vpop.f32.mrf.mxu0
  %v445 = vadd.f32 %v238, %v444
  %446 = vmatmul.f32.gmra.mxu0 %v38
  %v447 = vpop.f32.mrf.mxu0
  %v448 = vadd.f32 %v238, %v447
  %449 = vmatmul.f32.gmra.mxu0 %v40
  %v450 = vpop.f32.mrf.mxu0
  %v451 = vadd.f32 %v238, %v450
  %452 = vdwg.mxu0
  %453 = vmatpush.msra.mxu0 %v230
  %454 = vmatpush.msra.mxu0 %v224
  %455 = vmatpush.msra.mxu0 %v218
  %456 = vmatpush.msra.mxu0 %v212
  %457 = vmatpush.msra.mxu0 %v206
  %458 = vmatpush.msra.mxu0 %v200
  %459 = vmatpush.msra.mxu0 %v194
  %460 = vmatpush.msra.mxu0 %v188
  %461 = vmatpush.msra.mxu0 %v182
  %462 = vmatpush.msra.mxu0 %v176
  %463 = vmatpush.msra.mxu0 %v170
  %464 = vmatpush.msra.mxu0 %v164
  %465 = vmatpush.msra.mxu0 %v158
  %466 = vmatpush.msra.mxu0 %v152
  %467 = vmatpush.msra.mxu0 %v146
  %468 = vmatpush.msra.mxu0 %v140
  %469 = vmatmul.f32.gmra.mxu0 %v27
  %v470 = vpop.f32.mrf.mxu0
  %v471 = vadd.f32 %v430, %v470
  %472 = vmatmul.f32.gmra.mxu0 %v29
  %v473 = vpop.f32.mrf.mxu0
  %v474 = vadd.f32 %v433, %v473
  %475 = vmatmul.f32.gmra.mxu0 %v31
  %v476 = vpop.f32.mrf.mxu0
  %v477 = vadd.f32 %v436, %v476
  %478 = vmatmul.f32.gmra.mxu0 %v33
  %v479 = vpop.f32.mrf.mxu0
  %v480 = vadd.f32 %v439, %v479
  %481 = vmatmul.f32.gmra.mxu0 %v35
  %v482 = vpop.f32.mrf.mxu0
  %v483 = vadd.f32 %v442, %v482
  %484 = vmatmul.f32.gmra.mxu0 %v37
  %v485 = vpop.f32.mrf.mxu0
  %v486 = vadd.f32 %v445, %v485
  %487 = vmatmul.f32.gmra.mxu0 %v39
  %v488 = vpop.f32.mrf.mxu0
  %v489 = vadd.f32 %v448, %v488
  %490 = vmatmul.f32.gmra.mxu0 %v41
  %v491 = vpop.f32.mrf.mxu0
  %v492 = vadd.f32 %v451, %v491
  %493 = vdwg.mxu0
  %494 = vmatpush.msra.mxu0 %v135
  %495 = vmatpush.msra.mxu0 %v129
  %496 = vmatpush.msra.mxu0 %v123
  %497 = vmatpush.msra.mxu0 %v117
  %498 = vmatpush.msra.mxu0 %v111
  %499 = vmatpush.msra.mxu0 %v105
  %500 = vmatpush.msra.mxu0 %v99
  %501 = vmatpush.msra.mxu0 %v93
  %502 = vmatpush.msra.mxu0 %v87
  %503 = vmatpush.msra.mxu0 %v81
  %504 = vmatpush.msra.mxu0 %v75
  %505 = vmatpush.msra.mxu0 %v69
  %506 = vmatpush.msra.mxu0 %v63
  %507 = vmatpush.msra.mxu0 %v57
  %508 = vmatpush.msra.mxu0 %v51
  %509 = vmatpush.msra.mxu0 %v45
  %510 = vmatmul.f32.gmra.mxu0 %v26
  %v511 = vpop.f32.mrf.mxu0
  %v512 = vadd.f32 %v239, %v511
  %513 = vmatmul.f32.gmra.mxu0 %v28
  %v514 = vpop.f32.mrf.mxu0
  %v515 = vadd.f32 %v239, %v514
  %516 = vmatmul.f32.gmra.mxu0 %v30
  %v517 = vpop.f32.mrf.mxu0
  %v518 = vadd.f32 %v239, %v517
  %519 = vmatmul.f32.gmra.mxu0 %v32
  %v520 = vpop.f32.mrf.mxu0
  %v521 = vadd.f32 %v239, %v520
  %522 = vmatmul.f32.gmra.mxu0 %v34
  %v523 = vpop.f32.mrf.mxu0
  %v524 = vadd.f32 %v239, %v523
  %525 = vmatmul.f32.gmra.mxu0 %v36
  %v526 = vpop.f32.mrf.mxu0
  %v527 = vadd.f32 %v239, %v526
  %528 = vmatmul.f32.gmra.mxu0 %v38
  %v529 = vpop.f32.mrf.mxu0
  %v530 = vadd.f32 %v239, %v529
  %531 = vmatmul.f32.gmra.mxu0 %v40
  %v532 = vpop.f32.mrf.mxu0
  %v533 = vadd.f32 %v239, %v532
  %534 = vdwg.mxu0
  %535 = vmatpush.msra.mxu0 %v231
  %536 = vmatpush.msra.mxu0 %v225
  %537 = vmatpush.msra.mxu0 %v219
  %538 = vmatpush.msra.mxu0 %v213
  %539 = vmatpush.msra.mxu0 %v207
  %540 = vmatpush.msra.mxu0 %v201
  %541 = vmatpush.msra.mxu0 %v195
  %542 = vmatpush.msra.mxu0 %v189
  %543 = vmatpush.msra.mxu0 %v183
  %544 = vmatpush.msra.mxu0 %v177
  %545 = vmatpush.msra.mxu0 %v171
  %546 = vmatpush.msra.mxu0 %v165
  %547 = vmatpush.msra.mxu0 %v159
  %548 = vmatpush.msra.mxu0 %v153
  %549 = vmatpush.msra.mxu0 %v147
  %550 = vmatpush.msra.mxu0 %v141
  %551 = vmatmul.f32.gmra.mxu0 %v27
  %v552 = vpop.f32.mrf.mxu0
  %v553 = vadd.f32 %v512, %v552
  %554 = vmatmul.f32.gmra.mxu0 %v29
  %v555 = vpop.f32.mrf.mxu0
  %v556 = vadd.f32 %v515, %v555
  %557 = vmatmul.f32.gmra.mxu0 %v31
  %v558 = vpop.f32.mrf.mxu0
  %v559 = vadd.f32 %v518, %v558
  %560 = vmatmul.f32.gmra.mxu0 %v33
  %v561 = vpop.f32.mrf.mxu0
  %v562 = vadd.f32 %v521, %v561
  %563 = vmatmul.f32.gmra.mxu0 %v35
  %v564 = vpop.f32.mrf.mxu0
  %v565 = vadd.f32 %v524, %v564
  %566 = vmatmul.f32.gmra.mxu0 %v37
  %v567 = vpop.f32.mrf.mxu0
  %v568 = vadd.f32 %v527, %v567
  %569 = vmatmul.f32.gmra.mxu0 %v39
  %v570 = vpop.f32.mrf.mxu0
  %v571 = vadd.f32 %v530, %v570
  %572 = vmatmul.f32.gmra.mxu0 %v41
  %v573 = vpop.f32.mrf.mxu0
  %v574 = vadd.f32 %v533, %v573
  %575 = vdwg.mxu0
  %576 = vmatpush.msra.mxu0 %v136
  %577 = vmatpush.msra.mxu0 %v130
  %578 = vmatpush.msra.mxu0 %v124
  %579 = vmatpush.msra.mxu0 %v118
  %580 = vmatpush.msra.mxu0 %v112
  %581 = vmatpush.msra.mxu0 %v106
  %582 = vmatpush.msra.mxu0 %v100
  %583 = vmatpush.msra.mxu0 %v94
  %584 = vmatpush.msra.mxu0 %v88
  %585 = vmatpush.msra.mxu0 %v82
  %586 = vmatpush.msra.mxu0 %v76
  %587 = vmatpush.msra.mxu0 %v70
  %588 = vmatpush.msra.mxu0 %v64
  %589 = vmatpush.msra.mxu0 %v58
  %590 = vmatpush.msra.mxu0 %v52
  %591 = vmatpush.msra.mxu0 %v46
  %592 = vmatmul.f32.gmra.mxu0 %v26
  %v593 = vpop.f32.mrf.mxu0
  %v594 = vadd.f32 %v240, %v593
  %595 = vmatmul.f32.gmra.mxu0 %v28
  %v596 = vpop.f32.mrf.mxu0
  %v597 = vadd.f32 %v240, %v596
  %598 = vmatmul.f32.gmra.mxu0 %v30
  %v599 = vpop.f32.mrf.mxu0
  %v600 = vadd.f32 %v240, %v599
  %601 = vmatmul.f32.gmra.mxu0 %v32
  %v602 = vpop.f32.mrf.mxu0
  %v603 = vadd.f32 %v240, %v602
  %604 = vmatmul.f32.gmra.mxu0 %v34
  %v605 = vpop.f32.mrf.mxu0
  %v606 = vadd.f32 %v240, %v605
  %607 = vmatmul.f32.gmra.mxu0 %v36
  %v608 = vpop.f32.mrf.mxu0
  %v609 = vadd.f32 %v240, %v608
  %610 = vmatmul.f32.gmra.mxu0 %v38
  %v611 = vpop.f32.mrf.mxu0
  %v612 = vadd.f32 %v240, %v611
  %613 = vmatmul.f32.gmra.mxu0 %v40
  %v614 = vpop.f32.mrf.mxu0
  %v615 = vadd.f32 %v240, %v614
  %616 = vdwg.mxu0
  %617 = vmatpush.msra.mxu0 %v232
  %618 = vmatpush.msra.mxu0 %v226
  %619 = vmatpush.msra.mxu0 %v220
  %620 = vmatpush.msra.mxu0 %v214
  %621 = vmatpush.msra.mxu0 %v208
  %622 = vmatpush.msra.mxu0 %v202
  %623 = vmatpush.msra.mxu0 %v196
  %624 = vmatpush.msra.mxu0 %v190
  %625 = vmatpush.msra.mxu0 %v184
  %626 = vmatpush.msra.mxu0 %v178
  %627 = vmatpush.msra.mxu0 %v172
  %628 = vmatpush.msra.mxu0 %v166
  %629 = vmatpush.msra.mxu0 %v160
  %630 = vmatpush.msra.mxu0 %v154
  %631 = vmatpush.msra.mxu0 %v148
  %632 = vmatpush.msra.mxu0 %v142
  %633 = vmatmul.f32.gmra.mxu0 %v27
  %v634 = vpop.f32.mrf.mxu0
  %v635 = vadd.f32 %v594, %v634
  %636 = vmatmul.f32.gmra.mxu0 %v29
  %v637 = vpop.f32.mrf.mxu0
  %v638 = vadd.f32 %v597, %v637
  %639 = vmatmul.f32.gmra.mxu0 %v31
  %v640 = vpop.f32.mrf.mxu0
  %v641 = vadd.f32 %v600, %v640
  %642 = vmatmul.f32.gmra.mxu0 %v33
  %v643 = vpop.f32.mrf.mxu0
  %v644 = vadd.f32 %v603, %v643
  %645 = vmatmul.f32.gmra.mxu0 %v35
  %v646 = vpop.f32.mrf.mxu0
  %v647 = vadd.f32 %v606, %v646
  %648 = vmatmul.f32.gmra.mxu0 %v37
  %v649 = vpop.f32.mrf.mxu0
  %v650 = vadd.f32 %v609, %v649
  %651 = vmatmul.f32.gmra.mxu0 %v39
  %v652 = vpop.f32.mrf.mxu0
  %v653 = vadd.f32 %v612, %v652
  %654 = vmatmul.f32.gmra.mxu0 %v41
  %v655 = vpop.f32.mrf.mxu0
  %v656 = vadd.f32 %v615, %v655
  %657 = vdwg.mxu0
  %658 = vmatpush.msra.mxu0 %v137
  %659 = vmatpush.msra.mxu0 %v131
  %660 = vmatpush.msra.mxu0 %v125
  %661 = vmatpush.msra.mxu0 %v119
  %662 = vmatpush.msra.mxu0 %v113
  %663 = vmatpush.msra.mxu0 %v107
  %664 = vmatpush.msra.mxu0 %v101
  %665 = vmatpush.msra.mxu0 %v95
  %666 = vmatpush.msra.mxu0 %v89
  %667 = vmatpush.msra.mxu0 %v83
  %668 = vmatpush.msra.mxu0 %v77
  %669 = vmatpush.msra.mxu0 %v71
  %670 = vmatpush.msra.mxu0 %v65
  %671 = vmatpush.msra.mxu0 %v59
  %672 = vmatpush.msra.mxu0 %v53
  %673 = vmatpush.msra.mxu0 %v47
  %674 = vmatmul.f32.gmra.mxu0 %v26
  %v675 = vpop.f32.mrf.mxu0
  %v676 = vadd.f32 %v241, %v675
  %677 = vmatmul.f32.gmra.mxu0 %v28
  %v678 = vpop.f32.mrf.mxu0
  %v679 = vadd.f32 %v241, %v678
  %680 = vmatmul.f32.gmra.mxu0 %v30
  %v681 = vpop.f32.mrf.mxu0
  %v682 = vadd.f32 %v241, %v681
  %683 = vmatmul.f32.gmra.mxu0 %v32
  %v684 = vpop.f32.mrf.mxu0
  %v685 = vadd.f32 %v241, %v684
  %686 = vmatmul.f32.gmra.mxu0 %v34
  %v687 = vpop.f32.mrf.mxu0
  %v688 = vadd.f32 %v241, %v687
  %689 = vmatmul.f32.gmra.mxu0 %v36
  %v690 = vpop.f32.mrf.mxu0
  %v691 = vadd.f32 %v241, %v690
  %692 = vmatmul.f32.gmra.mxu0 %v38
  %v693 = vpop.f32.mrf.mxu0
  %v694 = vadd.f32 %v241, %v693
  %695 = vmatmul.f32.gmra.mxu0 %v40
  %v696 = vpop.f32.mrf.mxu0
  %v697 = vadd.f32 %v241, %v696
  %698 = vdwg.mxu0
  %699 = vmatpush.msra.mxu0 %v233
  %700 = vmatpush.msra.mxu0 %v227
  %701 = vmatpush.msra.mxu0 %v221
  %702 = vmatpush.msra.mxu0 %v215
  %703 = vmatpush.msra.mxu0 %v209
  %704 = vmatpush.msra.mxu0 %v203
  %705 = vmatpush.msra.mxu0 %v197
  %706 = vmatpush.msra.mxu0 %v191
  %707 = vmatpush.msra.mxu0 %v185
  %708 = vmatpush.msra.mxu0 %v179
  %709 = vmatpush.msra.mxu0 %v173
  %710 = vmatpush.msra.mxu0 %v167
  %711 = vmatpush.msra.mxu0 %v161
  %712 = vmatpush.msra.mxu0 %v155
  %713 = vmatpush.msra.mxu0 %v149
  %714 = vmatpush.msra.mxu0 %v143
  %715 = vmatmul.f32.gmra.mxu0 %v27
  %v716 = vpop.f32.mrf.mxu0
  %v717 = vadd.f32 %v676, %v716
  %718 = vmatmul.f32.gmra.mxu0 %v29
  %v719 = vpop.f32.mrf.mxu0
  %v720 = vadd.f32 %v679, %v719
  %721 = vmatmul.f32.gmra.mxu0 %v31
  %v722 = vpop.f32.mrf.mxu0
  %v723 = vadd.f32 %v682, %v722
  %724 = vmatmul.f32.gmra.mxu0 %v33
  %v725 = vpop.f32.mrf.mxu0
  %v726 = vadd.f32 %v685, %v725
  %727 = vmatmul.f32.gmra.mxu0 %v35
  %v728 = vpop.f32.mrf.mxu0
  %v729 = vadd.f32 %v688, %v728
  %730 = vmatmul.f32.gmra.mxu0 %v37
  %v731 = vpop.f32.mrf.mxu0
  %v732 = vadd.f32 %v691, %v731
  %733 = vmatmul.f32.gmra.mxu0 %v39
  %v734 = vpop.f32.mrf.mxu0
  %v735 = vadd.f32 %v694, %v734
  %736 = vmatmul.f32.gmra.mxu0 %v41
  %v737 = vpop.f32.mrf.mxu0
  %v738 = vadd.f32 %v697, %v737
  %739 = vdwg.mxu0
  %740 = vst [vmem:[#allocation2] sm:$0xff] %v307
  %741 = vst [vmem:[#allocation2 + $0x8] sm:$0xff] %v389
  %742 = vst [vmem:[#allocation2 + $0x10] sm:$0xff] %v471
  %743 = vst [vmem:[#allocation2 + $0x18] sm:$0xff] %v553
  %744 = vst [vmem:[#allocation2 + $0x20] sm:$0xff] %v635
  %745 = vst [vmem:[#allocation2 + $0x28] sm:$0xff] %v717
  %746 = vst [vmem:[#allocation2 + $0x30] sm:$0xff] %v310
  %747 = vst [vmem:[#allocation2 + $0x38] sm:$0xff] %v392
  %748 = vst [vmem:[#allocation2 + $0x40] sm:$0xff] %v474
  %749 = vst [vmem:[#allocation2 + $0x48] sm:$0xff] %v556
  %750 = vst [vmem:[#allocation2 + $0x50] sm:$0xff] %v638
  %751 = vst [vmem:[#allocation2 + $0x58] sm:$0xff] %v720
  %752 = vst [vmem:[#allocation2 + $0x60] sm:$0xff] %v313
  %753 = vst [vmem:[#allocation2 + $0x68] sm:$0xff] %v395
  %754 = vst [vmem:[#allocation2 + $0x70] sm:$0xff] %v477
  %755 = vst [vmem:[#allocation2 + $0x78] sm:$0xff] %v559
  %756 = vst [vmem:[#allocation2 + $0x80] sm:$0xff] %v641
  %757 = vst [vmem:[#allocation2 + $0x88] sm:$0xff] %v723
  %758 = vst [vmem:[#allocation2 + $0x90] sm:$0xff] %v316
  %759 = vst [vmem:[#allocation2 + $0x98] sm:$0xff] %v398
  %760 = vst [vmem:[#allocation2 + $0xa0] sm:$0xff] %v480
  %761 = vst [vmem:[#allocation2 + $0xa8] sm:$0xff] %v562
  %762 = vst [vmem:[#allocation2 + $0xb0] sm:$0xff] %v644
  %763 = vst [vmem:[#allocation2 + $0xb8] sm:$0xff] %v726
  %764 = vst [vmem:[#allocation2 + $0xc0] sm:$0xff] %v319
  %765 = vst [vmem:[#allocation2 + $0xc8] sm:$0xff] %v401
  %766 = vst [vmem:[#allocation2 + $0xd0] sm:$0xff] %v483
  %767 = vst [vmem:[#allocation2 + $0xd8] sm:$0xff] %v565
  %768 = vst [vmem:[#allocation2 + $0xe0] sm:$0xff] %v647
  %769 = vst [vmem:[#allocation2 + $0xe8] sm:$0xff] %v729
  %770 = vst [vmem:[#allocation2 + $0xf0] sm:$0xff] %v322
  %771 = vst [vmem:[#allocation2 + $0xf8] sm:$0xff] %v404
  %772 = vst [vmem:[#allocation2 + $0x100] sm:$0xff] %v486
  %773 = vst [vmem:[#allocation2 + $0x108] sm:$0xff] %v568
  %774 = vst [vmem:[#allocation2 + $0x110] sm:$0xff] %v650
  %775 = vst [vmem:[#allocation2 + $0x118] sm:$0xff] %v732
  %776 = vst [vmem:[#allocation2 + $0x120] sm:$0xff] %v325
  %777 = vst [vmem:[#allocation2 + $0x128] sm:$0xff] %v407
  %778 = vst [vmem:[#allocation2 + $0x130] sm:$0xff] %v489
  %779 = vst [vmem:[#allocation2 + $0x138] sm:$0xff] %v571
  %780 = vst [vmem:[#allocation2 + $0x140] sm:$0xff] %v653
  %781 = vst [vmem:[#allocation2 + $0x148] sm:$0xff] %v735
  %782 = vst [vmem:[#allocation2 + $0x150] sm:$0xff] %v328
  %783 = vst [vmem:[#allocation2 + $0x158] sm:$0xff] %v410
  %784 = vst [vmem:[#allocation2 + $0x160] sm:$0xff] %v492
  %785 = vst [vmem:[#allocation2 + $0x168] sm:$0xff] %v574
  %786 = vst [vmem:[#allocation2 + $0x170] sm:$0xff] %v656
  %787 = vst [vmem:[#allocation2 + $0x178] sm:$0xff] %v738
  %v788 = vld [vmem:[%s5] sm:$0x1]
  %v790 = vperm.slane %v788, 0
  %v792 = vld [vmem:[%s6] sm:$0x1]
  %v794 = vperm.slane %v792, 0
  %s796 = smul.u32 0, 6
  %s797 = smul.addr %s796, 8
  %s798 = scalar_lea.vmem [#allocation2], %s797
  %v799 = vld [vmem:[%s798] sm:$0xff]
  %v800 = vld [vmem:[%s798 + $0x8] sm:$0xff]
  %v801 = vld [vmem:[%s798 + $0x10] sm:$0xff]
  %v802 = vld [vmem:[%s3] sm:$0xff]
  %v803 = vld [vmem:[%s3 + $0x8] sm:$0xff]
  %v804 = vld [vmem:[%s3 + $0x10] sm:$0xff]
  %v805 = vld [vmem:[%s3 + $0x18] sm:$0xff]
  %v806 = vld [vmem:[%s3 + $0x20] sm:$0xff]
  %v807 = vld [vmem:[%s3 + $0x28] sm:$0xff]
  %v808 = vld [vmem:[%s3 + $0x30] sm:$0xff]
  %v809 = vld [vmem:[%s3 + $0x38] sm:$0xff]
  %v810 = vld [vmem:[%s3 + $0x40] sm:$0xff]
  %v811 = vld [vmem:[%s3 + $0x48] sm:$0xff]
  %v812 = vld [vmem:[%s3 + $0x50] sm:$0xff]
  %v813 = vld [vmem:[%s3 + $0x58] sm:$0xff]
  %v814 = vld [vmem:[%s3 + $0x60] sm:$0xff]
  %v815 = vld [vmem:[%s3 + $0x68] sm:$0xff]
  %v816 = vld [vmem:[%s3 + $0x70] sm:$0xff]
  %v817 = vld [vmem:[%s3 + $0x78] sm:$0xff]
  %v818 = vld [vmem:[%s3 + $0x80] sm:$0xff]
  %v819 = vld [vmem:[%s3 + $0x88] sm:$0xff]
  %v820 = vld [vmem:[%s3 + $0x90] sm:$0xff]
  %v821 = vld [vmem:[%s3 + $0x98] sm:$0xff]
  %v822 = vld [vmem:[%s3 + $0xa0] sm:$0xff]
  %v823 = vld [vmem:[%s3 + $0xa8] sm:$0xff]
  %v824 = vld [vmem:[%s3 + $0xb0] sm:$0xff]
  %v825 = vld [vmem:[%s3 + $0xb8] sm:$0xff]
  %v826 = vld [vmem:[%s3 + $0xc0] sm:$0xff]
  %v827 = vld [vmem:[%s3 + $0xc8] sm:$0xff]
  %v828 = vld [vmem:[%s3 + $0xd0] sm:$0xff]
  %v829 = vld [vmem:[%s3 + $0xd8] sm:$0xff]
  %v830 = vld [vmem:[%s3 + $0xe0] sm:$0xff]
  %v831 = vld [vmem:[%s3 + $0xe8] sm:$0xff]
  %v832 = vld [vmem:[%s3 + $0xf0] sm:$0xff]
  %v833 = vld [vmem:[%s3 + $0xf8] sm:$0xff]
  %v834 = vld [vmem:[%s3 + $0x100] sm:$0xff]
  %v835 = vld [vmem:[%s3 + $0x108] sm:$0xff]
  %v836 = vld [vmem:[%s3 + $0x110] sm:$0xff]
  %v837 = vld [vmem:[%s3 + $0x118] sm:$0xff]
  %v838 = vld [vmem:[%s3 + $0x120] sm:$0xff]
  %v839 = vld [vmem:[%s3 + $0x128] sm:$0xff]
  %v840 = vld [vmem:[%s3 + $0x130] sm:$0xff]
  %v841 = vld [vmem:[%s3 + $0x138] sm:$0xff]
  %v842 = vld [vmem:[%s3 + $0x140] sm:$0xff]
  %v843 = vld [vmem:[%s3 + $0x148] sm:$0xff]
  %v844 = vld [vmem:[%s3 + $0x150] sm:$0xff]
  %v845 = vld [vmem:[%s3 + $0x158] sm:$0xff]
  %v846 = vld [vmem:[%s3 + $0x160] sm:$0xff]
  %v847 = vld [vmem:[%s3 + $0x168] sm:$0xff]
  %v848 = vld [vmem:[%s3 + $0x170] sm:$0xff]
  %v849 = vld [vmem:[%s3 + $0x178] sm:$0xff]
  %850 = vmatpush.msra.mxu0 %v847
  %851 = vmatpush.msra.mxu0 %v844
  %852 = vmatpush.msra.mxu0 %v841
  %853 = vmatpush.msra.mxu0 %v838
  %854 = vmatpush.msra.mxu0 %v835
  %855 = vmatpush.msra.mxu0 %v832
  %856 = vmatpush.msra.mxu0 %v829
  %857 = vmatpush.msra.mxu0 %v826
  %858 = vmatpush.msra.mxu0 %v823
  %859 = vmatpush.msra.mxu0 %v820
  %860 = vmatpush.msra.mxu0 %v817
  %861 = vmatpush.msra.mxu0 %v814
  %862 = vmatpush.msra.mxu0 %v811
  %863 = vmatpush.msra.mxu0 %v808
  %864 = vmatpush.msra.mxu0 %v805
  %865 = vmatpush.msra.mxu0 %v802
  %866 = vmatmul.f32.gmra.mxu0 0.0
  %v867 = vpop.f32.mrf.mxu0
  %v868 = vadd.f32 0.0, %v867
  %869 = vdwg.mxu0
  %870 = vmatpush.msra.mxu0 %v848
  %871 = vmatpush.msra.mxu0 %v845
  %872 = vmatpush.msra.mxu0 %v842
  %873 = vmatpush.msra.mxu0 %v839
  %874 = vmatpush.msra.mxu0 %v836
  %875 = vmatpush.msra.mxu0 %v833
  %876 = vmatpush.msra.mxu0 %v830
  %877 = vmatpush.msra.mxu0 %v827
  %878 = vmatpush.msra.mxu0 %v824
  %879 = vmatpush.msra.mxu0 %v821
  %880 = vmatpush.msra.mxu0 %v818
  %881 = vmatpush.msra.mxu0 %v815
  %882 = vmatpush.msra.mxu0 %v812
  %883 = vmatpush.msra.mxu0 %v809
  %884 = vmatpush.msra.mxu0 %v806
  %885 = vmatpush.msra.mxu0 %v803
  %886 = vmatmul.f32.gmra.mxu0 0.0
  %v887 = vpop.f32.mrf.mxu0
  %v888 = vadd.f32 0.0, %v887
  %889 = vdwg.mxu0
  %890 = vmatpush.msra.mxu0 %v849
  %891 = vmatpush.msra.mxu0 %v846
  %892 = vmatpush.msra.mxu0 %v843
  %893 = vmatpush.msra.mxu0 %v840
  %894 = vmatpush.msra.mxu0 %v837
  %895 = vmatpush.msra.mxu0 %v834
  %896 = vmatpush.msra.mxu0 %v831
  %897 = vmatpush.msra.mxu0 %v828
  %898 = vmatpush.msra.mxu0 %v825
  %899 = vmatpush.msra.mxu0 %v822
  %900 = vmatpush.msra.mxu0 %v819
  %901 = vmatpush.msra.mxu0 %v816
  %902 = vmatpush.msra.mxu0 %v813
  %903 = vmatpush.msra.mxu0 %v810
  %904 = vmatpush.msra.mxu0 %v807
  %905 = vmatpush.msra.mxu0 %v804
  %906 = vmatmul.f32.gmra.mxu0 0.0
  %v907 = vpop.f32.mrf.mxu0
  %v908 = vadd.f32 0.0, %v907
  %909 = vdwg.mxu0
  %v910 = vadd.f32 %v799, %v868
  %v911 = vsub.f32 0.0, %v910
  %v912 = vmul.f32 %v911, 1.442695
  %v913 = vpow.pop %v912
  %v914 = vadd.f32 %v913, 1.0
  %v915 = vrcp.pop %v914
  %v916 = vmul.f32 %v914, %v915
  %v917 = vsub.f32 1.0, %v916
  %v918 = vmul.f32 %v915, %v917
  %v919 = vadd.f32 %v915, %v918
  %vm920 = vweird.f32 %v914
  %vm921 = vweird.f32 %v915
  %vm922 = vmor %vm920, %vm921
  %v923 = vsel %vm922, %v915, %v919
  %v924 = vand.u32 2147483647, %v914
  %vm925 = vcmp.eq.f32.partialorder %v924, 8.507059e+37
  %v926 = vand.u32 %v914, 2147483648
  %v927 = vor.u32 1.1754944e-38, %v926
  %v928 = vsel %vm925, %v927, %v923
  %v929 = vmul.f32 1.0, %v928
  %v930 = vadd.f32 %v800, %v888
  %v931 = vsub.f32 0.0, %v930
  %v932 = vmul.f32 %v931, 1.442695
  %v933 = vpow.pop %v932
  %v934 = vadd.f32 %v933, 1.0
  %v935 = vrcp.pop %v934
  %v936 = vmul.f32 %v934, %v935
  %v937 = vsub.f32 1.0, %v936
  %v938 = vmul.f32 %v935, %v937
  %v939 = vadd.f32 %v935, %v938
  %vm940 = vweird.f32 %v934
  %vm941 = vweird.f32 %v935
  %vm942 = vmor %vm940, %vm941
  %v943 = vsel %vm942, %v935, %v939
  %v944 = vand.u32 2147483647, %v934
  %vm945 = vcmp.eq.f32.partialorder %v944, 8.507059e+37
  %v946 = vand.u32 %v934, 2147483648
  %v947 = vor.u32 1.1754944e-38, %v946
  %v948 = vsel %vm945, %v947, %v943
  %v949 = vmul.f32 1.0, %v948
  %v950 = vadd.f32 %v908, %v790
  %v951 = vmul.f32 %v929, %v950
  %v952 = vadd.f32 %v801, %v951
  %v953 = vtanh.pop %v952
  %v954 = vsub.f32 1.0, %v949
  %v955 = vmul.f32 %v954, %v953
  %v956 = vmul.f32 %v949, 0.0
  %v957 = vadd.f32 %v955, %v956
  %s958 = smul.u32 7, 6
  %s959 = smul.addr %s958, 8
  %s960 = scalar_lea.vmem [#allocation2], %s959
  %v961 = vld [vmem:[%s960 + $0x18] sm:$0xff]
  %v962 = vld [vmem:[%s960 + $0x20] sm:$0xff]
  %v963 = vld [vmem:[%s960 + $0x28] sm:$0xff]
  %v964 = vld [vmem:[%s4] sm:$0xff]
  %v965 = vld [vmem:[%s4 + $0x8] sm:$0xff]
  %v966 = vld [vmem:[%s4 + $0x10] sm:$0xff]
  %v967 = vld [vmem:[%s4 + $0x18] sm:$0xff]
  %v968 = vld [vmem:[%s4 + $0x20] sm:$0xff]
  %v969 = vld [vmem:[%s4 + $0x28] sm:$0xff]
  %v970 = vld [vmem:[%s4 + $0x30] sm:$0xff]
  %v971 = vld [vmem:[%s4 + $0x38] sm:$0xff]
  %v972 = vld [vmem:[%s4 + $0x40] sm:$0xff]
  %v973 = vld [vmem:[%s4 + $0x48] sm:$0xff]
  %v974 = vld [vmem:[%s4 + $0x50] sm:$0xff]
  %v975 = vld [vmem:[%s4 + $0x58] sm:$0xff]
  %v976 = vld [vmem:[%s4 + $0x60] sm:$0xff]
  %v977 = vld [vmem:[%s4 + $0x68] sm:$0xff]
  %v978 = vld [vmem:[%s4 + $0x70] sm:$0xff]
  %v979 = vld [vmem:[%s4 + $0x78] sm:$0xff]
  %v980 = vld [vmem:[%s4 + $0x80] sm:$0xff]
  %v981 = vld [vmem:[%s4 + $0x88] sm:$0xff]
  %v982 = vld [vmem:[%s4 + $0x90] sm:$0xff]
  %v983 = vld [vmem:[%s4 + $0x98] sm:$0xff]
  %v984 = vld [vmem:[%s4 + $0xa0] sm:$0xff]
  %v985 = vld [vmem:[%s4 + $0xa8] sm:$0xff]
  %v986 = vld [vmem:[%s4 + $0xb0] sm:$0xff]
  %v987 = vld [vmem:[%s4 + $0xb8] sm:$0xff]
  %v988 = vld [vmem:[%s4 + $0xc0] sm:$0xff]
  %v989 = vld [vmem:[%s4 + $0xc8] sm:$0xff]
  %v990 = vld [vmem:[%s4 + $0xd0] sm:$0xff]
  %v991 = vld [vmem:[%s4 + $0xd8] sm:$0xff]
  %v992 = vld [vmem:[%s4 + $0xe0] sm:$0xff]
  %v993 = vld [vmem:[%s4 + $0xe8] sm:$0xff]
  %v994 = vld [vmem:[%s4 + $0xf0] sm:$0xff]
  %v995 = vld [vmem:[%s4 + $0xf8] sm:$0xff]
  %v996 = vld [vmem:[%s4 + $0x100] sm:$0xff]
  %v997 = vld [vmem:[%s4 + $0x108] sm:$0xff]
  %v998 = vld [vmem:[%s4 + $0x110] sm:$0xff]
  %v999 = vld [vmem:[%s4 + $0x118] sm:$0xff]
  %v1000 = vld [vmem:[%s4 + $0x120] sm:$0xff]
  %v1001 = vld [vmem:[%s4 + $0x128] sm:$0xff]
  %v1002 = vld [vmem:[%s4 + $0x130] sm:$0xff]
  %v1003 = vld [vmem:[%s4 + $0x138] sm:$0xff]
  %v1004 = vld [vmem:[%s4 + $0x140] sm:$0xff]
  %v1005 = vld [vmem:[%s4 + $0x148] sm:$0xff]
  %v1006 = vld [vmem:[%s4 + $0x150] sm:$0xff]
  %v1007 = vld [vmem:[%s4 + $0x158] sm:$0xff]
  %v1008 = vld [vmem:[%s4 + $0x160] sm:$0xff]
  %v1009 = vld [vmem:[%s4 + $0x168] sm:$0xff]
  %v1010 = vld [vmem:[%s4 + $0x170] sm:$0xff]
  %v1011 = vld [vmem:[%s4 + $0x178] sm:$0xff]
  %1012 = vmatpush.msra.mxu0 %v1009
  %1013 = vmatpush.msra.mxu0 %v1006
  %1014 = vmatpush.msra.mxu0 %v1003
  %1015 = vmatpush.msra.mxu0 %v1000
  %1016 = vmatpush.msra.mxu0 %v997
  %1017 = vmatpush.msra.mxu0 %v994
  %1018 = vmatpush.msra.mxu0 %v991
  %1019 = vmatpush.msra.mxu0 %v988
  %1020 = vmatpush.msra.mxu0 %v985
  %1021 = vmatpush.msra.mxu0 %v982
  %1022 = vmatpush.msra.mxu0 %v979
  %1023 = vmatpush.msra.mxu0 %v976
  %1024 = vmatpush.msra.mxu0 %v973
  %1025 = vmatpush.msra.mxu0 %v970
  %1026 = vmatpush.msra.mxu0 %v967
  %1027 = vmatpush.msra.mxu0 %v964
  %1028 = vmatmul.f32.gmra.mxu0 0.0
  %v1029 = vpop.f32.mrf.mxu0
  %v1030 = vadd.f32 0.0, %v1029
  %1031 = vdwg.mxu0
  %1032 = vmatpush.msra.mxu0 %v1010
  %1033 = vmatpush.msra.mxu0 %v1007
  %1034 = vmatpush.msra.mxu0 %v1004
  %1035 = vmatpush.msra.mxu0 %v1001
  %1036 = vmatpush.msra.mxu0 %v998
  %1037 = vmatpush.msra.mxu0 %v995
  %1038 = vmatpush.msra.mxu0 %v992
  %1039 = vmatpush.msra.mxu0 %v989
  %1040 = vmatpush.msra.mxu0 %v986
  %1041 = vmatpush.msra.mxu0 %v983
  %1042 = vmatpush.msra.mxu0 %v980
  %1043 = vmatpush.msra.mxu0 %v977
  %1044 = vmatpush.msra.mxu0 %v974
  %1045 = vmatpush.msra.mxu0 %v971
  %1046 = vmatpush.msra.mxu0 %v968
  %1047 = vmatpush.msra.mxu0 %v965
  %1048 = vmatmul.f32.gmra.mxu0 0.0
  %v1049 = vpop.f32.mrf.mxu0
  %v1050 = vadd.f32 0.0, %v1049
  %1051 = vdwg.mxu0
  %1052 = vmatpush.msra.mxu0 %v1011
  %1053 = vmatpush.msra.mxu0 %v1008
  %1054 = vmatpush.msra.mxu0 %v1005
  %1055 = vmatpush.msra.mxu0 %v1002
  %1056 = vmatpush.msra.mxu0 %v999
  %1057 = vmatpush.msra.mxu0 %v996
  %1058 = vmatpush.msra.mxu0 %v993
  %1059 = vmatpush.msra.mxu0 %v990
  %1060 = vmatpush.msra.mxu0 %v987
  %1061 = vmatpush.msra.mxu0 %v984
  %1062 = vmatpush.msra.mxu0 %v981
  %1063 = vmatpush.msra.mxu0 %v978
  %1064 = vmatpush.msra.mxu0 %v975
  %1065 = vmatpush.msra.mxu0 %v972
  %1066 = vmatpush.msra.mxu0 %v969
  %1067 = vmatpush.msra.mxu0 %v966
  %1068 = vmatmul.f32.gmra.mxu0 0.0
  %v1069 = vpop.f32.mrf.mxu0
  %v1070 = vadd.f32 0.0, %v1069
  %1071 = vdwg.mxu0
  %v1072 = vadd.f32 %v961, %v1030
  %v1073 = vsub.f32 0.0, %v1072
  %v1074 = vmul.f32 %v1073, 1.442695
  %v1075 = vpow.pop %v1074
  %v1076 = vadd.f32 %v1075, 1.0
  %v1077 = vrcp.pop %v1076
  %v1078 = vmul.f32 %v1076, %v1077
  %v1079 = vsub.f32 1.0, %v1078
  %v1080 = vmul.f32 %v1077, %v1079
  %v1081 = vadd.f32 %v1077, %v1080
  %vm1082 = vweird.f32 %v1076
  %vm1083 = vweird.f32 %v1077
  %vm1084 = vmor %vm1082, %vm1083
  %v1085 = vsel %vm1084, %v1077, %v1081
  %v1086 = vand.u32 2147483647, %v1076
  %vm1087 = vcmp.eq.f32.partialorder %v1086, 8.507059e+37
  %v1088 = vand.u32 %v1076, 2147483648
  %v1089 = vor.u32 1.1754944e-38, %v1088
  %v1090 = vsel %vm1087, %v1089, %v1085
  %v1091 = vmul.f32 1.0, %v1090
  %v1092 = vadd.f32 %v962, %v1050
  %v1093 = vsub.f32 0.0, %v1092
  %v1094 = vmul.f32 %v1093, 1.442695
  %v1095 = vpow.pop %v1094
  %v1096 = vadd.f32 %v1095, 1.0
  %v1097 = vrcp.pop %v1096
  %v1098 = vmul.f32 %v1096, %v1097
  %v1099 = vsub.f32 1.0, %v1098
  %v1100 = vmul.f32 %v1097, %v1099
  %v1101 = vadd.f32 %v1097, %v1100
  %vm1102 = vweird.f32 %v1096
  %vm1103 = vweird.f32 %v1097
  %vm1104 = vmor %vm1102, %vm1103
  %v1105 = vsel %vm1104, %v1097, %v1101
  %v1106 = vand.u32 2147483647, %v1096
  %vm1107 = vcmp.eq.f32.partialorder %v1106, 8.507059e+37
  %v1108 = vand.u32 %v1096, 2147483648
  %v1109 = vor.u32 1.1754944e-38, %v1108
  %v1110 = vsel %vm1107, %v1109, %v1105
  %v1111 = vmul.f32 1.0, %v1110
  %v1112 = vadd.f32 %v1070, %v794
  %v1113 = vmul.f32 %v1091, %v1112
  %v1114 = vadd.f32 %v963, %v1113
  %v1115 = vtanh.pop %v1114
  %v1116 = vsub.f32 1.0, %v1111
  %v1117 = vmul.f32 %v1116, %v1115
  %v1118 = vmul.f32 %v1111, 0.0
  %v1119 = vadd.f32 %v1117, %v1118
  %1120 = vst [vmem:[%s7] sm:$0xff] %v957
  %s1121 = scalar_lea.vmem %s7, 112
  %1122 = vst [vmem:[%s1121 + $0x8] sm:$0xff] %v1119
  %s1123 = smul.u32 1, 6
  %s1124 = smul.addr %s1123, 8
  %s1125 = scalar_lea.vmem [#allocation2], %s1124
  %v1126 = vld [vmem:[%s1125] sm:$0xff]
  %v1127 = vld [vmem:[%s1125 + $0x8] sm:$0xff]
  %v1128 = vld [vmem:[%s1125 + $0x10] sm:$0xff]
  %v1129 = vld [vmem:[%s3] sm:$0xff]
  %v1130 = vld [vmem:[%s3 + $0x8] sm:$0xff]
  %v1131 = vld [vmem:[%s3 + $0x10] sm:$0xff]
  %v1132 = vld [vmem:[%s3 + $0x18] sm:$0xff]
  %v1133 = vld [vmem:[%s3 + $0x20] sm:$0xff]
  %v1134 = vld [vmem:[%s3 + $0x28] sm:$0xff]
  %v1135 = vld [vmem:[%s3 + $0x30] sm:$0xff]
  %v1136 = vld [vmem:[%s3 + $0x38] sm:$0xff]
  %v1137 = vld [vmem:[%s3 + $0x40] sm:$0xff]
  %v1138 = vld [vmem:[%s3 + $0x48] sm:$0xff]
  %v1139 = vld [vmem:[%s3 + $0x50] sm:$0xff]
  %v1140 = vld [vmem:[%s3 + $0x58] sm:$0xff]
  %v1141 = vld [vmem:[%s3 + $0x60] sm:$0xff]
  %v1142 = vld [vmem:[%s3 + $0x68] sm:$0xff]
  %v1143 = vld [vmem:[%s3 + $0x70] sm:$0xff]
  %v1144 = vld [vmem:[%s3 + $0x78] sm:$0xff]
  %v1145 = vld [vmem:[%s3 + $0x80] sm:$0xff]
  %v1146 = vld [vmem:[%s3 + $0x88] sm:$0xff]
  %v1147 = vld [vmem:[%s3 + $0x90] sm:$0xff]
  %v1148 = vld [vmem:[%s3 + $0x98] sm:$0xff]
  %v1149 = vld [vmem:[%s3 + $0xa0] sm:$0xff]
  %v1150 = vld [vmem:[%s3 + $0xa8] sm:$0xff]
  %v1151 = vld [vmem:[%s3 + $0xb0] sm:$0xff]
  %v1152 = vld [vmem:[%s3 + $0xb8] sm:$0xff]
  %v1153 = vld [vmem:[%s3 + $0xc0] sm:$0xff]
  %v1154 = vld [vmem:[%s3 + $0xc8] sm:$0xff]
  %v1155 = vld [vmem:[%s3 + $0xd0] sm:$0xff]
  %v1156 = vld [vmem:[%s3 + $0xd8] sm:$0xff]
  %v1157 = vld [vmem:[%s3 + $0xe0] sm:$0xff]
  %v1158 = vld [vmem:[%s3 + $0xe8] sm:$0xff]
  %v1159 = vld [vmem:[%s3 + $0xf0] sm:$0xff]
  %v1160 = vld [vmem:[%s3 + $0xf8] sm:$0xff]
  %v1161 = vld [vmem:[%s3 + $0x100] sm:$0xff]
  %v1162 = vld [vmem:[%s3 + $0x108] sm:$0xff]
  %v1163 = vld [vmem:[%s3 + $0x110] sm:$0xff]
  %v1164 = vld [vmem:[%s3 + $0x118] sm:$0xff]
  %v1165 = vld [vmem:[%s3 + $0x120] sm:$0xff]
  %v1166 = vld [vmem:[%s3 + $0x128] sm:$0xff]
  %v1167 = vld [vmem:[%s3 + $0x130] sm:$0xff]
  %v1168 = vld [vmem:[%s3 + $0x138] sm:$0xff]
  %v1169 = vld [vmem:[%s3 + $0x140] sm:$0xff]
  %v1170 = vld [vmem:[%s3 + $0x148] sm:$0xff]
  %v1171 = vld [vmem:[%s3 + $0x150] sm:$0xff]
  %v1172 = vld [vmem:[%s3 + $0x158] sm:$0xff]
  %v1173 = vld [vmem:[%s3 + $0x160] sm:$0xff]
  %v1174 = vld [vmem:[%s3 + $0x168] sm:$0xff]
  %v1175 = vld [vmem:[%s3 + $0x170] sm:$0xff]
  %v1176 = vld [vmem:[%s3 + $0x178] sm:$0xff]
  %1177 = vmatpush.msra.mxu0 %v1174
  %1178 = vmatpush.msra.mxu0 %v1171
  %1179 = vmatpush.msra.mxu0 %v1168
  %1180 = vmatpush.msra.mxu0 %v1165
  %1181 = vmatpush.msra.mxu0 %v1162
  %1182 = vmatpush.msra.mxu0 %v1159
  %1183 = vmatpush.msra.mxu0 %v1156
  %1184 = vmatpush.msra.mxu0 %v1153
  %1185 = vmatpush.msra.mxu0 %v1150
  %1186 = vmatpush.msra.mxu0 %v1147
  %1187 = vmatpush.msra.mxu0 %v1144
  %1188 = vmatpush.msra.mxu0 %v1141
  %1189 = vmatpush.msra.mxu0 %v1138
  %1190 = vmatpush.msra.mxu0 %v1135
  %1191 = vmatpush.msra.mxu0 %v1132
  %1192 = vmatpush.msra.mxu0 %v1129
  %1193 = vmatmul.f32.gmra.mxu0 %v957
  %v1194 = vpop.f32.mrf.mxu0
  %v1195 = vadd.f32 0.0, %v1194
  %1196 = vdwg.mxu0
  %1197 = vmatpush.msra.mxu0 %v1175
  %1198 = vmatpush.msra.mxu0 %v1172
  %1199 = vmatpush.msra.mxu0 %v1169
  %1200 = vmatpush.msra.mxu0 %v1166
  %1201 = vmatpush.msra.mxu0 %v1163
  %1202 = vmatpush.msra.mxu0 %v1160
  %1203 = vmatpush.msra.mxu0 %v1157
  %1204 = vmatpush.msra.mxu0 %v1154
  %1205 = vmatpush.msra.mxu0 %v1151
  %1206 = vmatpush.msra.mxu0 %v1148
  %1207 = vmatpush.msra.mxu0 %v1145
  %1208 = vmatpush.msra.mxu0 %v1142
  %1209 = vmatpush.msra.mxu0 %v1139
  %1210 = vmatpush.msra.mxu0 %v1136
  %1211 = vmatpush.msra.mxu0 %v1133
  %1212 = vmatpush.msra.mxu0 %v1130
  %1213 = vmatmul.f32.gmra.mxu0 %v957
  %v1214 = vpop.f32.mrf.mxu0
  %v1215 = vadd.f32 0.0, %v1214
  %1216 = vdwg.mxu0
  %1217 = vmatpush.msra.mxu0 %v1176
  %1218 = vmatpush.msra.mxu0 %v1173
  %1219 = vmatpush.msra.mxu0 %v1170
  %1220 = vmatpush.msra.mxu0 %v1167
  %1221 = vmatpush.msra.mxu0 %v1164
  %1222 = vmatpush.msra.mxu0 %v1161
  %1223 = vmatpush.msra.mxu0 %v1158
  %1224 = vmatpush.msra.mxu0 %v1155
  %1225 = vmatpush.msra.mxu0 %v1152
  %1226 = vmatpush.msra.mxu0 %v1149
  %1227 = vmatpush.msra.mxu0 %v1146
  %1228 = vmatpush.msra.mxu0 %v1143
  %1229 = vmatpush.msra.mxu0 %v1140
  %1230 = vmatpush.msra.mxu0 %v1137
  %1231 = vmatpush.msra.mxu0 %v1134
  %1232 = vmatpush.msra.mxu0 %v1131
  %1233 = vmatmul.f32.gmra.mxu0 %v957
  %v1234 = vpop.f32.mrf.mxu0
  %v1235 = vadd.f32 0.0, %v1234
  %1236 = vdwg.mxu0
  %v1237 = vadd.f32 %v1126, %v1195
  %v1238 = vsub.f32 0.0, %v1237
  %v1239 = vmul.f32 %v1238, 1.442695
  %v1240 = vpow.pop %v1239
  %v1241 = vadd.f32 %v1240, 1.0
  %v1242 = vrcp.pop %v1241
  %v1243 = vmul.f32 %v1241, %v1242
  %v1244 = vsub.f32 1.0, %v1243
  %v1245 = vmul.f32 %v1242, %v1244
  %v1246 = vadd.f32 %v1242, %v1245
  %vm1247 = vweird.f32 %v1241
  %vm1248 = vweird.f32 %v1242
  %vm1249 = vmor %vm1247, %vm1248
  %v1250 = vsel %vm1249, %v1242, %v1246
  %v1251 = vand.u32 2147483647, %v1241
  %vm1252 = vcmp.eq.f32.partialorder %v1251, 8.507059e+37
  %v1253 = vand.u32 %v1241, 2147483648
  %v1254 = vor.u32 1.1754944e-38, %v1253
  %v1255 = vsel %vm1252, %v1254, %v1250
  %v1256 = vmul.f32 1.0, %v1255
  %v1257 = vadd.f32 %v1127, %v1215
  %v1258 = vsub.f32 0.0, %v1257
  %v1259 = vmul.f32 %v1258, 1.442695
  %v1260 = vpow.pop %v1259
  %v1261 = vadd.f32 %v1260, 1.0
  %v1262 = vrcp.pop %v1261
  %v1263 = vmul.f32 %v1261, %v1262
  %v1264 = vsub.f32 1.0, %v1263
  %v1265 = vmul.f32 %v1262, %v1264
  %v1266 = vadd.f32 %v1262, %v1265
  %vm1267 = vweird.f32 %v1261
  %vm1268 = vweird.f32 %v1262
  %vm1269 = vmor %vm1267, %vm1268
  %v1270 = vsel %vm1269, %v1262, %v1266
  %v1271 = vand.u32 2147483647, %v1261
  %vm1272 = vcmp.eq.f32.partialorder %v1271, 8.507059e+37
  %v1273 = vand.u32 %v1261, 2147483648
  %v1274 = vor.u32 1.1754944e-38, %v1273
  %v1275 = vsel %vm1272, %v1274, %v1270
  %v1276 = vmul.f32 1.0, %v1275
  %v1277 = vadd.f32 %v1235, %v790
  %v1278 = vmul.f32 %v1256, %v1277
  %v1279 = vadd.f32 %v1128, %v1278
  %v1280 = vtanh.pop %v1279
  %v1281 = vsub.f32 1.0, %v1276
  %v1282 = vmul.f32 %v1281, %v1280
  %v1283 = vmul.f32 %v1276, %v957
  %v1284 = vadd.f32 %v1282, %v1283
  %s1285 = smul.u32 6, 6
  %s1286 = smul.addr %s1285, 8
  %s1287 = scalar_lea.vmem [#allocation2], %s1286
  %v1288 = vld [vmem:[%s1287 + $0x18] sm:$0xff]
  %v1289 = vld [vmem:[%s1287 + $0x20] sm:$0xff]
  %v1290 = vld [vmem:[%s1287 + $0x28] sm:$0xff]
  %v1291 = vld [vmem:[%s4] sm:$0xff]
  %v1292 = vld [vmem:[%s4 + $0x8] sm:$0xff]
  %v1293 = vld [vmem:[%s4 + $0x10] sm:$0xff]
  %v1294 = vld [vmem:[%s4 + $0x18] sm:$0xff]
  %v1295 = vld [vmem:[%s4 + $0x20] sm:$0xff]
  %v1296 = vld [vmem:[%s4 + $0x28] sm:$0xff]
  %v1297 = vld [vmem:[%s4 + $0x30] sm:$0xff]
  %v1298 = vld [vmem:[%s4 + $0x38] sm:$0xff]
  %v1299 = vld [vmem:[%s4 + $0x40] sm:$0xff]
  %v1300 = vld [vmem:[%s4 + $0x48] sm:$0xff]
  %v1301 = vld [vmem:[%s4 + $0x50] sm:$0xff]
  %v1302 = vld [vmem:[%s4 + $0x58] sm:$0xff]
  %v1303 = vld [vmem:[%s4 + $0x60] sm:$0xff]
  %v1304 = vld [vmem:[%s4 + $0x68] sm:$0xff]
  %v1305 = vld [vmem:[%s4 + $0x70] sm:$0xff]
  %v1306 = vld [vmem:[%s4 + $0x78] sm:$0xff]
  %v1307 = vld [vmem:[%s4 + $0x80] sm:$0xff]
  %v1308 = vld [vmem:[%s4 + $0x88] sm:$0xff]
  %v1309 = vld [vmem:[%s4 + $0x90] sm:$0xff]
  %v1310 = vld [vmem:[%s4 + $0x98] sm:$0xff]
  %v1311 = vld [vmem:[%s4 + $0xa0] sm:$0xff]
  %v1312 = vld [vmem:[%s4 + $0xa8] sm:$0xff]
  %v1313 = vld [vmem:[%s4 + $0xb0] sm:$0xff]
  %v1314 = vld [vmem:[%s4 + $0xb8] sm:$0xff]
  %v1315 = vld [vmem:[%s4 + $0xc0] sm:$0xff]
  %v1316 = vld [vmem:[%s4 + $0xc8] sm:$0xff]
  %v1317 = vld [vmem:[%s4 + $0xd0] sm:$0xff]
  %v1318 = vld [vmem:[%s4 + $0xd8] sm:$0xff]
  %v1319 = vld [vmem:[%s4 + $0xe0] sm:$0xff]
  %v1320 = vld [vmem:[%s4 + $0xe8] sm:$0xff]
  %v1321 = vld [vmem:[%s4 + $0xf0] sm:$0xff]
  %v1322 = vld [vmem:[%s4 + $0xf8] sm:$0xff]
  %v1323 = vld [vmem:[%s4 + $0x100] sm:$0xff]
  %v1324 = vld [vmem:[%s4 + $0x108] sm:$0xff]
  %v1325 = vld [vmem:[%s4 + $0x110] sm:$0xff]
  %v1326 = vld [vmem:[%s4 + $0x118] sm:$0xff]
  %v1327 = vld [vmem:[%s4 + $0x120] sm:$0xff]
  %v1328 = vld [vmem:[%s4 + $0x128] sm:$0xff]
  %v1329 = vld [vmem:[%s4 + $0x130] sm:$0xff]
  %v1330 = vld [vmem:[%s4 + $0x138] sm:$0xff]
  %v1331 = vld [vmem:[%s4 + $0x140] sm:$0xff]
  %v1332 = vld [vmem:[%s4 + $0x148] sm:$0xff]
  %v1333 = vld [vmem:[%s4 + $0x150] sm:$0xff]
  %v1334 = vld [vmem:[%s4 + $0x158] sm:$0xff]
  %v1335 = vld [vmem:[%s4 + $0x160] sm:$0xff]
  %v1336 = vld [vmem:[%s4 + $0x168] sm:$0xff]
  %v1337 = vld [vmem:[%s4 + $0x170] sm:$0xff]
  %v1338 = vld [vmem:[%s4 + $0x178] sm:$0xff]
  %1339 = vmatpush.msra.mxu0 %v1336
  %1340 = vmatpush.msra.mxu0 %v1333
  %1341 = vmatpush.msra.mxu0 %v1330
  %1342 = vmatpush.msra.mxu0 %v1327
  %1343 = vmatpush.msra.mxu0 %v1324
  %1344 = vmatpush.msra.mxu0 %v1321
  %1345 = vmatpush.msra.mxu0 %v1318
  %1346 = vmatpush.msra.mxu0 %v1315
  %1347 = vmatpush.msra.mxu0 %v1312
  %1348 = vmatpush.msra.mxu0 %v1309
  %1349 = vmatpush.msra.mxu0 %v1306
  %1350 = vmatpush.msra.mxu0 %v1303
  %1351 = vmatpush.msra.mxu0 %v1300
  %1352 = vmatpush.msra.mxu0 %v1297
  %1353 = vmatpush.msra.mxu0 %v1294
  %1354 = vmatpush.msra.mxu0 %v1291
  %1355 = vmatmul.f32.gmra.mxu0 %v1119
  %v1356 = vpop.f32.mrf.mxu0
  %v1357 = vadd.f32 0.0, %v1356
  %1358 = vdwg.mxu0
  %1359 = vmatpush.msra.mxu0 %v1337
  %1360 = vmatpush.msra.mxu0 %v1334
  %1361 = vmatpush.msra.mxu0 %v1331
  %1362 = vmatpush.msra.mxu0 %v1328
  %1363 = vmatpush.msra.mxu0 %v1325
  %1364 = vmatpush.msra.mxu0 %v1322
  %1365 = vmatpush.msra.mxu0 %v1319
  %1366 = vmatpush.msra.mxu0 %v1316
  %1367 = vmatpush.msra.mxu0 %v1313
  %1368 = vmatpush.msra.mxu0 %v1310
  %1369 = vmatpush.msra.mxu0 %v1307
  %1370 = vmatpush.msra.mxu0 %v1304
  %1371 = vmatpush.msra.mxu0 %v1301
  %1372 = vmatpush.msra.mxu0 %v1298
  %1373 = vmatpush.msra.mxu0 %v1295
  %1374 = vmatpush.msra.mxu0 %v1292
  %1375 = vmatmul.f32.gmra.mxu0 %v1119
  %v1376 = vpop.f32.mrf.mxu0
  %v1377 = vadd.f32 0.0, %v1376
  %1378 = vdwg.mxu0
  %1379 = vmatpush.msra.mxu0 %v1338
  %1380 = vmatpush.msra.mxu0 %v1335
  %1381 = vmatpush.msra.mxu0 %v1332
  %1382 = vmatpush.msra.mxu0 %v1329
  %1383 = vmatpush.msra.mxu0 %v1326
  %1384 = vmatpush.msra.mxu0 %v1323
  %1385 = vmatpush.msra.mxu0 %v1320
  %1386 = vmatpush.msra.mxu0 %v1317
  %1387 = vmatpush.msra.mxu0 %v1314
  %1388 = vmatpush.msra.mxu0 %v1311
  %1389 = vmatpush.msra.mxu0 %v1308
  %1390 = vmatpush.msra.mxu0 %v1305
  %1391 = vmatpush.msra.mxu0 %v1302
  %1392 = vmatpush.msra.mxu0 %v1299
  %1393 = vmatpush.msra.mxu0 %v1296
  %1394 = vmatpush.msra.mxu0 %v1293
  %1395 = vmatmul.f32.gmra.mxu0 %v1119
  %v1396 = vpop.f32.mrf.mxu0
  %v1397 = vadd.f32 0.0, %v1396
  %1398 = vdwg.mxu0
  %v1399 = vadd.f32 %v1288, %v1357
  %v1400 = vsub.f32 0.0, %v1399
  %v1401 = vmul.f32 %v1400, 1.442695
  %v1402 = vpow.pop %v1401
  %v1403 = vadd.f32 %v1402, 1.0
  %v1404 = vrcp.pop %v1403
  %v1405 = vmul.f32 %v1403, %v1404
  %v1406 = vsub.f32 1.0, %v1405
  %v1407 = vmul.f32 %v1404, %v1406
  %v1408 = vadd.f32 %v1404, %v1407
  %vm1409 = vweird.f32 %v1403
  %vm1410 = vweird.f32 %v1404
  %vm1411 = vmor %vm1409, %vm1410
  %v1412 = vsel %vm1411, %v1404, %v1408
  %v1413 = vand.u32 2147483647, %v1403
  %vm1414 = vcmp.eq.f32.partialorder %v1413, 8.507059e+37
  %v1415 = vand.u32 %v1403, 2147483648
  %v1416 = vor.u32 1.1754944e-38, %v1415
  %v1417 = vsel %vm1414, %v1416, %v1412
  %v1418 = vmul.f32 1.0, %v1417
  %v1419 = vadd.f32 %v1289, %v1377
  %v1420 = vsub.f32 0.0, %v1419
  %v1421 = vmul.f32 %v1420, 1.442695
  %v1422 = vpow.pop %v1421
  %v1423 = vadd.f32 %v1422, 1.0
  %v1424 = vrcp.pop %v1423
  %v1425 = vmul.f32 %v1423, %v1424
  %v1426 = vsub.f32 1.0, %v1425
  %v1427 = vmul.f32 %v1424, %v1426
  %v1428 = vadd.f32 %v1424, %v1427
  %vm1429 = vweird.f32 %v1423
  %vm1430 = vweird.f32 %v1424
  %vm1431 = vmor %vm1429, %vm1430
  %v1432 = vsel %vm1431, %v1424, %v1428
  %v1433 = vand.u32 2147483647, %v1423
  %vm1434 = vcmp.eq.f32.partialorder %v1433, 8.507059e+37
  %v1435 = vand.u32 %v1423, 2147483648
  %v1436 = vor.u32 1.1754944e-38, %v1435
  %v1437 = vsel %vm1434, %v1436, %v1432
  %v1438 = vmul.f32 1.0, %v1437
  %v1439 = vadd.f32 %v1397, %v794
  %v1440 = vmul.f32 %v1418, %v1439
  %v1441 = vadd.f32 %v1290, %v1440
  %v1442 = vtanh.pop %v1441
  %v1443 = vsub.f32 1.0, %v1438
  %v1444 = vmul.f32 %v1443, %v1442
  %v1445 = vmul.f32 %v1438, %v1119
  %v1446 = vadd.f32 %v1444, %v1445
  %s1447 = scalar_lea.vmem %s7, 16
  %1448 = vst [vmem:[%s1447] sm:$0xff] %v1284
  %s1449 = scalar_lea.vmem %s7, 96
  %1450 = vst [vmem:[%s1449 + $0x8] sm:$0xff] %v1446
  %s1451 = smul.u32 2, 6
  %s1452 = smul.addr %s1451, 8
  %s1453 = scalar_lea.vmem [#allocation2], %s1452
  %v1454 = vld [vmem:[%s1453] sm:$0xff]
  %v1455 = vld [vmem:[%s1453 + $0x8] sm:$0xff]
  %v1456 = vld [vmem:[%s1453 + $0x10] sm:$0xff]
  %v1457 = vld [vmem:[%s3] sm:$0xff]
  %v1458 = vld [vmem:[%s3 + $0x8] sm:$0xff]
  %v1459 = vld [vmem:[%s3 + $0x10] sm:$0xff]
  %v1460 = vld [vmem:[%s3 + $0x18] sm:$0xff]
  %v1461 = vld [vmem:[%s3 + $0x20] sm:$0xff]
  %v1462 = vld [vmem:[%s3 + $0x28] sm:$0xff]
  %v1463 = vld [vmem:[%s3 + $0x30] sm:$0xff]
  %v1464 = vld [vmem:[%s3 + $0x38] sm:$0xff]
  %v1465 = vld [vmem:[%s3 + $0x40] sm:$0xff]
  %v1466 = vld [vmem:[%s3 + $0x48] sm:$0xff]
  %v1467 = vld [vmem:[%s3 + $0x50] sm:$0xff]
  %v1468 = vld [vmem:[%s3 + $0x58] sm:$0xff]
  %v1469 = vld [vmem:[%s3 + $0x60] sm:$0xff]
  %v1470 = vld [vmem:[%s3 + $0x68] sm:$0xff]
  %v1471 = vld [vmem:[%s3 + $0x70] sm:$0xff]
  %v1472 = vld [vmem:[%s3 + $0x78] sm:$0xff]
  %v1473 = vld [vmem:[%s3 + $0x80] sm:$0xff]
  %v1474 = vld [vmem:[%s3 + $0x88] sm:$0xff]
  %v1475 = vld [vmem:[%s3 + $0x90] sm:$0xff]
  %v1476 = vld [vmem:[%s3 + $0x98] sm:$0xff]
  %v1477 = vld [vmem:[%s3 + $0xa0] sm:$0xff]
  %v1478 = vld [vmem:[%s3 + $0xa8] sm:$0xff]
  %v1479 = vld [vmem:[%s3 + $0xb0] sm:$0xff]
  %v1480 = vld [vmem:[%s3 + $0xb8] sm:$0xff]
  %v1481 = vld [vmem:[%s3 + $0xc0] sm:$0xff]
  %v1482 = vld [vmem:[%s3 + $0xc8] sm:$0xff]
  %v1483 = vld [vmem:[%s3 + $0xd0] sm:$0xff]
  %v1484 = vld [vmem:[%s3 + $0xd8] sm:$0xff]
  %v1485 = vld [vmem:[%s3 + $0xe0] sm:$0xff]
  %v1486 = vld [vmem:[%s3 + $0xe8] sm:$0xff]
  %v1487 = vld [vmem:[%s3 + $0xf0] sm:$0xff]
  %v1488 = vld [vmem:[%s3 + $0xf8] sm:$0xff]
  %v1489 = vld [vmem:[%s3 + $0x100] sm:$0xff]
  %v1490 = vld [vmem:[%s3 + $0x108] sm:$0xff]
  %v1491 = vld [vmem:[%s3 + $0x110] sm:$0xff]
  %v1492 = vld [vmem:[%s3 + $0x118] sm:$0xff]
  %v1493 = vld [vmem:[%s3 + $0x120] sm:$0xff]
  %v1494 = vld [vmem:[%s3 + $0x128] sm:$0xff]
  %v1495 = vld [vmem:[%s3 + $0x130] sm:$0xff]
  %v1496 = vld [vmem:[%s3 + $0x138] sm:$0xff]
  %v1497 = vld [vmem:[%s3 + $0x140] sm:$0xff]
  %v1498 = vld [vmem:[%s3 + $0x148] sm:$0xff]
  %v1499 = vld [vmem:[%s3 + $0x150] sm:$0xff]
  %v1500 = vld [vmem:[%s3 + $0x158] sm:$0xff]
  %v1501 = vld [vmem:[%s3 + $0x160] sm:$0xff]
  %v1502 = vld [vmem:[%s3 + $0x168] sm:$0xff]
  %v1503 = vld [vmem:[%s3 + $0x170] sm:$0xff]
  %v1504 = vld [vmem:[%s3 + $0x178] sm:$0xff]
  %1505 = vmatpush.msra.mxu0 %v1502
  %1506 = vmatpush.msra.mxu0 %v1499
  %1507 = vmatpush.msra.mxu0 %v1496
  %1508 = vmatpush.msra.mxu0 %v1493
  %1509 = vmatpush.msra.mxu0 %v1490
  %1510 = vmatpush.msra.mxu0 %v1487
  %1511 = vmatpush.msra.mxu0 %v1484
  %1512 = vmatpush.msra.mxu0 %v1481
  %1513 = vmatpush.msra.mxu0 %v1478
  %1514 = vmatpush.msra.mxu0 %v1475
  %1515 = vmatpush.msra.mxu0 %v1472
  %1516 = vmatpush.msra.mxu0 %v1469
  %1517 = vmatpush.msra.mxu0 %v1466
  %1518 = vmatpush.msra.mxu0 %v1463
  %1519 = vmatpush.msra.mxu0 %v1460
  %1520 = vmatpush.msra.mxu0 %v1457
  %1521 = vmatmul.f32.gmra.mxu0 %v1284
  %v1522 = vpop.f32.mrf.mxu0
  %v1523 = vadd.f32 0.0, %v1522
  %1524 = vdwg.mxu0
  %1525 = vmatpush.msra.mxu0 %v1503
  %1526 = vmatpush.msra.mxu0 %v1500
  %1527 = vmatpush.msra.mxu0 %v1497
  %1528 = vmatpush.msra.mxu0 %v1494
  %1529 = vmatpush.msra.mxu0 %v1491
  %1530 = vmatpush.msra.mxu0 %v1488
  %1531 = vmatpush.msra.mxu0 %v1485
  %1532 = vmatpush.msra.mxu0 %v1482
  %1533 = vmatpush.msra.mxu0 %v1479
  %1534 = vmatpush.msra.mxu0 %v1476
  %1535 = vmatpush.msra.mxu0 %v1473
  %1536 = vmatpush.msra.mxu0 %v1470
  %1537 = vmatpush.msra.mxu0 %v1467
  %1538 = vmatpush.msra.mxu0 %v1464
  %1539 = vmatpush.msra.mxu0 %v1461
  %1540 = vmatpush.msra.mxu0 %v1458
  %1541 = vmatmul.f32.gmra.mxu0 %v1284
  %v1542 = vpop.f32.mrf.mxu0
  %v1543 = vadd.f32 0.0, %v1542
  %1544 = vdwg.mxu0
  %1545 = vmatpush.msra.mxu0 %v1504
  %1546 = vmatpush.msra.mxu0 %v1501
  %1547 = vmatpush.msra.mxu0 %v1498
  %1548 = vmatpush.msra.mxu0 %v1495
  %1549 = vmatpush.msra.mxu0 %v1492
  %1550 = vmatpush.msra.mxu0 %v1489
  %1551 = vmatpush.msra.mxu0 %v1486
  %1552 = vmatpush.msra.mxu0 %v1483
  %1553 = vmatpush.msra.mxu0 %v1480
  %1554 = vmatpush.msra.mxu0 %v1477
  %1555 = vmatpush.msra.mxu0 %v1474
  %1556 = vmatpush.msra.mxu0 %v1471
  %1557 = vmatpush.msra.mxu0 %v1468
  %1558 = vmatpush.msra.mxu0 %v1465
  %1559 = vmatpush.msra.mxu0 %v1462
  %1560 = vmatpush.msra.mxu0 %v1459
  %1561 = vmatmul.f32.gmra.mxu0 %v1284
  %v1562 = vpop.f32.mrf.mxu0
  %v1563 = vadd.f32 0.0, %v1562
  %1564 = vdwg.mxu0
  %v1565 = vadd.f32 %v1454, %v1523
  %v1566 = vsub.f32 0.0, %v1565
  %v1567 = vmul.f32 %v1566, 1.442695
  %v1568 = vpow.pop %v1567
  %v1569 = vadd.f32 %v1568, 1.0
  %v1570 = vrcp.pop %v1569
  %v1571 = vmul.f32 %v1569, %v1570
  %v1572 = vsub.f32 1.0, %v1571
  %v1573 = vmul.f32 %v1570, %v1572
  %v1574 = vadd.f32 %v1570, %v1573
  %vm1575 = vweird.f32 %v1569
  %vm1576 = vweird.f32 %v1570
  %vm1577 = vmor %vm1575, %vm1576
  %v1578 = vsel %vm1577, %v1570, %v1574
  %v1579 = vand.u32 2147483647, %v1569
  %vm1580 = vcmp.eq.f32.partialorder %v1579, 8.507059e+37
  %v1581 = vand.u32 %v1569, 2147483648
  %v1582 = vor.u32 1.1754944e-38, %v1581
  %v1583 = vsel %vm1580, %v1582, %v1578
  %v1584 = vmul.f32 1.0, %v1583
  %v1585 = vadd.f32 %v1455, %v1543
  %v1586 = vsub.f32 0.0, %v1585
  %v1587 = vmul.f32 %v1586, 1.442695
  %v1588 = vpow.pop %v1587
  %v1589 = vadd.f32 %v1588, 1.0
  %v1590 = vrcp.pop %v1589
  %v1591 = vmul.f32 %v1589, %v1590
  %v1592 = vsub.f32 1.0, %v1591
  %v1593 = vmul.f32 %v1590, %v1592
  %v1594 = vadd.f32 %v1590, %v1593
  %vm1595 = vweird.f32 %v1589
  %vm1596 = vweird.f32 %v1590
  %vm1597 = vmor %vm1595, %vm1596
  %v1598 = vsel %vm1597, %v1590, %v1594
  %v1599 = vand.u32 2147483647, %v1589
  %vm1600 = vcmp.eq.f32.partialorder %v1599, 8.507059e+37
  %v1601 = vand.u32 %v1589, 2147483648
  %v1602 = vor.u32 1.1754944e-38, %v1601
  %v1603 = vsel %vm1600, %v1602, %v1598
  %v1604 = vmul.f32 1.0, %v1603
  %v1605 = vadd.f32 %v1563, %v790
  %v1606 = vmul.f32 %v1584, %v1605
  %v1607 = vadd.f32 %v1456, %v1606
  %v1608 = vtanh.pop %v1607
  %v1609 = vsub.f32 1.0, %v1604
  %v1610 = vmul.f32 %v1609, %v1608
  %v1611 = vmul.f32 %v1604, %v1284
  %v1612 = vadd.f32 %v1610, %v1611
  %s1613 = smul.u32 5, 6
  %s1614 = smul.addr %s1613, 8
  %s1615 = scalar_lea.vmem [#allocation2], %s1614
  %v1616 = vld [vmem:[%s1615 + $0x18] sm:$0xff]
  %v1617 = vld [vmem:[%s1615 + $0x20] sm:$0xff]
  %v1618 = vld [vmem:[%s1615 + $0x28] sm:$0xff]
  %v1619 = vld [vmem:[%s4] sm:$0xff]
  %v1620 = vld [vmem:[%s4 + $0x8] sm:$0xff]
  %v1621 = vld [vmem:[%s4 + $0x10] sm:$0xff]
  %v1622 = vld [vmem:[%s4 + $0x18] sm:$0xff]
  %v1623 = vld [vmem:[%s4 + $0x20] sm:$0xff]
  %v1624 = vld [vmem:[%s4 + $0x28] sm:$0xff]
  %v1625 = vld [vmem:[%s4 + $0x30] sm:$0xff]
  %v1626 = vld [vmem:[%s4 + $0x38] sm:$0xff]
  %v1627 = vld [vmem:[%s4 + $0x40] sm:$0xff]
  %v1628 = vld [vmem:[%s4 + $0x48] sm:$0xff]
  %v1629 = vld [vmem:[%s4 + $0x50] sm:$0xff]
  %v1630 = vld [vmem:[%s4 + $0x58] sm:$0xff]
  %v1631 = vld [vmem:[%s4 + $0x60] sm:$0xff]
  %v1632 = vld [vmem:[%s4 + $0x68] sm:$0xff]
  %v1633 = vld [vmem:[%s4 + $0x70] sm:$0xff]
  %v1634 = vld [vmem:[%s4 + $0x78] sm:$0xff]
  %v1635 = vld [vmem:[%s4 + $0x80] sm:$0xff]
  %v1636 = vld [vmem:[%s4 + $0x88] sm:$0xff]
  %v1637 = vld [vmem:[%s4 + $0x90] sm:$0xff]
  %v1638 = vld [vmem:[%s4 + $0x98] sm:$0xff]
  %v1639 = vld [vmem:[%s4 + $0xa0] sm:$0xff]
  %v1640 = vld [vmem:[%s4 + $0xa8] sm:$0xff]
  %v1641 = vld [vmem:[%s4 + $0xb0] sm:$0xff]
  %v1642 = vld [vmem:[%s4 + $0xb8] sm:$0xff]
  %v1643 = vld [vmem:[%s4 + $0xc0] sm:$0xff]
  %v1644 = vld [vmem:[%s4 + $0xc8] sm:$0xff]
  %v1645 = vld [vmem:[%s4 + $0xd0] sm:$0xff]
  %v1646 = vld [vmem:[%s4 + $0xd8] sm:$0xff]
  %v1647 = vld [vmem:[%s4 + $0xe0] sm:$0xff]
  %v1648 = vld [vmem:[%s4 + $0xe8] sm:$0xff]
  %v1649 = vld [vmem:[%s4 + $0xf0] sm:$0xff]
  %v1650 = vld [vmem:[%s4 + $0xf8] sm:$0xff]
  %v1651 = vld [vmem:[%s4 + $0x100] sm:$0xff]
  %v1652 = vld [vmem:[%s4 + $0x108] sm:$0xff]
  %v1653 = vld [vmem:[%s4 + $0x110] sm:$0xff]
  %v1654 = vld [vmem:[%s4 + $0x118] sm:$0xff]
  %v1655 = vld [vmem:[%s4 + $0x120] sm:$0xff]
  %v1656 = vld [vmem:[%s4 + $0x128] sm:$0xff]
  %v1657 = vld [vmem:[%s4 + $0x130] sm:$0xff]
  %v1658 = vld [vmem:[%s4 + $0x138] sm:$0xff]
  %v1659 = vld [vmem:[%s4 + $0x140] sm:$0xff]
  %v1660 = vld [vmem:[%s4 + $0x148] sm:$0xff]
  %v1661 = vld [vmem:[%s4 + $0x150] sm:$0xff]
  %v1662 = vld [vmem:[%s4 + $0x158] sm:$0xff]
  %v1663 = vld [vmem:[%s4 + $0x160] sm:$0xff]
  %v1664 = vld [vmem:[%s4 + $0x168] sm:$0xff]
  %v1665 = vld [vmem:[%s4 + $0x170] sm:$0xff]
  %v1666 = vld [vmem:[%s4 + $0x178] sm:$0xff]
  %1667 = vmatpush.msra.mxu0 %v1664
  %1668 = vmatpush.msra.mxu0 %v1661
  %1669 = vmatpush.msra.mxu0 %v1658
  %1670 = vmatpush.msra.mxu0 %v1655
  %1671 = vmatpush.msra.mxu0 %v1652
  %1672 = vmatpush.msra.mxu0 %v1649
  %1673 = vmatpush.msra.mxu0 %v1646
  %1674 = vmatpush.msra.mxu0 %v1643
  %1675 = vmatpush.msra.mxu0 %v1640
  %1676 = vmatpush.msra.mxu0 %v1637
  %1677 = vmatpush.msra.mxu0 %v1634
  %1678 = vmatpush.msra.mxu0 %v1631
  %1679 = vmatpush.msra.mxu0 %v1628
  %1680 = vmatpush.msra.mxu0 %v1625
  %1681 = vmatpush.msra.mxu0 %v1622
  %1682 = vmatpush.msra.mxu0 %v1619
  %1683 = vmatmul.f32.gmra.mxu0 %v1446
  %v1684 = vpop.f32.mrf.mxu0
  %v1685 = vadd.f32 0.0, %v1684
  %1686 = vdwg.mxu0
  %1687 = vmatpush.msra.mxu0 %v1665
  %1688 = vmatpush.msra.mxu0 %v1662
  %1689 = vmatpush.msra.mxu0 %v1659
  %1690 = vmatpush.msra.mxu0 %v1656
  %1691 = vmatpush.msra.mxu0 %v1653
  %1692 = vmatpush.msra.mxu0 %v1650
  %1693 = vmatpush.msra.mxu0 %v1647
  %1694 = vmatpush.msra.mxu0 %v1644
  %1695 = vmatpush.msra.mxu0 %v1641
  %1696 = vmatpush.msra.mxu0 %v1638
  %1697 = vmatpush.msra.mxu0 %v1635
  %1698 = vmatpush.msra.mxu0 %v1632
  %1699 = vmatpush.msra.mxu0 %v1629
  %1700 = vmatpush.msra.mxu0 %v1626
  %1701 = vmatpush.msra.mxu0 %v1623
  %1702 = vmatpush.msra.mxu0 %v1620
  %1703 = vmatmul.f32.gmra.mxu0 %v1446
  %v1704 = vpop.f32.mrf.mxu0
  %v1705 = vadd.f32 0.0, %v1704
  %1706 = vdwg.mxu0
  %1707 = vmatpush.msra.mxu0 %v1666
  %1708 = vmatpush.msra.mxu0 %v1663
  %1709 = vmatpush.msra.mxu0 %v1660
  %1710 = vmatpush.msra.mxu0 %v1657
  %1711 = vmatpush.msra.mxu0 %v1654
  %1712 = vmatpush.msra.mxu0 %v1651
  %1713 = vmatpush.msra.mxu0 %v1648
  %1714 = vmatpush.msra.mxu0 %v1645
  %1715 = vmatpush.msra.mxu0 %v1642
  %1716 = vmatpush.msra.mxu0 %v1639
  %1717 = vmatpush.msra.mxu0 %v1636
  %1718 = vmatpush.msra.mxu0 %v1633
  %1719 = vmatpush.msra.mxu0 %v1630
  %1720 = vmatpush.msra.mxu0 %v1627
  %1721 = vmatpush.msra.mxu0 %v1624
  %1722 = vmatpush.msra.mxu0 %v1621
  %1723 = vmatmul.f32.gmra.mxu0 %v1446
  %v1724 = vpop.f32.mrf.mxu0
  %v1725 = vadd.f32 0.0, %v1724
  %1726 = vdwg.mxu0
  %v1727 = vadd.f32 %v1616, %v1685
  %v1728 = vsub.f32 0.0, %v1727
  %v1729 = vmul.f32 %v1728, 1.442695
  %v1730 = vpow.pop %v1729
  %v1731 = vadd.f32 %v1730, 1.0
  %v1732 = vrcp.pop %v1731
  %v1733 = vmul.f32 %v1731, %v1732
  %v1734 = vsub.f32 1.0, %v1733
  %v1735 = vmul.f32 %v1732, %v1734
  %v1736 = vadd.f32 %v1732, %v1735
  %vm1737 = vweird.f32 %v1731
  %vm1738 = vweird.f32 %v1732
  %vm1739 = vmor %vm1737, %vm1738
  %v1740 = vsel %vm1739, %v1732, %v1736
  %v1741 = vand.u32 2147483647, %v1731
  %vm1742 = vcmp.eq.f32.partialorder %v1741, 8.507059e+37
  %v1743 = vand.u32 %v1731, 2147483648
  %v1744 = vor.u32 1.1754944e-38, %v1743
  %v1745 = vsel %vm1742, %v1744, %v1740
  %v1746 = vmul.f32 1.0, %v1745
  %v1747 = vadd.f32 %v1617, %v1705
  %v1748 = vsub.f32 0.0, %v1747
  %v1749 = vmul.f32 %v1748, 1.442695
  %v1750 = vpow.pop %v1749
  %v1751 = vadd.f32 %v1750, 1.0
  %v1752 = vrcp.pop %v1751
  %v1753 = vmul.f32 %v1751, %v1752
  %v1754 = vsub.f32 1.0, %v1753
  %v1755 = vmul.f32 %v1752, %v1754
  %v1756 = vadd.f32 %v1752, %v1755
  %vm1757 = vweird.f32 %v1751
  %vm1758 = vweird.f32 %v1752
  %vm1759 = vmor %vm1757, %vm1758
  %v1760 = vsel %vm1759, %v1752, %v1756
  %v1761 = vand.u32 2147483647, %v1751
  %vm1762 = vcmp.eq.f32.partialorder %v1761, 8.507059e+37
  %v1763 = vand.u32 %v1751, 2147483648
  %v1764 = vor.u32 1.1754944e-38, %v1763
  %v1765 = vsel %vm1762, %v1764, %v1760
  %v1766 = vmul.f32 1.0, %v1765
  %v1767 = vadd.f32 %v1725, %v794
  %v1768 = vmul.f32 %v1746, %v1767
  %v1769 = vadd.f32 %v1618, %v1768
  %v1770 = vtanh.pop %v1769
  %v1771 = vsub.f32 1.0, %v1766
  %v1772 = vmul.f32 %v1771, %v1770
  %v1773 = vmul.f32 %v1766, %v1446
  %v1774 = vadd.f32 %v1772, %v1773
  %s1775 = scalar_lea.vmem %s7, 32
  %1776 = vst [vmem:[%s1775] sm:$0xff] %v1612
  %s1777 = scalar_lea.vmem %s7, 80
  %1778 = vst [vmem:[%s1777 + $0x8] sm:$0xff] %v1774
  %s1779 = smul.u32 3, 6
  %s1780 = smul.addr %s1779, 8
  %s1781 = scalar_lea.vmem [#allocation2], %s1780
  %v1782 = vld [vmem:[%s1781] sm:$0xff]
  %v1783 = vld [vmem:[%s1781 + $0x8] sm:$0xff]
  %v1784 = vld [vmem:[%s1781 + $0x10] sm:$0xff]
  %v1785 = vld [vmem:[%s3] sm:$0xff]
  %v1786 = vld [vmem:[%s3 + $0x8] sm:$0xff]
  %v1787 = vld [vmem:[%s3 + $0x10] sm:$0xff]
  %v1788 = vld [vmem:[%s3 + $0x18] sm:$0xff]
  %v1789 = vld [vmem:[%s3 + $0x20] sm:$0xff]
  %v1790 = vld [vmem:[%s3 + $0x28] sm:$0xff]
  %v1791 = vld [vmem:[%s3 + $0x30] sm:$0xff]
  %v1792 = vld [vmem:[%s3 + $0x38] sm:$0xff]
  %v1793 = vld [vmem:[%s3 + $0x40] sm:$0xff]
  %v1794 = vld [vmem:[%s3 + $0x48] sm:$0xff]
  %v1795 = vld [vmem:[%s3 + $0x50] sm:$0xff]
  %v1796 = vld [vmem:[%s3 + $0x58] sm:$0xff]
  %v1797 = vld [vmem:[%s3 + $0x60] sm:$0xff]
  %v1798 = vld [vmem:[%s3 + $0x68] sm:$0xff]
  %v1799 = vld [vmem:[%s3 + $0x70] sm:$0xff]
  %v1800 = vld [vmem:[%s3 + $0x78] sm:$0xff]
  %v1801 = vld [vmem:[%s3 + $0x80] sm:$0xff]
  %v1802 = vld [vmem:[%s3 + $0x88] sm:$0xff]
  %v1803 = vld [vmem:[%s3 + $0x90] sm:$0xff]
  %v1804 = vld [vmem:[%s3 + $0x98] sm:$0xff]
  %v1805 = vld [vmem:[%s3 + $0xa0] sm:$0xff]
  %v1806 = vld [vmem:[%s3 + $0xa8] sm:$0xff]
  %v1807 = vld [vmem:[%s3 + $0xb0] sm:$0xff]
  %v1808 = vld [vmem:[%s3 + $0xb8] sm:$0xff]
  %v1809 = vld [vmem:[%s3 + $0xc0] sm:$0xff]
  %v1810 = vld [vmem:[%s3 + $0xc8] sm:$0xff]
  %v1811 = vld [vmem:[%s3 + $0xd0] sm:$0xff]
  %v1812 = vld [vmem:[%s3 + $0xd8] sm:$0xff]
  %v1813 = vld [vmem:[%s3 + $0xe0] sm:$0xff]
  %v1814 = vld [vmem:[%s3 + $0xe8] sm:$0xff]
  %v1815 = vld [vmem:[%s3 + $0xf0] sm:$0xff]
  %v1816 = vld [vmem:[%s3 + $0xf8] sm:$0xff]
  %v1817 = vld [vmem:[%s3 + $0x100] sm:$0xff]
  %v1818 = vld [vmem:[%s3 + $0x108] sm:$0xff]
  %v1819 = vld [vmem:[%s3 + $0x110] sm:$0xff]
  %v1820 = vld [vmem:[%s3 + $0x118] sm:$0xff]
  %v1821 = vld [vmem:[%s3 + $0x120] sm:$0xff]
  %v1822 = vld [vmem:[%s3 + $0x128] sm:$0xff]
  %v1823 = vld [vmem:[%s3 + $0x130] sm:$0xff]
  %v1824 = vld [vmem:[%s3 + $0x138] sm:$0xff]
  %v1825 = vld [vmem:[%s3 + $0x140] sm:$0xff]
  %v1826 = vld [vmem:[%s3 + $0x148] sm:$0xff]
  %v1827 = vld [vmem:[%s3 + $0x150] sm:$0xff]
  %v1828 = vld [vmem:[%s3 + $0x158] sm:$0xff]
  %v1829 = vld [vmem:[%s3 + $0x160] sm:$0xff]
  %v1830 = vld [vmem:[%s3 + $0x168] sm:$0xff]
  %v1831 = vld [vmem:[%s3 + $0x170] sm:$0xff]
  %v1832 = vld [vmem:[%s3 + $0x178] sm:$0xff]
  %1833 = vmatpush.msra.mxu0 %v1830
  %1834 = vmatpush.msra.mxu0 %v1827
  %1835 = vmatpush.msra.mxu0 %v1824
  %1836 = vmatpush.msra.mxu0 %v1821
  %1837 = vmatpush.msra.mxu0 %v1818
  %1838 = vmatpush.msra.mxu0 %v1815
  %1839 = vmatpush.msra.mxu0 %v1812
  %1840 = vmatpush.msra.mxu0 %v1809
  %1841 = vmatpush.msra.mxu0 %v1806
  %1842 = vmatpush.msra.mxu0 %v1803
  %1843 = vmatpush.msra.mxu0 %v1800
  %1844 = vmatpush.msra.mxu0 %v1797
  %1845 = vmatpush.msra.mxu0 %v1794
  %1846 = vmatpush.msra.mxu0 %v1791
  %1847 = vmatpush.msra.mxu0 %v1788
  %1848 = vmatpush.msra.mxu0 %v1785
  %1849 = vmatmul.f32.gmra.mxu0 %v1612
  %v1850 = vpop.f32.mrf.mxu0
  %v1851 = vadd.f32 0.0, %v1850
  %1852 = vdwg.mxu0
  %1853 = vmatpush.msra.mxu0 %v1831
  %1854 = vmatpush.msra.mxu0 %v1828
  %1855 = vmatpush.msra.mxu0 %v1825
  %1856 = vmatpush.msra.mxu0 %v1822
  %1857 = vmatpush.msra.mxu0 %v1819
  %1858 = vmatpush.msra.mxu0 %v1816
  %1859 = vmatpush.msra.mxu0 %v1813
  %1860 = vmatpush.msra.mxu0 %v1810
  %1861 = vmatpush.msra.mxu0 %v1807
  %1862 = vmatpush.msra.mxu0 %v1804
  %1863 = vmatpush.msra.mxu0 %v1801
  %1864 = vmatpush.msra.mxu0 %v1798
  %1865 = vmatpush.msra.mxu0 %v1795
  %1866 = vmatpush.msra.mxu0 %v1792
  %1867 = vmatpush.msra.mxu0 %v1789
  %1868 = vmatpush.msra.mxu0 %v1786
  %1869 = vmatmul.f32.gmra.mxu0 %v1612
  %v1870 = vpop.f32.mrf.mxu0
  %v1871 = vadd.f32 0.0, %v1870
  %1872 = vdwg.mxu0
  %1873 = vmatpush.msra.mxu0 %v1832
  %1874 = vmatpush.msra.mxu0 %v1829
  %1875 = vmatpush.msra.mxu0 %v1826
  %1876 = vmatpush.msra.mxu0 %v1823
  %1877 = vmatpush.msra.mxu0 %v1820
  %1878 = vmatpush.msra.mxu0 %v1817
  %1879 = vmatpush.msra.mxu0 %v1814
  %1880 = vmatpush.msra.mxu0 %v1811
  %1881 = vmatpush.msra.mxu0 %v1808
  %1882 = vmatpush.msra.mxu0 %v1805
  %1883 = vmatpush.msra.mxu0 %v1802
  %1884 = vmatpush.msra.mxu0 %v1799
  %1885 = vmatpush.msra.mxu0 %v1796
  %1886 = vmatpush.msra.mxu0 %v1793
  %1887 = vmatpush.msra.mxu0 %v1790
  %1888 = vmatpush.msra.mxu0 %v1787
  %1889 = vmatmul.f32.gmra.mxu0 %v1612
  %v1890 = vpop.f32.mrf.mxu0
  %v1891 = vadd.f32 0.0, %v1890
  %1892 = vdwg.mxu0
  %v1893 = vadd.f32 %v1782, %v1851
  %v1894 = vsub.f32 0.0, %v1893
  %v1895 = vmul.f32 %v1894, 1.442695
  %v1896 = vpow.pop %v1895
  %v1897 = vadd.f32 %v1896, 1.0
  %v1898 = vrcp.pop %v1897
  %v1899 = vmul.f32 %v1897, %v1898
  %v1900 = vsub.f32 1.0, %v1899
  %v1901 = vmul.f32 %v1898, %v1900
  %v1902 = vadd.f32 %v1898, %v1901
  %vm1903 = vweird.f32 %v1897
  %vm1904 = vweird.f32 %v1898
  %vm1905 = vmor %vm1903, %vm1904
  %v1906 = vsel %vm1905, %v1898, %v1902
  %v1907 = vand.u32 2147483647, %v1897
  %vm1908 = vcmp.eq.f32.partialorder %v1907, 8.507059e+37
  %v1909 = vand.u32 %v1897, 2147483648
  %v1910 = vor.u32 1.1754944e-38, %v1909
  %v1911 = vsel %vm1908, %v1910, %v1906
  %v1912 = vmul.f32 1.0, %v1911
  %v1913 = vadd.f32 %v1783, %v1871
  %v1914 = vsub.f32 0.0, %v1913
  %v1915 = vmul.f32 %v1914, 1.442695
  %v1916 = vpow.pop %v1915
  %v1917 = vadd.f32 %v1916, 1.0
  %v1918 = vrcp.pop %v1917
  %v1919 = vmul.f32 %v1917, %v1918
  %v1920 = vsub.f32 1.0, %v1919
  %v1921 = vmul.f32 %v1918, %v1920
  %v1922 = vadd.f32 %v1918, %v1921
  %vm1923 = vweird.f32 %v1917
  %vm1924 = vweird.f32 %v1918
  %vm1925 = vmor %vm1923, %vm1924
  %v1926 = vsel %vm1925, %v1918, %v1922
  %v1927 = vand.u32 2147483647, %v1917
  %vm1928 = vcmp.eq.f32.partialorder %v1927, 8.507059e+37
  %v1929 = vand.u32 %v1917, 2147483648
  %v1930 = vor.u32 1.1754944e-38, %v1929
  %v1931 = vsel %vm1928, %v1930, %v1926
  %v1932 = vmul.f32 1.0, %v1931
  %v1933 = vadd.f32 %v1891, %v790
  %v1934 = vmul.f32 %v1912, %v1933
  %v1935 = vadd.f32 %v1784, %v1934
  %v1936 = vtanh.pop %v1935
  %v1937 = vsub.f32 1.0, %v1932
  %v1938 = vmul.f32 %v1937, %v1936
  %v1939 = vmul.f32 %v1932, %v1612
  %v1940 = vadd.f32 %v1938, %v1939
  %s1941 = smul.u32 4, 6
  %s1942 = smul.addr %s1941, 8
  %s1943 = scalar_lea.vmem [#allocation2], %s1942
  %v1944 = vld [vmem:[%s1943 + $0x18] sm:$0xff]
  %v1945 = vld [vmem:[%s1943 + $0x20] sm:$0xff]
  %v1946 = vld [vmem:[%s1943 + $0x28] sm:$0xff]
  %v1947 = vld [vmem:[%s4] sm:$0xff]
  %v1948 = vld [vmem:[%s4 + $0x8] sm:$0xff]
  %v1949 = vld [vmem:[%s4 + $0x10] sm:$0xff]
  %v1950 = vld [vmem:[%s4 + $0x18] sm:$0xff]
  %v1951 = vld [vmem:[%s4 + $0x20] sm:$0xff]
  %v1952 = vld [vmem:[%s4 + $0x28] sm:$0xff]
  %v1953 = vld [vmem:[%s4 + $0x30] sm:$0xff]
  %v1954 = vld [vmem:[%s4 + $0x38] sm:$0xff]
  %v1955 = vld [vmem:[%s4 + $0x40] sm:$0xff]
  %v1956 = vld [vmem:[%s4 + $0x48] sm:$0xff]
  %v1957 = vld [vmem:[%s4 + $0x50] sm:$0xff]
  %v1958 = vld [vmem:[%s4 + $0x58] sm:$0xff]
  %v1959 = vld [vmem:[%s4 + $0x60] sm:$0xff]
  %v1960 = vld [vmem:[%s4 + $0x68] sm:$0xff]
  %v1961 = vld [vmem:[%s4 + $0x70] sm:$0xff]
  %v1962 = vld [vmem:[%s4 + $0x78] sm:$0xff]
  %v1963 = vld [vmem:[%s4 + $0x80] sm:$0xff]
  %v1964 = vld [vmem:[%s4 + $0x88] sm:$0xff]
  %v1965 = vld [vmem:[%s4 + $0x90] sm:$0xff]
  %v1966 = vld [vmem:[%s4 + $0x98] sm:$0xff]
  %v1967 = vld [vmem:[%s4 + $0xa0] sm:$0xff]
  %v1968 = vld [vmem:[%s4 + $0xa8] sm:$0xff]
  %v1969 = vld [vmem:[%s4 + $0xb0] sm:$0xff]
  %v1970 = vld [vmem:[%s4 + $0xb8] sm:$0xff]
  %v1971 = vld [vmem:[%s4 + $0xc0] sm:$0xff]
  %v1972 = vld [vmem:[%s4 + $0xc8] sm:$0xff]
  %v1973 = vld [vmem:[%s4 + $0xd0] sm:$0xff]
  %v1974 = vld [vmem:[%s4 + $0xd8] sm:$0xff]
  %v1975 = vld [vmem:[%s4 + $0xe0] sm:$0xff]
  %v1976 = vld [vmem:[%s4 + $0xe8] sm:$0xff]
  %v1977 = vld [vmem:[%s4 + $0xf0] sm:$0xff]
  %v1978 = vld [vmem:[%s4 + $0xf8] sm:$0xff]
  %v1979 = vld [vmem:[%s4 + $0x100] sm:$0xff]
  %v1980 = vld [vmem:[%s4 + $0x108] sm:$0xff]
  %v1981 = vld [vmem:[%s4 + $0x110] sm:$0xff]
  %v1982 = vld [vmem:[%s4 + $0x118] sm:$0xff]
  %v1983 = vld [vmem:[%s4 + $0x120] sm:$0xff]
  %v1984 = vld [vmem:[%s4 + $0x128] sm:$0xff]
  %v1985 = vld [vmem:[%s4 + $0x130] sm:$0xff]
  %v1986 = vld [vmem:[%s4 + $0x138] sm:$0xff]
  %v1987 = vld [vmem:[%s4 + $0x140] sm:$0xff]
  %v1988 = vld [vmem:[%s4 + $0x148] sm:$0xff]
  %v1989 = vld [vmem:[%s4 + $0x150] sm:$0xff]
  %v1990 = vld [vmem:[%s4 + $0x158] sm:$0xff]
  %v1991 = vld [vmem:[%s4 + $0x160] sm:$0xff]
  %v1992 = vld [vmem:[%s4 + $0x168] sm:$0xff]
  %v1993 = vld [vmem:[%s4 + $0x170] sm:$0xff]
  %v1994 = vld [vmem:[%s4 + $0x178] sm:$0xff]
  %1995 = vmatpush.msra.mxu0 %v1992
  %1996 = vmatpush.msra.mxu0 %v1989
  %1997 = vmatpush.msra.mxu0 %v1986
  %1998 = vmatpush.msra.mxu0 %v1983
  %1999 = vmatpush.msra.mxu0 %v1980
  %2000 = vmatpush.msra.mxu0 %v1977
  %2001 = vmatpush.msra.mxu0 %v1974
  %2002 = vmatpush.msra.mxu0 %v1971
  %2003 = vmatpush.msra.mxu0 %v1968
  %2004 = vmatpush.msra.mxu0 %v1965
  %2005 = vmatpush.msra.mxu0 %v1962
  %2006 = vmatpush.msra.mxu0 %v1959
  %2007 = vmatpush.msra.mxu0 %v1956
  %2008 = vmatpush.msra.mxu0 %v1953
  %2009 = vmatpush.msra.mxu0 %v1950
  %2010 = vmatpush.msra.mxu0 %v1947
  %2011 = vmatmul.f32.gmra.mxu0 %v1774
  %v2012 = vpop.f32.mrf.mxu0
  %v2013 = vadd.f32 0.0, %v2012
  %2014 = vdwg.mxu0
  %2015 = vmatpush.msra.mxu0 %v1993
  %2016 = vmatpush.msra.mxu0 %v1990
  %2017 = vmatpush.msra.mxu0 %v1987
  %2018 = vmatpush.msra.mxu0 %v1984
  %2019 = vmatpush.msra.mxu0 %v1981
  %2020 = vmatpush.msra.mxu0 %v1978
  %2021 = vmatpush.msra.mxu0 %v1975
  %2022 = vmatpush.msra.mxu0 %v1972
  %2023 = vmatpush.msra.mxu0 %v1969
  %2024 = vmatpush.msra.mxu0 %v1966
  %2025 = vmatpush.msra.mxu0 %v1963
  %2026 = vmatpush.msra.mxu0 %v1960
  %2027 = vmatpush.msra.mxu0 %v1957
  %2028 = vmatpush.msra.mxu0 %v1954
  %2029 = vmatpush.msra.mxu0 %v1951
  %2030 = vmatpush.msra.mxu0 %v1948
  %2031 = vmatmul.f32.gmra.mxu0 %v1774
  %v2032 = vpop.f32.mrf.mxu0
  %v2033 = vadd.f32 0.0, %v2032
  %2034 = vdwg.mxu0
  %2035 = vmatpush.msra.mxu0 %v1994
  %2036 = vmatpush.msra.mxu0 %v1991
  %2037 = vmatpush.msra.mxu0 %v1988
  %2038 = vmatpush.msra.mxu0 %v1985
  %2039 = vmatpush.msra.mxu0 %v1982
  %2040 = vmatpush.msra.mxu0 %v1979
  %2041 = vmatpush.msra.mxu0 %v1976
  %2042 = vmatpush.msra.mxu0 %v1973
  %2043 = vmatpush.msra.mxu0 %v1970
  %2044 = vmatpush.msra.mxu0 %v1967
  %2045 = vmatpush.msra.mxu0 %v1964
  %2046 = vmatpush.msra.mxu0 %v1961
  %2047 = vmatpush.msra.mxu0 %v1958
  %2048 = vmatpush.msra.mxu0 %v1955
  %2049 = vmatpush.msra.mxu0 %v1952
  %2050 = vmatpush.msra.mxu0 %v1949
  %2051 = vmatmul.f32.gmra.mxu0 %v1774
  %v2052 = vpop.f32.mrf.mxu0
  %v2053 = vadd.f32 0.0, %v2052
  %2054 = vdwg.mxu0
  %v2055 = vadd.f32 %v1944, %v2013
  %v2056 = vsub.f32 0.0, %v2055
  %v2057 = vmul.f32 %v2056, 1.442695
  %v2058 = vpow.pop %v2057
  %v2059 = vadd.f32 %v2058, 1.0
  %v2060 = vrcp.pop %v2059
  %v2061 = vmul.f32 %v2059, %v2060
  %v2062 = vsub.f32 1.0, %v2061
  %v2063 = vmul.f32 %v2060, %v2062
  %v2064 = vadd.f32 %v2060, %v2063
  %vm2065 = vweird.f32 %v2059
  %vm2066 = vweird.f32 %v2060
  %vm2067 = vmor %vm2065, %vm2066
  %v2068 = vsel %vm2067, %v2060, %v2064
  %v2069 = vand.u32 2147483647, %v2059
  %vm2070 = vcmp.eq.f32.partialorder %v2069, 8.507059e+37
  %v2071 = vand.u32 %v2059, 2147483648
  %v2072 = vor.u32 1.1754944e-38, %v2071
  %v2073 = vsel %vm2070, %v2072, %v2068
  %v2074 = vmul.f32 1.0, %v2073
  %v2075 = vadd.f32 %v1945, %v2033
  %v2076 = vsub.f32 0.0, %v2075
  %v2077 = vmul.f32 %v2076, 1.442695
  %v2078 = vpow.pop %v2077
  %v2079 = vadd.f32 %v2078, 1.0
  %v2080 = vrcp.pop %v2079
  %v2081 = vmul.f32 %v2079, %v2080
  %v2082 = vsub.f32 1.0, %v2081
  %v2083 = vmul.f32 %v2080, %v2082
  %v2084 = vadd.f32 %v2080, %v2083
  %vm2085 = vweird.f32 %v2079
  %vm2086 = vweird.f32 %v2080
  %vm2087 = vmor %vm2085, %vm2086
  %v2088 = vsel %vm2087, %v2080, %v2084
  %v2089 = vand.u32 2147483647, %v2079
  %vm2090 = vcmp.eq.f32.partialorder %v2089, 8.507059e+37
  %v2091 = vand.u32 %v2079, 2147483648
  %v2092 = vor.u32 1.1754944e-38, %v2091
  %v2093 = vsel %vm2090, %v2092, %v2088
  %v2094 = vmul.f32 1.0, %v2093
  %v2095 = vadd.f32 %v2053, %v794
  %v2096 = vmul.f32 %v2074, %v2095
  %v2097 = vadd.f32 %v1946, %v2096
  %v2098 = vtanh.pop %v2097
  %v2099 = vsub.f32 1.0, %v2094
  %v2100 = vmul.f32 %v2099, %v2098
  %v2101 = vmul.f32 %v2094, %v1774
  %v2102 = vadd.f32 %v2100, %v2101
  %s2103 = scalar_lea.vmem %s7, 48
  %2104 = vst [vmem:[%s2103] sm:$0xff] %v1940
  %s2105 = scalar_lea.vmem %s7, 64
  %2106 = vst [vmem:[%s2105 + $0x8] sm:$0xff] %v2102
  %v2107 = vld [vmem:[%s1943] sm:$0xff]
  %v2108 = vld [vmem:[%s1943 + $0x8] sm:$0xff]
  %v2109 = vld [vmem:[%s1943 + $0x10] sm:$0xff]
  %v2110 = vld [vmem:[%s3] sm:$0xff]
  %v2111 = vld [vmem:[%s3 + $0x8] sm:$0xff]
  %v2112 = vld [vmem:[%s3 + $0x10] sm:$0xff]
  %v2113 = vld [vmem:[%s3 + $0x18] sm:$0xff]
  %v2114 = vld [vmem:[%s3 + $0x20] sm:$0xff]
  %v2115 = vld [vmem:[%s3 + $0x28] sm:$0xff]
  %v2116 = vld [vmem:[%s3 + $0x30] sm:$0xff]
  %v2117 = vld [vmem:[%s3 + $0x38] sm:$0xff]
  %v2118 = vld [vmem:[%s3 + $0x40] sm:$0xff]
  %v2119 = vld [vmem:[%s3 + $0x48] sm:$0xff]
  %v2120 = vld [vmem:[%s3 + $0x50] sm:$0xff]
  %v2121 = vld [vmem:[%s3 + $0x58] sm:$0xff]
  %v2122 = vld [vmem:[%s3 + $0x60] sm:$0xff]
  %v2123 = vld [vmem:[%s3 + $0x68] sm:$0xff]
  %v2124 = vld [vmem:[%s3 + $0x70] sm:$0xff]
  %v2125 = vld [vmem:[%s3 + $0x78] sm:$0xff]
  %v2126 = vld [vmem:[%s3 + $0x80] sm:$0xff]
  %v2127 = vld [vmem:[%s3 + $0x88] sm:$0xff]
  %v2128 = vld [vmem:[%s3 + $0x90] sm:$0xff]
  %v2129 = vld [vmem:[%s3 + $0x98] sm:$0xff]
  %v2130 = vld [vmem:[%s3 + $0xa0] sm:$0xff]
  %v2131 = vld [vmem:[%s3 + $0xa8] sm:$0xff]
  %v2132 = vld [vmem:[%s3 + $0xb0] sm:$0xff]
  %v2133 = vld [vmem:[%s3 + $0xb8] sm:$0xff]
  %v2134 = vld [vmem:[%s3 + $0xc0] sm:$0xff]
  %v2135 = vld [vmem:[%s3 + $0xc8] sm:$0xff]
  %v2136 = vld [vmem:[%s3 + $0xd0] sm:$0xff]
  %v2137 = vld [vmem:[%s3 + $0xd8] sm:$0xff]
  %v2138 = vld [vmem:[%s3 + $0xe0] sm:$0xff]
  %v2139 = vld [vmem:[%s3 + $0xe8] sm:$0xff]
  %v2140 = vld [vmem:[%s3 + $0xf0] sm:$0xff]
  %v2141 = vld [vmem:[%s3 + $0xf8] sm:$0xff]
  %v2142 = vld [vmem:[%s3 + $0x100] sm:$0xff]
  %v2143 = vld [vmem:[%s3 + $0x108] sm:$0xff]
  %v2144 = vld [vmem:[%s3 + $0x110] sm:$0xff]
  %v2145 = vld [vmem:[%s3 + $0x118] sm:$0xff]
  %v2146 = vld [vmem:[%s3 + $0x120] sm:$0xff]
  %v2147 = vld [vmem:[%s3 + $0x128] sm:$0xff]
  %v2148 = vld [vmem:[%s3 + $0x130] sm:$0xff]
  %v2149 = vld [vmem:[%s3 + $0x138] sm:$0xff]
  %v2150 = vld [vmem:[%s3 + $0x140] sm:$0xff]
  %v2151 = vld [vmem:[%s3 + $0x148] sm:$0xff]
  %v2152 = vld [vmem:[%s3 + $0x150] sm:$0xff]
  %v2153 = vld [vmem:[%s3 + $0x158] sm:$0xff]
  %v2154 = vld [vmem:[%s3 + $0x160] sm:$0xff]
  %v2155 = vld [vmem:[%s3 + $0x168] sm:$0xff]
  %v2156 = vld [vmem:[%s3 + $0x170] sm:$0xff]
  %v2157 = vld [vmem:[%s3 + $0x178] sm:$0xff]
  %2158 = vmatpush.msra.mxu0 %v2155
  %2159 = vmatpush.msra.mxu0 %v2152
  %2160 = vmatpush.msra.mxu0 %v2149
  %2161 = vmatpush.msra.mxu0 %v2146
  %2162 = vmatpush.msra.mxu0 %v2143
  %2163 = vmatpush.msra.mxu0 %v2140
  %2164 = vmatpush.msra.mxu0 %v2137
  %2165 = vmatpush.msra.mxu0 %v2134
  %2166 = vmatpush.msra.mxu0 %v2131
  %2167 = vmatpush.msra.mxu0 %v2128
  %2168 = vmatpush.msra.mxu0 %v2125
  %2169 = vmatpush.msra.mxu0 %v2122
  %2170 = vmatpush.msra.mxu0 %v2119
  %2171 = vmatpush.msra.mxu0 %v2116
  %2172 = vmatpush.msra.mxu0 %v2113
  %2173 = vmatpush.msra.mxu0 %v2110
  %2174 = vmatmul.f32.gmra.mxu0 %v1940
  %v2175 = vpop.f32.mrf.mxu0
  %v2176 = vadd.f32 0.0, %v2175
  %2177 = vdwg.mxu0
  %2178 = vmatpush.msra.mxu0 %v2156
  %2179 = vmatpush.msra.mxu0 %v2153
  %2180 = vmatpush.msra.mxu0 %v2150
  %2181 = vmatpush.msra.mxu0 %v2147
  %2182 = vmatpush.msra.mxu0 %v2144
  %2183 = vmatpush.msra.mxu0 %v2141
  %2184 = vmatpush.msra.mxu0 %v2138
  %2185 = vmatpush.msra.mxu0 %v2135
  %2186 = vmatpush.msra.mxu0 %v2132
  %2187 = vmatpush.msra.mxu0 %v2129
  %2188 = vmatpush.msra.mxu0 %v2126
  %2189 = vmatpush.msra.mxu0 %v2123
  %2190 = vmatpush.msra.mxu0 %v2120
  %2191 = vmatpush.msra.mxu0 %v2117
  %2192 = vmatpush.msra.mxu0 %v2114
  %2193 = vmatpush.msra.mxu0 %v2111
  %2194 = vmatmul.f32.gmra.mxu0 %v1940
  %v2195 = vpop.f32.mrf.mxu0
  %v2196 = vadd.f32 0.0, %v2195
  %2197 = vdwg.mxu0
  %2198 = vmatpush.msra.mxu0 %v2157
  %2199 = vmatpush.msra.mxu0 %v2154
  %2200 = vmatpush.msra.mxu0 %v2151
  %2201 = vmatpush.msra.mxu0 %v2148
  %2202 = vmatpush.msra.mxu0 %v2145
  %2203 = vmatpush.msra.mxu0 %v2142
  %2204 = vmatpush.msra.mxu0 %v2139
  %2205 = vmatpush.msra.mxu0 %v2136
  %2206 = vmatpush.msra.mxu0 %v2133
  %2207 = vmatpush.msra.mxu0 %v2130
  %2208 = vmatpush.msra.mxu0 %v2127
  %2209 = vmatpush.msra.mxu0 %v2124
  %2210 = vmatpush.msra.mxu0 %v2121
  %2211 = vmatpush.msra.mxu0 %v2118
  %2212 = vmatpush.msra.mxu0 %v2115
  %2213 = vmatpush.msra.mxu0 %v2112
  %2214 = vmatmul.f32.gmra.mxu0 %v1940
  %v2215 = vpop.f32.mrf.mxu0
  %v2216 = vadd.f32 0.0, %v2215
  %2217 = vdwg.mxu0
  %v2218 = vadd.f32 %v2107, %v2176
  %v2219 = vsub.f32 0.0, %v2218
  %v2220 = vmul.f32 %v2219, 1.442695
  %v2221 = vpow.pop %v2220
  %v2222 = vadd.f32 %v2221, 1.0
  %v2223 = vrcp.pop %v2222
  %v2224 = vmul.f32 %v2222, %v2223
  %v2225 = vsub.f32 1.0, %v2224
  %v2226 = vmul.f32 %v2223, %v2225
  %v2227 = vadd.f32 %v2223, %v2226
  %vm2228 = vweird.f32 %v2222
  %vm2229 = vweird.f32 %v2223
  %vm2230 = vmor %vm2228, %vm2229
  %v2231 = vsel %vm2230, %v2223, %v2227
  %v2232 = vand.u32 2147483647, %v2222
  %vm2233 = vcmp.eq.f32.partialorder %v2232, 8.507059e+37
  %v2234 = vand.u32 %v2222, 2147483648
  %v2235 = vor.u32 1.1754944e-38, %v2234
  %v2236 = vsel %vm2233, %v2235, %v2231
  %v2237 = vmul.f32 1.0, %v2236
  %v2238 = vadd.f32 %v2108, %v2196
  %v2239 = vsub.f32 0.0, %v2238
  %v2240 = vmul.f32 %v2239, 1.442695
  %v2241 = vpow.pop %v2240
  %v2242 = vadd.f32 %v2241, 1.0
  %v2243 = vrcp.pop %v2242
  %v2244 = vmul.f32 %v2242, %v2243
  %v2245 = vsub.f32 1.0, %v2244
  %v2246 = vmul.f32 %v2243, %v2245
  %v2247 = vadd.f32 %v2243, %v2246
  %vm2248 = vweird.f32 %v2242
  %vm2249 = vweird.f32 %v2243
  %vm2250 = vmor %vm2248, %vm2249
  %v2251 = vsel %vm2250, %v2243, %v2247
  %v2252 = vand.u32 2147483647, %v2242
  %vm2253 = vcmp.eq.f32.partialorder %v2252, 8.507059e+37
  %v2254 = vand.u32 %v2242, 2147483648
  %v2255 = vor.u32 1.1754944e-38, %v2254
  %v2256 = vsel %vm2253, %v2255, %v2251
  %v2257 = vmul.f32 1.0, %v2256
  %v2258 = vadd.f32 %v2216, %v790
  %v2259 = vmul.f32 %v2237, %v2258
  %v2260 = vadd.f32 %v2109, %v2259
  %v2261 = vtanh.pop %v2260
  %v2262 = vsub.f32 1.0, %v2257
  %v2263 = vmul.f32 %v2262, %v2261
  %v2264 = vmul.f32 %v2257, %v1940
  %v2265 = vadd.f32 %v2263, %v2264
  %v2266 = vld [vmem:[%s1781 + $0x18] sm:$0xff]
  %v2267 = vld [vmem:[%s1781 + $0x20] sm:$0xff]
  %v2268 = vld [vmem:[%s1781 + $0x28] sm:$0xff]
  %v2269 = vld [vmem:[%s4] sm:$0xff]
  %v2270 = vld [vmem:[%s4 + $0x8] sm:$0xff]
  %v2271 = vld [vmem:[%s4 + $0x10] sm:$0xff]
  %v2272 = vld [vmem:[%s4 + $0x18] sm:$0xff]
  %v2273 = vld [vmem:[%s4 + $0x20] sm:$0xff]
  %v2274 = vld [vmem:[%s4 + $0x28] sm:$0xff]
  %v2275 = vld [vmem:[%s4 + $0x30] sm:$0xff]
  %v2276 = vld [vmem:[%s4 + $0x38] sm:$0xff]
  %v2277 = vld [vmem:[%s4 + $0x40] sm:$0xff]
  %v2278 = vld [vmem:[%s4 + $0x48] sm:$0xff]
  %v2279 = vld [vmem:[%s4 + $0x50] sm:$0xff]
  %v2280 = vld [vmem:[%s4 + $0x58] sm:$0xff]
  %v2281 = vld [vmem:[%s4 + $0x60] sm:$0xff]
  %v2282 = vld [vmem:[%s4 + $0x68] sm:$0xff]
  %v2283 = vld [vmem:[%s4 + $0x70] sm:$0xff]
  %v2284 = vld [vmem:[%s4 + $0x78] sm:$0xff]
  %v2285 = vld [vmem:[%s4 + $0x80] sm:$0xff]
  %v2286 = vld [vmem:[%s4 + $0x88] sm:$0xff]
  %v2287 = vld [vmem:[%s4 + $0x90] sm:$0xff]
  %v2288 = vld [vmem:[%s4 + $0x98] sm:$0xff]
  %v2289 = vld [vmem:[%s4 + $0xa0] sm:$0xff]
  %v2290 = vld [vmem:[%s4 + $0xa8] sm:$0xff]
  %v2291 = vld [vmem:[%s4 + $0xb0] sm:$0xff]
  %v2292 = vld [vmem:[%s4 + $0xb8] sm:$0xff]
  %v2293 = vld [vmem:[%s4 + $0xc0] sm:$0xff]
  %v2294 = vld [vmem:[%s4 + $0xc8] sm:$0xff]
  %v2295 = vld [vmem:[%s4 + $0xd0] sm:$0xff]
  %v2296 = vld [vmem:[%s4 + $0xd8] sm:$0xff]
  %v2297 = vld [vmem:[%s4 + $0xe0] sm:$0xff]
  %v2298 = vld [vmem:[%s4 + $0xe8] sm:$0xff]
  %v2299 = vld [vmem:[%s4 + $0xf0] sm:$0xff]
  %v2300 = vld [vmem:[%s4 + $0xf8] sm:$0xff]
  %v2301 = vld [vmem:[%s4 + $0x100] sm:$0xff]
  %v2302 = vld [vmem:[%s4 + $0x108] sm:$0xff]
  %v2303 = vld [vmem:[%s4 + $0x110] sm:$0xff]
  %v2304 = vld [vmem:[%s4 + $0x118] sm:$0xff]
  %v2305 = vld [vmem:[%s4 + $0x120] sm:$0xff]
  %v2306 = vld [vmem:[%s4 + $0x128] sm:$0xff]
  %v2307 = vld [vmem:[%s4 + $0x130] sm:$0xff]
  %v2308 = vld [vmem:[%s4 + $0x138] sm:$0xff]
  %v2309 = vld [vmem:[%s4 + $0x140] sm:$0xff]
  %v2310 = vld [vmem:[%s4 + $0x148] sm:$0xff]
  %v2311 = vld [vmem:[%s4 + $0x150] sm:$0xff]
  %v2312 = vld [vmem:[%s4 + $0x158] sm:$0xff]
  %v2313 = vld [vmem:[%s4 + $0x160] sm:$0xff]
  %v2314 = vld [vmem:[%s4 + $0x168] sm:$0xff]
  %v2315 = vld [vmem:[%s4 + $0x170] sm:$0xff]
  %v2316 = vld [vmem:[%s4 + $0x178] sm:$0xff]
  %2317 = vmatpush.msra.mxu0 %v2314
  %2318 = vmatpush.msra.mxu0 %v2311
  %2319 = vmatpush.msra.mxu0 %v2308
  %2320 = vmatpush.msra.mxu0 %v2305
  %2321 = vmatpush.msra.mxu0 %v2302
  %2322 = vmatpush.msra.mxu0 %v2299
  %2323 = vmatpush.msra.mxu0 %v2296
  %2324 = vmatpush.msra.mxu0 %v2293
  %2325 = vmatpush.msra.mxu0 %v2290
  %2326 = vmatpush.msra.mxu0 %v2287
  %2327 = vmatpush.msra.mxu0 %v2284
  %2328 = vmatpush.msra.mxu0 %v2281
  %2329 = vmatpush.msra.mxu0 %v2278
  %2330 = vmatpush.msra.mxu0 %v2275
  %2331 = vmatpush.msra.mxu0 %v2272
  %2332 = vmatpush.msra.mxu0 %v2269
  %2333 = vmatmul.f32.gmra.mxu0 %v2102
  %v2334 = vpop.f32.mrf.mxu0
  %v2335 = vadd.f32 0.0, %v2334
  %2336 = vdwg.mxu0
  %2337 = vmatpush.msra.mxu0 %v2315
  %2338 = vmatpush.msra.mxu0 %v2312
  %2339 = vmatpush.msra.mxu0 %v2309
  %2340 = vmatpush.msra.mxu0 %v2306
  %2341 = vmatpush.msra.mxu0 %v2303
  %2342 = vmatpush.msra.mxu0 %v2300
  %2343 = vmatpush.msra.mxu0 %v2297
  %2344 = vmatpush.msra.mxu0 %v2294
  %2345 = vmatpush.msra.mxu0 %v2291
  %2346 = vmatpush.msra.mxu0 %v2288
  %2347 = vmatpush.msra.mxu0 %v2285
  %2348 = vmatpush.msra.mxu0 %v2282
  %2349 = vmatpush.msra.mxu0 %v2279
  %2350 = vmatpush.msra.mxu0 %v2276
  %2351 = vmatpush.msra.mxu0 %v2273
  %2352 = vmatpush.msra.mxu0 %v2270
  %2353 = vmatmul.f32.gmra.mxu0 %v2102
  %v2354 = vpop.f32.mrf.mxu0
  %v2355 = vadd.f32 0.0, %v2354
  %2356 = vdwg.mxu0
  %2357 = vmatpush.msra.mxu0 %v2316
  %2358 = vmatpush.msra.mxu0 %v2313
  %2359 = vmatpush.msra.mxu0 %v2310
  %2360 = vmatpush.msra.mxu0 %v2307
  %2361 = vmatpush.msra.mxu0 %v2304
  %2362 = vmatpush.msra.mxu0 %v2301
  %2363 = vmatpush.msra.mxu0 %v2298
  %2364 = vmatpush.msra.mxu0 %v2295
  %2365 = vmatpush.msra.mxu0 %v2292
  %2366 = vmatpush.msra.mxu0 %v2289
  %2367 = vmatpush.msra.mxu0 %v2286
  %2368 = vmatpush.msra.mxu0 %v2283
  %2369 = vmatpush.msra.mxu0 %v2280
  %2370 = vmatpush.msra.mxu0 %v2277
  %2371 = vmatpush.msra.mxu0 %v2274
  %2372 = vmatpush.msra.mxu0 %v2271
  %2373 = vmatmul.f32.gmra.mxu0 %v2102
  %v2374 = vpop.f32.mrf.mxu0
  %v2375 = vadd.f32 0.0, %v2374
  %2376 = vdwg.mxu0
  %v2377 = vadd.f32 %v2266, %v2335
  %v2378 = vsub.f32 0.0, %v2377
  %v2379 = vmul.f32 %v2378, 1.442695
  %v2380 = vpow.pop %v2379
  %v2381 = vadd.f32 %v2380, 1.0
  %v2382 = vrcp.pop %v2381
  %v2383 = vmul.f32 %v2381, %v2382
  %v2384 = vsub.f32 1.0, %v2383
  %v2385 = vmul.f32 %v2382, %v2384
  %v2386 = vadd.f32 %v2382, %v2385
  %vm2387 = vweird.f32 %v2381
  %vm2388 = vweird.f32 %v2382
  %vm2389 = vmor %vm2387, %vm2388
  %v2390 = vsel %vm2389, %v2382, %v2386
  %v2391 = vand.u32 2147483647, %v2381
  %vm2392 = vcmp.eq.f32.partialorder %v2391, 8.507059e+37
  %v2393 = vand.u32 %v2381, 2147483648
  %v2394 = vor.u32 1.1754944e-38, %v2393
  %v2395 = vsel %vm2392, %v2394, %v2390
  %v2396 = vmul.f32 1.0, %v2395
  %v2397 = vadd.f32 %v2267, %v2355
  %v2398 = vsub.f32 0.0, %v2397
  %v2399 = vmul.f32 %v2398, 1.442695
  %v2400 = vpow.pop %v2399
  %v2401 = vadd.f32 %v2400, 1.0
  %v2402 = vrcp.pop %v2401
  %v2403 = vmul.f32 %v2401, %v2402
  %v2404 = vsub.f32 1.0, %v2403
  %v2405 = vmul.f32 %v2402, %v2404
  %v2406 = vadd.f32 %v2402, %v2405
  %vm2407 = vweird.f32 %v2401
  %vm2408 = vweird.f32 %v2402
  %vm2409 = vmor %vm2407, %vm2408
  %v2410 = vsel %vm2409, %v2402, %v2406
  %v2411 = vand.u32 2147483647, %v2401
  %vm2412 = vcmp.eq.f32.partialorder %v2411, 8.507059e+37
  %v2413 = vand.u32 %v2401, 2147483648
  %v2414 = vor.u32 1.1754944e-38, %v2413
  %v2415 = vsel %vm2412, %v2414, %v2410
  %v2416 = vmul.f32 1.0, %v2415
  %v2417 = vadd.f32 %v2375, %v794
  %v2418 = vmul.f32 %v2396, %v2417
  %v2419 = vadd.f32 %v2268, %v2418
  %v2420 = vtanh.pop %v2419
  %v2421 = vsub.f32 1.0, %v2416
  %v2422 = vmul.f32 %v2421, %v2420
  %v2423 = vmul.f32 %v2416, %v2102
  %v2424 = vadd.f32 %v2422, %v2423
  %2425 = vst [vmem:[%s2105] sm:$0xff] %v2265
  %2426 = vst [vmem:[%s2103 + $0x8] sm:$0xff] %v2424
  %v2427 = vld [vmem:[%s1615] sm:$0xff]
  %v2428 = vld [vmem:[%s1615 + $0x8] sm:$0xff]
  %v2429 = vld [vmem:[%s1615 + $0x10] sm:$0xff]
  %v2430 = vld [vmem:[%s3] sm:$0xff]
  %v2431 = vld [vmem:[%s3 + $0x8] sm:$0xff]
  %v2432 = vld [vmem:[%s3 + $0x10] sm:$0xff]
  %v2433 = vld [vmem:[%s3 + $0x18] sm:$0xff]
  %v2434 = vld [vmem:[%s3 + $0x20] sm:$0xff]
  %v2435 = vld [vmem:[%s3 + $0x28] sm:$0xff]
  %v2436 = vld [vmem:[%s3 + $0x30] sm:$0xff]
  %v2437 = vld [vmem:[%s3 + $0x38] sm:$0xff]
  %v2438 = vld [vmem:[%s3 + $0x40] sm:$0xff]
  %v2439 = vld [vmem:[%s3 + $0x48] sm:$0xff]
  %v2440 = vld [vmem:[%s3 + $0x50] sm:$0xff]
  %v2441 = vld [vmem:[%s3 + $0x58] sm:$0xff]
  %v2442 = vld [vmem:[%s3 + $0x60] sm:$0xff]
  %v2443 = vld [vmem:[%s3 + $0x68] sm:$0xff]
  %v2444 = vld [vmem:[%s3 + $0x70] sm:$0xff]
  %v2445 = vld [vmem:[%s3 + $0x78] sm:$0xff]
  %v2446 = vld [vmem:[%s3 + $0x80] sm:$0xff]
  %v2447 = vld [vmem:[%s3 + $0x88] sm:$0xff]
  %v2448 = vld [vmem:[%s3 + $0x90] sm:$0xff]
  %v2449 = vld [vmem:[%s3 + $0x98] sm:$0xff]
  %v2450 = vld [vmem:[%s3 + $0xa0] sm:$0xff]
  %v2451 = vld [vmem:[%s3 + $0xa8] sm:$0xff]
  %v2452 = vld [vmem:[%s3 + $0xb0] sm:$0xff]
  %v2453 = vld [vmem:[%s3 + $0xb8] sm:$0xff]
  %v2454 = vld [vmem:[%s3 + $0xc0] sm:$0xff]
  %v2455 = vld [vmem:[%s3 + $0xc8] sm:$0xff]
  %v2456 = vld [vmem:[%s3 + $0xd0] sm:$0xff]
  %v2457 = vld [vmem:[%s3 + $0xd8] sm:$0xff]
  %v2458 = vld [vmem:[%s3 + $0xe0] sm:$0xff]
  %v2459 = vld [vmem:[%s3 + $0xe8] sm:$0xff]
  %v2460 = vld [vmem:[%s3 + $0xf0] sm:$0xff]
  %v2461 = vld [vmem:[%s3 + $0xf8] sm:$0xff]
  %v2462 = vld [vmem:[%s3 + $0x100] sm:$0xff]
  %v2463 = vld [vmem:[%s3 + $0x108] sm:$0xff]
  %v2464 = vld [vmem:[%s3 + $0x110] sm:$0xff]
  %v2465 = vld [vmem:[%s3 + $0x118] sm:$0xff]
  %v2466 = vld [vmem:[%s3 + $0x120] sm:$0xff]
  %v2467 = vld [vmem:[%s3 + $0x128] sm:$0xff]
  %v2468 = vld [vmem:[%s3 + $0x130] sm:$0xff]
  %v2469 = vld [vmem:[%s3 + $0x138] sm:$0xff]
  %v2470 = vld [vmem:[%s3 + $0x140] sm:$0xff]
  %v2471 = vld [vmem:[%s3 + $0x148] sm:$0xff]
  %v2472 = vld [vmem:[%s3 + $0x150] sm:$0xff]
  %v2473 = vld [vmem:[%s3 + $0x158] sm:$0xff]
  %v2474 = vld [vmem:[%s3 + $0x160] sm:$0xff]
  %v2475 = vld [vmem:[%s3 + $0x168] sm:$0xff]
  %v2476 = vld [vmem:[%s3 + $0x170] sm:$0xff]
  %v2477 = vld [vmem:[%s3 + $0x178] sm:$0xff]
  %2478 = vmatpush.msra.mxu0 %v2475
  %2479 = vmatpush.msra.mxu0 %v2472
  %2480 = vmatpush.msra.mxu0 %v2469
  %2481 = vmatpush.msra.mxu0 %v2466
  %2482 = vmatpush.msra.mxu0 %v2463
  %2483 = vmatpush.msra.mxu0 %v2460
  %2484 = vmatpush.msra.mxu0 %v2457
  %2485 = vmatpush.msra.mxu0 %v2454
  %2486 = vmatpush.msra.mxu0 %v2451
  %2487 = vmatpush.msra.mxu0 %v2448
  %2488 = vmatpush.msra.mxu0 %v2445
  %2489 = vmatpush.msra.mxu0 %v2442
  %2490 = vmatpush.msra.mxu0 %v2439
  %2491 = vmatpush.msra.mxu0 %v2436
  %2492 = vmatpush.msra.mxu0 %v2433
  %2493 = vmatpush.msra.mxu0 %v2430
  %2494 = vmatmul.f32.gmra.mxu0 %v2265
  %v2495 = vpop.f32.mrf.mxu0
  %v2496 = vadd.f32 0.0, %v2495
  %2497 = vdwg.mxu0
  %2498 = vmatpush.msra.mxu0 %v2476
  %2499 = vmatpush.msra.mxu0 %v2473
  %2500 = vmatpush.msra.mxu0 %v2470
  %2501 = vmatpush.msra.mxu0 %v2467
  %2502 = vmatpush.msra.mxu0 %v2464
  %2503 = vmatpush.msra.mxu0 %v2461
  %2504 = vmatpush.msra.mxu0 %v2458
  %2505 = vmatpush.msra.mxu0 %v2455
  %2506 = vmatpush.msra.mxu0 %v2452
  %2507 = vmatpush.msra.mxu0 %v2449
  %2508 = vmatpush.msra.mxu0 %v2446
  %2509 = vmatpush.msra.mxu0 %v2443
  %2510 = vmatpush.msra.mxu0 %v2440
  %2511 = vmatpush.msra.mxu0 %v2437
  %2512 = vmatpush.msra.mxu0 %v2434
  %2513 = vmatpush.msra.mxu0 %v2431
  %2514 = vmatmul.f32.gmra.mxu0 %v2265
  %v2515 = vpop.f32.mrf.mxu0
  %v2516 = vadd.f32 0.0, %v2515
  %2517 = vdwg.mxu0
  %2518 = vmatpush.msra.mxu0 %v2477
  %2519 = vmatpush.msra.mxu0 %v2474
  %2520 = vmatpush.msra.mxu0 %v2471
  %2521 = vmatpush.msra.mxu0 %v2468
  %2522 = vmatpush.msra.mxu0 %v2465
  %2523 = vmatpush.msra.mxu0 %v2462
  %2524 = vmatpush.msra.mxu0 %v2459
  %2525 = vmatpush.msra.mxu0 %v2456
  %2526 = vmatpush.msra.mxu0 %v2453
  %2527 = vmatpush.msra.mxu0 %v2450
  %2528 = vmatpush.msra.mxu0 %v2447
  %2529 = vmatpush.msra.mxu0 %v2444
  %2530 = vmatpush.msra.mxu0 %v2441
  %2531 = vmatpush.msra.mxu0 %v2438
  %2532 = vmatpush.msra.mxu0 %v2435
  %2533 = vmatpush.msra.mxu0 %v2432
  %2534 = vmatmul.f32.gmra.mxu0 %v2265
  %v2535 = vpop.f32.mrf.mxu0
  %v2536 = vadd.f32 0.0, %v2535
  %2537 = vdwg.mxu0
  %v2538 = vadd.f32 %v2427, %v2496
  %v2539 = vsub.f32 0.0, %v2538
  %v2540 = vmul.f32 %v2539, 1.442695
  %v2541 = vpow.pop %v2540
  %v2542 = vadd.f32 %v2541, 1.0
  %v2543 = vrcp.pop %v2542
  %v2544 = vmul.f32 %v2542, %v2543
  %v2545 = vsub.f32 1.0, %v2544
  %v2546 = vmul.f32 %v2543, %v2545
  %v2547 = vadd.f32 %v2543, %v2546
  %vm2548 = vweird.f32 %v2542
  %vm2549 = vweird.f32 %v2543
  %vm2550 = vmor %vm2548, %vm2549
  %v2551 = vsel %vm2550, %v2543, %v2547
  %v2552 = vand.u32 2147483647, %v2542
  %vm2553 = vcmp.eq.f32.partialorder %v2552, 8.507059e+37
  %v2554 = vand.u32 %v2542, 2147483648
  %v2555 = vor.u32 1.1754944e-38, %v2554
  %v2556 = vsel %vm2553, %v2555, %v2551
  %v2557 = vmul.f32 1.0, %v2556
  %v2558 = vadd.f32 %v2428, %v2516
  %v2559 = vsub.f32 0.0, %v2558
  %v2560 = vmul.f32 %v2559, 1.442695
  %v2561 = vpow.pop %v2560
  %v2562 = vadd.f32 %v2561, 1.0
  %v2563 = vrcp.pop %v2562
  %v2564 = vmul.f32 %v2562, %v2563
  %v2565 = vsub.f32 1.0, %v2564
  %v2566 = vmul.f32 %v2563, %v2565
  %v2567 = vadd.f32 %v2563, %v2566
  %vm2568 = vweird.f32 %v2562
  %vm2569 = vweird.f32 %v2563
  %vm2570 = vmor %vm2568, %vm2569
  %v2571 = vsel %vm2570, %v2563, %v2567
  %v2572 = vand.u32 2147483647, %v2562
  %vm2573 = vcmp.eq.f32.partialorder %v2572, 8.507059e+37
  %v2574 = vand.u32 %v2562, 2147483648
  %v2575 = vor.u32 1.1754944e-38, %v2574
  %v2576 = vsel %vm2573, %v2575, %v2571
  %v2577 = vmul.f32 1.0, %v2576
  %v2578 = vadd.f32 %v2536, %v790
  %v2579 = vmul.f32 %v2557, %v2578
  %v2580 = vadd.f32 %v2429, %v2579
  %v2581 = vtanh.pop %v2580
  %v2582 = vsub.f32 1.0, %v2577
  %v2583 = vmul.f32 %v2582, %v2581
  %v2584 = vmul.f32 %v2577, %v2265
  %v2585 = vadd.f32 %v2583, %v2584
  %v2586 = vld [vmem:[%s1453 + $0x18] sm:$0xff]
  %v2587 = vld [vmem:[%s1453 + $0x20] sm:$0xff]
  %v2588 = vld [vmem:[%s1453 + $0x28] sm:$0xff]
  %v2589 = vld [vmem:[%s4] sm:$0xff]
  %v2590 = vld [vmem:[%s4 + $0x8] sm:$0xff]
  %v2591 = vld [vmem:[%s4 + $0x10] sm:$0xff]
  %v2592 = vld [vmem:[%s4 + $0x18] sm:$0xff]
  %v2593 = vld [vmem:[%s4 + $0x20] sm:$0xff]
  %v2594 = vld [vmem:[%s4 + $0x28] sm:$0xff]
  %v2595 = vld [vmem:[%s4 + $0x30] sm:$0xff]
  %v2596 = vld [vmem:[%s4 + $0x38] sm:$0xff]
  %v2597 = vld [vmem:[%s4 + $0x40] sm:$0xff]
  %v2598 = vld [vmem:[%s4 + $0x48] sm:$0xff]
  %v2599 = vld [vmem:[%s4 + $0x50] sm:$0xff]
  %v2600 = vld [vmem:[%s4 + $0x58] sm:$0xff]
  %v2601 = vld [vmem:[%s4 + $0x60] sm:$0xff]
  %v2602 = vld [vmem:[%s4 + $0x68] sm:$0xff]
  %v2603 = vld [vmem:[%s4 + $0x70] sm:$0xff]
  %v2604 = vld [vmem:[%s4 + $0x78] sm:$0xff]
  %v2605 = vld [vmem:[%s4 + $0x80] sm:$0xff]
  %v2606 = vld [vmem:[%s4 + $0x88] sm:$0xff]
  %v2607 = vld [vmem:[%s4 + $0x90] sm:$0xff]
  %v2608 = vld [vmem:[%s4 + $0x98] sm:$0xff]
  %v2609 = vld [vmem:[%s4 + $0xa0] sm:$0xff]
  %v2610 = vld [vmem:[%s4 + $0xa8] sm:$0xff]
  %v2611 = vld [vmem:[%s4 + $0xb0] sm:$0xff]
  %v2612 = vld [vmem:[%s4 + $0xb8] sm:$0xff]
  %v2613 = vld [vmem:[%s4 + $0xc0] sm:$0xff]
  %v2614 = vld [vmem:[%s4 + $0xc8] sm:$0xff]
  %v2615 = vld [vmem:[%s4 + $0xd0] sm:$0xff]
  %v2616 = vld [vmem:[%s4 + $0xd8] sm:$0xff]
  %v2617 = vld [vmem:[%s4 + $0xe0] sm:$0xff]
  %v2618 = vld [vmem:[%s4 + $0xe8] sm:$0xff]
  %v2619 = vld [vmem:[%s4 + $0xf0] sm:$0xff]
  %v2620 = vld [vmem:[%s4 + $0xf8] sm:$0xff]
  %v2621 = vld [vmem:[%s4 + $0x100] sm:$0xff]
  %v2622 = vld [vmem:[%s4 + $0x108] sm:$0xff]
  %v2623 = vld [vmem:[%s4 + $0x110] sm:$0xff]
  %v2624 = vld [vmem:[%s4 + $0x118] sm:$0xff]
  %v2625 = vld [vmem:[%s4 + $0x120] sm:$0xff]
  %v2626 = vld [vmem:[%s4 + $0x128] sm:$0xff]
  %v2627 = vld [vmem:[%s4 + $0x130] sm:$0xff]
  %v2628 = vld [vmem:[%s4 + $0x138] sm:$0xff]
  %v2629 = vld [vmem:[%s4 + $0x140] sm:$0xff]
  %v2630 = vld [vmem:[%s4 + $0x148] sm:$0xff]
  %v2631 = vld [vmem:[%s4 + $0x150] sm:$0xff]
  %v2632 = vld [vmem:[%s4 + $0x158] sm:$0xff]
  %v2633 = vld [vmem:[%s4 + $0x160] sm:$0xff]
  %v2634 = vld [vmem:[%s4 + $0x168] sm:$0xff]
  %v2635 = vld [vmem:[%s4 + $0x170] sm:$0xff]
  %v2636 = vld [vmem:[%s4 + $0x178] sm:$0xff]
  %2637 = vmatpush.msra.mxu0 %v2634
  %2638 = vmatpush.msra.mxu0 %v2631
  %2639 = vmatpush.msra.mxu0 %v2628
  %2640 = vmatpush.msra.mxu0 %v2625
  %2641 = vmatpush.msra.mxu0 %v2622
  %2642 = vmatpush.msra.mxu0 %v2619
  %2643 = vmatpush.msra.mxu0 %v2616
  %2644 = vmatpush.msra.mxu0 %v2613
  %2645 = vmatpush.msra.mxu0 %v2610
  %2646 = vmatpush.msra.mxu0 %v2607
  %2647 = vmatpush.msra.mxu0 %v2604
  %2648 = vmatpush.msra.mxu0 %v2601
  %2649 = vmatpush.msra.mxu0 %v2598
  %2650 = vmatpush.msra.mxu0 %v2595
  %2651 = vmatpush.msra.mxu0 %v2592
  %2652 = vmatpush.msra.mxu0 %v2589
  %2653 = vmatmul.f32.gmra.mxu0 %v2424
  %v2654 = vpop.f32.mrf.mxu0
  %v2655 = vadd.f32 0.0, %v2654
  %2656 = vdwg.mxu0
  %2657 = vmatpush.msra.mxu0 %v2635
  %2658 = vmatpush.msra.mxu0 %v2632
  %2659 = vmatpush.msra.mxu0 %v2629
  %2660 = vmatpush.msra.mxu0 %v2626
  %2661 = vmatpush.msra.mxu0 %v2623
  %2662 = vmatpush.msra.mxu0 %v2620
  %2663 = vmatpush.msra.mxu0 %v2617
  %2664 = vmatpush.msra.mxu0 %v2614
  %2665 = vmatpush.msra.mxu0 %v2611
  %2666 = vmatpush.msra.mxu0 %v2608
  %2667 = vmatpush.msra.mxu0 %v2605
  %2668 = vmatpush.msra.mxu0 %v2602
  %2669 = vmatpush.msra.mxu0 %v2599
  %2670 = vmatpush.msra.mxu0 %v2596
  %2671 = vmatpush.msra.mxu0 %v2593
  %2672 = vmatpush.msra.mxu0 %v2590
  %2673 = vmatmul.f32.gmra.mxu0 %v2424
  %v2674 = vpop.f32.mrf.mxu0
  %v2675 = vadd.f32 0.0, %v2674
  %2676 = vdwg.mxu0
  %2677 = vmatpush.msra.mxu0 %v2636
  %2678 = vmatpush.msra.mxu0 %v2633
  %2679 = vmatpush.msra.mxu0 %v2630
  %2680 = vmatpush.msra.mxu0 %v2627
  %2681 = vmatpush.msra.mxu0 %v2624
  %2682 = vmatpush.msra.mxu0 %v2621
  %2683 = vmatpush.msra.mxu0 %v2618
  %2684 = vmatpush.msra.mxu0 %v2615
  %2685 = vmatpush.msra.mxu0 %v2612
  %2686 = vmatpush.msra.mxu0 %v2609
  %2687 = vmatpush.msra.mxu0 %v2606
  %2688 = vmatpush.msra.mxu0 %v2603
  %2689 = vmatpush.msra.mxu0 %v2600
  %2690 = vmatpush.msra.mxu0 %v2597
  %2691 = vmatpush.msra.mxu0 %v2594
  %2692 = vmatpush.msra.mxu0 %v2591
  %2693 = vmatmul.f32.gmra.mxu0 %v2424
  %v2694 = vpop.f32.mrf.mxu0
  %v2695 = vadd.f32 0.0, %v2694
  %2696 = vdwg.mxu0
  %v2697 = vadd.f32 %v2586, %v2655
  %v2698 = vsub.f32 0.0, %v2697
  %v2699 = vmul.f32 %v2698, 1.442695
  %v2700 = vpow.pop %v2699
  %v2701 = vadd.f32 %v2700, 1.0
  %v2702 = vrcp.pop %v2701
  %v2703 = vmul.f32 %v2701, %v2702
  %v2704 = vsub.f32 1.0, %v2703
  %v2705 = vmul.f32 %v2702, %v2704
  %v2706 = vadd.f32 %v2702, %v2705
  %vm2707 = vweird.f32 %v2701
  %vm2708 = vweird.f32 %v2702
  %vm2709 = vmor %vm2707, %vm2708
  %v2710 = vsel %vm2709, %v2702, %v2706
  %v2711 = vand.u32 2147483647, %v2701
  %vm2712 = vcmp.eq.f32.partialorder %v2711, 8.507059e+37
  %v2713 = vand.u32 %v2701, 2147483648
  %v2714 = vor.u32 1.1754944e-38, %v2713
  %v2715 = vsel %vm2712, %v2714, %v2710
  %v2716 = vmul.f32 1.0, %v2715
  %v2717 = vadd.f32 %v2587, %v2675
  %v2718 = vsub.f32 0.0, %v2717
  %v2719 = vmul.f32 %v2718, 1.442695
  %v2720 = vpow.pop %v2719
  %v2721 = vadd.f32 %v2720, 1.0
  %v2722 = vrcp.pop %v2721
  %v2723 = vmul.f32 %v2721, %v2722
  %v2724 = vsub.f32 1.0, %v2723
  %v2725 = vmul.f32 %v2722, %v2724
  %v2726 = vadd.f32 %v2722, %v2725
  %vm2727 = vweird.f32 %v2721
  %vm2728 = vweird.f32 %v2722
  %vm2729 = vmor %vm2727, %vm2728
  %v2730 = vsel %vm2729, %v2722, %v2726
  %v2731 = vand.u32 2147483647, %v2721
  %vm2732 = vcmp.eq.f32.partialorder %v2731, 8.507059e+37
  %v2733 = vand.u32 %v2721, 2147483648
  %v2734 = vor.u32 1.1754944e-38, %v2733
  %v2735 = vsel %vm2732, %v2734, %v2730
  %v2736 = vmul.f32 1.0, %v2735
  %v2737 = vadd.f32 %v2695, %v794
  %v2738 = vmul.f32 %v2716, %v2737
  %v2739 = vadd.f32 %v2588, %v2738
  %v2740 = vtanh.pop %v2739
  %v2741 = vsub.f32 1.0, %v2736
  %v2742 = vmul.f32 %v2741, %v2740
  %v2743 = vmul.f32 %v2736, %v2424
  %v2744 = vadd.f32 %v2742, %v2743
  %2745 = vst [vmem:[%s1777] sm:$0xff] %v2585
  %2746 = vst [vmem:[%s1775 + $0x8] sm:$0xff] %v2744
  %v2747 = vld [vmem:[%s1287] sm:$0xff]
  %v2748 = vld [vmem:[%s1287 + $0x8] sm:$0xff]
  %v2749 = vld [vmem:[%s1287 + $0x10] sm:$0xff]
  %v2750 = vld [vmem:[%s3] sm:$0xff]
  %v2751 = vld [vmem:[%s3 + $0x8] sm:$0xff]
  %v2752 = vld [vmem:[%s3 + $0x10] sm:$0xff]
  %v2753 = vld [vmem:[%s3 + $0x18] sm:$0xff]
  %v2754 = vld [vmem:[%s3 + $0x20] sm:$0xff]
  %v2755 = vld [vmem:[%s3 + $0x28] sm:$0xff]
  %v2756 = vld [vmem:[%s3 + $0x30] sm:$0xff]
  %v2757 = vld [vmem:[%s3 + $0x38] sm:$0xff]
  %v2758 = vld [vmem:[%s3 + $0x40] sm:$0xff]
  %v2759 = vld [vmem:[%s3 + $0x48] sm:$0xff]
  %v2760 = vld [vmem:[%s3 + $0x50] sm:$0xff]
  %v2761 = vld [vmem:[%s3 + $0x58] sm:$0xff]
  %v2762 = vld [vmem:[%s3 + $0x60] sm:$0xff]
  %v2763 = vld [vmem:[%s3 + $0x68] sm:$0xff]
  %v2764 = vld [vmem:[%s3 + $0x70] sm:$0xff]
  %v2765 = vld [vmem:[%s3 + $0x78] sm:$0xff]
  %v2766 = vld [vmem:[%s3 + $0x80] sm:$0xff]
  %v2767 = vld [vmem:[%s3 + $0x88] sm:$0xff]
  %v2768 = vld [vmem:[%s3 + $0x90] sm:$0xff]
  %v2769 = vld [vmem:[%s3 + $0x98] sm:$0xff]
  %v2770 = vld [vmem:[%s3 + $0xa0] sm:$0xff]
  %v2771 = vld [vmem:[%s3 + $0xa8] sm:$0xff]
  %v2772 = vld [vmem:[%s3 + $0xb0] sm:$0xff]
  %v2773 = vld [vmem:[%s3 + $0xb8] sm:$0xff]
  %v2774 = vld [vmem:[%s3 + $0xc0] sm:$0xff]
  %v2775 = vld [vmem:[%s3 + $0xc8] sm:$0xff]
  %v2776 = vld [vmem:[%s3 + $0xd0] sm:$0xff]
  %v2777 = vld [vmem:[%s3 + $0xd8] sm:$0xff]
  %v2778 = vld [vmem:[%s3 + $0xe0] sm:$0xff]
  %v2779 = vld [vmem:[%s3 + $0xe8] sm:$0xff]
  %v2780 = vld [vmem:[%s3 + $0xf0] sm:$0xff]
  %v2781 = vld [vmem:[%s3 + $0xf8] sm:$0xff]
  %v2782 = vld [vmem:[%s3 + $0x100] sm:$0xff]
  %v2783 = vld [vmem:[%s3 + $0x108] sm:$0xff]
  %v2784 = vld [vmem:[%s3 + $0x110] sm:$0xff]
  %v2785 = vld [vmem:[%s3 + $0x118] sm:$0xff]
  %v2786 = vld [vmem:[%s3 + $0x120] sm:$0xff]
  %v2787 = vld [vmem:[%s3 + $0x128] sm:$0xff]
  %v2788 = vld [vmem:[%s3 + $0x130] sm:$0xff]
  %v2789 = vld [vmem:[%s3 + $0x138] sm:$0xff]
  %v2790 = vld [vmem:[%s3 + $0x140] sm:$0xff]
  %v2791 = vld [vmem:[%s3 + $0x148] sm:$0xff]
  %v2792 = vld [vmem:[%s3 + $0x150] sm:$0xff]
  %v2793 = vld [vmem:[%s3 + $0x158] sm:$0xff]
  %v2794 = vld [vmem:[%s3 + $0x160] sm:$0xff]
  %v2795 = vld [vmem:[%s3 + $0x168] sm:$0xff]
  %v2796 = vld [vmem:[%s3 + $0x170] sm:$0xff]
  %v2797 = vld [vmem:[%s3 + $0x178] sm:$0xff]
  %2798 = vmatpush.msra.mxu0 %v2795
  %2799 = vmatpush.msra.mxu0 %v2792
  %2800 = vmatpush.msra.mxu0 %v2789
  %2801 = vmatpush.msra.mxu0 %v2786
  %2802 = vmatpush.msra.mxu0 %v2783
  %2803 = vmatpush.msra.mxu0 %v2780
  %2804 = vmatpush.msra.mxu0 %v2777
  %2805 = vmatpush.msra.mxu0 %v2774
  %2806 = vmatpush.msra.mxu0 %v2771
  %2807 = vmatpush.msra.mxu0 %v2768
  %2808 = vmatpush.msra.mxu0 %v2765
  %2809 = vmatpush.msra.mxu0 %v2762
  %2810 = vmatpush.msra.mxu0 %v2759
  %2811 = vmatpush.msra.mxu0 %v2756
  %2812 = vmatpush.msra.mxu0 %v2753
  %2813 = vmatpush.msra.mxu0 %v2750
  %2814 = vmatmul.f32.gmra.mxu0 %v2585
  %v2815 = vpop.f32.mrf.mxu0
  %v2816 = vadd.f32 0.0, %v2815
  %2817 = vdwg.mxu0
  %2818 = vmatpush.msra.mxu0 %v2796
  %2819 = vmatpush.msra.mxu0 %v2793
  %2820 = vmatpush.msra.mxu0 %v2790
  %2821 = vmatpush.msra.mxu0 %v2787
  %2822 = vmatpush.msra.mxu0 %v2784
  %2823 = vmatpush.msra.mxu0 %v2781
  %2824 = vmatpush.msra.mxu0 %v2778
  %2825 = vmatpush.msra.mxu0 %v2775
  %2826 = vmatpush.msra.mxu0 %v2772
  %2827 = vmatpush.msra.mxu0 %v2769
  %2828 = vmatpush.msra.mxu0 %v2766
  %2829 = vmatpush.msra.mxu0 %v2763
  %2830 = vmatpush.msra.mxu0 %v2760
  %2831 = vmatpush.msra.mxu0 %v2757
  %2832 = vmatpush.msra.mxu0 %v2754
  %2833 = vmatpush.msra.mxu0 %v2751
  %2834 = vmatmul.f32.gmra.mxu0 %v2585
  %v2835 = vpop.f32.mrf.mxu0
  %v2836 = vadd.f32 0.0, %v2835
  %2837 = vdwg.mxu0
  %2838 = vmatpush.msra.mxu0 %v2797
  %2839 = vmatpush.msra.mxu0 %v2794
  %2840 = vmatpush.msra.mxu0 %v2791
  %2841 = vmatpush.msra.mxu0 %v2788
  %2842 = vmatpush.msra.mxu0 %v2785
  %2843 = vmatpush.msra.mxu0 %v2782
  %2844 = vmatpush.msra.mxu0 %v2779
  %2845 = vmatpush.msra.mxu0 %v2776
  %2846 = vmatpush.msra.mxu0 %v2773
  %2847 = vmatpush.msra.mxu0 %v2770
  %2848 = vmatpush.msra.mxu0 %v2767
  %2849 = vmatpush.msra.mxu0 %v2764
  %2850 = vmatpush.msra.mxu0 %v2761
  %2851 = vmatpush.msra.mxu0 %v2758
  %2852 = vmatpush.msra.mxu0 %v2755
  %2853 = vmatpush.msra.mxu0 %v2752
  %2854 = vmatmul.f32.gmra.mxu0 %v2585
  %v2855 = vpop.f32.mrf.mxu0
  %v2856 = vadd.f32 0.0, %v2855
  %2857 = vdwg.mxu0
  %v2858 = vadd.f32 %v2747, %v2816
  %v2859 = vsub.f32 0.0, %v2858
  %v2860 = vmul.f32 %v2859, 1.442695
  %v2861 = vpow.pop %v2860
  %v2862 = vadd.f32 %v2861, 1.0
  %v2863 = vrcp.pop %v2862
  %v2864 = vmul.f32 %v2862, %v2863
  %v2865 = vsub.f32 1.0, %v2864
  %v2866 = vmul.f32 %v2863, %v2865
  %v2867 = vadd.f32 %v2863, %v2866
  %vm2868 = vweird.f32 %v2862
  %vm2869 = vweird.f32 %v2863
  %vm2870 = vmor %vm2868, %vm2869
  %v2871 = vsel %vm2870, %v2863, %v2867
  %v2872 = vand.u32 2147483647, %v2862
  %vm2873 = vcmp.eq.f32.partialorder %v2872, 8.507059e+37
  %v2874 = vand.u32 %v2862, 2147483648
  %v2875 = vor.u32 1.1754944e-38, %v2874
  %v2876 = vsel %vm2873, %v2875, %v2871
  %v2877 = vmul.f32 1.0, %v2876
  %v2878 = vadd.f32 %v2748, %v2836
  %v2879 = vsub.f32 0.0, %v2878
  %v2880 = vmul.f32 %v2879, 1.442695
  %v2881 = vpow.pop %v2880
  %v2882 = vadd.f32 %v2881, 1.0
  %v2883 = vrcp.pop %v2882
  %v2884 = vmul.f32 %v2882, %v2883
  %v2885 = vsub.f32 1.0, %v2884
  %v2886 = vmul.f32 %v2883, %v2885
  %v2887 = vadd.f32 %v2883, %v2886
  %vm2888 = vweird.f32 %v2882
  %vm2889 = vweird.f32 %v2883
  %vm2890 = vmor %vm2888, %vm2889
  %v2891 = vsel %vm2890, %v2883, %v2887
  %v2892 = vand.u32 2147483647, %v2882
  %vm2893 = vcmp.eq.f32.partialorder %v2892, 8.507059e+37
  %v2894 = vand.u32 %v2882, 2147483648
  %v2895 = vor.u32 1.1754944e-38, %v2894
  %v2896 = vsel %vm2893, %v2895, %v2891
  %v2897 = vmul.f32 1.0, %v2896
  %v2898 = vadd.f32 %v2856, %v790
  %v2899 = vmul.f32 %v2877, %v2898
  %v2900 = vadd.f32 %v2749, %v2899
  %v2901 = vtanh.pop %v2900
  %v2902 = vsub.f32 1.0, %v2897
  %v2903 = vmul.f32 %v2902, %v2901
  %v2904 = vmul.f32 %v2897, %v2585
  %v2905 = vadd.f32 %v2903, %v2904
  %v2906 = vld [vmem:[%s1125 + $0x18] sm:$0xff]
  %v2907 = vld [vmem:[%s1125 + $0x20] sm:$0xff]
  %v2908 = vld [vmem:[%s1125 + $0x28] sm:$0xff]
  %v2909 = vld [vmem:[%s4] sm:$0xff]
  %v2910 = vld [vmem:[%s4 + $0x8] sm:$0xff]
  %v2911 = vld [vmem:[%s4 + $0x10] sm:$0xff]
  %v2912 = vld [vmem:[%s4 + $0x18] sm:$0xff]
  %v2913 = vld [vmem:[%s4 + $0x20] sm:$0xff]
  %v2914 = vld [vmem:[%s4 + $0x28] sm:$0xff]
  %v2915 = vld [vmem:[%s4 + $0x30] sm:$0xff]
  %v2916 = vld [vmem:[%s4 + $0x38] sm:$0xff]
  %v2917 = vld [vmem:[%s4 + $0x40] sm:$0xff]
  %v2918 = vld [vmem:[%s4 + $0x48] sm:$0xff]
  %v2919 = vld [vmem:[%s4 + $0x50] sm:$0xff]
  %v2920 = vld [vmem:[%s4 + $0x58] sm:$0xff]
  %v2921 = vld [vmem:[%s4 + $0x60] sm:$0xff]
  %v2922 = vld [vmem:[%s4 + $0x68] sm:$0xff]
  %v2923 = vld [vmem:[%s4 + $0x70] sm:$0xff]
  %v2924 = vld [vmem:[%s4 + $0x78] sm:$0xff]
  %v2925 = vld [vmem:[%s4 + $0x80] sm:$0xff]
  %v2926 = vld [vmem:[%s4 + $0x88] sm:$0xff]
  %v2927 = vld [vmem:[%s4 + $0x90] sm:$0xff]
  %v2928 = vld [vmem:[%s4 + $0x98] sm:$0xff]
  %v2929 = vld [vmem:[%s4 + $0xa0] sm:$0xff]
  %v2930 = vld [vmem:[%s4 + $0xa8] sm:$0xff]
  %v2931 = vld [vmem:[%s4 + $0xb0] sm:$0xff]
  %v2932 = vld [vmem:[%s4 + $0xb8] sm:$0xff]
  %v2933 = vld [vmem:[%s4 + $0xc0] sm:$0xff]
  %v2934 = vld [vmem:[%s4 + $0xc8] sm:$0xff]
  %v2935 = vld [vmem:[%s4 + $0xd0] sm:$0xff]
  %v2936 = vld [vmem:[%s4 + $0xd8] sm:$0xff]
  %v2937 = vld [vmem:[%s4 + $0xe0] sm:$0xff]
  %v2938 = vld [vmem:[%s4 + $0xe8] sm:$0xff]
  %v2939 = vld [vmem:[%s4 + $0xf0] sm:$0xff]
  %v2940 = vld [vmem:[%s4 + $0xf8] sm:$0xff]
  %v2941 = vld [vmem:[%s4 + $0x100] sm:$0xff]
  %v2942 = vld [vmem:[%s4 + $0x108] sm:$0xff]
  %v2943 = vld [vmem:[%s4 + $0x110] sm:$0xff]
  %v2944 = vld [vmem:[%s4 + $0x118] sm:$0xff]
  %v2945 = vld [vmem:[%s4 + $0x120] sm:$0xff]
  %v2946 = vld [vmem:[%s4 + $0x128] sm:$0xff]
  %v2947 = vld [vmem:[%s4 + $0x130] sm:$0xff]
  %v2948 = vld [vmem:[%s4 + $0x138] sm:$0xff]
  %v2949 = vld [vmem:[%s4 + $0x140] sm:$0xff]
  %v2950 = vld [vmem:[%s4 + $0x148] sm:$0xff]
  %v2951 = vld [vmem:[%s4 + $0x150] sm:$0xff]
  %v2952 = vld [vmem:[%s4 + $0x158] sm:$0xff]
  %v2953 = vld [vmem:[%s4 + $0x160] sm:$0xff]
  %v2954 = vld [vmem:[%s4 + $0x168] sm:$0xff]
  %v2955 = vld [vmem:[%s4 + $0x170] sm:$0xff]
  %v2956 = vld [vmem:[%s4 + $0x178] sm:$0xff]
  %2957 = vmatpush.msra.mxu0 %v2954
  %2958 = vmatpush.msra.mxu0 %v2951
  %2959 = vmatpush.msra.mxu0 %v2948
  %2960 = vmatpush.msra.mxu0 %v2945
  %2961 = vmatpush.msra.mxu0 %v2942
  %2962 = vmatpush.msra.mxu0 %v2939
  %2963 = vmatpush.msra.mxu0 %v2936
  %2964 = vmatpush.msra.mxu0 %v2933
  %2965 = vmatpush.msra.mxu0 %v2930
  %2966 = vmatpush.msra.mxu0 %v2927
  %2967 = vmatpush.msra.mxu0 %v2924
  %2968 = vmatpush.msra.mxu0 %v2921
  %2969 = vmatpush.msra.mxu0 %v2918
  %2970 = vmatpush.msra.mxu0 %v2915
  %2971 = vmatpush.msra.mxu0 %v2912
  %2972 = vmatpush.msra.mxu0 %v2909
  %2973 = vmatmul.f32.gmra.mxu0 %v2744
  %v2974 = vpop.f32.mrf.mxu0
  %v2975 = vadd.f32 0.0, %v2974
  %2976 = vdwg.mxu0
  %2977 = vmatpush.msra.mxu0 %v2955
  %2978 = vmatpush.msra.mxu0 %v2952
  %2979 = vmatpush.msra.mxu0 %v2949
  %2980 = vmatpush.msra.mxu0 %v2946
  %2981 = vmatpush.msra.mxu0 %v2943
  %2982 = vmatpush.msra.mxu0 %v2940
  %2983 = vmatpush.msra.mxu0 %v2937
  %2984 = vmatpush.msra.mxu0 %v2934
  %2985 = vmatpush.msra.mxu0 %v2931
  %2986 = vmatpush.msra.mxu0 %v2928
  %2987 = vmatpush.msra.mxu0 %v2925
  %2988 = vmatpush.msra.mxu0 %v2922
  %2989 = vmatpush.msra.mxu0 %v2919
  %2990 = vmatpush.msra.mxu0 %v2916
  %2991 = vmatpush.msra.mxu0 %v2913
  %2992 = vmatpush.msra.mxu0 %v2910
  %2993 = vmatmul.f32.gmra.mxu0 %v2744
  %v2994 = vpop.f32.mrf.mxu0
  %v2995 = vadd.f32 0.0, %v2994
  %2996 = vdwg.mxu0
  %2997 = vmatpush.msra.mxu0 %v2956
  %2998 = vmatpush.msra.mxu0 %v2953
  %2999 = vmatpush.msra.mxu0 %v2950
  %3000 = vmatpush.msra.mxu0 %v2947
  %3001 = vmatpush.msra.mxu0 %v2944
  %3002 = vmatpush.msra.mxu0 %v2941
  %3003 = vmatpush.msra.mxu0 %v2938
  %3004 = vmatpush.msra.mxu0 %v2935
  %3005 = vmatpush.msra.mxu0 %v2932
  %3006 = vmatpush.msra.mxu0 %v2929
  %3007 = vmatpush.msra.mxu0 %v2926
  %3008 = vmatpush.msra.mxu0 %v2923
  %3009 = vmatpush.msra.mxu0 %v2920
  %3010 = vmatpush.msra.mxu0 %v2917
  %3011 = vmatpush.msra.mxu0 %v2914
  %3012 = vmatpush.msra.mxu0 %v2911
  %3013 = vmatmul.f32.gmra.mxu0 %v2744
  %v3014 = vpop.f32.mrf.mxu0
  %v3015 = vadd.f32 0.0, %v3014
  %3016 = vdwg.mxu0
  %v3017 = vadd.f32 %v2906, %v2975
  %v3018 = vsub.f32 0.0, %v3017
  %v3019 = vmul.f32 %v3018, 1.442695
  %v3020 = vpow.pop %v3019
  %v3021 = vadd.f32 %v3020, 1.0
  %v3022 = vrcp.pop %v3021
  %v3023 = vmul.f32 %v3021, %v3022
  %v3024 = vsub.f32 1.0, %v3023
  %v3025 = vmul.f32 %v3022, %v3024
  %v3026 = vadd.f32 %v3022, %v3025
  %vm3027 = vweird.f32 %v3021
  %vm3028 = vweird.f32 %v3022
  %vm3029 = vmor %vm3027, %vm3028
  %v3030 = vsel %vm3029, %v3022, %v3026
  %v3031 = vand.u32 2147483647, %v3021
  %vm3032 = vcmp.eq.f32.partialorder %v3031, 8.507059e+37
  %v3033 = vand.u32 %v3021, 2147483648
  %v3034 = vor.u32 1.1754944e-38, %v3033
  %v3035 = vsel %vm3032, %v3034, %v3030
  %v3036 = vmul.f32 1.0, %v3035
  %v3037 = vadd.f32 %v2907, %v2995
  %v3038 = vsub.f32 0.0, %v3037
  %v3039 = vmul.f32 %v3038, 1.442695
  %v3040 = vpow.pop %v3039
  %v3041 = vadd.f32 %v3040, 1.0
  %v3042 = vrcp.pop %v3041
  %v3043 = vmul.f32 %v3041, %v3042
  %v3044 = vsub.f32 1.0, %v3043
  %v3045 = vmul.f32 %v3042, %v3044
  %v3046 = vadd.f32 %v3042, %v3045
  %vm3047 = vweird.f32 %v3041
  %vm3048 = vweird.f32 %v3042
  %vm3049 = vmor %vm3047, %vm3048
  %v3050 = vsel %vm3049, %v3042, %v3046
  %v3051 = vand.u32 2147483647, %v3041
  %vm3052 = vcmp.eq.f32.partialorder %v3051, 8.507059e+37
  %v3053 = vand.u32 %v3041, 2147483648
  %v3054 = vor.u32 1.1754944e-38, %v3053
  %v3055 = vsel %vm3052, %v3054, %v3050
  %v3056 = vmul.f32 1.0, %v3055
  %v3057 = vadd.f32 %v3015, %v794
  %v3058 = vmul.f32 %v3036, %v3057
  %v3059 = vadd.f32 %v2908, %v3058
  %v3060 = vtanh.pop %v3059
  %v3061 = vsub.f32 1.0, %v3056
  %v3062 = vmul.f32 %v3061, %v3060
  %v3063 = vmul.f32 %v3056, %v2744
  %v3064 = vadd.f32 %v3062, %v3063
  %3065 = vst [vmem:[%s1449] sm:$0xff] %v2905
  %3066 = vst [vmem:[%s1447 + $0x8] sm:$0xff] %v3064
  %v3067 = vld [vmem:[%s960] sm:$0xff]
  %v3068 = vld [vmem:[%s960 + $0x8] sm:$0xff]
  %v3069 = vld [vmem:[%s960 + $0x10] sm:$0xff]
  %v3070 = vld [vmem:[%s3] sm:$0xff]
  %v3071 = vld [vmem:[%s3 + $0x8] sm:$0xff]
  %v3072 = vld [vmem:[%s3 + $0x10] sm:$0xff]
  %v3073 = vld [vmem:[%s3 + $0x18] sm:$0xff]
  %v3074 = vld [vmem:[%s3 + $0x20] sm:$0xff]
  %v3075 = vld [vmem:[%s3 + $0x28] sm:$0xff]
  %v3076 = vld [vmem:[%s3 + $0x30] sm:$0xff]
  %v3077 = vld [vmem:[%s3 + $0x38] sm:$0xff]
  %v3078 = vld [vmem:[%s3 + $0x40] sm:$0xff]
  %v3079 = vld [vmem:[%s3 + $0x48] sm:$0xff]
  %v3080 = vld [vmem:[%s3 + $0x50] sm:$0xff]
  %v3081 = vld [vmem:[%s3 + $0x58] sm:$0xff]
  %v3082 = vld [vmem:[%s3 + $0x60] sm:$0xff]
  %v3083 = vld [vmem:[%s3 + $0x68] sm:$0xff]
  %v3084 = vld [vmem:[%s3 + $0x70] sm:$0xff]
  %v3085 = vld [vmem:[%s3 + $0x78] sm:$0xff]
  %v3086 = vld [vmem:[%s3 + $0x80] sm:$0xff]
  %v3087 = vld [vmem:[%s3 + $0x88] sm:$0xff]
  %v3088 = vld [vmem:[%s3 + $0x90] sm:$0xff]
  %v3089 = vld [vmem:[%s3 + $0x98] sm:$0xff]
  %v3090 = vld [vmem:[%s3 + $0xa0] sm:$0xff]
  %v3091 = vld [vmem:[%s3 + $0xa8] sm:$0xff]
  %v3092 = vld [vmem:[%s3 + $0xb0] sm:$0xff]
  %v3093 = vld [vmem:[%s3 + $0xb8] sm:$0xff]
  %v3094 = vld [vmem:[%s3 + $0xc0] sm:$0xff]
  %v3095 = vld [vmem:[%s3 + $0xc8] sm:$0xff]
  %v3096 = vld [vmem:[%s3 + $0xd0] sm:$0xff]
  %v3097 = vld [vmem:[%s3 + $0xd8] sm:$0xff]
  %v3098 = vld [vmem:[%s3 + $0xe0] sm:$0xff]
  %v3099 = vld [vmem:[%s3 + $0xe8] sm:$0xff]
  %v3100 = vld [vmem:[%s3 + $0xf0] sm:$0xff]
  %v3101 = vld [vmem:[%s3 + $0xf8] sm:$0xff]
  %v3102 = vld [vmem:[%s3 + $0x100] sm:$0xff]
  %v3103 = vld [vmem:[%s3 + $0x108] sm:$0xff]
  %v3104 = vld [vmem:[%s3 + $0x110] sm:$0xff]
  %v3105 = vld [vmem:[%s3 + $0x118] sm:$0xff]
  %v3106 = vld [vmem:[%s3 + $0x120] sm:$0xff]
  %v3107 = vld [vmem:[%s3 + $0x128] sm:$0xff]
  %v3108 = vld [vmem:[%s3 + $0x130] sm:$0xff]
  %v3109 = vld [vmem:[%s3 + $0x138] sm:$0xff]
  %v3110 = vld [vmem:[%s3 + $0x140] sm:$0xff]
  %v3111 = vld [vmem:[%s3 + $0x148] sm:$0xff]
  %v3112 = vld [vmem:[%s3 + $0x150] sm:$0xff]
  %v3113 = vld [vmem:[%s3 + $0x158] sm:$0xff]
  %v3114 = vld [vmem:[%s3 + $0x160] sm:$0xff]
  %v3115 = vld [vmem:[%s3 + $0x168] sm:$0xff]
  %v3116 = vld [vmem:[%s3 + $0x170] sm:$0xff]
  %v3117 = vld [vmem:[%s3 + $0x178] sm:$0xff]
  %3118 = vmatpush.msra.mxu0 %v3115
  %3119 = vmatpush.msra.mxu0 %v3112
  %3120 = vmatpush.msra.mxu0 %v3109
  %3121 = vmatpush.msra.mxu0 %v3106
  %3122 = vmatpush.msra.mxu0 %v3103
  %3123 = vmatpush.msra.mxu0 %v3100
  %3124 = vmatpush.msra.mxu0 %v3097
  %3125 = vmatpush.msra.mxu0 %v3094
  %3126 = vmatpush.msra.mxu0 %v3091
  %3127 = vmatpush.msra.mxu0 %v3088
  %3128 = vmatpush.msra.mxu0 %v3085
  %3129 = vmatpush.msra.mxu0 %v3082
  %3130 = vmatpush.msra.mxu0 %v3079
  %3131 = vmatpush.msra.mxu0 %v3076
  %3132 = vmatpush.msra.mxu0 %v3073
  %3133 = vmatpush.msra.mxu0 %v3070
  %3134 = vmatmul.f32.gmra.mxu0 %v2905
  %v3135 = vpop.f32.mrf.mxu0
  %v3136 = vadd.f32 0.0, %v3135
  %3137 = vdwg.mxu0
  %3138 = vmatpush.msra.mxu0 %v3116
  %3139 = vmatpush.msra.mxu0 %v3113
  %3140 = vmatpush.msra.mxu0 %v3110
  %3141 = vmatpush.msra.mxu0 %v3107
  %3142 = vmatpush.msra.mxu0 %v3104
  %3143 = vmatpush.msra.mxu0 %v3101
  %3144 = vmatpush.msra.mxu0 %v3098
  %3145 = vmatpush.msra.mxu0 %v3095
  %3146 = vmatpush.msra.mxu0 %v3092
  %3147 = vmatpush.msra.mxu0 %v3089
  %3148 = vmatpush.msra.mxu0 %v3086
  %3149 = vmatpush.msra.mxu0 %v3083
  %3150 = vmatpush.msra.mxu0 %v3080
  %3151 = vmatpush.msra.mxu0 %v3077
  %3152 = vmatpush.msra.mxu0 %v3074
  %3153 = vmatpush.msra.mxu0 %v3071
  %3154 = vmatmul.f32.gmra.mxu0 %v2905
  %v3155 = vpop.f32.mrf.mxu0
  %v3156 = vadd.f32 0.0, %v3155
  %3157 = vdwg.mxu0
  %3158 = vmatpush.msra.mxu0 %v3117
  %3159 = vmatpush.msra.mxu0 %v3114
  %3160 = vmatpush.msra.mxu0 %v3111
  %3161 = vmatpush.msra.mxu0 %v3108
  %3162 = vmatpush.msra.mxu0 %v3105
  %3163 = vmatpush.msra.mxu0 %v3102
  %3164 = vmatpush.msra.mxu0 %v3099
  %3165 = vmatpush.msra.mxu0 %v3096
  %3166 = vmatpush.msra.mxu0 %v3093
  %3167 = vmatpush.msra.mxu0 %v3090
  %3168 = vmatpush.msra.mxu0 %v3087
  %3169 = vmatpush.msra.mxu0 %v3084
  %3170 = vmatpush.msra.mxu0 %v3081
  %3171 = vmatpush.msra.mxu0 %v3078
  %3172 = vmatpush.msra.mxu0 %v3075
  %3173 = vmatpush.msra.mxu0 %v3072
  %3174 = vmatmul.f32.gmra.mxu0 %v2905
  %v3175 = vpop.f32.mrf.mxu0
  %v3176 = vadd.f32 0.0, %v3175
  %3177 = vdwg.mxu0
  %v3178 = vadd.f32 %v3067, %v3136
  %v3179 = vsub.f32 0.0, %v3178
  %v3180 = vmul.f32 %v3179, 1.442695
  %v3181 = vpow.pop %v3180
  %v3182 = vadd.f32 %v3181, 1.0
  %v3183 = vrcp.pop %v3182
  %v3184 = vmul.f32 %v3182, %v3183
  %v3185 = vsub.f32 1.0, %v3184
  %v3186 = vmul.f32 %v3183, %v3185
  %v3187 = vadd.f32 %v3183, %v3186
  %vm3188 = vweird.f32 %v3182
  %vm3189 = vweird.f32 %v3183
  %vm3190 = vmor %vm3188, %vm3189
  %v3191 = vsel %vm3190, %v3183, %v3187
  %v3192 = vand.u32 2147483647, %v3182
  %vm3193 = vcmp.eq.f32.partialorder %v3192, 8.507059e+37
  %v3194 = vand.u32 %v3182, 2147483648
  %v3195 = vor.u32 1.1754944e-38, %v3194
  %v3196 = vsel %vm3193, %v3195, %v3191
  %v3197 = vmul.f32 1.0, %v3196
  %v3198 = vadd.f32 %v3068, %v3156
  %v3199 = vsub.f32 0.0, %v3198
  %v3200 = vmul.f32 %v3199, 1.442695
  %v3201 = vpow.pop %v3200
  %v3202 = vadd.f32 %v3201, 1.0
  %v3203 = vrcp.pop %v3202
  %v3204 = vmul.f32 %v3202, %v3203
  %v3205 = vsub.f32 1.0, %v3204
  %v3206 = vmul.f32 %v3203, %v3205
  %v3207 = vadd.f32 %v3203, %v3206
  %vm3208 = vweird.f32 %v3202
  %vm3209 = vweird.f32 %v3203
  %vm3210 = vmor %vm3208, %vm3209
  %v3211 = vsel %vm3210, %v3203, %v3207
  %v3212 = vand.u32 2147483647, %v3202
  %vm3213 = vcmp.eq.f32.partialorder %v3212, 8.507059e+37
  %v3214 = vand.u32 %v3202, 2147483648
  %v3215 = vor.u32 1.1754944e-38, %v3214
  %v3216 = vsel %vm3213, %v3215, %v3211
  %v3217 = vmul.f32 1.0, %v3216
  %v3218 = vadd.f32 %v3176, %v790
  %v3219 = vmul.f32 %v3197, %v3218
  %v3220 = vadd.f32 %v3069, %v3219
  %v3221 = vtanh.pop %v3220
  %v3222 = vsub.f32 1.0, %v3217
  %v3223 = vmul.f32 %v3222, %v3221
  %v3224 = vmul.f32 %v3217, %v2905
  %v3225 = vadd.f32 %v3223, %v3224
  %v3226 = vld [vmem:[%s798 + $0x18] sm:$0xff]
  %v3227 = vld [vmem:[%s798 + $0x20] sm:$0xff]
  %v3228 = vld [vmem:[%s798 + $0x28] sm:$0xff]
  %v3229 = vld [vmem:[%s4] sm:$0xff]
  %v3230 = vld [vmem:[%s4 + $0x8] sm:$0xff]
  %v3231 = vld [vmem:[%s4 + $0x10] sm:$0xff]
  %v3232 = vld [vmem:[%s4 + $0x18] sm:$0xff]
  %v3233 = vld [vmem:[%s4 + $0x20] sm:$0xff]
  %v3234 = vld [vmem:[%s4 + $0x28] sm:$0xff]
  %v3235 = vld [vmem:[%s4 + $0x30] sm:$0xff]
  %v3236 = vld [vmem:[%s4 + $0x38] sm:$0xff]
  %v3237 = vld [vmem:[%s4 + $0x40] sm:$0xff]
  %v3238 = vld [vmem:[%s4 + $0x48] sm:$0xff]
  %v3239 = vld [vmem:[%s4 + $0x50] sm:$0xff]
  %v3240 = vld [vmem:[%s4 + $0x58] sm:$0xff]
  %v3241 = vld [vmem:[%s4 + $0x60] sm:$0xff]
  %v3242 = vld [vmem:[%s4 + $0x68] sm:$0xff]
  %v3243 = vld [vmem:[%s4 + $0x70] sm:$0xff]
  %v3244 = vld [vmem:[%s4 + $0x78] sm:$0xff]
  %v3245 = vld [vmem:[%s4 + $0x80] sm:$0xff]
  %v3246 = vld [vmem:[%s4 + $0x88] sm:$0xff]
  %v3247 = vld [vmem:[%s4 + $0x90] sm:$0xff]
  %v3248 = vld [vmem:[%s4 + $0x98] sm:$0xff]
  %v3249 = vld [vmem:[%s4 + $0xa0] sm:$0xff]
  %v3250 = vld [vmem:[%s4 + $0xa8] sm:$0xff]
  %v3251 = vld [vmem:[%s4 + $0xb0] sm:$0xff]
  %v3252 = vld [vmem:[%s4 + $0xb8] sm:$0xff]
  %v3253 = vld [vmem:[%s4 + $0xc0] sm:$0xff]
  %v3254 = vld [vmem:[%s4 + $0xc8] sm:$0xff]
  %v3255 = vld [vmem:[%s4 + $0xd0] sm:$0xff]
  %v3256 = vld [vmem:[%s4 + $0xd8] sm:$0xff]
  %v3257 = vld [vmem:[%s4 + $0xe0] sm:$0xff]
  %v3258 = vld [vmem:[%s4 + $0xe8] sm:$0xff]
  %v3259 = vld [vmem:[%s4 + $0xf0] sm:$0xff]
  %v3260 = vld [vmem:[%s4 + $0xf8] sm:$0xff]
  %v3261 = vld [vmem:[%s4 + $0x100] sm:$0xff]
  %v3262 = vld [vmem:[%s4 + $0x108] sm:$0xff]
  %v3263 = vld [vmem:[%s4 + $0x110] sm:$0xff]
  %v3264 = vld [vmem:[%s4 + $0x118] sm:$0xff]
  %v3265 = vld [vmem:[%s4 + $0x120] sm:$0xff]
  %v3266 = vld [vmem:[%s4 + $0x128] sm:$0xff]
  %v3267 = vld [vmem:[%s4 + $0x130] sm:$0xff]
  %v3268 = vld [vmem:[%s4 + $0x138] sm:$0xff]
  %v3269 = vld [vmem:[%s4 + $0x140] sm:$0xff]
  %v3270 = vld [vmem:[%s4 + $0x148] sm:$0xff]
  %v3271 = vld [vmem:[%s4 + $0x150] sm:$0xff]
  %v3272 = vld [vmem:[%s4 + $0x158] sm:$0xff]
  %v3273 = vld [vmem:[%s4 + $0x160] sm:$0xff]
  %v3274 = vld [vmem:[%s4 + $0x168] sm:$0xff]
  %v3275 = vld [vmem:[%s4 + $0x170] sm:$0xff]
  %v3276 = vld [vmem:[%s4 + $0x178] sm:$0xff]
  %3277 = vmatpush.msra.mxu0 %v3274
  %3278 = vmatpush.msra.mxu0 %v3271
  %3279 = vmatpush.msra.mxu0 %v3268
  %3280 = vmatpush.msra.mxu0 %v3265
  %3281 = vmatpush.msra.mxu0 %v3262
  %3282 = vmatpush.msra.mxu0 %v3259
  %3283 = vmatpush.msra.mxu0 %v3256
  %3284 = vmatpush.msra.mxu0 %v3253
  %3285 = vmatpush.msra.mxu0 %v3250
  %3286 = vmatpush.msra.mxu0 %v3247
  %3287 = vmatpush.msra.mxu0 %v3244
  %3288 = vmatpush.msra.mxu0 %v3241
  %3289 = vmatpush.msra.mxu0 %v3238
  %3290 = vmatpush.msra.mxu0 %v3235
  %3291 = vmatpush.msra.mxu0 %v3232
  %3292 = vmatpush.msra.mxu0 %v3229
  %3293 = vmatmul.f32.gmra.mxu0 %v3064
  %v3294 = vpop.f32.mrf.mxu0
  %v3295 = vadd.f32 0.0, %v3294
  %3296 = vdwg.mxu0
  %3297 = vmatpush.msra.mxu0 %v3275
  %3298 = vmatpush.msra.mxu0 %v3272
  %3299 = vmatpush.msra.mxu0 %v3269
  %3300 = vmatpush.msra.mxu0 %v3266
  %3301 = vmatpush.msra.mxu0 %v3263
  %3302 = vmatpush.msra.mxu0 %v3260
  %3303 = vmatpush.msra.mxu0 %v3257
  %3304 = vmatpush.msra.mxu0 %v3254
  %3305 = vmatpush.msra.mxu0 %v3251
  %3306 = vmatpush.msra.mxu0 %v3248
  %3307 = vmatpush.msra.mxu0 %v3245
  %3308 = vmatpush.msra.mxu0 %v3242
  %3309 = vmatpush.msra.mxu0 %v3239
  %3310 = vmatpush.msra.mxu0 %v3236
  %3311 = vmatpush.msra.mxu0 %v3233
  %3312 = vmatpush.msra.mxu0 %v3230
  %3313 = vmatmul.f32.gmra.mxu0 %v3064
  %v3314 = vpop.f32.mrf.mxu0
  %v3315 = vadd.f32 0.0, %v3314
  %3316 = vdwg.mxu0
  %3317 = vmatpush.msra.mxu0 %v3276
  %3318 = vmatpush.msra.mxu0 %v3273
  %3319 = vmatpush.msra.mxu0 %v3270
  %3320 = vmatpush.msra.mxu0 %v3267
  %3321 = vmatpush.msra.mxu0 %v3264
  %3322 = vmatpush.msra.mxu0 %v3261
  %3323 = vmatpush.msra.mxu0 %v3258
  %3324 = vmatpush.msra.mxu0 %v3255
  %3325 = vmatpush.msra.mxu0 %v3252
  %3326 = vmatpush.msra.mxu0 %v3249
  %3327 = vmatpush.msra.mxu0 %v3246
  %3328 = vmatpush.msra.mxu0 %v3243
  %3329 = vmatpush.msra.mxu0 %v3240
  %3330 = vmatpush.msra.mxu0 %v3237
  %3331 = vmatpush.msra.mxu0 %v3234
  %3332 = vmatpush.msra.mxu0 %v3231
  %3333 = vmatmul.f32.gmra.mxu0 %v3064
  %v3334 = vpop.f32.mrf.mxu0
  %v3335 = vadd.f32 0.0, %v3334
  %3336 = vdwg.mxu0
  %v3337 = vadd.f32 %v3226, %v3295
  %v3338 = vsub.f32 0.0, %v3337
  %v3339 = vmul.f32 %v3338, 1.442695
  %v3340 = vpow.pop %v3339
  %v3341 = vadd.f32 %v3340, 1.0
  %v3342 = vrcp.pop %v3341
  %v3343 = vmul.f32 %v3341, %v3342
  %v3344 = vsub.f32 1.0, %v3343
  %v3345 = vmul.f32 %v3342, %v3344
  %v3346 = vadd.f32 %v3342, %v3345
  %vm3347 = vweird.f32 %v3341
  %vm3348 = vweird.f32 %v3342
  %vm3349 = vmor %vm3347, %vm3348
  %v3350 = vsel %vm3349, %v3342, %v3346
  %v3351 = vand.u32 2147483647, %v3341
  %vm3352 = vcmp.eq.f32.partialorder %v3351, 8.507059e+37
  %v3353 = vand.u32 %v3341, 2147483648
  %v3354 = vor.u32 1.1754944e-38, %v3353
  %v3355 = vsel %vm3352, %v3354, %v3350
  %v3356 = vmul.f32 1.0, %v3355
  %v3357 = vadd.f32 %v3227, %v3315
  %v3358 = vsub.f32 0.0, %v3357
  %v3359 = vmul.f32 %v3358, 1.442695
  %v3360 = vpow.pop %v3359
  %v3361 = vadd.f32 %v3360, 1.0
  %v3362 = vrcp.pop %v3361
  %v3363 = vmul.f32 %v3361, %v3362
  %v3364 = vsub.f32 1.0, %v3363
  %v3365 = vmul.f32 %v3362, %v3364
  %v3366 = vadd.f32 %v3362, %v3365
  %vm3367 = vweird.f32 %v3361
  %vm3368 = vweird.f32 %v3362
  %vm3369 = vmor %vm3367, %vm3368
  %v3370 = vsel %vm3369, %v3362, %v3366
  %v3371 = vand.u32 2147483647, %v3361
  %vm3372 = vcmp.eq.f32.partialorder %v3371, 8.507059e+37
  %v3373 = vand.u32 %v3361, 2147483648
  %v3374 = vor.u32 1.1754944e-38, %v3373
  %v3375 = vsel %vm3372, %v3374, %v3370
  %v3376 = vmul.f32 1.0, %v3375
  %v3377 = vadd.f32 %v3335, %v794
  %v3378 = vmul.f32 %v3356, %v3377
  %v3379 = vadd.f32 %v3228, %v3378
  %v3380 = vtanh.pop %v3379
  %v3381 = vsub.f32 1.0, %v3376
  %v3382 = vmul.f32 %v3381, %v3380
  %v3383 = vmul.f32 %v3376, %v3064
  %v3384 = vadd.f32 %v3382, %v3383
  %3385 = vst [vmem:[%s1121] sm:$0xff] %v3225
  %3386 = vst [vmem:[%s7 + $0x8] sm:$0xff] %v3384
  // Predicated region
  $region30: #{grud_forward.4} parent=0 // pred_check
    _
  $region31: #{grud_forward.4} parent=0 // pred_check_branch
    %3388 = sbr.rel (0) target = $region33
  $region32: #{grud_forward.4} parent=0 // pred_region
    _
  $region33: #{grud_forward.4} parent=0 // pred_fallthru
    _
  // Predicated region
  $region34: #{grud_forward.4} parent=0 // pred_check
    _
  $region35: #{grud_forward.4} parent=0 // pred_check_branch
    %3390 = sbr.rel (0) target = $region37
  $region36: #{grud_forward.4} parent=0 // pred_region
    _
  $region37: #{grud_forward.4} parent=0 // pred_fallthru
    _

</llo_original>
